<compile_context>
chip_gen: v5e
topology: v5e:2x2
jax: 0.10.0
libtpu: 0.0.40
codegen_flags: <defaults>
</compile_context>

<pallas_src>
import numpy as np

import jax
import jax.numpy as jnp
from jax.experimental import pallas as pl
from jax.experimental.pallas import tpu as pltpu


XROW = 32         # input row padded 28 -> 32 (aligned strips; col 28 == 1.0)
XLEN = 28 * XROW  # 896 rows of the 2D (row, batch) input slab


# ------------------------------ Pallas kernel ------------------------------ #

def _lenet_kernel(x_ref, w1_ref, w2_ref, b2_ref,
                  fw1_ref, fb1_ref, fw2_ref, fb2_ref, fw3_ref, fb3_ref,
                  out_ref, p1_ref, p2_ref):
    """Fused LeNet forward for one tile of TB images (batch in lanes).

    x_ref  : (896, TB) bf16  padded images, row = h*32 + w, column 28 == 1.0
    w1_ref : (288, 192) bf16 conv1 dh-pair row-Toeplitz (bias folded in)
    w2_ref : (128, 360) bf16 conv2 row-Toeplitz;  b2_ref: (128, 1) f32 bias
    fw*_ref: bf16 FC weights (out, in); fb*_ref: f32 biases (out, 1)
    out_ref: (10, TB)  f32 logits
    p1_ref : (864, TB) f32 scratch, pool1: row = h*72 + w*6 + c
    p2_ref : (256, TB) f32 scratch, pool2: row = (h*4 + w)*16 + c
    """
    f32 = jnp.float32
    bf16 = jnp.bfloat16
    tb = x_ref.shape[-1]

    # ---- conv1 (5x5, 1->6) + 2x2 maxpool + ReLU: one fused bf16 matmul per
    #      pooled output row (both conv rows of the pool window at once). ----
    w1 = w1_ref[...]                                            # (288, 192) bf16
    for ph in range(12):
        strip = x_ref[pl.ds(ph * 64, 192), :]                   # (192, TB) bf16
        y = jnp.dot(w1, strip, preferred_element_type=f32)      # (288, TB), bias incl.
        h0 = jnp.maximum(y[0:72, :], y[72:144, :])              # W-pool, conv row 2ph
        h1 = jnp.maximum(y[144:216, :], y[216:288, :])          # W-pool, conv row 2ph+1
        p1_ref[pl.ds(ph * 72, 72), :] = jnp.maximum(            # H-pool + ReLU
            jnp.maximum(h0, h1), 0.0)

    # ---- conv2 (5x5, 6->16) + 2x2 maxpool + ReLU ----
    w2 = w2_ref[...]                                            # (128, 360) bf16
    b2b = jnp.broadcast_to(b2_ref[...], (128, tb))              # hoisted broadcast
    for ph in range(4):
        halves = []
        for dh in range(2):
            oh = 2 * ph + dh
            strip = p1_ref[pl.ds(oh * 72, 360), :].astype(bf16)
            y = jnp.dot(w2, strip, preferred_element_type=f32) + b2b
            halves.append(jnp.maximum(y[:64, :], y[64:, :]))    # W-pool
        p2_ref[pl.ds(ph * 64, 64), :] = jnp.maximum(            # H-pool + ReLU
            jnp.maximum(halves[0], halves[1]), 0.0)

    # ---- fused FC stack (pool2 row order already matches fw1 layout) ----
    flat = p2_ref[...].astype(bf16)                             # (256, TB)
    a1 = jnp.dot(fw1_ref[...], flat, preferred_element_type=f32) + fb1_ref[...]
    a1 = jnp.maximum(a1, 0.0).astype(bf16)                      # (120, TB)
    a2 = jnp.dot(fw2_ref[...], a1, preferred_element_type=f32) + fb2_ref[...]
    a2 = jnp.maximum(a2, 0.0).astype(bf16)                      # (84, TB)
    out_ref[...] = jnp.dot(fw3_ref[...], a2,
                           preferred_element_type=f32) + fb3_ref[...]


def _lenet_pallas(x2d, kp, np_batch, tb):
    const = lambda i: (0, 0)
    return pl.pallas_call(
        _lenet_kernel,
        out_shape=jax.ShapeDtypeStruct((10, np_batch), jnp.float32),
        grid_spec=pltpu.PrefetchScalarGridSpec(
            num_scalar_prefetch=0,
            grid=(np_batch // tb,),
            in_specs=[
                pl.BlockSpec((XLEN, tb), lambda i: (0, i)),   # bf16 images
                pl.BlockSpec((288, 192), const),              # conv1 Toeplitz (+bias)
                pl.BlockSpec((128, 360), const),              # conv2 Toeplitz
                pl.BlockSpec((128, 1), const),                # conv2 bias
                pl.BlockSpec((120, 256), const),              # fc1
                pl.BlockSpec((120, 1), const),
                pl.BlockSpec((84, 120), const),               # fc2
                pl.BlockSpec((84, 1), const),
                pl.BlockSpec((10, 84), const),                # fc3
                pl.BlockSpec((10, 1), const),
            ],
            out_specs=pl.BlockSpec((10, tb), lambda i: (0, i)),
            scratch_shapes=[
                pltpu.VMEM((12 * 72, tb), jnp.float32),       # pool1 activations
                pltpu.VMEM((256, tb), jnp.float32),           # pool2 activations
            ],
        ),
        compiler_params=pltpu.CompilerParams(
            dimension_semantics=("parallel",)),
    )(x2d, kp["w1t"], kp["w2t"], kp["b2t"],
      kp["fw1"], kp["fb1"], kp["fw2"], kp["fb2"], kp["fw3"], kp["fb3"])


# ------------------------- host-side parameter prep ------------------------ #

def _conv1_toeplitz_fused(w, b):
    """w: (6,1,5,5), b: (6,) -> dh-pair row-Toeplitz (288, 192) bf16.

    Output row r = d*144 + s*72 + pw*6 + co computes conv row oh = 2*ph + d,
    conv column ow = 2*pw + s, channel co, against the 6-row input strip of
    pooled row ph (strip row j = input row 2*ph + j, strip col q = j*32 + w').
    The bias rides on the constant-1.0 input column (j=0, w'=28).
    """
    w = np.asarray(w, np.float32)
    b = np.asarray(b, np.float32)
    Wt = np.zeros((288, 6 * XROW), np.float32)
    for d in range(2):
        for s in range(2):
            for pw in range(12):
                for co in range(6):
                    r = d * 144 + s * 72 + pw * 6 + co
                    ow = 2 * pw + s
                    Wt[r, 28] = b[co]                       # bias via ones column
                    for i in range(5):
                        for dj in range(5):
                            Wt[r, (d + i) * XROW + ow + dj] = w[co, 0, i, dj]
    return jnp.asarray(Wt, dtype=jnp.bfloat16)


def _conv2_toeplitz(w, b):
    """w: (16,6,5,5), b: (16,) -> row-Toeplitz (128, 360) bf16 + bias (128, 1) f32.

    Row r = s*64 + pw*16 + co (output column ow = 2*pw + s, channel co).
    Col q = i*72 + w1*6 + ci  (matches pool1 scratch row layout h*72 + w*6 + c).
    """
    w = np.asarray(w, np.float32)
    b = np.asarray(b, np.float32)
    Wt = np.zeros((128, 5 * 72), np.float32)
    bt = np.zeros((128, 1), np.float32)
    for s in range(2):
        for pw in range(4):
            for co in range(16):
                r = s * 64 + pw * 16 + co
                ow = 2 * pw + s
                bt[r, 0] = b[co]
                for i in range(5):
                    for dj in range(5):
                        for ci in range(6):
                            Wt[r, i * 72 + (ow + dj) * 6 + ci] = w[co, ci, i, dj]
    return jnp.asarray(Wt, dtype=jnp.bfloat16), jnp.asarray(bt)


def prepare_kernel_params(params):
    """One-time re-layout of the PyTorch-convention parameters (bf16 weights)."""
    w1t = _conv1_toeplitz_fused(params["conv1_w"], params["conv1_b"])
    w2t, b2t = _conv2_toeplitz(params["conv2_w"], params["conv2_b"])

    # fc1 rows in PyTorch flatten order (c*16 + h*4 + w) -> permute once to the
    # kernel's pool2 row order ((h*4 + w)*16 + c); removes any runtime transpose.
    fw1 = np.asarray(params["fc1_w"], np.float32).reshape(16, 16, 120)  # (c, p, o)
    fw1 = np.transpose(fw1, (2, 1, 0)).reshape(120, 256)                # (o, p*16+c)

    return {
        "w1t": w1t, "w2t": w2t, "b2t": b2t,
        "fw1": jnp.asarray(fw1, dtype=jnp.bfloat16),
        "fb1": jnp.asarray(np.asarray(params["fc1_b"], np.float32).reshape(120, 1)),
        "fw2": jnp.asarray(np.asarray(params["fc2_w"], np.float32).T,
                           dtype=jnp.bfloat16),                          # (84,120)
        "fb2": jnp.asarray(np.asarray(params["fc2_b"], np.float32).reshape(84, 1)),
        "fw3": jnp.asarray(np.asarray(params["fc3_w"], np.float32).T,
                           dtype=jnp.bfloat16),                          # (10,84)
        "fb3": jnp.asarray(np.asarray(params["fc3_b"], np.float32).reshape(10, 1)),
    }


# --------------------------------- forward --------------------------------- #

def _choose_tb(n_batch):
    """Batch tile (the lane width of every matmul in the kernel).

    v5e: N=128 already saturates the 4x128^2 MXU -> stay at 128.
    v6e/v7x: 256-wide MXU -> use TB=256 once there are >=2 full 256-image
    tiles of work, keeping >=2 grid steps so both v7x TensorCores get a share
    of the 'parallel' axis.  Small batches stay at 128.
    """
    try:
        kind = jax.devices()[0].device_kind.lower()
    except Exception:  # pragma: no cover - defensive only
        kind = ""
    if "v5" in kind:
        return 128
    return 256 if n_batch >= 512 else 128


def convnet_forward(x_nchw, kparams):
    """x_nchw: (N, 1, 28, 28) f32 -> logits (N, 10) f32."""
    n = x_nchw.shape[0]
    tb = _choose_tb(n)
    np_batch = ((n + tb - 1) // tb) * tb
    # Pad batch to the lane tile and W 28 -> 32; set padded column 28 to 1.0 so
    # the conv1 bias comes out of the Toeplitz matmul for free (columns 29..31
    # stay 0 and have zero Toeplitz weights).  All of this (pad + set + reshape
    # + transpose + bf16 cast) fuses inside the same jit.
    xp = jnp.pad(x_nchw, ((0, np_batch - n), (0, 0), (0, 0), (0, XROW - 28)))
    xp = xp.at[:, :, :, 28].set(1.0)
    x2d = xp.reshape(np_batch, XLEN).T.astype(jnp.bfloat16)     # (896, NP) bf16
    y = _lenet_pallas(x2d, kparams, np_batch, tb)               # (10, NP) f32
    return y[:, :n].T                                           # (N, 10)


# ------------------------------- parameters -------------------------------- #

def init_params(key):
    ks = jax.random.split(key, 10)

    def u(k, shape, fan_in):
        bound = 1.0 / jnp.sqrt(jnp.float32(fan_in))
        return jax.random.uniform(k, shape, jnp.float32, -bound, bound)

    return {
        "conv1_w": u(ks[0], (6, 1, 5, 5), 1 * 5 * 5),
        "conv1_b": u(ks[1], (6,), 1 * 5 * 5),
        "conv2_w": u(ks[2], (16, 6, 5, 5), 6 * 5 * 5),
        "conv2_b": u(ks[3], (16,), 6 * 5 * 5),
        "fc1_w": u(ks[4], (256, 120), 256),   # rows in PyTorch (c, h, w) flatten order
        "fc1_b": u(ks[5], (120,), 256),
        "fc2_w": u(ks[6], (120, 84), 120),
        "fc2_b": u(ks[7], (84,), 120),
        "fc3_w": u(ks[8], (84, 10), 84),
        "fc3_b": u(ks[9], (10,), 84),
    }


# ----------------------- pure-JAX reference (checking) ---------------------- #

def reference_forward(x, params):
    hi = jax.lax.Precision.HIGHEST
    h = jax.lax.conv_general_dilated(
        x, params["conv1_w"], (1, 1), "VALID",
        dimension_numbers=("NCHW", "OIHW", "NCHW"), precision=hi)
    h = jnp.maximum(h + params["conv1_b"][None, :, None, None], 0.0)
    h = jax.lax.reduce_window(h, -jnp.inf, jax.lax.max, (1, 1, 2, 2), (1, 1, 2, 2), "VALID")
    h = jax.lax.conv_general_dilated(
        h, params["conv2_w"], (1, 1), "VALID",
        dimension_numbers=("NCHW", "OIHW", "NCHW"), precision=hi)
    h = jnp.maximum(h + params["conv2_b"][None, :, None, None], 0.0)
    h = jax.lax.reduce_window(h, -jnp.inf, jax.lax.max, (1, 1, 2, 2), (1, 1, 2, 2), "VALID")
    h = h.reshape(x.shape[0], 16 * 4 * 4)                 # NCHW flatten order
    h = jnp.maximum(h @ params["fc1_w"] + params["fc1_b"], 0.0)
    h = jnp.maximum(h @ params["fc2_w"] + params["fc2_b"], 0.0)
    return h @ params["fc3_w"] + params["fc3_b"]


# ----------------------------------- main ----------------------------------- #

if __name__ == "__main__":
    key = jax.random.PRNGKey(0)
    k_in, k_params = jax.random.split(key)

    # Input implied by the module: 16*4*4 flatten -> 28x28 single-channel images.
    x = jax.random.normal(k_in, (2, 1, 28, 28), jnp.float32)
    params = init_params(k_params)
    kparams = prepare_kernel_params(params)

    fwd = jax.jit(convnet_forward)
    out = jax.block_until_ready(fwd(x, kparams))
    assert out.shape == (2, 10) and out.dtype == jnp.float32

    ref = jax.block_until_ready(reference_forward(x, params))
    max_err = float(jnp.max(jnp.abs(out - ref)))
    # bf16 matmul operands with f32 accumulation -> slightly looser tolerance.
    assert jnp.allclose(out, ref, atol=5e-2, rtol=5e-2), f"max abs err {max_err}"

    print("KERNEL_OK")
</pallas_src>

<mosaic_0001>
module attributes {stable_mosaic.version = 11 : i64} {
  func.func @_lenet_kernel(%arg0: i32, %arg1: memref<896x128xbf16, #tpu.memory_space<vmem>>, %arg2: memref<288x192xbf16, #tpu.memory_space<vmem>>, %arg3: memref<128x360xbf16, #tpu.memory_space<vmem>>, %arg4: memref<128x1xf32, #tpu.memory_space<vmem>>, %arg5: memref<120x256xbf16, #tpu.memory_space<vmem>>, %arg6: memref<120x1xf32, #tpu.memory_space<vmem>>, %arg7: memref<84x120xbf16, #tpu.memory_space<vmem>>, %arg8: memref<84x1xf32, #tpu.memory_space<vmem>>, %arg9: memref<10x84xbf16, #tpu.memory_space<vmem>>, %arg10: memref<10x1xf32, #tpu.memory_space<vmem>>, %arg11: memref<10x128xf32, #tpu.memory_space<vmem>>, %arg12: memref<864x128xf32, #tpu.memory_space<vmem>>, %arg13: memref<256x128xf32, #tpu.memory_space<vmem>>) attributes {dimension_semantics = [#tpu.dimension_semantics<parallel>], iteration_bounds = array<i64: 1>, scalar_prefetch = 0 : i64, scratch_operands = 2 : i64, tpu.core_type = #tpu.core_type<tc>, window_params = [{transform_indices = @transform_0, window_bounds = array<i64: 896, 128>}, {pipeline_mode = #tpu.pipeline_mode<synchronous>, transform_indices = @transform_1, window_bounds = array<i64: 288, 192>}, {pipeline_mode = #tpu.pipeline_mode<synchronous>, transform_indices = @transform_2, window_bounds = array<i64: 128, 360>}, {pipeline_mode = #tpu.pipeline_mode<synchronous>, transform_indices = @transform_3, window_bounds = array<i64: 128, 1>}, {pipeline_mode = #tpu.pipeline_mode<synchronous>, transform_indices = @transform_4, window_bounds = array<i64: 120, 256>}, {pipeline_mode = #tpu.pipeline_mode<synchronous>, transform_indices = @transform_5, window_bounds = array<i64: 120, 1>}, {pipeline_mode = #tpu.pipeline_mode<synchronous>, transform_indices = @transform_6, window_bounds = array<i64: 84, 120>}, {pipeline_mode = #tpu.pipeline_mode<synchronous>, transform_indices = @transform_7, window_bounds = array<i64: 84, 1>}, {pipeline_mode = #tpu.pipeline_mode<synchronous>, transform_indices = @transform_8, window_bounds = array<i64: 10, 84>}, {pipeline_mode = #tpu.pipeline_mode<synchronous>, transform_indices = @transform_9, window_bounds = array<i64: 10, 1>}, {transform_indices = @transform_10, window_bounds = array<i64: 10, 128>}]} {
    %c0 = arith.constant 0 : index
    %c0_0 = arith.constant 0 : index
    %0 = vector.load %arg2[%c0, %c0_0] : memref<288x192xbf16, #tpu.memory_space<vmem>>, vector<288x192xbf16>
    %c0_1 = arith.constant 0 : index
    %c0_2 = arith.constant 0 : index
    %1 = vector.load %arg1[%c0_1, %c0_2] : memref<896x128xbf16, #tpu.memory_space<vmem>>, vector<192x128xbf16>
    %cst = arith.constant dense<0.000000e+00> : vector<288x128xf32>
    %2 = tpu.matmul %0, %1, %cst {dimension_numbers = #tpu.dot_dimension_numbers<[1], [0], [0], [1], [0, 0, 1, 1], [], []>} : vector<288x192xbf16>, vector<192x128xbf16>, vector<288x128xf32> -> vector<288x128xf32>
    %3 = vector.extract_strided_slice %2 {offsets = [0, 0], sizes = [72, 128], strides = [1, 1]} : vector<288x128xf32> to vector<72x128xf32>
    %4 = vector.extract_strided_slice %2 {offsets = [72, 0], sizes = [72, 128], strides = [1, 1]} : vector<288x128xf32> to vector<72x128xf32>
    %5 = arith.maximumf %3, %4 : vector<72x128xf32>
    %6 = vector.extract_strided_slice %2 {offsets = [144, 0], sizes = [72, 128], strides = [1, 1]} : vector<288x128xf32> to vector<72x128xf32>
    %7 = vector.extract_strided_slice %2 {offsets = [216, 0], sizes = [72, 128], strides = [1, 1]} : vector<288x128xf32> to vector<72x128xf32>
    %8 = arith.maximumf %6, %7 : vector<72x128xf32>
    %9 = arith.maximumf %5, %8 : vector<72x128xf32>
    %cst_3 = arith.constant 0.000000e+00 : f32
    %10 = vector.broadcast %cst_3 : f32 to vector<72x128xf32>
    %11 = arith.maximumf %9, %10 : vector<72x128xf32>
    %c0_4 = arith.constant 0 : index
    %c0_5 = arith.constant 0 : index
    %12 = vector.load %arg12[%c0_4, %c0_5] : memref<864x128xf32, #tpu.memory_space<vmem>>, vector<72x128xf32>
    tpu.vector_store %arg12[%c0_4, %c0_5], %11 {strides = array<i32>} : memref<864x128xf32, #tpu.memory_space<vmem>>, vector<72x128xf32>,
    %c64 = arith.constant 64 : index
    %c0_6 = arith.constant 0 : index
    %13 = vector.load %arg1[%c64, %c0_6] : memref<896x128xbf16, #tpu.memory_space<vmem>>, vector<192x128xbf16>
    %cst_7 = arith.constant dense<0.000000e+00> : vector<288x128xf32>
    %14 = tpu.matmul %0, %13, %cst_7 {dimension_numbers = #tpu.dot_dimension_numbers<[1], [0], [0], [1], [0, 0, 1, 1], [], []>} : vector<288x192xbf16>, vector<192x128xbf16>, vector<288x128xf32> -> vector<288x128xf32>
    %15 = vector.extract_strided_slice %14 {offsets = [0, 0], sizes = [72, 128], strides = [1, 1]} : vector<288x128xf32> to vector<72x128xf32>
    %16 = vector.extract_strided_slice %14 {offsets = [72, 0], sizes = [72, 128], strides = [1, 1]} : vector<288x128xf32> to vector<72x128xf32>
    %17 = arith.maximumf %15, %16 : vector<72x128xf32>
    %18 = vector.extract_strided_slice %14 {offsets = [144, 0], sizes = [72, 128], strides = [1, 1]} : vector<288x128xf32> to vector<72x128xf32>
    %19 = vector.extract_strided_slice %14 {offsets = [216, 0], sizes = [72, 128], strides = [1, 1]} : vector<288x128xf32> to vector<72x128xf32>
    %20 = arith.maximumf %18, %19 : vector<72x128xf32>
    %21 = arith.maximumf %17, %20 : vector<72x128xf32>
    %cst_8 = arith.constant 0.000000e+00 : f32
    %22 = vector.broadcast %cst_8 : f32 to vector<72x128xf32>
    %23 = arith.maximumf %21, %22 : vector<72x128xf32>
    %c72 = arith.constant 72 : index
    %c0_9 = arith.constant 0 : index
    %24 = vector.load %arg12[%c72, %c0_9] : memref<864x128xf32, #tpu.memory_space<vmem>>, vector<72x128xf32>
    tpu.vector_store %arg12[%c72, %c0_9], %23 {strides = array<i32>} : memref<864x128xf32, #tpu.memory_space<vmem>>, vector<72x128xf32>,
    %c128 = arith.constant 128 : index
    %c0_10 = arith.constant 0 : index
    %25 = vector.load %arg1[%c128, %c0_10] : memref<896x128xbf16, #tpu.memory_space<vmem>>, vector<192x128xbf16>
    %cst_11 = arith.constant dense<0.000000e+00> : vector<288x128xf32>
    %26 = tpu.matmul %0, %25, %cst_11 {dimension_numbers = #tpu.dot_dimension_numbers<[1], [0], [0], [1], [0, 0, 1, 1], [], []>} : vector<288x192xbf16>, vector<192x128xbf16>, vector<288x128xf32> -> vector<288x128xf32>
    %27 = vector.extract_strided_slice %26 {offsets = [0, 0], sizes = [72, 128], strides = [1, 1]} : vector<288x128xf32> to vector<72x128xf32>
    %28 = vector.extract_strided_slice %26 {offsets = [72, 0], sizes = [72, 128], strides = [1, 1]} : vector<288x128xf32> to vector<72x128xf32>
    %29 = arith.maximumf %27, %28 : vector<72x128xf32>
    %30 = vector.extract_strided_slice %26 {offsets = [144, 0], sizes = [72, 128], strides = [1, 1]} : vector<288x128xf32> to vector<72x128xf32>
    %31 = vector.extract_strided_slice %26 {offsets = [216, 0], sizes = [72, 128], strides = [1, 1]} : vector<288x128xf32> to vector<72x128xf32>
    %32 = arith.maximumf %30, %31 : vector<72x128xf32>
    %33 = arith.maximumf %29, %32 : vector<72x128xf32>
    %cst_12 = arith.constant 0.000000e+00 : f32
    %34 = vector.broadcast %cst_12 : f32 to vector<72x128xf32>
    %35 = arith.maximumf %33, %34 : vector<72x128xf32>
    %c144 = arith.constant 144 : index
    %c0_13 = arith.constant 0 : index
    %36 = vector.load %arg12[%c144, %c0_13] : memref<864x128xf32, #tpu.memory_space<vmem>>, vector<72x128xf32>
    tpu.vector_store %arg12[%c144, %c0_13], %35 {strides = array<i32>} : memref<864x128xf32, #tpu.memory_space<vmem>>, vector<72x128xf32>,
    %c192 = arith.constant 192 : index
    %c0_14 = arith.constant 0 : index
    %37 = vector.load %arg1[%c192, %c0_14] : memref<896x128xbf16, #tpu.memory_space<vmem>>, vector<192x128xbf16>
    %cst_15 = arith.constant dense<0.000000e+00> : vector<288x128xf32>
    %38 = tpu.matmul %0, %37, %cst_15 {dimension_numbers = #tpu.dot_dimension_numbers<[1], [0], [0], [1], [0, 0, 1, 1], [], []>} : vector<288x192xbf16>, vector<192x128xbf16>, vector<288x128xf32> -> vector<288x128xf32>
    %39 = vector.extract_strided_slice %38 {offsets = [0, 0], sizes = [72, 128], strides = [1, 1]} : vector<288x128xf32> to vector<72x128xf32>
    %40 = vector.extract_strided_slice %38 {offsets = [72, 0], sizes = [72, 128], strides = [1, 1]} : vector<288x128xf32> to vector<72x128xf32>
    %41 = arith.maximumf %39, %40 : vector<72x128xf32>
    %42 = vector.extract_strided_slice %38 {offsets = [144, 0], sizes = [72, 128], strides = [1, 1]} : vector<288x128xf32> to vector<72x128xf32>
    %43 = vector.extract_strided_slice %38 {offsets = [216, 0], sizes = [72, 128], strides = [1, 1]} : vector<288x128xf32> to vector<72x128xf32>
    %44 = arith.maximumf %42, %43 : vector<72x128xf32>
    %45 = arith.maximumf %41, %44 : vector<72x128xf32>
    %cst_16 = arith.constant 0.000000e+00 : f32
    %46 = vector.broadcast %cst_16 : f32 to vector<72x128xf32>
    %47 = arith.maximumf %45, %46 : vector<72x128xf32>
    %c216 = arith.constant 216 : index
    %c0_17 = arith.constant 0 : index
    %48 = vector.load %arg12[%c216, %c0_17] : memref<864x128xf32, #tpu.memory_space<vmem>>, vector<72x128xf32>
    tpu.vector_store %arg12[%c216, %c0_17], %47 {strides = array<i32>} : memref<864x128xf32, #tpu.memory_space<vmem>>, vector<72x128xf32>,
    %c256 = arith.constant 256 : index
    %c0_18 = arith.constant 0 : index
    %49 = vector.load %arg1[%c256, %c0_18] : memref<896x128xbf16, #tpu.memory_space<vmem>>, vector<192x128xbf16>
    %cst_19 = arith.constant dense<0.000000e+00> : vector<288x128xf32>
    %50 = tpu.matmul %0, %49, %cst_19 {dimension_numbers = #tpu.dot_dimension_numbers<[1], [0], [0], [1], [0, 0, 1, 1], [], []>} : vector<288x192xbf16>, vector<192x128xbf16>, vector<288x128xf32> -> vector<288x128xf32>
    %51 = vector.extract_strided_slice %50 {offsets = [0, 0], sizes = [72, 128], strides = [1, 1]} : vector<288x128xf32> to vector<72x128xf32>
    %52 = vector.extract_strided_slice %50 {offsets = [72, 0], sizes = [72, 128], strides = [1, 1]} : vector<288x128xf32> to vector<72x128xf32>
    %53 = arith.maximumf %51, %52 : vector<72x128xf32>
    %54 = vector.extract_strided_slice %50 {offsets = [144, 0], sizes = [72, 128], strides = [1, 1]} : vector<288x128xf32> to vector<72x128xf32>
    %55 = vector.extract_strided_slice %50 {offsets = [216, 0], sizes = [72, 128], strides = [1, 1]} : vector<288x128xf32> to vector<72x128xf32>
    %56 = arith.maximumf %54, %55 : vector<72x128xf32>
    %57 = arith.maximumf %53, %56 : vector<72x128xf32>
    %cst_20 = arith.constant 0.000000e+00 : f32
    %58 = vector.broadcast %cst_20 : f32 to vector<72x128xf32>
    %59 = arith.maximumf %57, %58 : vector<72x128xf32>
    %c288 = arith.constant 288 : index
    %c0_21 = arith.constant 0 : index
    %60 = vector.load %arg12[%c288, %c0_21] : memref<864x128xf32, #tpu.memory_space<vmem>>, vector<72x128xf32>
    tpu.vector_store %arg12[%c288, %c0_21], %59 {strides = array<i32>} : memref<864x128xf32, #tpu.memory_space<vmem>>, vector<72x128xf32>,
    %c320 = arith.constant 320 : index
    %c0_22 = arith.constant 0 : index
    %61 = vector.load %arg1[%c320, %c0_22] : memref<896x128xbf16, #tpu.memory_space<vmem>>, vector<192x128xbf16>
    %cst_23 = arith.constant dense<0.000000e+00> : vector<288x128xf32>
    %62 = tpu.matmul %0, %61, %cst_23 {dimension_numbers = #tpu.dot_dimension_numbers<[1], [0], [0], [1], [0, 0, 1, 1], [], []>} : vector<288x192xbf16>, vector<192x128xbf16>, vector<288x128xf32> -> vector<288x128xf32>
    %63 = vector.extract_strided_slice %62 {offsets = [0, 0], sizes = [72, 128], strides = [1, 1]} : vector<288x128xf32> to vector<72x128xf32>
    %64 = vector.extract_strided_slice %62 {offsets = [72, 0], sizes = [72, 128], strides = [1, 1]} : vector<288x128xf32> to vector<72x128xf32>
    %65 = arith.maximumf %63, %64 : vector<72x128xf32>
    %66 = vector.extract_strided_slice %62 {offsets = [144, 0], sizes = [72, 128], strides = [1, 1]} : vector<288x128xf32> to vector<72x128xf32>
    %67 = vector.extract_strided_slice %62 {offsets = [216, 0], sizes = [72, 128], strides = [1, 1]} : vector<288x128xf32> to vector<72x128xf32>
    %68 = arith.maximumf %66, %67 : vector<72x128xf32>
    %69 = arith.maximumf %65, %68 : vector<72x128xf32>
    %cst_24 = arith.constant 0.000000e+00 : f32
    %70 = vector.broadcast %cst_24 : f32 to vector<72x128xf32>
    %71 = arith.maximumf %69, %70 : vector<72x128xf32>
    %c360 = arith.constant 360 : index
    %c0_25 = arith.constant 0 : index
    %72 = vector.load %arg12[%c360, %c0_25] : memref<864x128xf32, #tpu.memory_space<vmem>>, vector<72x128xf32>
    tpu.vector_store %arg12[%c360, %c0_25], %71 {strides = array<i32>} : memref<864x128xf32, #tpu.memory_space<vmem>>, vector<72x128xf32>,
    %c384 = arith.constant 384 : index
    %c0_26 = arith.constant 0 : index
    %73 = vector.load %arg1[%c384, %c0_26] : memref<896x128xbf16, #tpu.memory_space<vmem>>, vector<192x128xbf16>
    %cst_27 = arith.constant dense<0.000000e+00> : vector<288x128xf32>
    %74 = tpu.matmul %0, %73, %cst_27 {dimension_numbers = #tpu.dot_dimension_numbers<[1], [0], [0], [1], [0, 0, 1, 1], [], []>} : vector<288x192xbf16>, vector<192x128xbf16>, vector<288x128xf32> -> vector<288x128xf32>
    %75 = vector.extract_strided_slice %74 {offsets = [0, 0], sizes = [72, 128], strides = [1, 1]} : vector<288x128xf32> to vector<72x128xf32>
    %76 = vector.extract_strided_slice %74 {offsets = [72, 0], sizes = [72, 128], strides = [1, 1]} : vector<288x128xf32> to vector<72x128xf32>
    %77 = arith.maximumf %75, %76 : vector<72x128xf32>
    %78 = vector.extract_strided_slice %74 {offsets = [144, 0], sizes = [72, 128], strides = [1, 1]} : vector<288x128xf32> to vector<72x128xf32>
    %79 = vector.extract_strided_slice %74 {offsets = [216, 0], sizes = [72, 128], strides = [1, 1]} : vector<288x128xf32> to vector<72x128xf32>
    %80 = arith.maximumf %78, %79 : vector<72x128xf32>
    %81 = arith.maximumf %77, %80 : vector<72x128xf32>
    %cst_28 = arith.constant 0.000000e+00 : f32
    %82 = vector.broadcast %cst_28 : f32 to vector<72x128xf32>
    %83 = arith.maximumf %81, %82 : vector<72x128xf32>
    %c432 = arith.constant 432 : index
    %c0_29 = arith.constant 0 : index
    %84 = vector.load %arg12[%c432, %c0_29] : memref<864x128xf32, #tpu.memory_space<vmem>>, vector<72x128xf32>
    tpu.vector_store %arg12[%c432, %c0_29], %83 {strides = array<i32>} : memref<864x128xf32, #tpu.memory_space<vmem>>, vector<72x128xf32>,
    %c448 = arith.constant 448 : index
    %c0_30 = arith.constant 0 : index
    %85 = vector.load %arg1[%c448, %c0_30] : memref<896x128xbf16, #tpu.memory_space<vmem>>, vector<192x128xbf16>
    %cst_31 = arith.constant dense<0.000000e+00> : vector<288x128xf32>
    %86 = tpu.matmul %0, %85, %cst_31 {dimension_numbers = #tpu.dot_dimension_numbers<[1], [0], [0], [1], [0, 0, 1, 1], [], []>} : vector<288x192xbf16>, vector<192x128xbf16>, vector<288x128xf32> -> vector<288x128xf32>
    %87 = vector.extract_strided_slice %86 {offsets = [0, 0], sizes = [72, 128], strides = [1, 1]} : vector<288x128xf32> to vector<72x128xf32>
    %88 = vector.extract_strided_slice %86 {offsets = [72, 0], sizes = [72, 128], strides = [1, 1]} : vector<288x128xf32> to vector<72x128xf32>
    %89 = arith.maximumf %87, %88 : vector<72x128xf32>
    %90 = vector.extract_strided_slice %86 {offsets = [144, 0], sizes = [72, 128], strides = [1, 1]} : vector<288x128xf32> to vector<72x128xf32>
    %91 = vector.extract_strided_slice %86 {offsets = [216, 0], sizes = [72, 128], strides = [1, 1]} : vector<288x128xf32> to vector<72x128xf32>
    %92 = arith.maximumf %90, %91 : vector<72x128xf32>
    %93 = arith.maximumf %89, %92 : vector<72x128xf32>
    %cst_32 = arith.constant 0.000000e+00 : f32
    %94 = vector.broadcast %cst_32 : f32 to vector<72x128xf32>
    %95 = arith.maximumf %93, %94 : vector<72x128xf32>
    %c504 = arith.constant 504 : index
    %c0_33 = arith.constant 0 : index
    %96 = vector.load %arg12[%c504, %c0_33] : memref<864x128xf32, #tpu.memory_space<vmem>>, vector<72x128xf32>
    tpu.vector_store %arg12[%c504, %c0_33], %95 {strides = array<i32>} : memref<864x128xf32, #tpu.memory_space<vmem>>, vector<72x128xf32>,
    %c512 = arith.constant 512 : index
    %c0_34 = arith.constant 0 : index
    %97 = vector.load %arg1[%c512, %c0_34] : memref<896x128xbf16, #tpu.memory_space<vmem>>, vector<192x128xbf16>
    %cst_35 = arith.constant dense<0.000000e+00> : vector<288x128xf32>
    %98 = tpu.matmul %0, %97, %cst_35 {dimension_numbers = #tpu.dot_dimension_numbers<[1], [0], [0], [1], [0, 0, 1, 1], [], []>} : vector<288x192xbf16>, vector<192x128xbf16>, vector<288x128xf32> -> vector<288x128xf32>
    %99 = vector.extract_strided_slice %98 {offsets = [0, 0], sizes = [72, 128], strides = [1, 1]} : vector<288x128xf32> to vector<72x128xf32>
    %100 = vector.extract_strided_slice %98 {offsets = [72, 0], sizes = [72, 128], strides = [1, 1]} : vector<288x128xf32> to vector<72x128xf32>
    %101 = arith.maximumf %99, %100 : vector<72x128xf32>
    %102 = vector.extract_strided_slice %98 {offsets = [144, 0], sizes = [72, 128], strides = [1, 1]} : vector<288x128xf32> to vector<72x128xf32>
    %103 = vector.extract_strided_slice %98 {offsets = [216, 0], sizes = [72, 128], strides = [1, 1]} : vector<288x128xf32> to vector<72x128xf32>
    %104 = arith.maximumf %102, %103 : vector<72x128xf32>
    %105 = arith.maximumf %101, %104 : vector<72x128xf32>
    %cst_36 = arith.constant 0.000000e+00 : f32
    %106 = vector.broadcast %cst_36 : f32 to vector<72x128xf32>
    %107 = arith.maximumf %105, %106 : vector<72x128xf32>
    %c576 = arith.constant 576 : index
    %c0_37 = arith.constant 0 : index
    %108 = vector.load %arg12[%c576, %c0_37] : memref<864x128xf32, #tpu.memory_space<vmem>>, vector<72x128xf32>
    tpu.vector_store %arg12[%c576, %c0_37], %107 {strides = array<i32>} : memref<864x128xf32, #tpu.memory_space<vmem>>, vector<72x128xf32>,
    %c576_38 = arith.constant 576 : index
    %c0_39 = arith.constant 0 : index
    %109 = vector.load %arg1[%c576_38, %c0_39] : memref<896x128xbf16, #tpu.memory_space<vmem>>, vector<192x128xbf16>
    %cst_40 = arith.constant dense<0.000000e+00> : vector<288x128xf32>
    %110 = tpu.matmul %0, %109, %cst_40 {dimension_numbers = #tpu.dot_dimension_numbers<[1], [0], [0], [1], [0, 0, 1, 1], [], []>} : vector<288x192xbf16>, vector<192x128xbf16>, vector<288x128xf32> -> vector<288x128xf32>
    %111 = vector.extract_strided_slice %110 {offsets = [0, 0], sizes = [72, 128], strides = [1, 1]} : vector<288x128xf32> to vector<72x128xf32>
    %112 = vector.extract_strided_slice %110 {offsets = [72, 0], sizes = [72, 128], strides = [1, 1]} : vector<288x128xf32> to vector<72x128xf32>
    %113 = arith.maximumf %111, %112 : vector<72x128xf32>
    %114 = vector.extract_strided_slice %110 {offsets = [144, 0], sizes = [72, 128], strides = [1, 1]} : vector<288x128xf32> to vector<72x128xf32>
    %115 = vector.extract_strided_slice %110 {offsets = [216, 0], sizes = [72, 128], strides = [1, 1]} : vector<288x128xf32> to vector<72x128xf32>
    %116 = arith.maximumf %114, %115 : vector<72x128xf32>
    %117 = arith.maximumf %113, %116 : vector<72x128xf32>
    %cst_41 = arith.constant 0.000000e+00 : f32
    %118 = vector.broadcast %cst_41 : f32 to vector<72x128xf32>
    %119 = arith.maximumf %117, %118 : vector<72x128xf32>
    %c648 = arith.constant 648 : index
    %c0_42 = arith.constant 0 : index
    %120 = vector.load %arg12[%c648, %c0_42] : memref<864x128xf32, #tpu.memory_space<vmem>>, vector<72x128xf32>
    tpu.vector_store %arg12[%c648, %c0_42], %119 {strides = array<i32>} : memref<864x128xf32, #tpu.memory_space<vmem>>, vector<72x128xf32>,
    %c640 = arith.constant 640 : index
    %c0_43 = arith.constant 0 : index
    %121 = vector.load %arg1[%c640, %c0_43] : memref<896x128xbf16, #tpu.memory_space<vmem>>, vector<192x128xbf16>
    %cst_44 = arith.constant dense<0.000000e+00> : vector<288x128xf32>
    %122 = tpu.matmul %0, %121, %cst_44 {dimension_numbers = #tpu.dot_dimension_numbers<[1], [0], [0], [1], [0, 0, 1, 1], [], []>} : vector<288x192xbf16>, vector<192x128xbf16>, vector<288x128xf32> -> vector<288x128xf32>
    %123 = vector.extract_strided_slice %122 {offsets = [0, 0], sizes = [72, 128], strides = [1, 1]} : vector<288x128xf32> to vector<72x128xf32>
    %124 = vector.extract_strided_slice %122 {offsets = [72, 0], sizes = [72, 128], strides = [1, 1]} : vector<288x128xf32> to vector<72x128xf32>
    %125 = arith.maximumf %123, %124 : vector<72x128xf32>
    %126 = vector.extract_strided_slice %122 {offsets = [144, 0], sizes = [72, 128], strides = [1, 1]} : vector<288x128xf32> to vector<72x128xf32>
    %127 = vector.extract_strided_slice %122 {offsets = [216, 0], sizes = [72, 128], strides = [1, 1]} : vector<288x128xf32> to vector<72x128xf32>
    %128 = arith.maximumf %126, %127 : vector<72x128xf32>
    %129 = arith.maximumf %125, %128 : vector<72x128xf32>
    %cst_45 = arith.constant 0.000000e+00 : f32
    %130 = vector.broadcast %cst_45 : f32 to vector<72x128xf32>
    %131 = arith.maximumf %129, %130 : vector<72x128xf32>
    %c720 = arith.constant 720 : index
    %c0_46 = arith.constant 0 : index
    %132 = vector.load %arg12[%c720, %c0_46] : memref<864x128xf32, #tpu.memory_space<vmem>>, vector<72x128xf32>
    tpu.vector_store %arg12[%c720, %c0_46], %131 {strides = array<i32>} : memref<864x128xf32, #tpu.memory_space<vmem>>, vector<72x128xf32>,
    %c704 = arith.constant 704 : index
    %c0_47 = arith.constant 0 : index
    %133 = vector.load %arg1[%c704, %c0_47] : memref<896x128xbf16, #tpu.memory_space<vmem>>, vector<192x128xbf16>
    %cst_48 = arith.constant dense<0.000000e+00> : vector<288x128xf32>
    %134 = tpu.matmul %0, %133, %cst_48 {dimension_numbers = #tpu.dot_dimension_numbers<[1], [0], [0], [1], [0, 0, 1, 1], [], []>} : vector<288x192xbf16>, vector<192x128xbf16>, vector<288x128xf32> -> vector<288x128xf32>
    %135 = vector.extract_strided_slice %134 {offsets = [0, 0], sizes = [72, 128], strides = [1, 1]} : vector<288x128xf32> to vector<72x128xf32>
    %136 = vector.extract_strided_slice %134 {offsets = [72, 0], sizes = [72, 128], strides = [1, 1]} : vector<288x128xf32> to vector<72x128xf32>
    %137 = arith.maximumf %135, %136 : vector<72x128xf32>
    %138 = vector.extract_strided_slice %134 {offsets = [144, 0], sizes = [72, 128], strides = [1, 1]} : vector<288x128xf32> to vector<72x128xf32>
    %139 = vector.extract_strided_slice %134 {offsets = [216, 0], sizes = [72, 128], strides = [1, 1]} : vector<288x128xf32> to vector<72x128xf32>
    %140 = arith.maximumf %138, %139 : vector<72x128xf32>
    %141 = arith.maximumf %137, %140 : vector<72x128xf32>
    %cst_49 = arith.constant 0.000000e+00 : f32
    %142 = vector.broadcast %cst_49 : f32 to vector<72x128xf32>
    %143 = arith.maximumf %141, %142 : vector<72x128xf32>
    %c792 = arith.constant 792 : index
    %c0_50 = arith.constant 0 : index
    %144 = vector.load %arg12[%c792, %c0_50] : memref<864x128xf32, #tpu.memory_space<vmem>>, vector<72x128xf32>
    tpu.vector_store %arg12[%c792, %c0_50], %143 {strides = array<i32>} : memref<864x128xf32, #tpu.memory_space<vmem>>, vector<72x128xf32>,
    %c0_51 = arith.constant 0 : index
    %c0_52 = arith.constant 0 : index
    %145 = vector.load %arg3[%c0_51, %c0_52] : memref<128x360xbf16, #tpu.memory_space<vmem>>, vector<128x360xbf16>
    %c0_53 = arith.constant 0 : index
    %c0_54 = arith.constant 0 : index
    %146 = vector.load %arg4[%c0_53, %c0_54] : memref<128x1xf32, #tpu.memory_space<vmem>>, vector<128x1xf32>
    %147 = vector.shape_cast %146 : vector<128x1xf32> to vector<128x1xf32>
    %148 = vector.broadcast %147 : vector<128x1xf32> to vector<128x128xf32>
    %c0_55 = arith.constant 0 : index
    %c0_56 = arith.constant 0 : index
    %149 = vector.load %arg12[%c0_55, %c0_56] : memref<864x128xf32, #tpu.memory_space<vmem>>, vector<360x128xf32>
    %150 = arith.truncf %149 : vector<360x128xf32> to vector<360x128xbf16>
    %cst_57 = arith.constant dense<0.000000e+00> : vector<128x128xf32>
    %151 = tpu.matmul %145, %150, %cst_57 {dimension_numbers = #tpu.dot_dimension_numbers<[1], [0], [0], [1], [0, 0, 1, 1], [], []>} : vector<128x360xbf16>, vector<360x128xbf16>, vector<128x128xf32> -> vector<128x128xf32>
    %152 = arith.addf %151, %148 : vector<128x128xf32>
    %153 = vector.extract_strided_slice %152 {offsets = [0, 0], sizes = [64, 128], strides = [1, 1]} : vector<128x128xf32> to vector<64x128xf32>
    %154 = vector.extract_strided_slice %152 {offsets = [64, 0], sizes = [64, 128], strides = [1, 1]} : vector<128x128xf32> to vector<64x128xf32>
    %155 = arith.maximumf %153, %154 : vector<64x128xf32>
    %c72_58 = arith.constant 72 : index
    %c0_59 = arith.constant 0 : index
    %156 = vector.load %arg12[%c72_58, %c0_59] : memref<864x128xf32, #tpu.memory_space<vmem>>, vector<360x128xf32>
    %157 = arith.truncf %156 : vector<360x128xf32> to vector<360x128xbf16>
    %cst_60 = arith.constant dense<0.000000e+00> : vector<128x128xf32>
    %158 = tpu.matmul %145, %157, %cst_60 {dimension_numbers = #tpu.dot_dimension_numbers<[1], [0], [0], [1], [0, 0, 1, 1], [], []>} : vector<128x360xbf16>, vector<360x128xbf16>, vector<128x128xf32> -> vector<128x128xf32>
    %159 = arith.addf %158, %148 : vector<128x128xf32>
    %160 = vector.extract_strided_slice %159 {offsets = [0, 0], sizes = [64, 128], strides = [1, 1]} : vector<128x128xf32> to vector<64x128xf32>
    %161 = vector.extract_strided_slice %159 {offsets = [64, 0], sizes = [64, 128], strides = [1, 1]} : vector<128x128xf32> to vector<64x128xf32>
    %162 = arith.maximumf %160, %161 : vector<64x128xf32>
    %163 = arith.maximumf %155, %162 : vector<64x128xf32>
    %cst_61 = arith.constant 0.000000e+00 : f32
    %164 = vector.broadcast %cst_61 : f32 to vector<64x128xf32>
    %165 = arith.maximumf %163, %164 : vector<64x128xf32>
    %c0_62 = arith.constant 0 : index
    %c0_63 = arith.constant 0 : index
    %166 = vector.load %arg13[%c0_62, %c0_63] : memref<256x128xf32, #tpu.memory_space<vmem>>, vector<64x128xf32>
    tpu.vector_store %arg13[%c0_62, %c0_63], %165 {strides = array<i32>} : memref<256x128xf32, #tpu.memory_space<vmem>>, vector<64x128xf32>,
    %c144_64 = arith.constant 144 : index
    %c0_65 = arith.constant 0 : index
    %167 = vector.load %arg12[%c144_64, %c0_65] : memref<864x128xf32, #tpu.memory_space<vmem>>, vector<360x128xf32>
    %168 = arith.truncf %167 : vector<360x128xf32> to vector<360x128xbf16>
    %cst_66 = arith.constant dense<0.000000e+00> : vector<128x128xf32>
    %169 = tpu.matmul %145, %168, %cst_66 {dimension_numbers = #tpu.dot_dimension_numbers<[1], [0], [0], [1], [0, 0, 1, 1], [], []>} : vector<128x360xbf16>, vector<360x128xbf16>, vector<128x128xf32> -> vector<128x128xf32>
    %170 = arith.addf %169, %148 : vector<128x128xf32>
    %171 = vector.extract_strided_slice %170 {offsets = [0, 0], sizes = [64, 128], strides = [1, 1]} : vector<128x128xf32> to vector<64x128xf32>
    %172 = vector.extract_strided_slice %170 {offsets = [64, 0], sizes = [64, 128], strides = [1, 1]} : vector<128x128xf32> to vector<64x128xf32>
    %173 = arith.maximumf %171, %172 : vector<64x128xf32>
    %c216_67 = arith.constant 216 : index
    %c0_68 = arith.constant 0 : index
    %174 = vector.load %arg12[%c216_67, %c0_68] : memref<864x128xf32, #tpu.memory_space<vmem>>, vector<360x128xf32>
    %175 = arith.truncf %174 : vector<360x128xf32> to vector<360x128xbf16>
    %cst_69 = arith.constant dense<0.000000e+00> : vector<128x128xf32>
    %176 = tpu.matmul %145, %175, %cst_69 {dimension_numbers = #tpu.dot_dimension_numbers<[1], [0], [0], [1], [0, 0, 1, 1], [], []>} : vector<128x360xbf16>, vector<360x128xbf16>, vector<128x128xf32> -> vector<128x128xf32>
    %177 = arith.addf %176, %148 : vector<128x128xf32>
    %178 = vector.extract_strided_slice %177 {offsets = [0, 0], sizes = [64, 128], strides = [1, 1]} : vector<128x128xf32> to vector<64x128xf32>
    %179 = vector.extract_strided_slice %177 {offsets = [64, 0], sizes = [64, 128], strides = [1, 1]} : vector<128x128xf32> to vector<64x128xf32>
    %180 = arith.maximumf %178, %179 : vector<64x128xf32>
    %181 = arith.maximumf %173, %180 : vector<64x128xf32>
    %cst_70 = arith.constant 0.000000e+00 : f32
    %182 = vector.broadcast %cst_70 : f32 to vector<64x128xf32>
    %183 = arith.maximumf %181, %182 : vector<64x128xf32>
    %c64_71 = arith.constant 64 : index
    %c0_72 = arith.constant 0 : index
    %184 = vector.load %arg13[%c64_71, %c0_72] : memref<256x128xf32, #tpu.memory_space<vmem>>, vector<64x128xf32>
    tpu.vector_store %arg13[%c64_71, %c0_72], %183 {strides = array<i32>} : memref<256x128xf32, #tpu.memory_space<vmem>>, vector<64x128xf32>,
    %c288_73 = arith.constant 288 : index
    %c0_74 = arith.constant 0 : index
    %185 = vector.load %arg12[%c288_73, %c0_74] : memref<864x128xf32, #tpu.memory_space<vmem>>, vector<360x128xf32>
    %186 = arith.truncf %185 : vector<360x128xf32> to vector<360x128xbf16>
    %cst_75 = arith.constant dense<0.000000e+00> : vector<128x128xf32>
    %187 = tpu.matmul %145, %186, %cst_75 {dimension_numbers = #tpu.dot_dimension_numbers<[1], [0], [0], [1], [0, 0, 1, 1], [], []>} : vector<128x360xbf16>, vector<360x128xbf16>, vector<128x128xf32> -> vector<128x128xf32>
    %188 = arith.addf %187, %148 : vector<128x128xf32>
    %189 = vector.extract_strided_slice %188 {offsets = [0, 0], sizes = [64, 128], strides = [1, 1]} : vector<128x128xf32> to vector<64x128xf32>
    %190 = vector.extract_strided_slice %188 {offsets = [64, 0], sizes = [64, 128], strides = [1, 1]} : vector<128x128xf32> to vector<64x128xf32>
    %191 = arith.maximumf %189, %190 : vector<64x128xf32>
    %c360_76 = arith.constant 360 : index
    %c0_77 = arith.constant 0 : index
    %192 = vector.load %arg12[%c360_76, %c0_77] : memref<864x128xf32, #tpu.memory_space<vmem>>, vector<360x128xf32>
    %193 = arith.truncf %192 : vector<360x128xf32> to vector<360x128xbf16>
    %cst_78 = arith.constant dense<0.000000e+00> : vector<128x128xf32>
    %194 = tpu.matmul %145, %193, %cst_78 {dimension_numbers = #tpu.dot_dimension_numbers<[1], [0], [0], [1], [0, 0, 1, 1], [], []>} : vector<128x360xbf16>, vector<360x128xbf16>, vector<128x128xf32> -> vector<128x128xf32>
    %195 = arith.addf %194, %148 : vector<128x128xf32>
    %196 = vector.extract_strided_slice %195 {offsets = [0, 0], sizes = [64, 128], strides = [1, 1]} : vector<128x128xf32> to vector<64x128xf32>
    %197 = vector.extract_strided_slice %195 {offsets = [64, 0], sizes = [64, 128], strides = [1, 1]} : vector<128x128xf32> to vector<64x128xf32>
    %198 = arith.maximumf %196, %197 : vector<64x128xf32>
    %199 = arith.maximumf %191, %198 : vector<64x128xf32>
    %cst_79 = arith.constant 0.000000e+00 : f32
    %200 = vector.broadcast %cst_79 : f32 to vector<64x128xf32>
    %201 = arith.maximumf %199, %200 : vector<64x128xf32>
    %c128_80 = arith.constant 128 : index
    %c0_81 = arith.constant 0 : index
    %202 = vector.load %arg13[%c128_80, %c0_81] : memref<256x128xf32, #tpu.memory_space<vmem>>, vector<64x128xf32>
    tpu.vector_store %arg13[%c128_80, %c0_81], %201 {strides = array<i32>} : memref<256x128xf32, #tpu.memory_space<vmem>>, vector<64x128xf32>,
    %c432_82 = arith.constant 432 : index
    %c0_83 = arith.constant 0 : index
    %203 = vector.load %arg12[%c432_82, %c0_83] : memref<864x128xf32, #tpu.memory_space<vmem>>, vector<360x128xf32>
    %204 = arith.truncf %203 : vector<360x128xf32> to vector<360x128xbf16>
    %cst_84 = arith.constant dense<0.000000e+00> : vector<128x128xf32>
    %205 = tpu.matmul %145, %204, %cst_84 {dimension_numbers = #tpu.dot_dimension_numbers<[1], [0], [0], [1], [0, 0, 1, 1], [], []>} : vector<128x360xbf16>, vector<360x128xbf16>, vector<128x128xf32> -> vector<128x128xf32>
    %206 = arith.addf %205, %148 : vector<128x128xf32>
    %207 = vector.extract_strided_slice %206 {offsets = [0, 0], sizes = [64, 128], strides = [1, 1]} : vector<128x128xf32> to vector<64x128xf32>
    %208 = vector.extract_strided_slice %206 {offsets = [64, 0], sizes = [64, 128], strides = [1, 1]} : vector<128x128xf32> to vector<64x128xf32>
    %209 = arith.maximumf %207, %208 : vector<64x128xf32>
    %c504_85 = arith.constant 504 : index
    %c0_86 = arith.constant 0 : index
    %210 = vector.load %arg12[%c504_85, %c0_86] : memref<864x128xf32, #tpu.memory_space<vmem>>, vector<360x128xf32>
    %211 = arith.truncf %210 : vector<360x128xf32> to vector<360x128xbf16>
    %cst_87 = arith.constant dense<0.000000e+00> : vector<128x128xf32>
    %212 = tpu.matmul %145, %211, %cst_87 {dimension_numbers = #tpu.dot_dimension_numbers<[1], [0], [0], [1], [0, 0, 1, 1], [], []>} : vector<128x360xbf16>, vector<360x128xbf16>, vector<128x128xf32> -> vector<128x128xf32>
    %213 = arith.addf %212, %148 : vector<128x128xf32>
    %214 = vector.extract_strided_slice %213 {offsets = [0, 0], sizes = [64, 128], strides = [1, 1]} : vector<128x128xf32> to vector<64x128xf32>
    %215 = vector.extract_strided_slice %213 {offsets = [64, 0], sizes = [64, 128], strides = [1, 1]} : vector<128x128xf32> to vector<64x128xf32>
    %216 = arith.maximumf %214, %215 : vector<64x128xf32>
    %217 = arith.maximumf %209, %216 : vector<64x128xf32>
    %cst_88 = arith.constant 0.000000e+00 : f32
    %218 = vector.broadcast %cst_88 : f32 to vector<64x128xf32>
    %219 = arith.maximumf %217, %218 : vector<64x128xf32>
    %c192_89 = arith.constant 192 : index
    %c0_90 = arith.constant 0 : index
    %220 = vector.load %arg13[%c192_89, %c0_90] : memref<256x128xf32, #tpu.memory_space<vmem>>, vector<64x128xf32>
    tpu.vector_store %arg13[%c192_89, %c0_90], %219 {strides = array<i32>} : memref<256x128xf32, #tpu.memory_space<vmem>>, vector<64x128xf32>,
    %c0_91 = arith.constant 0 : index
    %c0_92 = arith.constant 0 : index
    %221 = vector.load %arg13[%c0_91, %c0_92] : memref<256x128xf32, #tpu.memory_space<vmem>>, vector<256x128xf32>
    %222 = arith.truncf %221 : vector<256x128xf32> to vector<256x128xbf16>
    %c0_93 = arith.constant 0 : index
    %c0_94 = arith.constant 0 : index
    %223 = vector.load %arg5[%c0_93, %c0_94] : memref<120x256xbf16, #tpu.memory_space<vmem>>, vector<120x256xbf16>
    %cst_95 = arith.constant dense<0.000000e+00> : vector<120x128xf32>
    %224 = tpu.matmul %223, %222, %cst_95 {dimension_numbers = #tpu.dot_dimension_numbers<[1], [0], [0], [1], [0, 0, 1, 1], [], []>} : vector<120x256xbf16>, vector<256x128xbf16>, vector<120x128xf32> -> vector<120x128xf32>
    %c0_96 = arith.constant 0 : index
    %c0_97 = arith.constant 0 : index
    %225 = vector.load %arg6[%c0_96, %c0_97] : memref<120x1xf32, #tpu.memory_space<vmem>>, vector<120x1xf32>
    %226 = vector.broadcast %225 : vector<120x1xf32> to vector<120x128xf32>
    %227 = arith.addf %224, %226 : vector<120x128xf32>
    %cst_98 = arith.constant 0.000000e+00 : f32
    %228 = vector.broadcast %cst_98 : f32 to vector<120x128xf32>
    %229 = arith.maximumf %227, %228 : vector<120x128xf32>
    %230 = arith.truncf %229 : vector<120x128xf32> to vector<120x128xbf16>
    %c0_99 = arith.constant 0 : index
    %c0_100 = arith.constant 0 : index
    %231 = vector.load %arg7[%c0_99, %c0_100] : memref<84x120xbf16, #tpu.memory_space<vmem>>, vector<84x120xbf16>
    %cst_101 = arith.constant dense<0.000000e+00> : vector<84x128xf32>
    %232 = tpu.matmul %231, %230, %cst_101 {dimension_numbers = #tpu.dot_dimension_numbers<[1], [0], [0], [1], [0, 0, 1, 1], [], []>} : vector<84x120xbf16>, vector<120x128xbf16>, vector<84x128xf32> -> vector<84x128xf32>
    %c0_102 = arith.constant 0 : index
    %c0_103 = arith.constant 0 : index
    %233 = vector.load %arg8[%c0_102, %c0_103] : memref<84x1xf32, #tpu.memory_space<vmem>>, vector<84x1xf32>
    %234 = vector.broadcast %233 : vector<84x1xf32> to vector<84x128xf32>
    %235 = arith.addf %232, %234 : vector<84x128xf32>
    %cst_104 = arith.constant 0.000000e+00 : f32
    %236 = vector.broadcast %cst_104 : f32 to vector<84x128xf32>
    %237 = arith.maximumf %235, %236 : vector<84x128xf32>
    %238 = arith.truncf %237 : vector<84x128xf32> to vector<84x128xbf16>
    %c0_105 = arith.constant 0 : index
    %c0_106 = arith.constant 0 : index
    %239 = vector.load %arg9[%c0_105, %c0_106] : memref<10x84xbf16, #tpu.memory_space<vmem>>, vector<10x84xbf16>
    %cst_107 = arith.constant dense<0.000000e+00> : vector<10x128xf32>
    %240 = tpu.matmul %239, %238, %cst_107 {dimension_numbers = #tpu.dot_dimension_numbers<[1], [0], [0], [1], [0, 0, 1, 1], [], []>} : vector<10x84xbf16>, vector<84x128xbf16>, vector<10x128xf32> -> vector<10x128xf32>
    %c0_108 = arith.constant 0 : index
    %c0_109 = arith.constant 0 : index
    %241 = vector.load %arg10[%c0_108, %c0_109] : memref<10x1xf32, #tpu.memory_space<vmem>>, vector<10x1xf32>
    %242 = vector.broadcast %241 : vector<10x1xf32> to vector<10x128xf32>
    %243 = arith.addf %240, %242 : vector<10x128xf32>
    %c0_110 = arith.constant 0 : index
    %c0_111 = arith.constant 0 : index
    %244 = vector.load %arg11[%c0_110, %c0_111] : memref<10x128xf32, #tpu.memory_space<vmem>>, vector<10x128xf32>
    tpu.vector_store %arg11[%c0_110, %c0_111], %243 {strides = array<i32>} : memref<10x128xf32, #tpu.memory_space<vmem>>, vector<10x128xf32>,
    return
  }
  func.func @transform_0(%arg0: i32) -> (i32, i32) {
    %c0_i32 = arith.constant 0 : i32
    %c0_i32_0 = arith.constant 0 : i32
    return %c0_i32, %arg0 : i32, i32
  }
  func.func @transform_1(%arg0: i32) -> (i32, i32) {
    %c0_i32 = arith.constant 0 : i32
    %c0_i32_0 = arith.constant 0 : i32
    %c0_i32_1 = arith.constant 0 : i32
    return %c0_i32, %c0_i32_0 : i32, i32
  }
  func.func @transform_2(%arg0: i32) -> (i32, i32) {
    %c0_i32 = arith.constant 0 : i32
    %c0_i32_0 = arith.constant 0 : i32
    %c0_i32_1 = arith.constant 0 : i32
    return %c0_i32, %c0_i32_0 : i32, i32
  }
  func.func @transform_3(%arg0: i32) -> (i32, i32) {
    %c0_i32 = arith.constant 0 : i32
    %c0_i32_0 = arith.constant 0 : i32
    %c0_i32_1 = arith.constant 0 : i32
    return %c0_i32, %c0_i32_0 : i32, i32
  }
  func.func @transform_4(%arg0: i32) -> (i32, i32) {
    %c0_i32 = arith.constant 0 : i32
    %c0_i32_0 = arith.constant 0 : i32
    %c0_i32_1 = arith.constant 0 : i32
    return %c0_i32, %c0_i32_0 : i32, i32
  }
  func.func @transform_5(%arg0: i32) -> (i32, i32) {
    %c0_i32 = arith.constant 0 : i32
    %c0_i32_0 = arith.constant 0 : i32
    %c0_i32_1 = arith.constant 0 : i32
    return %c0_i32, %c0_i32_0 : i32, i32
  }
  func.func @transform_6(%arg0: i32) -> (i32, i32) {
    %c0_i32 = arith.constant 0 : i32
    %c0_i32_0 = arith.constant 0 : i32
    %c0_i32_1 = arith.constant 0 : i32
    return %c0_i32, %c0_i32_0 : i32, i32
  }
  func.func @transform_7(%arg0: i32) -> (i32, i32) {
    %c0_i32 = arith.constant 0 : i32
    %c0_i32_0 = arith.constant 0 : i32
    %c0_i32_1 = arith.constant 0 : i32
    return %c0_i32, %c0_i32_0 : i32, i32
  }
  func.func @transform_8(%arg0: i32) -> (i32, i32) {
    %c0_i32 = arith.constant 0 : i32
    %c0_i32_0 = arith.constant 0 : i32
    %c0_i32_1 = arith.constant 0 : i32
    return %c0_i32, %c0_i32_0 : i32, i32
  }
  func.func @transform_9(%arg0: i32) -> (i32, i32) {
    %c0_i32 = arith.constant 0 : i32
    %c0_i32_0 = arith.constant 0 : i32
    %c0_i32_1 = arith.constant 0 : i32
    return %c0_i32, %c0_i32_0 : i32, i32
  }
  func.func @transform_10(%arg0: i32) -> (i32, i32) {
    %c0_i32 = arith.constant 0 : i32
    %c0_i32_0 = arith.constant 0 : i32
    return %c0_i32, %arg0 : i32, i32
  }
}

</mosaic_0001>

<llo_original>
// kernel: convnet_forward.1
$region0: #{convnet_forward.1}
  #allocation0 [shape = 'u32[]', space=smem, size = 0x4, offset = 0x4, fixed_abs, tag = 'smem constant byte address 0x4 - core index']
  #allocation1 [shape = 'u32[72,128]{1,0:T(1,128)}', space=vmem, size = 0x9000, scoped, tag = 'internal scratch']
  #allocation2 [shape = 'f32[864,128]{1,0:T(8,128)}', space=vmem, size = 0x6c000, scoped, tag = 'scratch operand']
  #allocation3 [shape = 'f32[256,128]{1,0:T(8,128)}', space=vmem, size = 0x20000, scoped, tag = 'scratch operand']
  %s0 = inlined_call_operand.vmem [shape: bf16[896,128], index: 0, kind: input, shape index: {}]
  %s1 = inlined_call_operand.vmem [shape: bf16[288,192], index: 1, kind: input, shape index: {}]
  %s2 = inlined_call_operand.vmem [shape: bf16[128,360], index: 2, kind: input, shape index: {}]
  %s3 = inlined_call_operand.vmem [shape: f32[128,1], index: 3, kind: input, shape index: {}]
  %s4 = inlined_call_operand.vmem [shape: bf16[120,256], index: 4, kind: input, shape index: {}]
  %s5 = inlined_call_operand.vmem [shape: f32[120,1], index: 5, kind: input, shape index: {}]
  %s6 = inlined_call_operand.vmem [shape: bf16[84,120], index: 6, kind: input, shape index: {}]
  %s7 = inlined_call_operand.vmem [shape: f32[84,1], index: 7, kind: input, shape index: {}]
  %s8 = inlined_call_operand.vmem [shape: bf16[10,84], index: 8, kind: input, shape index: {}]
  %s9 = inlined_call_operand.vmem [shape: f32[10,1], index: 9, kind: input, shape index: {}]
  %s10 = inlined_call_operand.vmem [shape: f32[10,128], index: 10, kind: output, shape index: {}]
  %s11 = sld [smem:[#allocation0]]
  $region50: #{convnet_forward.1} parent=0
    _
  %s13 = ssub.s32 1, %s11
  %s14 = scalar_select 0, %s13, %s11
  // Predicated region
  $region2: #{convnet_forward.1} parent=0 // pred_check
    _
  $region3: #{convnet_forward.1} parent=0 // pred_check_branch
    %16 = sbr.rel (0) target = $region5
  $region4: #{convnet_forward.1} parent=0 // pred_region
    _
  $region5: #{convnet_forward.1} parent=0 // pred_fallthru
    _
  // Predicated region
  $region6: #{convnet_forward.1} parent=0 // pred_check
    _
  $region7: #{convnet_forward.1} parent=0 // pred_check_branch
    %18 = sbr.rel (0) target = $region9
  $region8: #{convnet_forward.1} parent=0 // pred_region
    _
  $region9: #{convnet_forward.1} parent=0 // pred_fallthru
    _
  // Predicated region
  $region10: #{convnet_forward.1} parent=0 // pred_check
    _
  $region11: #{convnet_forward.1} parent=0 // pred_check_branch
    %20 = sbr.rel (0) target = $region13
  $region12: #{convnet_forward.1} parent=0 // pred_region
    _
  $region13: #{convnet_forward.1} parent=0 // pred_fallthru
    _
  // Predicated region
  $region14: #{convnet_forward.1} parent=0 // pred_check
    _
  $region15: #{convnet_forward.1} parent=0 // pred_check_branch
    %22 = sbr.rel (0) target = $region17
  $region16: #{convnet_forward.1} parent=0 // pred_region
    _
  $region17: #{convnet_forward.1} parent=0 // pred_fallthru
    _
  // Predicated region
  $region18: #{convnet_forward.1} parent=0 // pred_check
    _
  $region19: #{convnet_forward.1} parent=0 // pred_check_branch
    %24 = sbr.rel (0) target = $region21
  $region20: #{convnet_forward.1} parent=0 // pred_region
    _
  $region21: #{convnet_forward.1} parent=0 // pred_fallthru
    _
  // Predicated region
  $region22: #{convnet_forward.1} parent=0 // pred_check
    _
  $region23: #{convnet_forward.1} parent=0 // pred_check_branch
    %26 = sbr.rel (0) target = $region25
  $region24: #{convnet_forward.1} parent=0 // pred_region
    _
  $region25: #{convnet_forward.1} parent=0 // pred_fallthru
    _
  // Predicated region
  $region26: #{convnet_forward.1} parent=0 // pred_check
    _
  $region27: #{convnet_forward.1} parent=0 // pred_check_branch
    %28 = sbr.rel (0) target = $region29
  $region28: #{convnet_forward.1} parent=0 // pred_region
    _
  $region29: #{convnet_forward.1} parent=0 // pred_fallthru
    _
  // Predicated region
  $region30: #{convnet_forward.1} parent=0 // pred_check
    _
  $region31: #{convnet_forward.1} parent=0 // pred_check_branch
    %30 = sbr.rel (0) target = $region33
  $region32: #{convnet_forward.1} parent=0 // pred_region
    _
  $region33: #{convnet_forward.1} parent=0 // pred_fallthru
    _
  // Predicated region
  $region34: #{convnet_forward.1} parent=0 // pred_check
    _
  $region35: #{convnet_forward.1} parent=0 // pred_check_branch
    %32 = sbr.rel (0) target = $region37
  $region36: #{convnet_forward.1} parent=0 // pred_region
    _
  $region37: #{convnet_forward.1} parent=0 // pred_fallthru
    _
  // Predicated region
  $region38: #{convnet_forward.1} parent=0 // pred_check
    _
  $region39: #{convnet_forward.1} parent=0 // pred_check_branch
    %34 = sbr.rel (0) target = $region41
  $region40: #{convnet_forward.1} parent=0 // pred_region
    _
  $region41: #{convnet_forward.1} parent=0 // pred_fallthru
    _
  %v36 = vld [vmem:[%s1] sm:$0xff]
  %v37 = vld [vmem:[%s1 + $0x8] sm:$0xff]
  %v38 = vld [vmem:[%s1 + $0x10] sm:$0xff]
  %v39 = vld [vmem:[%s1 + $0x18] sm:$0xff]
  %v40 = vld [vmem:[%s1 + $0x20] sm:$0xff]
  %v41 = vld [vmem:[%s1 + $0x28] sm:$0xff]
  %v42 = vld [vmem:[%s1 + $0x30] sm:$0xff]
  %v43 = vld [vmem:[%s1 + $0x38] sm:$0xff]
  %v44 = vld [vmem:[%s1 + $0x40] sm:$0xff]
  %v45 = vld [vmem:[%s1 + $0x48] sm:$0xff]
  %v46 = vld [vmem:[%s1 + $0x50] sm:$0xff]
  %v47 = vld [vmem:[%s1 + $0x58] sm:$0xff]
  %v48 = vld [vmem:[%s1 + $0x60] sm:$0xff]
  %v49 = vld [vmem:[%s1 + $0x68] sm:$0xff]
  %v50 = vld [vmem:[%s1 + $0x70] sm:$0xff]
  %v51 = vld [vmem:[%s1 + $0x78] sm:$0xff]
  %v52 = vld [vmem:[%s1 + $0x80] sm:$0xff]
  %v53 = vld [vmem:[%s1 + $0x88] sm:$0xff]
  %v54 = vld [vmem:[%s1 + $0x90] sm:$0xff]
  %v55 = vld [vmem:[%s1 + $0x98] sm:$0xff]
  %v56 = vld [vmem:[%s1 + $0xa0] sm:$0xff]
  %v57 = vld [vmem:[%s1 + $0xa8] sm:$0xff]
  %v58 = vld [vmem:[%s1 + $0xb0] sm:$0xff]
  %v59 = vld [vmem:[%s1 + $0xb8] sm:$0xff]
  %v60 = vld [vmem:[%s1 + $0xc0] sm:$0xff]
  %v61 = vld [vmem:[%s1 + $0xc8] sm:$0xff]
  %v62 = vld [vmem:[%s1 + $0xd0] sm:$0xff]
  %v63 = vld [vmem:[%s1 + $0xd8] sm:$0xff]
  %v64 = vld [vmem:[%s1 + $0xe0] sm:$0xff]
  %v65 = vld [vmem:[%s1 + $0xe8] sm:$0xff]
  %v66 = vld [vmem:[%s1 + $0xf0] sm:$0xff]
  %v67 = vld [vmem:[%s1 + $0xf8] sm:$0xff]
  %v68 = vld [vmem:[%s1 + $0x100] sm:$0xff]
  %v69 = vld [vmem:[%s1 + $0x108] sm:$0xff]
  %v70 = vld [vmem:[%s1 + $0x110] sm:$0xff]
  %v71 = vld [vmem:[%s1 + $0x118] sm:$0xff]
  %v72 = vld [vmem:[%s0] sm:$0xf]
  %v73 = vld [vmem:[%s0 + $0x4] sm:$0xf]
  %v74 = vld [vmem:[%s0 + $0x8] sm:$0xf]
  %v75 = vld [vmem:[%s0 + $0xc] sm:$0xf]
  %v76 = vld [vmem:[%s0 + $0x10] sm:$0xf]
  %v77 = vld [vmem:[%s0 + $0x14] sm:$0xf]
  %v78 = vld [vmem:[%s0 + $0x18] sm:$0xf]
  %v79 = vld [vmem:[%s0 + $0x1c] sm:$0xf]
  %v80 = vld [vmem:[%s0 + $0x20] sm:$0xf]
  %v81 = vld [vmem:[%s0 + $0x24] sm:$0xf]
  %v82 = vld [vmem:[%s0 + $0x28] sm:$0xf]
  %v83 = vld [vmem:[%s0 + $0x2c] sm:$0xf]
  %v84 = vld [vmem:[%s0 + $0x30] sm:$0xf]
  %v85 = vld [vmem:[%s0 + $0x34] sm:$0xf]
  %v86 = vld [vmem:[%s0 + $0x38] sm:$0xf]
  %v87 = vld [vmem:[%s0 + $0x3c] sm:$0xf]
  %v88 = vld [vmem:[%s0 + $0x40] sm:$0xf]
  %v89 = vld [vmem:[%s0 + $0x44] sm:$0xf]
  %v90 = vld [vmem:[%s0 + $0x48] sm:$0xf]
  %v91 = vld [vmem:[%s0 + $0x4c] sm:$0xf]
  %v92 = vld [vmem:[%s0 + $0x50] sm:$0xf]
  %v93 = vld [vmem:[%s0 + $0x54] sm:$0xf]
  %v94 = vld [vmem:[%s0 + $0x58] sm:$0xf]
  %v95 = vld [vmem:[%s0 + $0x5c] sm:$0xf]
  %v132 = vunpack.c.l.b16 %v36
  %v133 = vunpack.c.h.b16 %v36
  %v134 = vunpack.c.l.b16 %v37
  %v135 = vunpack.c.h.b16 %v37
  %v136 = vunpack.c.l.b16 %v38
  %v137 = vunpack.c.h.b16 %v38
  %v138 = vunpack.c.l.b16 %v39
  %v139 = vunpack.c.h.b16 %v39
  %v140 = vunpack.c.l.b16 %v40
  %v141 = vunpack.c.h.b16 %v40
  %v142 = vunpack.c.l.b16 %v41
  %v143 = vunpack.c.h.b16 %v41
  %v144 = vunpack.c.l.b16 %v42
  %v145 = vunpack.c.h.b16 %v42
  %v146 = vunpack.c.l.b16 %v43
  %v147 = vunpack.c.h.b16 %v43
  %v148 = vunpack.c.l.b16 %v44
  %v149 = vunpack.c.h.b16 %v44
  %v150 = vunpack.c.l.b16 %v45
  %v151 = vunpack.c.h.b16 %v45
  %v152 = vunpack.c.l.b16 %v46
  %v153 = vunpack.c.h.b16 %v46
  %v154 = vunpack.c.l.b16 %v47
  %v155 = vunpack.c.h.b16 %v47
  %v156 = vunpack.c.l.b16 %v48
  %v157 = vunpack.c.h.b16 %v48
  %v158 = vunpack.c.l.b16 %v49
  %v159 = vunpack.c.h.b16 %v49
  %v160 = vunpack.c.l.b16 %v50
  %v161 = vunpack.c.h.b16 %v50
  %v162 = vunpack.c.l.b16 %v51
  %v163 = vunpack.c.h.b16 %v51
  %v164 = vunpack.c.l.b16 %v52
  %v165 = vunpack.c.h.b16 %v52
  %v166 = vunpack.c.l.b16 %v53
  %v167 = vunpack.c.h.b16 %v53
  %v168 = vunpack.c.l.b16 %v54
  %v169 = vunpack.c.h.b16 %v54
  %v170 = vunpack.c.l.b16 %v55
  %v171 = vunpack.c.h.b16 %v55
  %v172 = vunpack.c.l.b16 %v56
  %v173 = vunpack.c.h.b16 %v56
  %v174 = vunpack.c.l.b16 %v57
  %v175 = vunpack.c.h.b16 %v57
  %v176 = vunpack.c.l.b16 %v58
  %v177 = vunpack.c.h.b16 %v58
  %v178 = vunpack.c.l.b16 %v59
  %v179 = vunpack.c.h.b16 %v59
  %v180 = vunpack.c.l.b16 %v60
  %v181 = vunpack.c.h.b16 %v60
  %v182 = vunpack.c.l.b16 %v61
  %v183 = vunpack.c.h.b16 %v61
  %v184 = vunpack.c.l.b16 %v62
  %v185 = vunpack.c.h.b16 %v62
  %v186 = vunpack.c.l.b16 %v63
  %v187 = vunpack.c.h.b16 %v63
  %v188 = vunpack.c.l.b16 %v64
  %v189 = vunpack.c.h.b16 %v64
  %v190 = vunpack.c.l.b16 %v65
  %v191 = vunpack.c.h.b16 %v65
  %v192 = vunpack.c.l.b16 %v66
  %v193 = vunpack.c.h.b16 %v66
  %v194 = vunpack.c.l.b16 %v67
  %v195 = vunpack.c.h.b16 %v67
  %v196 = vunpack.c.l.b16 %v68
  %v197 = vunpack.c.h.b16 %v68
  %v198 = vunpack.c.l.b16 %v69
  %v199 = vunpack.c.h.b16 %v69
  %v200 = vunpack.c.l.b16 %v70
  %v201 = vunpack.c.h.b16 %v70
  %v202 = vunpack.c.l.b16 %v71
  %v203 = vunpack.c.h.b16 %v71
  %v204 = vpack.c.b16 %v134, %v132
  %v205 = vpack.c.b16 %v135, %v133
  %v206 = vpack.c.b16 %v138, %v136
  %v207 = vpack.c.b16 %v139, %v137
  %v208 = vpack.c.b16 %v142, %v140
  %v209 = vpack.c.b16 %v143, %v141
  %v210 = vpack.c.b16 %v146, %v144
  %v211 = vpack.c.b16 %v147, %v145
  %v212 = vpack.c.b16 %v150, %v148
  %v213 = vpack.c.b16 %v151, %v149
  %v214 = vpack.c.b16 %v154, %v152
  %v215 = vpack.c.b16 %v155, %v153
  %v216 = vpack.c.b16 %v158, %v156
  %v217 = vpack.c.b16 %v159, %v157
  %v218 = vpack.c.b16 %v162, %v160
  %v219 = vpack.c.b16 %v163, %v161
  %v220 = vpack.c.b16 %v166, %v164
  %v221 = vpack.c.b16 %v167, %v165
  %v222 = vpack.c.b16 %v170, %v168
  %v223 = vpack.c.b16 %v171, %v169
  %v224 = vpack.c.b16 %v174, %v172
  %v225 = vpack.c.b16 %v175, %v173
  %v226 = vpack.c.b16 %v178, %v176
  %v227 = vpack.c.b16 %v179, %v177
  %v228 = vpack.c.b16 %v182, %v180
  %v229 = vpack.c.b16 %v183, %v181
  %v230 = vpack.c.b16 %v186, %v184
  %v231 = vpack.c.b16 %v187, %v185
  %v232 = vpack.c.b16 %v190, %v188
  %v233 = vpack.c.b16 %v191, %v189
  %v234 = vpack.c.b16 %v194, %v192
  %v235 = vpack.c.b16 %v195, %v193
  %v236 = vpack.c.b16 %v198, %v196
  %v237 = vpack.c.b16 %v199, %v197
  %v238 = vpack.c.b16 %v202, %v200
  %v239 = vpack.c.b16 %v203, %v201
  %v282 = vunpack.c.l.b16 %v72
  %v283 = vunpack.c.l.b16 %v73
  %v284 = vunpack.c.l.b16 %v74
  %v285 = vunpack.c.l.b16 %v75
  %v286 = vunpack.c.l.b16 %v76
  %v287 = vunpack.c.l.b16 %v77
  %v288 = vunpack.c.l.b16 %v78
  %v289 = vunpack.c.l.b16 %v79
  %v290 = vunpack.c.l.b16 %v80
  %v291 = vunpack.c.l.b16 %v81
  %v292 = vunpack.c.l.b16 %v82
  %v293 = vunpack.c.l.b16 %v83
  %v294 = vunpack.c.l.b16 %v84
  %v295 = vunpack.c.l.b16 %v85
  %v296 = vunpack.c.l.b16 %v86
  %v297 = vunpack.c.l.b16 %v87
  %v298 = vunpack.c.l.b16 %v88
  %v299 = vunpack.c.l.b16 %v89
  %v300 = vunpack.c.l.b16 %v90
  %v301 = vunpack.c.l.b16 %v91
  %v302 = vunpack.c.l.b16 %v92
  %v303 = vunpack.c.l.b16 %v93
  %v304 = vunpack.c.l.b16 %v94
  %v305 = vunpack.c.l.b16 %v95
  %v306 = vpack.c.b16 %v283, %v282
  %v307 = vpack.c.b16 %v285, %v284
  %v308 = vpack.c.b16 %v287, %v286
  %v309 = vpack.c.b16 %v289, %v288
  %v310 = vpack.c.b16 %v291, %v290
  %v311 = vpack.c.b16 %v293, %v292
  %v312 = vpack.c.b16 %v295, %v294
  %v313 = vpack.c.b16 %v297, %v296
  %v314 = vpack.c.b16 %v299, %v298
  %v315 = vpack.c.b16 %v301, %v300
  %v316 = vpack.c.b16 %v303, %v302
  %v317 = vpack.c.b16 %v305, %v304
  %vm330 = vcmask 523264
  %v332 = vsel %vm330, %v205, 0
  %v335 = vsel %vm330, %v207, 0
  %v338 = vsel %vm330, %v209, 0
  %v341 = vsel %vm330, %v211, 0
  %v344 = vsel %vm330, %v213, 0
  %v347 = vsel %vm330, %v215, 0
  %v350 = vsel %vm330, %v217, 0
  %v353 = vsel %vm330, %v219, 0
  %v356 = vsel %vm330, %v221, 0
  %v359 = vsel %vm330, %v223, 0
  %v362 = vsel %vm330, %v225, 0
  %v365 = vsel %vm330, %v227, 0
  %v368 = vsel %vm330, %v229, 0
  %v371 = vsel %vm330, %v231, 0
  %v374 = vsel %vm330, %v233, 0
  %v377 = vsel %vm330, %v235, 0
  %v380 = vsel %vm330, %v237, 0
  %v383 = vsel %vm330, %v239, 0
  %385 = vmatpush.bf16.msra.mxu0 %v313
  %386 = vmatpush.bf16.msra.mxu0 %v312
  %387 = vmatpush.bf16.msra.mxu0 %v311
  %388 = vmatpush.bf16.msra.mxu0 %v310
  %389 = vmatpush.bf16.msra.mxu0 %v309
  %390 = vmatpush.bf16.msra.mxu0 %v308
  %391 = vmatpush.bf16.msra.mxu0 %v307
  %392 = vmatpush.bf16.msra.mxu0 %v306
  %393 = vmatmul.bf16.gmra.mxu0 %v204
  %v394 = vpop.f32.mrf.mxu0
  %v395 = vadd.f32 0.0, %v394
  %v396 = vpop.f32.mrf.mxu0
  %v397 = vadd.f32 0.0, %v396
  %398 = vmatmul.bf16.gmra.mxu0 %v206
  %v399 = vpop.f32.mrf.mxu0
  %v400 = vadd.f32 0.0, %v399
  %v401 = vpop.f32.mrf.mxu0
  %v402 = vadd.f32 0.0, %v401
  %403 = vmatmul.bf16.gmra.mxu0 %v208
  %v404 = vpop.f32.mrf.mxu0
  %v405 = vadd.f32 0.0, %v404
  %v406 = vpop.f32.mrf.mxu0
  %v407 = vadd.f32 0.0, %v406
  %408 = vmatmul.bf16.gmra.mxu0 %v210
  %v409 = vpop.f32.mrf.mxu0
  %v410 = vadd.f32 0.0, %v409
  %v411 = vpop.f32.mrf.mxu0
  %v412 = vadd.f32 0.0, %v411
  %413 = vmatmul.bf16.gmra.mxu0 %v212
  %v414 = vpop.f32.mrf.mxu0
  %v415 = vadd.f32 0.0, %v414
  %v416 = vpop.f32.mrf.mxu0
  %v417 = vadd.f32 0.0, %v416
  %418 = vmatmul.bf16.gmra.mxu0 %v214
  %v419 = vpop.f32.mrf.mxu0
  %v420 = vadd.f32 0.0, %v419
  %v421 = vpop.f32.mrf.mxu0
  %v422 = vadd.f32 0.0, %v421
  %423 = vmatmul.bf16.gmra.mxu0 %v216
  %v424 = vpop.f32.mrf.mxu0
  %v425 = vadd.f32 0.0, %v424
  %v426 = vpop.f32.mrf.mxu0
  %v427 = vadd.f32 0.0, %v426
  %428 = vmatmul.bf16.gmra.mxu0 %v218
  %v429 = vpop.f32.mrf.mxu0
  %v430 = vadd.f32 0.0, %v429
  %v431 = vpop.f32.mrf.mxu0
  %v432 = vadd.f32 0.0, %v431
  %433 = vmatmul.bf16.gmra.mxu0 %v220
  %v434 = vpop.f32.mrf.mxu0
  %v435 = vadd.f32 0.0, %v434
  %v436 = vpop.f32.mrf.mxu0
  %v437 = vadd.f32 0.0, %v436
  %438 = vmatmul.bf16.gmra.mxu0 %v222
  %v439 = vpop.f32.mrf.mxu0
  %v440 = vadd.f32 0.0, %v439
  %v441 = vpop.f32.mrf.mxu0
  %v442 = vadd.f32 0.0, %v441
  %443 = vmatmul.bf16.gmra.mxu0 %v224
  %v444 = vpop.f32.mrf.mxu0
  %v445 = vadd.f32 0.0, %v444
  %v446 = vpop.f32.mrf.mxu0
  %v447 = vadd.f32 0.0, %v446
  %448 = vmatmul.bf16.gmra.mxu0 %v226
  %v449 = vpop.f32.mrf.mxu0
  %v450 = vadd.f32 0.0, %v449
  %v451 = vpop.f32.mrf.mxu0
  %v452 = vadd.f32 0.0, %v451
  %453 = vmatmul.bf16.gmra.mxu0 %v228
  %v454 = vpop.f32.mrf.mxu0
  %v455 = vadd.f32 0.0, %v454
  %v456 = vpop.f32.mrf.mxu0
  %v457 = vadd.f32 0.0, %v456
  %458 = vmatmul.bf16.gmra.mxu0 %v230
  %v459 = vpop.f32.mrf.mxu0
  %v460 = vadd.f32 0.0, %v459
  %v461 = vpop.f32.mrf.mxu0
  %v462 = vadd.f32 0.0, %v461
  %463 = vmatmul.bf16.gmra.mxu0 %v232
  %v464 = vpop.f32.mrf.mxu0
  %v465 = vadd.f32 0.0, %v464
  %v466 = vpop.f32.mrf.mxu0
  %v467 = vadd.f32 0.0, %v466
  %468 = vmatmul.bf16.gmra.mxu0 %v234
  %v469 = vpop.f32.mrf.mxu0
  %v470 = vadd.f32 0.0, %v469
  %v471 = vpop.f32.mrf.mxu0
  %v472 = vadd.f32 0.0, %v471
  %473 = vmatmul.bf16.gmra.mxu0 %v236
  %v474 = vpop.f32.mrf.mxu0
  %v475 = vadd.f32 0.0, %v474
  %v476 = vpop.f32.mrf.mxu0
  %v477 = vadd.f32 0.0, %v476
  %478 = vmatmul.bf16.gmra.mxu0 %v238
  %v479 = vpop.f32.mrf.mxu0
  %v480 = vadd.f32 0.0, %v479
  %v481 = vpop.f32.mrf.mxu0
  %v482 = vadd.f32 0.0, %v481
  %483 = vdwg.mxu0
  %484 = vmatpush.bf16.msra.mxu0 0
  %485 = vmatpush.bf16.msra.mxu0 0
  %486 = vmatpush.bf16.msra.mxu0 0
  %487 = vmatpush.bf16.msra.mxu0 0
  %488 = vmatpush.bf16.msra.mxu0 %v317
  %489 = vmatpush.bf16.msra.mxu0 %v316
  %490 = vmatpush.bf16.msra.mxu0 %v315
  %491 = vmatpush.bf16.msra.mxu0 %v314
  %492 = vmatmul.bf16.gmra.mxu0 %v332
  %v493 = vpop.f32.mrf.mxu0
  %v494 = vadd.f32 %v395, %v493
  %v495 = vpop.f32.mrf.mxu0
  %v496 = vadd.f32 %v397, %v495
  %497 = vmatmul.bf16.gmra.mxu0 %v335
  %v498 = vpop.f32.mrf.mxu0
  %v499 = vadd.f32 %v400, %v498
  %v500 = vpop.f32.mrf.mxu0
  %v501 = vadd.f32 %v402, %v500
  %502 = vmatmul.bf16.gmra.mxu0 %v338
  %v503 = vpop.f32.mrf.mxu0
  %v504 = vadd.f32 %v405, %v503
  %v505 = vpop.f32.mrf.mxu0
  %v506 = vadd.f32 %v407, %v505
  %507 = vmatmul.bf16.gmra.mxu0 %v341
  %v508 = vpop.f32.mrf.mxu0
  %v509 = vadd.f32 %v410, %v508
  %v510 = vpop.f32.mrf.mxu0
  %v511 = vadd.f32 %v412, %v510
  %512 = vmatmul.bf16.gmra.mxu0 %v344
  %v513 = vpop.f32.mrf.mxu0
  %v514 = vadd.f32 %v415, %v513
  %v515 = vpop.f32.mrf.mxu0
  %v516 = vadd.f32 %v417, %v515
  %517 = vmatmul.bf16.gmra.mxu0 %v347
  %v518 = vpop.f32.mrf.mxu0
  %v519 = vadd.f32 %v420, %v518
  %v520 = vpop.f32.mrf.mxu0
  %v521 = vadd.f32 %v422, %v520
  %522 = vmatmul.bf16.gmra.mxu0 %v350
  %v523 = vpop.f32.mrf.mxu0
  %v524 = vadd.f32 %v425, %v523
  %v525 = vpop.f32.mrf.mxu0
  %v526 = vadd.f32 %v427, %v525
  %527 = vmatmul.bf16.gmra.mxu0 %v353
  %v528 = vpop.f32.mrf.mxu0
  %v529 = vadd.f32 %v430, %v528
  %v530 = vpop.f32.mrf.mxu0
  %v531 = vadd.f32 %v432, %v530
  %532 = vmatmul.bf16.gmra.mxu0 %v356
  %v533 = vpop.f32.mrf.mxu0
  %v534 = vadd.f32 %v435, %v533
  %v535 = vpop.f32.mrf.mxu0
  %v536 = vadd.f32 %v437, %v535
  %537 = vmatmul.bf16.gmra.mxu0 %v359
  %v538 = vpop.f32.mrf.mxu0
  %v539 = vadd.f32 %v440, %v538
  %v540 = vpop.f32.mrf.mxu0
  %v541 = vadd.f32 %v442, %v540
  %542 = vmatmul.bf16.gmra.mxu0 %v362
  %v543 = vpop.f32.mrf.mxu0
  %v544 = vadd.f32 %v445, %v543
  %v545 = vpop.f32.mrf.mxu0
  %v546 = vadd.f32 %v447, %v545
  %547 = vmatmul.bf16.gmra.mxu0 %v365
  %v548 = vpop.f32.mrf.mxu0
  %v549 = vadd.f32 %v450, %v548
  %v550 = vpop.f32.mrf.mxu0
  %v551 = vadd.f32 %v452, %v550
  %552 = vmatmul.bf16.gmra.mxu0 %v368
  %v553 = vpop.f32.mrf.mxu0
  %v554 = vadd.f32 %v455, %v553
  %v555 = vpop.f32.mrf.mxu0
  %v556 = vadd.f32 %v457, %v555
  %557 = vmatmul.bf16.gmra.mxu0 %v371
  %v558 = vpop.f32.mrf.mxu0
  %v559 = vadd.f32 %v460, %v558
  %v560 = vpop.f32.mrf.mxu0
  %v561 = vadd.f32 %v462, %v560
  %562 = vmatmul.bf16.gmra.mxu0 %v374
  %v563 = vpop.f32.mrf.mxu0
  %v564 = vadd.f32 %v465, %v563
  %v565 = vpop.f32.mrf.mxu0
  %v566 = vadd.f32 %v467, %v565
  %567 = vmatmul.bf16.gmra.mxu0 %v377
  %v568 = vpop.f32.mrf.mxu0
  %v569 = vadd.f32 %v470, %v568
  %v570 = vpop.f32.mrf.mxu0
  %v571 = vadd.f32 %v472, %v570
  %572 = vmatmul.bf16.gmra.mxu0 %v380
  %v573 = vpop.f32.mrf.mxu0
  %v574 = vadd.f32 %v475, %v573
  %v575 = vpop.f32.mrf.mxu0
  %v576 = vadd.f32 %v477, %v575
  %577 = vmatmul.bf16.gmra.mxu0 %v383
  %v578 = vpop.f32.mrf.mxu0
  %v579 = vadd.f32 %v480, %v578
  %v580 = vpop.f32.mrf.mxu0
  %v581 = vadd.f32 %v482, %v580
  %582 = vdwg.mxu0
  %v583 = vmax.f32 %v494, %v516
  %v584 = vmax.f32 %v496, %v519
  %v585 = vmax.f32 %v499, %v521
  %v586 = vmax.f32 %v501, %v524
  %v587 = vmax.f32 %v504, %v526
  %v588 = vmax.f32 %v506, %v529
  %v589 = vmax.f32 %v509, %v531
  %v590 = vmax.f32 %v511, %v534
  %v591 = vmax.f32 %v514, %v536
  %v592 = vmax.f32 %v539, %v561
  %v593 = vmax.f32 %v541, %v564
  %v594 = vmax.f32 %v544, %v566
  %v595 = vmax.f32 %v546, %v569
  %v596 = vmax.f32 %v549, %v571
  %v597 = vmax.f32 %v551, %v574
  %v598 = vmax.f32 %v554, %v576
  %v599 = vmax.f32 %v556, %v579
  %v600 = vmax.f32 %v559, %v581
  %v601 = vmax.f32 %v583, %v592
  %v602 = vmax.f32 %v584, %v593
  %v603 = vmax.f32 %v585, %v594
  %v604 = vmax.f32 %v586, %v595
  %v605 = vmax.f32 %v587, %v596
  %v606 = vmax.f32 %v588, %v597
  %v607 = vmax.f32 %v589, %v598
  %v608 = vmax.f32 %v590, %v599
  %v609 = vmax.f32 %v591, %v600
  %v610 = vmax.f32 %v601, 0.0
  %v611 = vmax.f32 %v602, 0.0
  %v612 = vmax.f32 %v603, 0.0
  %v613 = vmax.f32 %v604, 0.0
  %v614 = vmax.f32 %v605, 0.0
  %v615 = vmax.f32 %v606, 0.0
  %v616 = vmax.f32 %v607, 0.0
  %v617 = vmax.f32 %v608, 0.0
  %v618 = vmax.f32 %v609, 0.0
  %619 = vst [vmem:[#allocation2] sm:$0xff] %v610
  %620 = vst [vmem:[#allocation2 + $0x8] sm:$0xff] %v611
  %621 = vst [vmem:[#allocation2 + $0x10] sm:$0xff] %v612
  %622 = vst [vmem:[#allocation2 + $0x18] sm:$0xff] %v613
  %623 = vst [vmem:[#allocation2 + $0x20] sm:$0xff] %v614
  %624 = vst [vmem:[#allocation2 + $0x28] sm:$0xff] %v615
  %625 = vst [vmem:[#allocation2 + $0x30] sm:$0xff] %v616
  %626 = vst [vmem:[#allocation2 + $0x38] sm:$0xff] %v617
  %627 = vst [vmem:[#allocation2 + $0x40] sm:$0xff] %v618
  %v628 = vld [vmem:[%s0 + $0x20] sm:$0xf]
  %v629 = vld [vmem:[%s0 + $0x24] sm:$0xf]
  %v630 = vld [vmem:[%s0 + $0x28] sm:$0xf]
  %v631 = vld [vmem:[%s0 + $0x2c] sm:$0xf]
  %v632 = vld [vmem:[%s0 + $0x30] sm:$0xf]
  %v633 = vld [vmem:[%s0 + $0x34] sm:$0xf]
  %v634 = vld [vmem:[%s0 + $0x38] sm:$0xf]
  %v635 = vld [vmem:[%s0 + $0x3c] sm:$0xf]
  %v636 = vld [vmem:[%s0 + $0x40] sm:$0xf]
  %v637 = vld [vmem:[%s0 + $0x44] sm:$0xf]
  %v638 = vld [vmem:[%s0 + $0x48] sm:$0xf]
  %v639 = vld [vmem:[%s0 + $0x4c] sm:$0xf]
  %v640 = vld [vmem:[%s0 + $0x50] sm:$0xf]
  %v641 = vld [vmem:[%s0 + $0x54] sm:$0xf]
  %v642 = vld [vmem:[%s0 + $0x58] sm:$0xf]
  %v643 = vld [vmem:[%s0 + $0x5c] sm:$0xf]
  %v644 = vld [vmem:[%s0 + $0x60] sm:$0xf]
  %v645 = vld [vmem:[%s0 + $0x64] sm:$0xf]
  %v646 = vld [vmem:[%s0 + $0x68] sm:$0xf]
  %v647 = vld [vmem:[%s0 + $0x6c] sm:$0xf]
  %v648 = vld [vmem:[%s0 + $0x70] sm:$0xf]
  %v649 = vld [vmem:[%s0 + $0x74] sm:$0xf]
  %v650 = vld [vmem:[%s0 + $0x78] sm:$0xf]
  %v651 = vld [vmem:[%s0 + $0x7c] sm:$0xf]
  %v676 = vunpack.c.l.b16 %v628
  %v677 = vunpack.c.l.b16 %v629
  %v678 = vunpack.c.l.b16 %v630
  %v679 = vunpack.c.l.b16 %v631
  %v680 = vunpack.c.l.b16 %v632
  %v681 = vunpack.c.l.b16 %v633
  %v682 = vunpack.c.l.b16 %v634
  %v683 = vunpack.c.l.b16 %v635
  %v684 = vunpack.c.l.b16 %v636
  %v685 = vunpack.c.l.b16 %v637
  %v686 = vunpack.c.l.b16 %v638
  %v687 = vunpack.c.l.b16 %v639
  %v688 = vunpack.c.l.b16 %v640
  %v689 = vunpack.c.l.b16 %v641
  %v690 = vunpack.c.l.b16 %v642
  %v691 = vunpack.c.l.b16 %v643
  %v692 = vunpack.c.l.b16 %v644
  %v693 = vunpack.c.l.b16 %v645
  %v694 = vunpack.c.l.b16 %v646
  %v695 = vunpack.c.l.b16 %v647
  %v696 = vunpack.c.l.b16 %v648
  %v697 = vunpack.c.l.b16 %v649
  %v698 = vunpack.c.l.b16 %v650
  %v699 = vunpack.c.l.b16 %v651
  %v700 = vpack.c.b16 %v677, %v676
  %v701 = vpack.c.b16 %v679, %v678
  %v702 = vpack.c.b16 %v681, %v680
  %v703 = vpack.c.b16 %v683, %v682
  %v704 = vpack.c.b16 %v685, %v684
  %v705 = vpack.c.b16 %v687, %v686
  %v706 = vpack.c.b16 %v689, %v688
  %v707 = vpack.c.b16 %v691, %v690
  %v708 = vpack.c.b16 %v693, %v692
  %v709 = vpack.c.b16 %v695, %v694
  %v710 = vpack.c.b16 %v697, %v696
  %v711 = vpack.c.b16 %v699, %v698
  %724 = vmatpush.bf16.msra.mxu0 %v707
  %725 = vmatpush.bf16.msra.mxu0 %v706
  %726 = vmatpush.bf16.msra.mxu0 %v705
  %727 = vmatpush.bf16.msra.mxu0 %v704
  %728 = vmatpush.bf16.msra.mxu0 %v703
  %729 = vmatpush.bf16.msra.mxu0 %v702
  %730 = vmatpush.bf16.msra.mxu0 %v701
  %731 = vmatpush.bf16.msra.mxu0 %v700
  %732 = vmatmul.bf16.gmra.mxu0 %v204
  %v733 = vpop.f32.mrf.mxu0
  %v734 = vadd.f32 0.0, %v733
  %v735 = vpop.f32.mrf.mxu0
  %v736 = vadd.f32 0.0, %v735
  %737 = vmatmul.bf16.gmra.mxu0 %v206
  %v738 = vpop.f32.mrf.mxu0
  %v739 = vadd.f32 0.0, %v738
  %v740 = vpop.f32.mrf.mxu0
  %v741 = vadd.f32 0.0, %v740
  %742 = vmatmul.bf16.gmra.mxu0 %v208
  %v743 = vpop.f32.mrf.mxu0
  %v744 = vadd.f32 0.0, %v743
  %v745 = vpop.f32.mrf.mxu0
  %v746 = vadd.f32 0.0, %v745
  %747 = vmatmul.bf16.gmra.mxu0 %v210
  %v748 = vpop.f32.mrf.mxu0
  %v749 = vadd.f32 0.0, %v748
  %v750 = vpop.f32.mrf.mxu0
  %v751 = vadd.f32 0.0, %v750
  %752 = vmatmul.bf16.gmra.mxu0 %v212
  %v753 = vpop.f32.mrf.mxu0
  %v754 = vadd.f32 0.0, %v753
  %v755 = vpop.f32.mrf.mxu0
  %v756 = vadd.f32 0.0, %v755
  %757 = vmatmul.bf16.gmra.mxu0 %v214
  %v758 = vpop.f32.mrf.mxu0
  %v759 = vadd.f32 0.0, %v758
  %v760 = vpop.f32.mrf.mxu0
  %v761 = vadd.f32 0.0, %v760
  %762 = vmatmul.bf16.gmra.mxu0 %v216
  %v763 = vpop.f32.mrf.mxu0
  %v764 = vadd.f32 0.0, %v763
  %v765 = vpop.f32.mrf.mxu0
  %v766 = vadd.f32 0.0, %v765
  %767 = vmatmul.bf16.gmra.mxu0 %v218
  %v768 = vpop.f32.mrf.mxu0
  %v769 = vadd.f32 0.0, %v768
  %v770 = vpop.f32.mrf.mxu0
  %v771 = vadd.f32 0.0, %v770
  %772 = vmatmul.bf16.gmra.mxu0 %v220
  %v773 = vpop.f32.mrf.mxu0
  %v774 = vadd.f32 0.0, %v773
  %v775 = vpop.f32.mrf.mxu0
  %v776 = vadd.f32 0.0, %v775
  %777 = vmatmul.bf16.gmra.mxu0 %v222
  %v778 = vpop.f32.mrf.mxu0
  %v779 = vadd.f32 0.0, %v778
  %v780 = vpop.f32.mrf.mxu0
  %v781 = vadd.f32 0.0, %v780
  %782 = vmatmul.bf16.gmra.mxu0 %v224
  %v783 = vpop.f32.mrf.mxu0
  %v784 = vadd.f32 0.0, %v783
  %v785 = vpop.f32.mrf.mxu0
  %v786 = vadd.f32 0.0, %v785
  %787 = vmatmul.bf16.gmra.mxu0 %v226
  %v788 = vpop.f32.mrf.mxu0
  %v789 = vadd.f32 0.0, %v788
  %v790 = vpop.f32.mrf.mxu0
  %v791 = vadd.f32 0.0, %v790
  %792 = vmatmul.bf16.gmra.mxu0 %v228
  %v793 = vpop.f32.mrf.mxu0
  %v794 = vadd.f32 0.0, %v793
  %v795 = vpop.f32.mrf.mxu0
  %v796 = vadd.f32 0.0, %v795
  %797 = vmatmul.bf16.gmra.mxu0 %v230
  %v798 = vpop.f32.mrf.mxu0
  %v799 = vadd.f32 0.0, %v798
  %v800 = vpop.f32.mrf.mxu0
  %v801 = vadd.f32 0.0, %v800
  %802 = vmatmul.bf16.gmra.mxu0 %v232
  %v803 = vpop.f32.mrf.mxu0
  %v804 = vadd.f32 0.0, %v803
  %v805 = vpop.f32.mrf.mxu0
  %v806 = vadd.f32 0.0, %v805
  %807 = vmatmul.bf16.gmra.mxu0 %v234
  %v808 = vpop.f32.mrf.mxu0
  %v809 = vadd.f32 0.0, %v808
  %v810 = vpop.f32.mrf.mxu0
  %v811 = vadd.f32 0.0, %v810
  %812 = vmatmul.bf16.gmra.mxu0 %v236
  %v813 = vpop.f32.mrf.mxu0
  %v814 = vadd.f32 0.0, %v813
  %v815 = vpop.f32.mrf.mxu0
  %v816 = vadd.f32 0.0, %v815
  %817 = vmatmul.bf16.gmra.mxu0 %v238
  %v818 = vpop.f32.mrf.mxu0
  %v819 = vadd.f32 0.0, %v818
  %v820 = vpop.f32.mrf.mxu0
  %v821 = vadd.f32 0.0, %v820
  %822 = vdwg.mxu0
  %823 = vmatpush.bf16.msra.mxu0 0
  %824 = vmatpush.bf16.msra.mxu0 0
  %825 = vmatpush.bf16.msra.mxu0 0
  %826 = vmatpush.bf16.msra.mxu0 0
  %827 = vmatpush.bf16.msra.mxu0 %v711
  %828 = vmatpush.bf16.msra.mxu0 %v710
  %829 = vmatpush.bf16.msra.mxu0 %v709
  %830 = vmatpush.bf16.msra.mxu0 %v708
  %831 = vmatmul.bf16.gmra.mxu0 %v332
  %v832 = vpop.f32.mrf.mxu0
  %v833 = vadd.f32 %v734, %v832
  %v834 = vpop.f32.mrf.mxu0
  %v835 = vadd.f32 %v736, %v834
  %836 = vmatmul.bf16.gmra.mxu0 %v335
  %v837 = vpop.f32.mrf.mxu0
  %v838 = vadd.f32 %v739, %v837
  %v839 = vpop.f32.mrf.mxu0
  %v840 = vadd.f32 %v741, %v839
  %841 = vmatmul.bf16.gmra.mxu0 %v338
  %v842 = vpop.f32.mrf.mxu0
  %v843 = vadd.f32 %v744, %v842
  %v844 = vpop.f32.mrf.mxu0
  %v845 = vadd.f32 %v746, %v844
  %846 = vmatmul.bf16.gmra.mxu0 %v341
  %v847 = vpop.f32.mrf.mxu0
  %v848 = vadd.f32 %v749, %v847
  %v849 = vpop.f32.mrf.mxu0
  %v850 = vadd.f32 %v751, %v849
  %851 = vmatmul.bf16.gmra.mxu0 %v344
  %v852 = vpop.f32.mrf.mxu0
  %v853 = vadd.f32 %v754, %v852
  %v854 = vpop.f32.mrf.mxu0
  %v855 = vadd.f32 %v756, %v854
  %856 = vmatmul.bf16.gmra.mxu0 %v347
  %v857 = vpop.f32.mrf.mxu0
  %v858 = vadd.f32 %v759, %v857
  %v859 = vpop.f32.mrf.mxu0
  %v860 = vadd.f32 %v761, %v859
  %861 = vmatmul.bf16.gmra.mxu0 %v350
  %v862 = vpop.f32.mrf.mxu0
  %v863 = vadd.f32 %v764, %v862
  %v864 = vpop.f32.mrf.mxu0
  %v865 = vadd.f32 %v766, %v864
  %866 = vmatmul.bf16.gmra.mxu0 %v353
  %v867 = vpop.f32.mrf.mxu0
  %v868 = vadd.f32 %v769, %v867
  %v869 = vpop.f32.mrf.mxu0
  %v870 = vadd.f32 %v771, %v869
  %871 = vmatmul.bf16.gmra.mxu0 %v356
  %v872 = vpop.f32.mrf.mxu0
  %v873 = vadd.f32 %v774, %v872
  %v874 = vpop.f32.mrf.mxu0
  %v875 = vadd.f32 %v776, %v874
  %876 = vmatmul.bf16.gmra.mxu0 %v359
  %v877 = vpop.f32.mrf.mxu0
  %v878 = vadd.f32 %v779, %v877
  %v879 = vpop.f32.mrf.mxu0
  %v880 = vadd.f32 %v781, %v879
  %881 = vmatmul.bf16.gmra.mxu0 %v362
  %v882 = vpop.f32.mrf.mxu0
  %v883 = vadd.f32 %v784, %v882
  %v884 = vpop.f32.mrf.mxu0
  %v885 = vadd.f32 %v786, %v884
  %886 = vmatmul.bf16.gmra.mxu0 %v365
  %v887 = vpop.f32.mrf.mxu0
  %v888 = vadd.f32 %v789, %v887
  %v889 = vpop.f32.mrf.mxu0
  %v890 = vadd.f32 %v791, %v889
  %891 = vmatmul.bf16.gmra.mxu0 %v368
  %v892 = vpop.f32.mrf.mxu0
  %v893 = vadd.f32 %v794, %v892
  %v894 = vpop.f32.mrf.mxu0
  %v895 = vadd.f32 %v796, %v894
  %896 = vmatmul.bf16.gmra.mxu0 %v371
  %v897 = vpop.f32.mrf.mxu0
  %v898 = vadd.f32 %v799, %v897
  %v899 = vpop.f32.mrf.mxu0
  %v900 = vadd.f32 %v801, %v899
  %901 = vmatmul.bf16.gmra.mxu0 %v374
  %v902 = vpop.f32.mrf.mxu0
  %v903 = vadd.f32 %v804, %v902
  %v904 = vpop.f32.mrf.mxu0
  %v905 = vadd.f32 %v806, %v904
  %906 = vmatmul.bf16.gmra.mxu0 %v377
  %v907 = vpop.f32.mrf.mxu0
  %v908 = vadd.f32 %v809, %v907
  %v909 = vpop.f32.mrf.mxu0
  %v910 = vadd.f32 %v811, %v909
  %911 = vmatmul.bf16.gmra.mxu0 %v380
  %v912 = vpop.f32.mrf.mxu0
  %v913 = vadd.f32 %v814, %v912
  %v914 = vpop.f32.mrf.mxu0
  %v915 = vadd.f32 %v816, %v914
  %916 = vmatmul.bf16.gmra.mxu0 %v383
  %v917 = vpop.f32.mrf.mxu0
  %v918 = vadd.f32 %v819, %v917
  %v919 = vpop.f32.mrf.mxu0
  %v920 = vadd.f32 %v821, %v919
  %921 = vdwg.mxu0
  %v922 = vmax.f32 %v833, %v855
  %v923 = vmax.f32 %v835, %v858
  %v924 = vmax.f32 %v838, %v860
  %v925 = vmax.f32 %v840, %v863
  %v926 = vmax.f32 %v843, %v865
  %v927 = vmax.f32 %v845, %v868
  %v928 = vmax.f32 %v848, %v870
  %v929 = vmax.f32 %v850, %v873
  %v930 = vmax.f32 %v853, %v875
  %v931 = vmax.f32 %v878, %v900
  %v932 = vmax.f32 %v880, %v903
  %v933 = vmax.f32 %v883, %v905
  %v934 = vmax.f32 %v885, %v908
  %v935 = vmax.f32 %v888, %v910
  %v936 = vmax.f32 %v890, %v913
  %v937 = vmax.f32 %v893, %v915
  %v938 = vmax.f32 %v895, %v918
  %v939 = vmax.f32 %v898, %v920
  %v940 = vmax.f32 %v922, %v931
  %v941 = vmax.f32 %v923, %v932
  %v942 = vmax.f32 %v924, %v933
  %v943 = vmax.f32 %v925, %v934
  %v944 = vmax.f32 %v926, %v935
  %v945 = vmax.f32 %v927, %v936
  %v946 = vmax.f32 %v928, %v937
  %v947 = vmax.f32 %v929, %v938
  %v948 = vmax.f32 %v930, %v939
  %v949 = vmax.f32 %v940, 0.0
  %v950 = vmax.f32 %v941, 0.0
  %v951 = vmax.f32 %v942, 0.0
  %v952 = vmax.f32 %v943, 0.0
  %v953 = vmax.f32 %v944, 0.0
  %v954 = vmax.f32 %v945, 0.0
  %v955 = vmax.f32 %v946, 0.0
  %v956 = vmax.f32 %v947, 0.0
  %v957 = vmax.f32 %v948, 0.0
  %958 = vst [vmem:[#allocation2 + $0x48] sm:$0xff] %v949
  %959 = vst [vmem:[#allocation2 + $0x50] sm:$0xff] %v950
  %960 = vst [vmem:[#allocation2 + $0x58] sm:$0xff] %v951
  %961 = vst [vmem:[#allocation2 + $0x60] sm:$0xff] %v952
  %962 = vst [vmem:[#allocation2 + $0x68] sm:$0xff] %v953
  %963 = vst [vmem:[#allocation2 + $0x70] sm:$0xff] %v954
  %964 = vst [vmem:[#allocation2 + $0x78] sm:$0xff] %v955
  %965 = vst [vmem:[#allocation2 + $0x80] sm:$0xff] %v956
  %966 = vst [vmem:[#allocation2 + $0x88] sm:$0xff] %v957
  %v967 = vld [vmem:[%s0 + $0x40] sm:$0xf]
  %v968 = vld [vmem:[%s0 + $0x44] sm:$0xf]
  %v969 = vld [vmem:[%s0 + $0x48] sm:$0xf]
  %v970 = vld [vmem:[%s0 + $0x4c] sm:$0xf]
  %v971 = vld [vmem:[%s0 + $0x50] sm:$0xf]
  %v972 = vld [vmem:[%s0 + $0x54] sm:$0xf]
  %v973 = vld [vmem:[%s0 + $0x58] sm:$0xf]
  %v974 = vld [vmem:[%s0 + $0x5c] sm:$0xf]
  %v975 = vld [vmem:[%s0 + $0x60] sm:$0xf]
  %v976 = vld [vmem:[%s0 + $0x64] sm:$0xf]
  %v977 = vld [vmem:[%s0 + $0x68] sm:$0xf]
  %v978 = vld [vmem:[%s0 + $0x6c] sm:$0xf]
  %v979 = vld [vmem:[%s0 + $0x70] sm:$0xf]
  %v980 = vld [vmem:[%s0 + $0x74] sm:$0xf]
  %v981 = vld [vmem:[%s0 + $0x78] sm:$0xf]
  %v982 = vld [vmem:[%s0 + $0x7c] sm:$0xf]
  %v983 = vld [vmem:[%s0 + $0x80] sm:$0xf]
  %v984 = vld [vmem:[%s0 + $0x84] sm:$0xf]
  %v985 = vld [vmem:[%s0 + $0x88] sm:$0xf]
  %v986 = vld [vmem:[%s0 + $0x8c] sm:$0xf]
  %v987 = vld [vmem:[%s0 + $0x90] sm:$0xf]
  %v988 = vld [vmem:[%s0 + $0x94] sm:$0xf]
  %v989 = vld [vmem:[%s0 + $0x98] sm:$0xf]
  %v990 = vld [vmem:[%s0 + $0x9c] sm:$0xf]
  %v1015 = vunpack.c.l.b16 %v967
  %v1016 = vunpack.c.l.b16 %v968
  %v1017 = vunpack.c.l.b16 %v969
  %v1018 = vunpack.c.l.b16 %v970
  %v1019 = vunpack.c.l.b16 %v971
  %v1020 = vunpack.c.l.b16 %v972
  %v1021 = vunpack.c.l.b16 %v973
  %v1022 = vunpack.c.l.b16 %v974
  %v1023 = vunpack.c.l.b16 %v975
  %v1024 = vunpack.c.l.b16 %v976
  %v1025 = vunpack.c.l.b16 %v977
  %v1026 = vunpack.c.l.b16 %v978
  %v1027 = vunpack.c.l.b16 %v979
  %v1028 = vunpack.c.l.b16 %v980
  %v1029 = vunpack.c.l.b16 %v981
  %v1030 = vunpack.c.l.b16 %v982
  %v1031 = vunpack.c.l.b16 %v983
  %v1032 = vunpack.c.l.b16 %v984
  %v1033 = vunpack.c.l.b16 %v985
  %v1034 = vunpack.c.l.b16 %v986
  %v1035 = vunpack.c.l.b16 %v987
  %v1036 = vunpack.c.l.b16 %v988
  %v1037 = vunpack.c.l.b16 %v989
  %v1038 = vunpack.c.l.b16 %v990
  %v1039 = vpack.c.b16 %v1016, %v1015
  %v1040 = vpack.c.b16 %v1018, %v1017
  %v1041 = vpack.c.b16 %v1020, %v1019
  %v1042 = vpack.c.b16 %v1022, %v1021
  %v1043 = vpack.c.b16 %v1024, %v1023
  %v1044 = vpack.c.b16 %v1026, %v1025
  %v1045 = vpack.c.b16 %v1028, %v1027
  %v1046 = vpack.c.b16 %v1030, %v1029
  %v1047 = vpack.c.b16 %v1032, %v1031
  %v1048 = vpack.c.b16 %v1034, %v1033
  %v1049 = vpack.c.b16 %v1036, %v1035
  %v1050 = vpack.c.b16 %v1038, %v1037
  %1063 = vmatpush.bf16.msra.mxu0 %v1046
  %1064 = vmatpush.bf16.msra.mxu0 %v1045
  %1065 = vmatpush.bf16.msra.mxu0 %v1044
  %1066 = vmatpush.bf16.msra.mxu0 %v1043
  %1067 = vmatpush.bf16.msra.mxu0 %v1042
  %1068 = vmatpush.bf16.msra.mxu0 %v1041
  %1069 = vmatpush.bf16.msra.mxu0 %v1040
  %1070 = vmatpush.bf16.msra.mxu0 %v1039
  %1071 = vmatmul.bf16.gmra.mxu0 %v204
  %v1072 = vpop.f32.mrf.mxu0
  %v1073 = vadd.f32 0.0, %v1072
  %v1074 = vpop.f32.mrf.mxu0
  %v1075 = vadd.f32 0.0, %v1074
  %1076 = vmatmul.bf16.gmra.mxu0 %v206
  %v1077 = vpop.f32.mrf.mxu0
  %v1078 = vadd.f32 0.0, %v1077
  %v1079 = vpop.f32.mrf.mxu0
  %v1080 = vadd.f32 0.0, %v1079
  %1081 = vmatmul.bf16.gmra.mxu0 %v208
  %v1082 = vpop.f32.mrf.mxu0
  %v1083 = vadd.f32 0.0, %v1082
  %v1084 = vpop.f32.mrf.mxu0
  %v1085 = vadd.f32 0.0, %v1084
  %1086 = vmatmul.bf16.gmra.mxu0 %v210
  %v1087 = vpop.f32.mrf.mxu0
  %v1088 = vadd.f32 0.0, %v1087
  %v1089 = vpop.f32.mrf.mxu0
  %v1090 = vadd.f32 0.0, %v1089
  %1091 = vmatmul.bf16.gmra.mxu0 %v212
  %v1092 = vpop.f32.mrf.mxu0
  %v1093 = vadd.f32 0.0, %v1092
  %v1094 = vpop.f32.mrf.mxu0
  %v1095 = vadd.f32 0.0, %v1094
  %1096 = vmatmul.bf16.gmra.mxu0 %v214
  %v1097 = vpop.f32.mrf.mxu0
  %v1098 = vadd.f32 0.0, %v1097
  %v1099 = vpop.f32.mrf.mxu0
  %v1100 = vadd.f32 0.0, %v1099
  %1101 = vmatmul.bf16.gmra.mxu0 %v216
  %v1102 = vpop.f32.mrf.mxu0
  %v1103 = vadd.f32 0.0, %v1102
  %v1104 = vpop.f32.mrf.mxu0
  %v1105 = vadd.f32 0.0, %v1104
  %1106 = vmatmul.bf16.gmra.mxu0 %v218
  %v1107 = vpop.f32.mrf.mxu0
  %v1108 = vadd.f32 0.0, %v1107
  %v1109 = vpop.f32.mrf.mxu0
  %v1110 = vadd.f32 0.0, %v1109
  %1111 = vmatmul.bf16.gmra.mxu0 %v220
  %v1112 = vpop.f32.mrf.mxu0
  %v1113 = vadd.f32 0.0, %v1112
  %v1114 = vpop.f32.mrf.mxu0
  %v1115 = vadd.f32 0.0, %v1114
  %1116 = vmatmul.bf16.gmra.mxu0 %v222
  %v1117 = vpop.f32.mrf.mxu0
  %v1118 = vadd.f32 0.0, %v1117
  %v1119 = vpop.f32.mrf.mxu0
  %v1120 = vadd.f32 0.0, %v1119
  %1121 = vmatmul.bf16.gmra.mxu0 %v224
  %v1122 = vpop.f32.mrf.mxu0
  %v1123 = vadd.f32 0.0, %v1122
  %v1124 = vpop.f32.mrf.mxu0
  %v1125 = vadd.f32 0.0, %v1124
  %1126 = vmatmul.bf16.gmra.mxu0 %v226
  %v1127 = vpop.f32.mrf.mxu0
  %v1128 = vadd.f32 0.0, %v1127
  %v1129 = vpop.f32.mrf.mxu0
  %v1130 = vadd.f32 0.0, %v1129
  %1131 = vmatmul.bf16.gmra.mxu0 %v228
  %v1132 = vpop.f32.mrf.mxu0
  %v1133 = vadd.f32 0.0, %v1132
  %v1134 = vpop.f32.mrf.mxu0
  %v1135 = vadd.f32 0.0, %v1134
  %1136 = vmatmul.bf16.gmra.mxu0 %v230
  %v1137 = vpop.f32.mrf.mxu0
  %v1138 = vadd.f32 0.0, %v1137
  %v1139 = vpop.f32.mrf.mxu0
  %v1140 = vadd.f32 0.0, %v1139
  %1141 = vmatmul.bf16.gmra.mxu0 %v232
  %v1142 = vpop.f32.mrf.mxu0
  %v1143 = vadd.f32 0.0, %v1142
  %v1144 = vpop.f32.mrf.mxu0
  %v1145 = vadd.f32 0.0, %v1144
  %1146 = vmatmul.bf16.gmra.mxu0 %v234
  %v1147 = vpop.f32.mrf.mxu0
  %v1148 = vadd.f32 0.0, %v1147
  %v1149 = vpop.f32.mrf.mxu0
  %v1150 = vadd.f32 0.0, %v1149
  %1151 = vmatmul.bf16.gmra.mxu0 %v236
  %v1152 = vpop.f32.mrf.mxu0
  %v1153 = vadd.f32 0.0, %v1152
  %v1154 = vpop.f32.mrf.mxu0
  %v1155 = vadd.f32 0.0, %v1154
  %1156 = vmatmul.bf16.gmra.mxu0 %v238
  %v1157 = vpop.f32.mrf.mxu0
  %v1158 = vadd.f32 0.0, %v1157
  %v1159 = vpop.f32.mrf.mxu0
  %v1160 = vadd.f32 0.0, %v1159
  %1161 = vdwg.mxu0
  %1162 = vmatpush.bf16.msra.mxu0 0
  %1163 = vmatpush.bf16.msra.mxu0 0
  %1164 = vmatpush.bf16.msra.mxu0 0
  %1165 = vmatpush.bf16.msra.mxu0 0
  %1166 = vmatpush.bf16.msra.mxu0 %v1050
  %1167 = vmatpush.bf16.msra.mxu0 %v1049
  %1168 = vmatpush.bf16.msra.mxu0 %v1048
  %1169 = vmatpush.bf16.msra.mxu0 %v1047
  %1170 = vmatmul.bf16.gmra.mxu0 %v332
  %v1171 = vpop.f32.mrf.mxu0
  %v1172 = vadd.f32 %v1073, %v1171
  %v1173 = vpop.f32.mrf.mxu0
  %v1174 = vadd.f32 %v1075, %v1173
  %1175 = vmatmul.bf16.gmra.mxu0 %v335
  %v1176 = vpop.f32.mrf.mxu0
  %v1177 = vadd.f32 %v1078, %v1176
  %v1178 = vpop.f32.mrf.mxu0
  %v1179 = vadd.f32 %v1080, %v1178
  %1180 = vmatmul.bf16.gmra.mxu0 %v338
  %v1181 = vpop.f32.mrf.mxu0
  %v1182 = vadd.f32 %v1083, %v1181
  %v1183 = vpop.f32.mrf.mxu0
  %v1184 = vadd.f32 %v1085, %v1183
  %1185 = vmatmul.bf16.gmra.mxu0 %v341
  %v1186 = vpop.f32.mrf.mxu0
  %v1187 = vadd.f32 %v1088, %v1186
  %v1188 = vpop.f32.mrf.mxu0
  %v1189 = vadd.f32 %v1090, %v1188
  %1190 = vmatmul.bf16.gmra.mxu0 %v344
  %v1191 = vpop.f32.mrf.mxu0
  %v1192 = vadd.f32 %v1093, %v1191
  %v1193 = vpop.f32.mrf.mxu0
  %v1194 = vadd.f32 %v1095, %v1193
  %1195 = vmatmul.bf16.gmra.mxu0 %v347
  %v1196 = vpop.f32.mrf.mxu0
  %v1197 = vadd.f32 %v1098, %v1196
  %v1198 = vpop.f32.mrf.mxu0
  %v1199 = vadd.f32 %v1100, %v1198
  %1200 = vmatmul.bf16.gmra.mxu0 %v350
  %v1201 = vpop.f32.mrf.mxu0
  %v1202 = vadd.f32 %v1103, %v1201
  %v1203 = vpop.f32.mrf.mxu0
  %v1204 = vadd.f32 %v1105, %v1203
  %1205 = vmatmul.bf16.gmra.mxu0 %v353
  %v1206 = vpop.f32.mrf.mxu0
  %v1207 = vadd.f32 %v1108, %v1206
  %v1208 = vpop.f32.mrf.mxu0
  %v1209 = vadd.f32 %v1110, %v1208
  %1210 = vmatmul.bf16.gmra.mxu0 %v356
  %v1211 = vpop.f32.mrf.mxu0
  %v1212 = vadd.f32 %v1113, %v1211
  %v1213 = vpop.f32.mrf.mxu0
  %v1214 = vadd.f32 %v1115, %v1213
  %1215 = vmatmul.bf16.gmra.mxu0 %v359
  %v1216 = vpop.f32.mrf.mxu0
  %v1217 = vadd.f32 %v1118, %v1216
  %v1218 = vpop.f32.mrf.mxu0
  %v1219 = vadd.f32 %v1120, %v1218
  %1220 = vmatmul.bf16.gmra.mxu0 %v362
  %v1221 = vpop.f32.mrf.mxu0
  %v1222 = vadd.f32 %v1123, %v1221
  %v1223 = vpop.f32.mrf.mxu0
  %v1224 = vadd.f32 %v1125, %v1223
  %1225 = vmatmul.bf16.gmra.mxu0 %v365
  %v1226 = vpop.f32.mrf.mxu0
  %v1227 = vadd.f32 %v1128, %v1226
  %v1228 = vpop.f32.mrf.mxu0
  %v1229 = vadd.f32 %v1130, %v1228
  %1230 = vmatmul.bf16.gmra.mxu0 %v368
  %v1231 = vpop.f32.mrf.mxu0
  %v1232 = vadd.f32 %v1133, %v1231
  %v1233 = vpop.f32.mrf.mxu0
  %v1234 = vadd.f32 %v1135, %v1233
  %1235 = vmatmul.bf16.gmra.mxu0 %v371
  %v1236 = vpop.f32.mrf.mxu0
  %v1237 = vadd.f32 %v1138, %v1236
  %v1238 = vpop.f32.mrf.mxu0
  %v1239 = vadd.f32 %v1140, %v1238
  %1240 = vmatmul.bf16.gmra.mxu0 %v374
  %v1241 = vpop.f32.mrf.mxu0
  %v1242 = vadd.f32 %v1143, %v1241
  %v1243 = vpop.f32.mrf.mxu0
  %v1244 = vadd.f32 %v1145, %v1243
  %1245 = vmatmul.bf16.gmra.mxu0 %v377
  %v1246 = vpop.f32.mrf.mxu0
  %v1247 = vadd.f32 %v1148, %v1246
  %v1248 = vpop.f32.mrf.mxu0
  %v1249 = vadd.f32 %v1150, %v1248
  %1250 = vmatmul.bf16.gmra.mxu0 %v380
  %v1251 = vpop.f32.mrf.mxu0
  %v1252 = vadd.f32 %v1153, %v1251
  %v1253 = vpop.f32.mrf.mxu0
  %v1254 = vadd.f32 %v1155, %v1253
  %1255 = vmatmul.bf16.gmra.mxu0 %v383
  %v1256 = vpop.f32.mrf.mxu0
  %v1257 = vadd.f32 %v1158, %v1256
  %v1258 = vpop.f32.mrf.mxu0
  %v1259 = vadd.f32 %v1160, %v1258
  %1260 = vdwg.mxu0
  %v1261 = vmax.f32 %v1172, %v1194
  %v1262 = vmax.f32 %v1174, %v1197
  %v1263 = vmax.f32 %v1177, %v1199
  %v1264 = vmax.f32 %v1179, %v1202
  %v1265 = vmax.f32 %v1182, %v1204
  %v1266 = vmax.f32 %v1184, %v1207
  %v1267 = vmax.f32 %v1187, %v1209
  %v1268 = vmax.f32 %v1189, %v1212
  %v1269 = vmax.f32 %v1192, %v1214
  %v1270 = vmax.f32 %v1217, %v1239
  %v1271 = vmax.f32 %v1219, %v1242
  %v1272 = vmax.f32 %v1222, %v1244
  %v1273 = vmax.f32 %v1224, %v1247
  %v1274 = vmax.f32 %v1227, %v1249
  %v1275 = vmax.f32 %v1229, %v1252
  %v1276 = vmax.f32 %v1232, %v1254
  %v1277 = vmax.f32 %v1234, %v1257
  %v1278 = vmax.f32 %v1237, %v1259
  %v1279 = vmax.f32 %v1261, %v1270
  %v1280 = vmax.f32 %v1262, %v1271
  %v1281 = vmax.f32 %v1263, %v1272
  %v1282 = vmax.f32 %v1264, %v1273
  %v1283 = vmax.f32 %v1265, %v1274
  %v1284 = vmax.f32 %v1266, %v1275
  %v1285 = vmax.f32 %v1267, %v1276
  %v1286 = vmax.f32 %v1268, %v1277
  %v1287 = vmax.f32 %v1269, %v1278
  %v1288 = vmax.f32 %v1279, 0.0
  %v1289 = vmax.f32 %v1280, 0.0
  %v1290 = vmax.f32 %v1281, 0.0
  %v1291 = vmax.f32 %v1282, 0.0
  %v1292 = vmax.f32 %v1283, 0.0
  %v1293 = vmax.f32 %v1284, 0.0
  %v1294 = vmax.f32 %v1285, 0.0
  %v1295 = vmax.f32 %v1286, 0.0
  %v1296 = vmax.f32 %v1287, 0.0
  %1297 = vst [vmem:[#allocation2 + $0x90] sm:$0xff] %v1288
  %1298 = vst [vmem:[#allocation2 + $0x98] sm:$0xff] %v1289
  %1299 = vst [vmem:[#allocation2 + $0xa0] sm:$0xff] %v1290
  %1300 = vst [vmem:[#allocation2 + $0xa8] sm:$0xff] %v1291
  %1301 = vst [vmem:[#allocation2 + $0xb0] sm:$0xff] %v1292
  %1302 = vst [vmem:[#allocation2 + $0xb8] sm:$0xff] %v1293
  %1303 = vst [vmem:[#allocation2 + $0xc0] sm:$0xff] %v1294
  %1304 = vst [vmem:[#allocation2 + $0xc8] sm:$0xff] %v1295
  %1305 = vst [vmem:[#allocation2 + $0xd0] sm:$0xff] %v1296
  %v1306 = vld [vmem:[%s0 + $0x60] sm:$0xf]
  %v1307 = vld [vmem:[%s0 + $0x64] sm:$0xf]
  %v1308 = vld [vmem:[%s0 + $0x68] sm:$0xf]
  %v1309 = vld [vmem:[%s0 + $0x6c] sm:$0xf]
  %v1310 = vld [vmem:[%s0 + $0x70] sm:$0xf]
  %v1311 = vld [vmem:[%s0 + $0x74] sm:$0xf]
  %v1312 = vld [vmem:[%s0 + $0x78] sm:$0xf]
  %v1313 = vld [vmem:[%s0 + $0x7c] sm:$0xf]
  %v1314 = vld [vmem:[%s0 + $0x80] sm:$0xf]
  %v1315 = vld [vmem:[%s0 + $0x84] sm:$0xf]
  %v1316 = vld [vmem:[%s0 + $0x88] sm:$0xf]
  %v1317 = vld [vmem:[%s0 + $0x8c] sm:$0xf]
  %v1318 = vld [vmem:[%s0 + $0x90] sm:$0xf]
  %v1319 = vld [vmem:[%s0 + $0x94] sm:$0xf]
  %v1320 = vld [vmem:[%s0 + $0x98] sm:$0xf]
  %v1321 = vld [vmem:[%s0 + $0x9c] sm:$0xf]
  %v1322 = vld [vmem:[%s0 + $0xa0] sm:$0xf]
  %v1323 = vld [vmem:[%s0 + $0xa4] sm:$0xf]
  %v1324 = vld [vmem:[%s0 + $0xa8] sm:$0xf]
  %v1325 = vld [vmem:[%s0 + $0xac] sm:$0xf]
  %v1326 = vld [vmem:[%s0 + $0xb0] sm:$0xf]
  %v1327 = vld [vmem:[%s0 + $0xb4] sm:$0xf]
  %v1328 = vld [vmem:[%s0 + $0xb8] sm:$0xf]
  %v1329 = vld [vmem:[%s0 + $0xbc] sm:$0xf]
  %v1354 = vunpack.c.l.b16 %v1306
  %v1355 = vunpack.c.l.b16 %v1307
  %v1356 = vunpack.c.l.b16 %v1308
  %v1357 = vunpack.c.l.b16 %v1309
  %v1358 = vunpack.c.l.b16 %v1310
  %v1359 = vunpack.c.l.b16 %v1311
  %v1360 = vunpack.c.l.b16 %v1312
  %v1361 = vunpack.c.l.b16 %v1313
  %v1362 = vunpack.c.l.b16 %v1314
  %v1363 = vunpack.c.l.b16 %v1315
  %v1364 = vunpack.c.l.b16 %v1316
  %v1365 = vunpack.c.l.b16 %v1317
  %v1366 = vunpack.c.l.b16 %v1318
  %v1367 = vunpack.c.l.b16 %v1319
  %v1368 = vunpack.c.l.b16 %v1320
  %v1369 = vunpack.c.l.b16 %v1321
  %v1370 = vunpack.c.l.b16 %v1322
  %v1371 = vunpack.c.l.b16 %v1323
  %v1372 = vunpack.c.l.b16 %v1324
  %v1373 = vunpack.c.l.b16 %v1325
  %v1374 = vunpack.c.l.b16 %v1326
  %v1375 = vunpack.c.l.b16 %v1327
  %v1376 = vunpack.c.l.b16 %v1328
  %v1377 = vunpack.c.l.b16 %v1329
  %v1378 = vpack.c.b16 %v1355, %v1354
  %v1379 = vpack.c.b16 %v1357, %v1356
  %v1380 = vpack.c.b16 %v1359, %v1358
  %v1381 = vpack.c.b16 %v1361, %v1360
  %v1382 = vpack.c.b16 %v1363, %v1362
  %v1383 = vpack.c.b16 %v1365, %v1364
  %v1384 = vpack.c.b16 %v1367, %v1366
  %v1385 = vpack.c.b16 %v1369, %v1368
  %v1386 = vpack.c.b16 %v1371, %v1370
  %v1387 = vpack.c.b16 %v1373, %v1372
  %v1388 = vpack.c.b16 %v1375, %v1374
  %v1389 = vpack.c.b16 %v1377, %v1376
  %1402 = vmatpush.bf16.msra.mxu0 %v1385
  %1403 = vmatpush.bf16.msra.mxu0 %v1384
  %1404 = vmatpush.bf16.msra.mxu0 %v1383
  %1405 = vmatpush.bf16.msra.mxu0 %v1382
  %1406 = vmatpush.bf16.msra.mxu0 %v1381
  %1407 = vmatpush.bf16.msra.mxu0 %v1380
  %1408 = vmatpush.bf16.msra.mxu0 %v1379
  %1409 = vmatpush.bf16.msra.mxu0 %v1378
  %1410 = vmatmul.bf16.gmra.mxu0 %v204
  %v1411 = vpop.f32.mrf.mxu0
  %v1412 = vadd.f32 0.0, %v1411
  %v1413 = vpop.f32.mrf.mxu0
  %v1414 = vadd.f32 0.0, %v1413
  %1415 = vmatmul.bf16.gmra.mxu0 %v206
  %v1416 = vpop.f32.mrf.mxu0
  %v1417 = vadd.f32 0.0, %v1416
  %v1418 = vpop.f32.mrf.mxu0
  %v1419 = vadd.f32 0.0, %v1418
  %1420 = vmatmul.bf16.gmra.mxu0 %v208
  %v1421 = vpop.f32.mrf.mxu0
  %v1422 = vadd.f32 0.0, %v1421
  %v1423 = vpop.f32.mrf.mxu0
  %v1424 = vadd.f32 0.0, %v1423
  %1425 = vmatmul.bf16.gmra.mxu0 %v210
  %v1426 = vpop.f32.mrf.mxu0
  %v1427 = vadd.f32 0.0, %v1426
  %v1428 = vpop.f32.mrf.mxu0
  %v1429 = vadd.f32 0.0, %v1428
  %1430 = vmatmul.bf16.gmra.mxu0 %v212
  %v1431 = vpop.f32.mrf.mxu0
  %v1432 = vadd.f32 0.0, %v1431
  %v1433 = vpop.f32.mrf.mxu0
  %v1434 = vadd.f32 0.0, %v1433
  %1435 = vmatmul.bf16.gmra.mxu0 %v214
  %v1436 = vpop.f32.mrf.mxu0
  %v1437 = vadd.f32 0.0, %v1436
  %v1438 = vpop.f32.mrf.mxu0
  %v1439 = vadd.f32 0.0, %v1438
  %1440 = vmatmul.bf16.gmra.mxu0 %v216
  %v1441 = vpop.f32.mrf.mxu0
  %v1442 = vadd.f32 0.0, %v1441
  %v1443 = vpop.f32.mrf.mxu0
  %v1444 = vadd.f32 0.0, %v1443
  %1445 = vmatmul.bf16.gmra.mxu0 %v218
  %v1446 = vpop.f32.mrf.mxu0
  %v1447 = vadd.f32 0.0, %v1446
  %v1448 = vpop.f32.mrf.mxu0
  %v1449 = vadd.f32 0.0, %v1448
  %1450 = vmatmul.bf16.gmra.mxu0 %v220
  %v1451 = vpop.f32.mrf.mxu0
  %v1452 = vadd.f32 0.0, %v1451
  %v1453 = vpop.f32.mrf.mxu0
  %v1454 = vadd.f32 0.0, %v1453
  %1455 = vmatmul.bf16.gmra.mxu0 %v222
  %v1456 = vpop.f32.mrf.mxu0
  %v1457 = vadd.f32 0.0, %v1456
  %v1458 = vpop.f32.mrf.mxu0
  %v1459 = vadd.f32 0.0, %v1458
  %1460 = vmatmul.bf16.gmra.mxu0 %v224
  %v1461 = vpop.f32.mrf.mxu0
  %v1462 = vadd.f32 0.0, %v1461
  %v1463 = vpop.f32.mrf.mxu0
  %v1464 = vadd.f32 0.0, %v1463
  %1465 = vmatmul.bf16.gmra.mxu0 %v226
  %v1466 = vpop.f32.mrf.mxu0
  %v1467 = vadd.f32 0.0, %v1466
  %v1468 = vpop.f32.mrf.mxu0
  %v1469 = vadd.f32 0.0, %v1468
  %1470 = vmatmul.bf16.gmra.mxu0 %v228
  %v1471 = vpop.f32.mrf.mxu0
  %v1472 = vadd.f32 0.0, %v1471
  %v1473 = vpop.f32.mrf.mxu0
  %v1474 = vadd.f32 0.0, %v1473
  %1475 = vmatmul.bf16.gmra.mxu0 %v230
  %v1476 = vpop.f32.mrf.mxu0
  %v1477 = vadd.f32 0.0, %v1476
  %v1478 = vpop.f32.mrf.mxu0
  %v1479 = vadd.f32 0.0, %v1478
  %1480 = vmatmul.bf16.gmra.mxu0 %v232
  %v1481 = vpop.f32.mrf.mxu0
  %v1482 = vadd.f32 0.0, %v1481
  %v1483 = vpop.f32.mrf.mxu0
  %v1484 = vadd.f32 0.0, %v1483
  %1485 = vmatmul.bf16.gmra.mxu0 %v234
  %v1486 = vpop.f32.mrf.mxu0
  %v1487 = vadd.f32 0.0, %v1486
  %v1488 = vpop.f32.mrf.mxu0
  %v1489 = vadd.f32 0.0, %v1488
  %1490 = vmatmul.bf16.gmra.mxu0 %v236
  %v1491 = vpop.f32.mrf.mxu0
  %v1492 = vadd.f32 0.0, %v1491
  %v1493 = vpop.f32.mrf.mxu0
  %v1494 = vadd.f32 0.0, %v1493
  %1495 = vmatmul.bf16.gmra.mxu0 %v238
  %v1496 = vpop.f32.mrf.mxu0
  %v1497 = vadd.f32 0.0, %v1496
  %v1498 = vpop.f32.mrf.mxu0
  %v1499 = vadd.f32 0.0, %v1498
  %1500 = vdwg.mxu0
  %1501 = vmatpush.bf16.msra.mxu0 0
  %1502 = vmatpush.bf16.msra.mxu0 0
  %1503 = vmatpush.bf16.msra.mxu0 0
  %1504 = vmatpush.bf16.msra.mxu0 0
  %1505 = vmatpush.bf16.msra.mxu0 %v1389
  %1506 = vmatpush.bf16.msra.mxu0 %v1388
  %1507 = vmatpush.bf16.msra.mxu0 %v1387
  %1508 = vmatpush.bf16.msra.mxu0 %v1386
  %1509 = vmatmul.bf16.gmra.mxu0 %v332
  %v1510 = vpop.f32.mrf.mxu0
  %v1511 = vadd.f32 %v1412, %v1510
  %v1512 = vpop.f32.mrf.mxu0
  %v1513 = vadd.f32 %v1414, %v1512
  %1514 = vmatmul.bf16.gmra.mxu0 %v335
  %v1515 = vpop.f32.mrf.mxu0
  %v1516 = vadd.f32 %v1417, %v1515
  %v1517 = vpop.f32.mrf.mxu0
  %v1518 = vadd.f32 %v1419, %v1517
  %1519 = vmatmul.bf16.gmra.mxu0 %v338
  %v1520 = vpop.f32.mrf.mxu0
  %v1521 = vadd.f32 %v1422, %v1520
  %v1522 = vpop.f32.mrf.mxu0
  %v1523 = vadd.f32 %v1424, %v1522
  %1524 = vmatmul.bf16.gmra.mxu0 %v341
  %v1525 = vpop.f32.mrf.mxu0
  %v1526 = vadd.f32 %v1427, %v1525
  %v1527 = vpop.f32.mrf.mxu0
  %v1528 = vadd.f32 %v1429, %v1527
  %1529 = vmatmul.bf16.gmra.mxu0 %v344
  %v1530 = vpop.f32.mrf.mxu0
  %v1531 = vadd.f32 %v1432, %v1530
  %v1532 = vpop.f32.mrf.mxu0
  %v1533 = vadd.f32 %v1434, %v1532
  %1534 = vmatmul.bf16.gmra.mxu0 %v347
  %v1535 = vpop.f32.mrf.mxu0
  %v1536 = vadd.f32 %v1437, %v1535
  %v1537 = vpop.f32.mrf.mxu0
  %v1538 = vadd.f32 %v1439, %v1537
  %1539 = vmatmul.bf16.gmra.mxu0 %v350
  %v1540 = vpop.f32.mrf.mxu0
  %v1541 = vadd.f32 %v1442, %v1540
  %v1542 = vpop.f32.mrf.mxu0
  %v1543 = vadd.f32 %v1444, %v1542
  %1544 = vmatmul.bf16.gmra.mxu0 %v353
  %v1545 = vpop.f32.mrf.mxu0
  %v1546 = vadd.f32 %v1447, %v1545
  %v1547 = vpop.f32.mrf.mxu0
  %v1548 = vadd.f32 %v1449, %v1547
  %1549 = vmatmul.bf16.gmra.mxu0 %v356
  %v1550 = vpop.f32.mrf.mxu0
  %v1551 = vadd.f32 %v1452, %v1550
  %v1552 = vpop.f32.mrf.mxu0
  %v1553 = vadd.f32 %v1454, %v1552
  %1554 = vmatmul.bf16.gmra.mxu0 %v359
  %v1555 = vpop.f32.mrf.mxu0
  %v1556 = vadd.f32 %v1457, %v1555
  %v1557 = vpop.f32.mrf.mxu0
  %v1558 = vadd.f32 %v1459, %v1557
  %1559 = vmatmul.bf16.gmra.mxu0 %v362
  %v1560 = vpop.f32.mrf.mxu0
  %v1561 = vadd.f32 %v1462, %v1560
  %v1562 = vpop.f32.mrf.mxu0
  %v1563 = vadd.f32 %v1464, %v1562
  %1564 = vmatmul.bf16.gmra.mxu0 %v365
  %v1565 = vpop.f32.mrf.mxu0
  %v1566 = vadd.f32 %v1467, %v1565
  %v1567 = vpop.f32.mrf.mxu0
  %v1568 = vadd.f32 %v1469, %v1567
  %1569 = vmatmul.bf16.gmra.mxu0 %v368
  %v1570 = vpop.f32.mrf.mxu0
  %v1571 = vadd.f32 %v1472, %v1570
  %v1572 = vpop.f32.mrf.mxu0
  %v1573 = vadd.f32 %v1474, %v1572
  %1574 = vmatmul.bf16.gmra.mxu0 %v371
  %v1575 = vpop.f32.mrf.mxu0
  %v1576 = vadd.f32 %v1477, %v1575
  %v1577 = vpop.f32.mrf.mxu0
  %v1578 = vadd.f32 %v1479, %v1577
  %1579 = vmatmul.bf16.gmra.mxu0 %v374
  %v1580 = vpop.f32.mrf.mxu0
  %v1581 = vadd.f32 %v1482, %v1580
  %v1582 = vpop.f32.mrf.mxu0
  %v1583 = vadd.f32 %v1484, %v1582
  %1584 = vmatmul.bf16.gmra.mxu0 %v377
  %v1585 = vpop.f32.mrf.mxu0
  %v1586 = vadd.f32 %v1487, %v1585
  %v1587 = vpop.f32.mrf.mxu0
  %v1588 = vadd.f32 %v1489, %v1587
  %1589 = vmatmul.bf16.gmra.mxu0 %v380
  %v1590 = vpop.f32.mrf.mxu0
  %v1591 = vadd.f32 %v1492, %v1590
  %v1592 = vpop.f32.mrf.mxu0
  %v1593 = vadd.f32 %v1494, %v1592
  %1594 = vmatmul.bf16.gmra.mxu0 %v383
  %v1595 = vpop.f32.mrf.mxu0
  %v1596 = vadd.f32 %v1497, %v1595
  %v1597 = vpop.f32.mrf.mxu0
  %v1598 = vadd.f32 %v1499, %v1597
  %1599 = vdwg.mxu0
  %v1600 = vmax.f32 %v1511, %v1533
  %v1601 = vmax.f32 %v1513, %v1536
  %v1602 = vmax.f32 %v1516, %v1538
  %v1603 = vmax.f32 %v1518, %v1541
  %v1604 = vmax.f32 %v1521, %v1543
  %v1605 = vmax.f32 %v1523, %v1546
  %v1606 = vmax.f32 %v1526, %v1548
  %v1607 = vmax.f32 %v1528, %v1551
  %v1608 = vmax.f32 %v1531, %v1553
  %v1609 = vmax.f32 %v1556, %v1578
  %v1610 = vmax.f32 %v1558, %v1581
  %v1611 = vmax.f32 %v1561, %v1583
  %v1612 = vmax.f32 %v1563, %v1586
  %v1613 = vmax.f32 %v1566, %v1588
  %v1614 = vmax.f32 %v1568, %v1591
  %v1615 = vmax.f32 %v1571, %v1593
  %v1616 = vmax.f32 %v1573, %v1596
  %v1617 = vmax.f32 %v1576, %v1598
  %v1618 = vmax.f32 %v1600, %v1609
  %v1619 = vmax.f32 %v1601, %v1610
  %v1620 = vmax.f32 %v1602, %v1611
  %v1621 = vmax.f32 %v1603, %v1612
  %v1622 = vmax.f32 %v1604, %v1613
  %v1623 = vmax.f32 %v1605, %v1614
  %v1624 = vmax.f32 %v1606, %v1615
  %v1625 = vmax.f32 %v1607, %v1616
  %v1626 = vmax.f32 %v1608, %v1617
  %v1627 = vmax.f32 %v1618, 0.0
  %v1628 = vmax.f32 %v1619, 0.0
  %v1629 = vmax.f32 %v1620, 0.0
  %v1630 = vmax.f32 %v1621, 0.0
  %v1631 = vmax.f32 %v1622, 0.0
  %v1632 = vmax.f32 %v1623, 0.0
  %v1633 = vmax.f32 %v1624, 0.0
  %v1634 = vmax.f32 %v1625, 0.0
  %v1635 = vmax.f32 %v1626, 0.0
  %1636 = vst [vmem:[#allocation2 + $0xd8] sm:$0xff] %v1627
  %1637 = vst [vmem:[#allocation2 + $0xe0] sm:$0xff] %v1628
  %1638 = vst [vmem:[#allocation2 + $0xe8] sm:$0xff] %v1629
  %1639 = vst [vmem:[#allocation2 + $0xf0] sm:$0xff] %v1630
  %1640 = vst [vmem:[#allocation2 + $0xf8] sm:$0xff] %v1631
  %1641 = vst [vmem:[#allocation2 + $0x100] sm:$0xff] %v1632
  %1642 = vst [vmem:[#allocation2 + $0x108] sm:$0xff] %v1633
  %1643 = vst [vmem:[#allocation2 + $0x110] sm:$0xff] %v1634
  %1644 = vst [vmem:[#allocation2 + $0x118] sm:$0xff] %v1635
  %v1645 = vld [vmem:[%s0 + $0x80] sm:$0xf]
  %v1646 = vld [vmem:[%s0 + $0x84] sm:$0xf]
  %v1647 = vld [vmem:[%s0 + $0x88] sm:$0xf]
  %v1648 = vld [vmem:[%s0 + $0x8c] sm:$0xf]
  %v1649 = vld [vmem:[%s0 + $0x90] sm:$0xf]
  %v1650 = vld [vmem:[%s0 + $0x94] sm:$0xf]
  %v1651 = vld [vmem:[%s0 + $0x98] sm:$0xf]
  %v1652 = vld [vmem:[%s0 + $0x9c] sm:$0xf]
  %v1653 = vld [vmem:[%s0 + $0xa0] sm:$0xf]
  %v1654 = vld [vmem:[%s0 + $0xa4] sm:$0xf]
  %v1655 = vld [vmem:[%s0 + $0xa8] sm:$0xf]
  %v1656 = vld [vmem:[%s0 + $0xac] sm:$0xf]
  %v1657 = vld [vmem:[%s0 + $0xb0] sm:$0xf]
  %v1658 = vld [vmem:[%s0 + $0xb4] sm:$0xf]
  %v1659 = vld [vmem:[%s0 + $0xb8] sm:$0xf]
  %v1660 = vld [vmem:[%s0 + $0xbc] sm:$0xf]
  %v1661 = vld [vmem:[%s0 + $0xc0] sm:$0xf]
  %v1662 = vld [vmem:[%s0 + $0xc4] sm:$0xf]
  %v1663 = vld [vmem:[%s0 + $0xc8] sm:$0xf]
  %v1664 = vld [vmem:[%s0 + $0xcc] sm:$0xf]
  %v1665 = vld [vmem:[%s0 + $0xd0] sm:$0xf]
  %v1666 = vld [vmem:[%s0 + $0xd4] sm:$0xf]
  %v1667 = vld [vmem:[%s0 + $0xd8] sm:$0xf]
  %v1668 = vld [vmem:[%s0 + $0xdc] sm:$0xf]
  %v1693 = vunpack.c.l.b16 %v1645
  %v1694 = vunpack.c.l.b16 %v1646
  %v1695 = vunpack.c.l.b16 %v1647
  %v1696 = vunpack.c.l.b16 %v1648
  %v1697 = vunpack.c.l.b16 %v1649
  %v1698 = vunpack.c.l.b16 %v1650
  %v1699 = vunpack.c.l.b16 %v1651
  %v1700 = vunpack.c.l.b16 %v1652
  %v1701 = vunpack.c.l.b16 %v1653
  %v1702 = vunpack.c.l.b16 %v1654
  %v1703 = vunpack.c.l.b16 %v1655
  %v1704 = vunpack.c.l.b16 %v1656
  %v1705 = vunpack.c.l.b16 %v1657
  %v1706 = vunpack.c.l.b16 %v1658
  %v1707 = vunpack.c.l.b16 %v1659
  %v1708 = vunpack.c.l.b16 %v1660
  %v1709 = vunpack.c.l.b16 %v1661
  %v1710 = vunpack.c.l.b16 %v1662
  %v1711 = vunpack.c.l.b16 %v1663
  %v1712 = vunpack.c.l.b16 %v1664
  %v1713 = vunpack.c.l.b16 %v1665
  %v1714 = vunpack.c.l.b16 %v1666
  %v1715 = vunpack.c.l.b16 %v1667
  %v1716 = vunpack.c.l.b16 %v1668
  %v1717 = vpack.c.b16 %v1694, %v1693
  %v1718 = vpack.c.b16 %v1696, %v1695
  %v1719 = vpack.c.b16 %v1698, %v1697
  %v1720 = vpack.c.b16 %v1700, %v1699
  %v1721 = vpack.c.b16 %v1702, %v1701
  %v1722 = vpack.c.b16 %v1704, %v1703
  %v1723 = vpack.c.b16 %v1706, %v1705
  %v1724 = vpack.c.b16 %v1708, %v1707
  %v1725 = vpack.c.b16 %v1710, %v1709
  %v1726 = vpack.c.b16 %v1712, %v1711
  %v1727 = vpack.c.b16 %v1714, %v1713
  %v1728 = vpack.c.b16 %v1716, %v1715
  %1741 = vmatpush.bf16.msra.mxu0 %v1724
  %1742 = vmatpush.bf16.msra.mxu0 %v1723
  %1743 = vmatpush.bf16.msra.mxu0 %v1722
  %1744 = vmatpush.bf16.msra.mxu0 %v1721
  %1745 = vmatpush.bf16.msra.mxu0 %v1720
  %1746 = vmatpush.bf16.msra.mxu0 %v1719
  %1747 = vmatpush.bf16.msra.mxu0 %v1718
  %1748 = vmatpush.bf16.msra.mxu0 %v1717
  %1749 = vmatmul.bf16.gmra.mxu0 %v204
  %v1750 = vpop.f32.mrf.mxu0
  %v1751 = vadd.f32 0.0, %v1750
  %v1752 = vpop.f32.mrf.mxu0
  %v1753 = vadd.f32 0.0, %v1752
  %1754 = vmatmul.bf16.gmra.mxu0 %v206
  %v1755 = vpop.f32.mrf.mxu0
  %v1756 = vadd.f32 0.0, %v1755
  %v1757 = vpop.f32.mrf.mxu0
  %v1758 = vadd.f32 0.0, %v1757
  %1759 = vmatmul.bf16.gmra.mxu0 %v208
  %v1760 = vpop.f32.mrf.mxu0
  %v1761 = vadd.f32 0.0, %v1760
  %v1762 = vpop.f32.mrf.mxu0
  %v1763 = vadd.f32 0.0, %v1762
  %1764 = vmatmul.bf16.gmra.mxu0 %v210
  %v1765 = vpop.f32.mrf.mxu0
  %v1766 = vadd.f32 0.0, %v1765
  %v1767 = vpop.f32.mrf.mxu0
  %v1768 = vadd.f32 0.0, %v1767
  %1769 = vmatmul.bf16.gmra.mxu0 %v212
  %v1770 = vpop.f32.mrf.mxu0
  %v1771 = vadd.f32 0.0, %v1770
  %v1772 = vpop.f32.mrf.mxu0
  %v1773 = vadd.f32 0.0, %v1772
  %1774 = vmatmul.bf16.gmra.mxu0 %v214
  %v1775 = vpop.f32.mrf.mxu0
  %v1776 = vadd.f32 0.0, %v1775
  %v1777 = vpop.f32.mrf.mxu0
  %v1778 = vadd.f32 0.0, %v1777
  %1779 = vmatmul.bf16.gmra.mxu0 %v216
  %v1780 = vpop.f32.mrf.mxu0
  %v1781 = vadd.f32 0.0, %v1780
  %v1782 = vpop.f32.mrf.mxu0
  %v1783 = vadd.f32 0.0, %v1782
  %1784 = vmatmul.bf16.gmra.mxu0 %v218
  %v1785 = vpop.f32.mrf.mxu0
  %v1786 = vadd.f32 0.0, %v1785
  %v1787 = vpop.f32.mrf.mxu0
  %v1788 = vadd.f32 0.0, %v1787
  %1789 = vmatmul.bf16.gmra.mxu0 %v220
  %v1790 = vpop.f32.mrf.mxu0
  %v1791 = vadd.f32 0.0, %v1790
  %v1792 = vpop.f32.mrf.mxu0
  %v1793 = vadd.f32 0.0, %v1792
  %1794 = vmatmul.bf16.gmra.mxu0 %v222
  %v1795 = vpop.f32.mrf.mxu0
  %v1796 = vadd.f32 0.0, %v1795
  %v1797 = vpop.f32.mrf.mxu0
  %v1798 = vadd.f32 0.0, %v1797
  %1799 = vmatmul.bf16.gmra.mxu0 %v224
  %v1800 = vpop.f32.mrf.mxu0
  %v1801 = vadd.f32 0.0, %v1800
  %v1802 = vpop.f32.mrf.mxu0
  %v1803 = vadd.f32 0.0, %v1802
  %1804 = vmatmul.bf16.gmra.mxu0 %v226
  %v1805 = vpop.f32.mrf.mxu0
  %v1806 = vadd.f32 0.0, %v1805
  %v1807 = vpop.f32.mrf.mxu0
  %v1808 = vadd.f32 0.0, %v1807
  %1809 = vmatmul.bf16.gmra.mxu0 %v228
  %v1810 = vpop.f32.mrf.mxu0
  %v1811 = vadd.f32 0.0, %v1810
  %v1812 = vpop.f32.mrf.mxu0
  %v1813 = vadd.f32 0.0, %v1812
  %1814 = vmatmul.bf16.gmra.mxu0 %v230
  %v1815 = vpop.f32.mrf.mxu0
  %v1816 = vadd.f32 0.0, %v1815
  %v1817 = vpop.f32.mrf.mxu0
  %v1818 = vadd.f32 0.0, %v1817
  %1819 = vmatmul.bf16.gmra.mxu0 %v232
  %v1820 = vpop.f32.mrf.mxu0
  %v1821 = vadd.f32 0.0, %v1820
  %v1822 = vpop.f32.mrf.mxu0
  %v1823 = vadd.f32 0.0, %v1822
  %1824 = vmatmul.bf16.gmra.mxu0 %v234
  %v1825 = vpop.f32.mrf.mxu0
  %v1826 = vadd.f32 0.0, %v1825
  %v1827 = vpop.f32.mrf.mxu0
  %v1828 = vadd.f32 0.0, %v1827
  %1829 = vmatmul.bf16.gmra.mxu0 %v236
  %v1830 = vpop.f32.mrf.mxu0
  %v1831 = vadd.f32 0.0, %v1830
  %v1832 = vpop.f32.mrf.mxu0
  %v1833 = vadd.f32 0.0, %v1832
  %1834 = vmatmul.bf16.gmra.mxu0 %v238
  %v1835 = vpop.f32.mrf.mxu0
  %v1836 = vadd.f32 0.0, %v1835
  %v1837 = vpop.f32.mrf.mxu0
  %v1838 = vadd.f32 0.0, %v1837
  %1839 = vdwg.mxu0
  %1840 = vmatpush.bf16.msra.mxu0 0
  %1841 = vmatpush.bf16.msra.mxu0 0
  %1842 = vmatpush.bf16.msra.mxu0 0
  %1843 = vmatpush.bf16.msra.mxu0 0
  %1844 = vmatpush.bf16.msra.mxu0 %v1728
  %1845 = vmatpush.bf16.msra.mxu0 %v1727
  %1846 = vmatpush.bf16.msra.mxu0 %v1726
  %1847 = vmatpush.bf16.msra.mxu0 %v1725
  %1848 = vmatmul.bf16.gmra.mxu0 %v332
  %v1849 = vpop.f32.mrf.mxu0
  %v1850 = vadd.f32 %v1751, %v1849
  %v1851 = vpop.f32.mrf.mxu0
  %v1852 = vadd.f32 %v1753, %v1851
  %1853 = vmatmul.bf16.gmra.mxu0 %v335
  %v1854 = vpop.f32.mrf.mxu0
  %v1855 = vadd.f32 %v1756, %v1854
  %v1856 = vpop.f32.mrf.mxu0
  %v1857 = vadd.f32 %v1758, %v1856
  %1858 = vmatmul.bf16.gmra.mxu0 %v338
  %v1859 = vpop.f32.mrf.mxu0
  %v1860 = vadd.f32 %v1761, %v1859
  %v1861 = vpop.f32.mrf.mxu0
  %v1862 = vadd.f32 %v1763, %v1861
  %1863 = vmatmul.bf16.gmra.mxu0 %v341
  %v1864 = vpop.f32.mrf.mxu0
  %v1865 = vadd.f32 %v1766, %v1864
  %v1866 = vpop.f32.mrf.mxu0
  %v1867 = vadd.f32 %v1768, %v1866
  %1868 = vmatmul.bf16.gmra.mxu0 %v344
  %v1869 = vpop.f32.mrf.mxu0
  %v1870 = vadd.f32 %v1771, %v1869
  %v1871 = vpop.f32.mrf.mxu0
  %v1872 = vadd.f32 %v1773, %v1871
  %1873 = vmatmul.bf16.gmra.mxu0 %v347
  %v1874 = vpop.f32.mrf.mxu0
  %v1875 = vadd.f32 %v1776, %v1874
  %v1876 = vpop.f32.mrf.mxu0
  %v1877 = vadd.f32 %v1778, %v1876
  %1878 = vmatmul.bf16.gmra.mxu0 %v350
  %v1879 = vpop.f32.mrf.mxu0
  %v1880 = vadd.f32 %v1781, %v1879
  %v1881 = vpop.f32.mrf.mxu0
  %v1882 = vadd.f32 %v1783, %v1881
  %1883 = vmatmul.bf16.gmra.mxu0 %v353
  %v1884 = vpop.f32.mrf.mxu0
  %v1885 = vadd.f32 %v1786, %v1884
  %v1886 = vpop.f32.mrf.mxu0
  %v1887 = vadd.f32 %v1788, %v1886
  %1888 = vmatmul.bf16.gmra.mxu0 %v356
  %v1889 = vpop.f32.mrf.mxu0
  %v1890 = vadd.f32 %v1791, %v1889
  %v1891 = vpop.f32.mrf.mxu0
  %v1892 = vadd.f32 %v1793, %v1891
  %1893 = vmatmul.bf16.gmra.mxu0 %v359
  %v1894 = vpop.f32.mrf.mxu0
  %v1895 = vadd.f32 %v1796, %v1894
  %v1896 = vpop.f32.mrf.mxu0
  %v1897 = vadd.f32 %v1798, %v1896
  %1898 = vmatmul.bf16.gmra.mxu0 %v362
  %v1899 = vpop.f32.mrf.mxu0
  %v1900 = vadd.f32 %v1801, %v1899
  %v1901 = vpop.f32.mrf.mxu0
  %v1902 = vadd.f32 %v1803, %v1901
  %1903 = vmatmul.bf16.gmra.mxu0 %v365
  %v1904 = vpop.f32.mrf.mxu0
  %v1905 = vadd.f32 %v1806, %v1904
  %v1906 = vpop.f32.mrf.mxu0
  %v1907 = vadd.f32 %v1808, %v1906
  %1908 = vmatmul.bf16.gmra.mxu0 %v368
  %v1909 = vpop.f32.mrf.mxu0
  %v1910 = vadd.f32 %v1811, %v1909
  %v1911 = vpop.f32.mrf.mxu0
  %v1912 = vadd.f32 %v1813, %v1911
  %1913 = vmatmul.bf16.gmra.mxu0 %v371
  %v1914 = vpop.f32.mrf.mxu0
  %v1915 = vadd.f32 %v1816, %v1914
  %v1916 = vpop.f32.mrf.mxu0
  %v1917 = vadd.f32 %v1818, %v1916
  %1918 = vmatmul.bf16.gmra.mxu0 %v374
  %v1919 = vpop.f32.mrf.mxu0
  %v1920 = vadd.f32 %v1821, %v1919
  %v1921 = vpop.f32.mrf.mxu0
  %v1922 = vadd.f32 %v1823, %v1921
  %1923 = vmatmul.bf16.gmra.mxu0 %v377
  %v1924 = vpop.f32.mrf.mxu0
  %v1925 = vadd.f32 %v1826, %v1924
  %v1926 = vpop.f32.mrf.mxu0
  %v1927 = vadd.f32 %v1828, %v1926
  %1928 = vmatmul.bf16.gmra.mxu0 %v380
  %v1929 = vpop.f32.mrf.mxu0
  %v1930 = vadd.f32 %v1831, %v1929
  %v1931 = vpop.f32.mrf.mxu0
  %v1932 = vadd.f32 %v1833, %v1931
  %1933 = vmatmul.bf16.gmra.mxu0 %v383
  %v1934 = vpop.f32.mrf.mxu0
  %v1935 = vadd.f32 %v1836, %v1934
  %v1936 = vpop.f32.mrf.mxu0
  %v1937 = vadd.f32 %v1838, %v1936
  %1938 = vdwg.mxu0
  %v1939 = vmax.f32 %v1850, %v1872
  %v1940 = vmax.f32 %v1852, %v1875
  %v1941 = vmax.f32 %v1855, %v1877
  %v1942 = vmax.f32 %v1857, %v1880
  %v1943 = vmax.f32 %v1860, %v1882
  %v1944 = vmax.f32 %v1862, %v1885
  %v1945 = vmax.f32 %v1865, %v1887
  %v1946 = vmax.f32 %v1867, %v1890
  %v1947 = vmax.f32 %v1870, %v1892
  %v1948 = vmax.f32 %v1895, %v1917
  %v1949 = vmax.f32 %v1897, %v1920
  %v1950 = vmax.f32 %v1900, %v1922
  %v1951 = vmax.f32 %v1902, %v1925
  %v1952 = vmax.f32 %v1905, %v1927
  %v1953 = vmax.f32 %v1907, %v1930
  %v1954 = vmax.f32 %v1910, %v1932
  %v1955 = vmax.f32 %v1912, %v1935
  %v1956 = vmax.f32 %v1915, %v1937
  %v1957 = vmax.f32 %v1939, %v1948
  %v1958 = vmax.f32 %v1940, %v1949
  %v1959 = vmax.f32 %v1941, %v1950
  %v1960 = vmax.f32 %v1942, %v1951
  %v1961 = vmax.f32 %v1943, %v1952
  %v1962 = vmax.f32 %v1944, %v1953
  %v1963 = vmax.f32 %v1945, %v1954
  %v1964 = vmax.f32 %v1946, %v1955
  %v1965 = vmax.f32 %v1947, %v1956
  %v1966 = vmax.f32 %v1957, 0.0
  %v1967 = vmax.f32 %v1958, 0.0
  %v1968 = vmax.f32 %v1959, 0.0
  %v1969 = vmax.f32 %v1960, 0.0
  %v1970 = vmax.f32 %v1961, 0.0
  %v1971 = vmax.f32 %v1962, 0.0
  %v1972 = vmax.f32 %v1963, 0.0
  %v1973 = vmax.f32 %v1964, 0.0
  %v1974 = vmax.f32 %v1965, 0.0
  %1975 = vst [vmem:[#allocation2 + $0x120] sm:$0xff] %v1966
  %1976 = vst [vmem:[#allocation2 + $0x128] sm:$0xff] %v1967
  %1977 = vst [vmem:[#allocation2 + $0x130] sm:$0xff] %v1968
  %1978 = vst [vmem:[#allocation2 + $0x138] sm:$0xff] %v1969
  %1979 = vst [vmem:[#allocation2 + $0x140] sm:$0xff] %v1970
  %1980 = vst [vmem:[#allocation2 + $0x148] sm:$0xff] %v1971
  %1981 = vst [vmem:[#allocation2 + $0x150] sm:$0xff] %v1972
  %1982 = vst [vmem:[#allocation2 + $0x158] sm:$0xff] %v1973
  %1983 = vst [vmem:[#allocation2 + $0x160] sm:$0xff] %v1974
  %v1984 = vld [vmem:[%s0 + $0xa0] sm:$0xf]
  %v1985 = vld [vmem:[%s0 + $0xa4] sm:$0xf]
  %v1986 = vld [vmem:[%s0 + $0xa8] sm:$0xf]
  %v1987 = vld [vmem:[%s0 + $0xac] sm:$0xf]
  %v1988 = vld [vmem:[%s0 + $0xb0] sm:$0xf]
  %v1989 = vld [vmem:[%s0 + $0xb4] sm:$0xf]
  %v1990 = vld [vmem:[%s0 + $0xb8] sm:$0xf]
  %v1991 = vld [vmem:[%s0 + $0xbc] sm:$0xf]
  %v1992 = vld [vmem:[%s0 + $0xc0] sm:$0xf]
  %v1993 = vld [vmem:[%s0 + $0xc4] sm:$0xf]
  %v1994 = vld [vmem:[%s0 + $0xc8] sm:$0xf]
  %v1995 = vld [vmem:[%s0 + $0xcc] sm:$0xf]
  %v1996 = vld [vmem:[%s0 + $0xd0] sm:$0xf]
  %v1997 = vld [vmem:[%s0 + $0xd4] sm:$0xf]
  %v1998 = vld [vmem:[%s0 + $0xd8] sm:$0xf]
  %v1999 = vld [vmem:[%s0 + $0xdc] sm:$0xf]
  %v2000 = vld [vmem:[%s0 + $0xe0] sm:$0xf]
  %v2001 = vld [vmem:[%s0 + $0xe4] sm:$0xf]
  %v2002 = vld [vmem:[%s0 + $0xe8] sm:$0xf]
  %v2003 = vld [vmem:[%s0 + $0xec] sm:$0xf]
  %v2004 = vld [vmem:[%s0 + $0xf0] sm:$0xf]
  %v2005 = vld [vmem:[%s0 + $0xf4] sm:$0xf]
  %v2006 = vld [vmem:[%s0 + $0xf8] sm:$0xf]
  %v2007 = vld [vmem:[%s0 + $0xfc] sm:$0xf]
  %v2032 = vunpack.c.l.b16 %v1984
  %v2033 = vunpack.c.l.b16 %v1985
  %v2034 = vunpack.c.l.b16 %v1986
  %v2035 = vunpack.c.l.b16 %v1987
  %v2036 = vunpack.c.l.b16 %v1988
  %v2037 = vunpack.c.l.b16 %v1989
  %v2038 = vunpack.c.l.b16 %v1990
  %v2039 = vunpack.c.l.b16 %v1991
  %v2040 = vunpack.c.l.b16 %v1992
  %v2041 = vunpack.c.l.b16 %v1993
  %v2042 = vunpack.c.l.b16 %v1994
  %v2043 = vunpack.c.l.b16 %v1995
  %v2044 = vunpack.c.l.b16 %v1996
  %v2045 = vunpack.c.l.b16 %v1997
  %v2046 = vunpack.c.l.b16 %v1998
  %v2047 = vunpack.c.l.b16 %v1999
  %v2048 = vunpack.c.l.b16 %v2000
  %v2049 = vunpack.c.l.b16 %v2001
  %v2050 = vunpack.c.l.b16 %v2002
  %v2051 = vunpack.c.l.b16 %v2003
  %v2052 = vunpack.c.l.b16 %v2004
  %v2053 = vunpack.c.l.b16 %v2005
  %v2054 = vunpack.c.l.b16 %v2006
  %v2055 = vunpack.c.l.b16 %v2007
  %v2056 = vpack.c.b16 %v2033, %v2032
  %v2057 = vpack.c.b16 %v2035, %v2034
  %v2058 = vpack.c.b16 %v2037, %v2036
  %v2059 = vpack.c.b16 %v2039, %v2038
  %v2060 = vpack.c.b16 %v2041, %v2040
  %v2061 = vpack.c.b16 %v2043, %v2042
  %v2062 = vpack.c.b16 %v2045, %v2044
  %v2063 = vpack.c.b16 %v2047, %v2046
  %v2064 = vpack.c.b16 %v2049, %v2048
  %v2065 = vpack.c.b16 %v2051, %v2050
  %v2066 = vpack.c.b16 %v2053, %v2052
  %v2067 = vpack.c.b16 %v2055, %v2054
  %2080 = vmatpush.bf16.msra.mxu0 %v2063
  %2081 = vmatpush.bf16.msra.mxu0 %v2062
  %2082 = vmatpush.bf16.msra.mxu0 %v2061
  %2083 = vmatpush.bf16.msra.mxu0 %v2060
  %2084 = vmatpush.bf16.msra.mxu0 %v2059
  %2085 = vmatpush.bf16.msra.mxu0 %v2058
  %2086 = vmatpush.bf16.msra.mxu0 %v2057
  %2087 = vmatpush.bf16.msra.mxu0 %v2056
  %2088 = vmatmul.bf16.gmra.mxu0 %v204
  %v2089 = vpop.f32.mrf.mxu0
  %v2090 = vadd.f32 0.0, %v2089
  %v2091 = vpop.f32.mrf.mxu0
  %v2092 = vadd.f32 0.0, %v2091
  %2093 = vmatmul.bf16.gmra.mxu0 %v206
  %v2094 = vpop.f32.mrf.mxu0
  %v2095 = vadd.f32 0.0, %v2094
  %v2096 = vpop.f32.mrf.mxu0
  %v2097 = vadd.f32 0.0, %v2096
  %2098 = vmatmul.bf16.gmra.mxu0 %v208
  %v2099 = vpop.f32.mrf.mxu0
  %v2100 = vadd.f32 0.0, %v2099
  %v2101 = vpop.f32.mrf.mxu0
  %v2102 = vadd.f32 0.0, %v2101
  %2103 = vmatmul.bf16.gmra.mxu0 %v210
  %v2104 = vpop.f32.mrf.mxu0
  %v2105 = vadd.f32 0.0, %v2104
  %v2106 = vpop.f32.mrf.mxu0
  %v2107 = vadd.f32 0.0, %v2106
  %2108 = vmatmul.bf16.gmra.mxu0 %v212
  %v2109 = vpop.f32.mrf.mxu0
  %v2110 = vadd.f32 0.0, %v2109
  %v2111 = vpop.f32.mrf.mxu0
  %v2112 = vadd.f32 0.0, %v2111
  %2113 = vmatmul.bf16.gmra.mxu0 %v214
  %v2114 = vpop.f32.mrf.mxu0
  %v2115 = vadd.f32 0.0, %v2114
  %v2116 = vpop.f32.mrf.mxu0
  %v2117 = vadd.f32 0.0, %v2116
  %2118 = vmatmul.bf16.gmra.mxu0 %v216
  %v2119 = vpop.f32.mrf.mxu0
  %v2120 = vadd.f32 0.0, %v2119
  %v2121 = vpop.f32.mrf.mxu0
  %v2122 = vadd.f32 0.0, %v2121
  %2123 = vmatmul.bf16.gmra.mxu0 %v218
  %v2124 = vpop.f32.mrf.mxu0
  %v2125 = vadd.f32 0.0, %v2124
  %v2126 = vpop.f32.mrf.mxu0
  %v2127 = vadd.f32 0.0, %v2126
  %2128 = vmatmul.bf16.gmra.mxu0 %v220
  %v2129 = vpop.f32.mrf.mxu0
  %v2130 = vadd.f32 0.0, %v2129
  %v2131 = vpop.f32.mrf.mxu0
  %v2132 = vadd.f32 0.0, %v2131
  %2133 = vmatmul.bf16.gmra.mxu0 %v222
  %v2134 = vpop.f32.mrf.mxu0
  %v2135 = vadd.f32 0.0, %v2134
  %v2136 = vpop.f32.mrf.mxu0
  %v2137 = vadd.f32 0.0, %v2136
  %2138 = vmatmul.bf16.gmra.mxu0 %v224
  %v2139 = vpop.f32.mrf.mxu0
  %v2140 = vadd.f32 0.0, %v2139
  %v2141 = vpop.f32.mrf.mxu0
  %v2142 = vadd.f32 0.0, %v2141
  %2143 = vmatmul.bf16.gmra.mxu0 %v226
  %v2144 = vpop.f32.mrf.mxu0
  %v2145 = vadd.f32 0.0, %v2144
  %v2146 = vpop.f32.mrf.mxu0
  %v2147 = vadd.f32 0.0, %v2146
  %2148 = vmatmul.bf16.gmra.mxu0 %v228
  %v2149 = vpop.f32.mrf.mxu0
  %v2150 = vadd.f32 0.0, %v2149
  %v2151 = vpop.f32.mrf.mxu0
  %v2152 = vadd.f32 0.0, %v2151
  %2153 = vmatmul.bf16.gmra.mxu0 %v230
  %v2154 = vpop.f32.mrf.mxu0
  %v2155 = vadd.f32 0.0, %v2154
  %v2156 = vpop.f32.mrf.mxu0
  %v2157 = vadd.f32 0.0, %v2156
  %2158 = vmatmul.bf16.gmra.mxu0 %v232
  %v2159 = vpop.f32.mrf.mxu0
  %v2160 = vadd.f32 0.0, %v2159
  %v2161 = vpop.f32.mrf.mxu0
  %v2162 = vadd.f32 0.0, %v2161
  %2163 = vmatmul.bf16.gmra.mxu0 %v234
  %v2164 = vpop.f32.mrf.mxu0
  %v2165 = vadd.f32 0.0, %v2164
  %v2166 = vpop.f32.mrf.mxu0
  %v2167 = vadd.f32 0.0, %v2166
  %2168 = vmatmul.bf16.gmra.mxu0 %v236
  %v2169 = vpop.f32.mrf.mxu0
  %v2170 = vadd.f32 0.0, %v2169
  %v2171 = vpop.f32.mrf.mxu0
  %v2172 = vadd.f32 0.0, %v2171
  %2173 = vmatmul.bf16.gmra.mxu0 %v238
  %v2174 = vpop.f32.mrf.mxu0
  %v2175 = vadd.f32 0.0, %v2174
  %v2176 = vpop.f32.mrf.mxu0
  %v2177 = vadd.f32 0.0, %v2176
  %2178 = vdwg.mxu0
  %2179 = vmatpush.bf16.msra.mxu0 0
  %2180 = vmatpush.bf16.msra.mxu0 0
  %2181 = vmatpush.bf16.msra.mxu0 0
  %2182 = vmatpush.bf16.msra.mxu0 0
  %2183 = vmatpush.bf16.msra.mxu0 %v2067
  %2184 = vmatpush.bf16.msra.mxu0 %v2066
  %2185 = vmatpush.bf16.msra.mxu0 %v2065
  %2186 = vmatpush.bf16.msra.mxu0 %v2064
  %2187 = vmatmul.bf16.gmra.mxu0 %v332
  %v2188 = vpop.f32.mrf.mxu0
  %v2189 = vadd.f32 %v2090, %v2188
  %v2190 = vpop.f32.mrf.mxu0
  %v2191 = vadd.f32 %v2092, %v2190
  %2192 = vmatmul.bf16.gmra.mxu0 %v335
  %v2193 = vpop.f32.mrf.mxu0
  %v2194 = vadd.f32 %v2095, %v2193
  %v2195 = vpop.f32.mrf.mxu0
  %v2196 = vadd.f32 %v2097, %v2195
  %2197 = vmatmul.bf16.gmra.mxu0 %v338
  %v2198 = vpop.f32.mrf.mxu0
  %v2199 = vadd.f32 %v2100, %v2198
  %v2200 = vpop.f32.mrf.mxu0
  %v2201 = vadd.f32 %v2102, %v2200
  %2202 = vmatmul.bf16.gmra.mxu0 %v341
  %v2203 = vpop.f32.mrf.mxu0
  %v2204 = vadd.f32 %v2105, %v2203
  %v2205 = vpop.f32.mrf.mxu0
  %v2206 = vadd.f32 %v2107, %v2205
  %2207 = vmatmul.bf16.gmra.mxu0 %v344
  %v2208 = vpop.f32.mrf.mxu0
  %v2209 = vadd.f32 %v2110, %v2208
  %v2210 = vpop.f32.mrf.mxu0
  %v2211 = vadd.f32 %v2112, %v2210
  %2212 = vmatmul.bf16.gmra.mxu0 %v347
  %v2213 = vpop.f32.mrf.mxu0
  %v2214 = vadd.f32 %v2115, %v2213
  %v2215 = vpop.f32.mrf.mxu0
  %v2216 = vadd.f32 %v2117, %v2215
  %2217 = vmatmul.bf16.gmra.mxu0 %v350
  %v2218 = vpop.f32.mrf.mxu0
  %v2219 = vadd.f32 %v2120, %v2218
  %v2220 = vpop.f32.mrf.mxu0
  %v2221 = vadd.f32 %v2122, %v2220
  %2222 = vmatmul.bf16.gmra.mxu0 %v353
  %v2223 = vpop.f32.mrf.mxu0
  %v2224 = vadd.f32 %v2125, %v2223
  %v2225 = vpop.f32.mrf.mxu0
  %v2226 = vadd.f32 %v2127, %v2225
  %2227 = vmatmul.bf16.gmra.mxu0 %v356
  %v2228 = vpop.f32.mrf.mxu0
  %v2229 = vadd.f32 %v2130, %v2228
  %v2230 = vpop.f32.mrf.mxu0
  %v2231 = vadd.f32 %v2132, %v2230
  %2232 = vmatmul.bf16.gmra.mxu0 %v359
  %v2233 = vpop.f32.mrf.mxu0
  %v2234 = vadd.f32 %v2135, %v2233
  %v2235 = vpop.f32.mrf.mxu0
  %v2236 = vadd.f32 %v2137, %v2235
  %2237 = vmatmul.bf16.gmra.mxu0 %v362
  %v2238 = vpop.f32.mrf.mxu0
  %v2239 = vadd.f32 %v2140, %v2238
  %v2240 = vpop.f32.mrf.mxu0
  %v2241 = vadd.f32 %v2142, %v2240
  %2242 = vmatmul.bf16.gmra.mxu0 %v365
  %v2243 = vpop.f32.mrf.mxu0
  %v2244 = vadd.f32 %v2145, %v2243
  %v2245 = vpop.f32.mrf.mxu0
  %v2246 = vadd.f32 %v2147, %v2245
  %2247 = vmatmul.bf16.gmra.mxu0 %v368
  %v2248 = vpop.f32.mrf.mxu0
  %v2249 = vadd.f32 %v2150, %v2248
  %v2250 = vpop.f32.mrf.mxu0
  %v2251 = vadd.f32 %v2152, %v2250
  %2252 = vmatmul.bf16.gmra.mxu0 %v371
  %v2253 = vpop.f32.mrf.mxu0
  %v2254 = vadd.f32 %v2155, %v2253
  %v2255 = vpop.f32.mrf.mxu0
  %v2256 = vadd.f32 %v2157, %v2255
  %2257 = vmatmul.bf16.gmra.mxu0 %v374
  %v2258 = vpop.f32.mrf.mxu0
  %v2259 = vadd.f32 %v2160, %v2258
  %v2260 = vpop.f32.mrf.mxu0
  %v2261 = vadd.f32 %v2162, %v2260
  %2262 = vmatmul.bf16.gmra.mxu0 %v377
  %v2263 = vpop.f32.mrf.mxu0
  %v2264 = vadd.f32 %v2165, %v2263
  %v2265 = vpop.f32.mrf.mxu0
  %v2266 = vadd.f32 %v2167, %v2265
  %2267 = vmatmul.bf16.gmra.mxu0 %v380
  %v2268 = vpop.f32.mrf.mxu0
  %v2269 = vadd.f32 %v2170, %v2268
  %v2270 = vpop.f32.mrf.mxu0
  %v2271 = vadd.f32 %v2172, %v2270
  %2272 = vmatmul.bf16.gmra.mxu0 %v383
  %v2273 = vpop.f32.mrf.mxu0
  %v2274 = vadd.f32 %v2175, %v2273
  %v2275 = vpop.f32.mrf.mxu0
  %v2276 = vadd.f32 %v2177, %v2275
  %2277 = vdwg.mxu0
  %v2278 = vmax.f32 %v2189, %v2211
  %v2279 = vmax.f32 %v2191, %v2214
  %v2280 = vmax.f32 %v2194, %v2216
  %v2281 = vmax.f32 %v2196, %v2219
  %v2282 = vmax.f32 %v2199, %v2221
  %v2283 = vmax.f32 %v2201, %v2224
  %v2284 = vmax.f32 %v2204, %v2226
  %v2285 = vmax.f32 %v2206, %v2229
  %v2286 = vmax.f32 %v2209, %v2231
  %v2287 = vmax.f32 %v2234, %v2256
  %v2288 = vmax.f32 %v2236, %v2259
  %v2289 = vmax.f32 %v2239, %v2261
  %v2290 = vmax.f32 %v2241, %v2264
  %v2291 = vmax.f32 %v2244, %v2266
  %v2292 = vmax.f32 %v2246, %v2269
  %v2293 = vmax.f32 %v2249, %v2271
  %v2294 = vmax.f32 %v2251, %v2274
  %v2295 = vmax.f32 %v2254, %v2276
  %v2296 = vmax.f32 %v2278, %v2287
  %v2297 = vmax.f32 %v2279, %v2288
  %v2298 = vmax.f32 %v2280, %v2289
  %v2299 = vmax.f32 %v2281, %v2290
  %v2300 = vmax.f32 %v2282, %v2291
  %v2301 = vmax.f32 %v2283, %v2292
  %v2302 = vmax.f32 %v2284, %v2293
  %v2303 = vmax.f32 %v2285, %v2294
  %v2304 = vmax.f32 %v2286, %v2295
  %v2305 = vmax.f32 %v2296, 0.0
  %v2306 = vmax.f32 %v2297, 0.0
  %v2307 = vmax.f32 %v2298, 0.0
  %v2308 = vmax.f32 %v2299, 0.0
  %v2309 = vmax.f32 %v2300, 0.0
  %v2310 = vmax.f32 %v2301, 0.0
  %v2311 = vmax.f32 %v2302, 0.0
  %v2312 = vmax.f32 %v2303, 0.0
  %v2313 = vmax.f32 %v2304, 0.0
  %2314 = vst [vmem:[#allocation2 + $0x168] sm:$0xff] %v2305
  %2315 = vst [vmem:[#allocation2 + $0x170] sm:$0xff] %v2306
  %2316 = vst [vmem:[#allocation2 + $0x178] sm:$0xff] %v2307
  %2317 = vst [vmem:[#allocation2 + $0x180] sm:$0xff] %v2308
  %2318 = vst [vmem:[#allocation2 + $0x188] sm:$0xff] %v2309
  %2319 = vst [vmem:[#allocation2 + $0x190] sm:$0xff] %v2310
  %2320 = vst [vmem:[#allocation2 + $0x198] sm:$0xff] %v2311
  %2321 = vst [vmem:[#allocation2 + $0x1a0] sm:$0xff] %v2312
  %2322 = vst [vmem:[#allocation2 + $0x1a8] sm:$0xff] %v2313
  %v2323 = vld [vmem:[%s0 + $0xc0] sm:$0xf]
  %v2324 = vld [vmem:[%s0 + $0xc4] sm:$0xf]
  %v2325 = vld [vmem:[%s0 + $0xc8] sm:$0xf]
  %v2326 = vld [vmem:[%s0 + $0xcc] sm:$0xf]
  %v2327 = vld [vmem:[%s0 + $0xd0] sm:$0xf]
  %v2328 = vld [vmem:[%s0 + $0xd4] sm:$0xf]
  %v2329 = vld [vmem:[%s0 + $0xd8] sm:$0xf]
  %v2330 = vld [vmem:[%s0 + $0xdc] sm:$0xf]
  %v2331 = vld [vmem:[%s0 + $0xe0] sm:$0xf]
  %v2332 = vld [vmem:[%s0 + $0xe4] sm:$0xf]
  %v2333 = vld [vmem:[%s0 + $0xe8] sm:$0xf]
  %v2334 = vld [vmem:[%s0 + $0xec] sm:$0xf]
  %v2335 = vld [vmem:[%s0 + $0xf0] sm:$0xf]
  %v2336 = vld [vmem:[%s0 + $0xf4] sm:$0xf]
  %v2337 = vld [vmem:[%s0 + $0xf8] sm:$0xf]
  %v2338 = vld [vmem:[%s0 + $0xfc] sm:$0xf]
  %v2339 = vld [vmem:[%s0 + $0x100] sm:$0xf]
  %v2340 = vld [vmem:[%s0 + $0x104] sm:$0xf]
  %v2341 = vld [vmem:[%s0 + $0x108] sm:$0xf]
  %v2342 = vld [vmem:[%s0 + $0x10c] sm:$0xf]
  %v2343 = vld [vmem:[%s0 + $0x110] sm:$0xf]
  %v2344 = vld [vmem:[%s0 + $0x114] sm:$0xf]
  %v2345 = vld [vmem:[%s0 + $0x118] sm:$0xf]
  %v2346 = vld [vmem:[%s0 + $0x11c] sm:$0xf]
  %v2371 = vunpack.c.l.b16 %v2323
  %v2372 = vunpack.c.l.b16 %v2324
  %v2373 = vunpack.c.l.b16 %v2325
  %v2374 = vunpack.c.l.b16 %v2326
  %v2375 = vunpack.c.l.b16 %v2327
  %v2376 = vunpack.c.l.b16 %v2328
  %v2377 = vunpack.c.l.b16 %v2329
  %v2378 = vunpack.c.l.b16 %v2330
  %v2379 = vunpack.c.l.b16 %v2331
  %v2380 = vunpack.c.l.b16 %v2332
  %v2381 = vunpack.c.l.b16 %v2333
  %v2382 = vunpack.c.l.b16 %v2334
  %v2383 = vunpack.c.l.b16 %v2335
  %v2384 = vunpack.c.l.b16 %v2336
  %v2385 = vunpack.c.l.b16 %v2337
  %v2386 = vunpack.c.l.b16 %v2338
  %v2387 = vunpack.c.l.b16 %v2339
  %v2388 = vunpack.c.l.b16 %v2340
  %v2389 = vunpack.c.l.b16 %v2341
  %v2390 = vunpack.c.l.b16 %v2342
  %v2391 = vunpack.c.l.b16 %v2343
  %v2392 = vunpack.c.l.b16 %v2344
  %v2393 = vunpack.c.l.b16 %v2345
  %v2394 = vunpack.c.l.b16 %v2346
  %v2395 = vpack.c.b16 %v2372, %v2371
  %v2396 = vpack.c.b16 %v2374, %v2373
  %v2397 = vpack.c.b16 %v2376, %v2375
  %v2398 = vpack.c.b16 %v2378, %v2377
  %v2399 = vpack.c.b16 %v2380, %v2379
  %v2400 = vpack.c.b16 %v2382, %v2381
  %v2401 = vpack.c.b16 %v2384, %v2383
  %v2402 = vpack.c.b16 %v2386, %v2385
  %v2403 = vpack.c.b16 %v2388, %v2387
  %v2404 = vpack.c.b16 %v2390, %v2389
  %v2405 = vpack.c.b16 %v2392, %v2391
  %v2406 = vpack.c.b16 %v2394, %v2393
  %2419 = vmatpush.bf16.msra.mxu0 %v2402
  %2420 = vmatpush.bf16.msra.mxu0 %v2401
  %2421 = vmatpush.bf16.msra.mxu0 %v2400
  %2422 = vmatpush.bf16.msra.mxu0 %v2399
  %2423 = vmatpush.bf16.msra.mxu0 %v2398
  %2424 = vmatpush.bf16.msra.mxu0 %v2397
  %2425 = vmatpush.bf16.msra.mxu0 %v2396
  %2426 = vmatpush.bf16.msra.mxu0 %v2395
  %2427 = vmatmul.bf16.gmra.mxu0 %v204
  %v2428 = vpop.f32.mrf.mxu0
  %v2429 = vadd.f32 0.0, %v2428
  %v2430 = vpop.f32.mrf.mxu0
  %v2431 = vadd.f32 0.0, %v2430
  %2432 = vmatmul.bf16.gmra.mxu0 %v206
  %v2433 = vpop.f32.mrf.mxu0
  %v2434 = vadd.f32 0.0, %v2433
  %v2435 = vpop.f32.mrf.mxu0
  %v2436 = vadd.f32 0.0, %v2435
  %2437 = vmatmul.bf16.gmra.mxu0 %v208
  %v2438 = vpop.f32.mrf.mxu0
  %v2439 = vadd.f32 0.0, %v2438
  %v2440 = vpop.f32.mrf.mxu0
  %v2441 = vadd.f32 0.0, %v2440
  %2442 = vmatmul.bf16.gmra.mxu0 %v210
  %v2443 = vpop.f32.mrf.mxu0
  %v2444 = vadd.f32 0.0, %v2443
  %v2445 = vpop.f32.mrf.mxu0
  %v2446 = vadd.f32 0.0, %v2445
  %2447 = vmatmul.bf16.gmra.mxu0 %v212
  %v2448 = vpop.f32.mrf.mxu0
  %v2449 = vadd.f32 0.0, %v2448
  %v2450 = vpop.f32.mrf.mxu0
  %v2451 = vadd.f32 0.0, %v2450
  %2452 = vmatmul.bf16.gmra.mxu0 %v214
  %v2453 = vpop.f32.mrf.mxu0
  %v2454 = vadd.f32 0.0, %v2453
  %v2455 = vpop.f32.mrf.mxu0
  %v2456 = vadd.f32 0.0, %v2455
  %2457 = vmatmul.bf16.gmra.mxu0 %v216
  %v2458 = vpop.f32.mrf.mxu0
  %v2459 = vadd.f32 0.0, %v2458
  %v2460 = vpop.f32.mrf.mxu0
  %v2461 = vadd.f32 0.0, %v2460
  %2462 = vmatmul.bf16.gmra.mxu0 %v218
  %v2463 = vpop.f32.mrf.mxu0
  %v2464 = vadd.f32 0.0, %v2463
  %v2465 = vpop.f32.mrf.mxu0
  %v2466 = vadd.f32 0.0, %v2465
  %2467 = vmatmul.bf16.gmra.mxu0 %v220
  %v2468 = vpop.f32.mrf.mxu0
  %v2469 = vadd.f32 0.0, %v2468
  %v2470 = vpop.f32.mrf.mxu0
  %v2471 = vadd.f32 0.0, %v2470
  %2472 = vmatmul.bf16.gmra.mxu0 %v222
  %v2473 = vpop.f32.mrf.mxu0
  %v2474 = vadd.f32 0.0, %v2473
  %v2475 = vpop.f32.mrf.mxu0
  %v2476 = vadd.f32 0.0, %v2475
  %2477 = vmatmul.bf16.gmra.mxu0 %v224
  %v2478 = vpop.f32.mrf.mxu0
  %v2479 = vadd.f32 0.0, %v2478
  %v2480 = vpop.f32.mrf.mxu0
  %v2481 = vadd.f32 0.0, %v2480
  %2482 = vmatmul.bf16.gmra.mxu0 %v226
  %v2483 = vpop.f32.mrf.mxu0
  %v2484 = vadd.f32 0.0, %v2483
  %v2485 = vpop.f32.mrf.mxu0
  %v2486 = vadd.f32 0.0, %v2485
  %2487 = vmatmul.bf16.gmra.mxu0 %v228
  %v2488 = vpop.f32.mrf.mxu0
  %v2489 = vadd.f32 0.0, %v2488
  %v2490 = vpop.f32.mrf.mxu0
  %v2491 = vadd.f32 0.0, %v2490
  %2492 = vmatmul.bf16.gmra.mxu0 %v230
  %v2493 = vpop.f32.mrf.mxu0
  %v2494 = vadd.f32 0.0, %v2493
  %v2495 = vpop.f32.mrf.mxu0
  %v2496 = vadd.f32 0.0, %v2495
  %2497 = vmatmul.bf16.gmra.mxu0 %v232
  %v2498 = vpop.f32.mrf.mxu0
  %v2499 = vadd.f32 0.0, %v2498
  %v2500 = vpop.f32.mrf.mxu0
  %v2501 = vadd.f32 0.0, %v2500
  %2502 = vmatmul.bf16.gmra.mxu0 %v234
  %v2503 = vpop.f32.mrf.mxu0
  %v2504 = vadd.f32 0.0, %v2503
  %v2505 = vpop.f32.mrf.mxu0
  %v2506 = vadd.f32 0.0, %v2505
  %2507 = vmatmul.bf16.gmra.mxu0 %v236
  %v2508 = vpop.f32.mrf.mxu0
  %v2509 = vadd.f32 0.0, %v2508
  %v2510 = vpop.f32.mrf.mxu0
  %v2511 = vadd.f32 0.0, %v2510
  %2512 = vmatmul.bf16.gmra.mxu0 %v238
  %v2513 = vpop.f32.mrf.mxu0
  %v2514 = vadd.f32 0.0, %v2513
  %v2515 = vpop.f32.mrf.mxu0
  %v2516 = vadd.f32 0.0, %v2515
  %2517 = vdwg.mxu0
  %2518 = vmatpush.bf16.msra.mxu0 0
  %2519 = vmatpush.bf16.msra.mxu0 0
  %2520 = vmatpush.bf16.msra.mxu0 0
  %2521 = vmatpush.bf16.msra.mxu0 0
  %2522 = vmatpush.bf16.msra.mxu0 %v2406
  %2523 = vmatpush.bf16.msra.mxu0 %v2405
  %2524 = vmatpush.bf16.msra.mxu0 %v2404
  %2525 = vmatpush.bf16.msra.mxu0 %v2403
  %2526 = vmatmul.bf16.gmra.mxu0 %v332
  %v2527 = vpop.f32.mrf.mxu0
  %v2528 = vadd.f32 %v2429, %v2527
  %v2529 = vpop.f32.mrf.mxu0
  %v2530 = vadd.f32 %v2431, %v2529
  %2531 = vmatmul.bf16.gmra.mxu0 %v335
  %v2532 = vpop.f32.mrf.mxu0
  %v2533 = vadd.f32 %v2434, %v2532
  %v2534 = vpop.f32.mrf.mxu0
  %v2535 = vadd.f32 %v2436, %v2534
  %2536 = vmatmul.bf16.gmra.mxu0 %v338
  %v2537 = vpop.f32.mrf.mxu0
  %v2538 = vadd.f32 %v2439, %v2537
  %v2539 = vpop.f32.mrf.mxu0
  %v2540 = vadd.f32 %v2441, %v2539
  %2541 = vmatmul.bf16.gmra.mxu0 %v341
  %v2542 = vpop.f32.mrf.mxu0
  %v2543 = vadd.f32 %v2444, %v2542
  %v2544 = vpop.f32.mrf.mxu0
  %v2545 = vadd.f32 %v2446, %v2544
  %2546 = vmatmul.bf16.gmra.mxu0 %v344
  %v2547 = vpop.f32.mrf.mxu0
  %v2548 = vadd.f32 %v2449, %v2547
  %v2549 = vpop.f32.mrf.mxu0
  %v2550 = vadd.f32 %v2451, %v2549
  %2551 = vmatmul.bf16.gmra.mxu0 %v347
  %v2552 = vpop.f32.mrf.mxu0
  %v2553 = vadd.f32 %v2454, %v2552
  %v2554 = vpop.f32.mrf.mxu0
  %v2555 = vadd.f32 %v2456, %v2554
  %2556 = vmatmul.bf16.gmra.mxu0 %v350
  %v2557 = vpop.f32.mrf.mxu0
  %v2558 = vadd.f32 %v2459, %v2557
  %v2559 = vpop.f32.mrf.mxu0
  %v2560 = vadd.f32 %v2461, %v2559
  %2561 = vmatmul.bf16.gmra.mxu0 %v353
  %v2562 = vpop.f32.mrf.mxu0
  %v2563 = vadd.f32 %v2464, %v2562
  %v2564 = vpop.f32.mrf.mxu0
  %v2565 = vadd.f32 %v2466, %v2564
  %2566 = vmatmul.bf16.gmra.mxu0 %v356
  %v2567 = vpop.f32.mrf.mxu0
  %v2568 = vadd.f32 %v2469, %v2567
  %v2569 = vpop.f32.mrf.mxu0
  %v2570 = vadd.f32 %v2471, %v2569
  %2571 = vmatmul.bf16.gmra.mxu0 %v359
  %v2572 = vpop.f32.mrf.mxu0
  %v2573 = vadd.f32 %v2474, %v2572
  %v2574 = vpop.f32.mrf.mxu0
  %v2575 = vadd.f32 %v2476, %v2574
  %2576 = vmatmul.bf16.gmra.mxu0 %v362
  %v2577 = vpop.f32.mrf.mxu0
  %v2578 = vadd.f32 %v2479, %v2577
  %v2579 = vpop.f32.mrf.mxu0
  %v2580 = vadd.f32 %v2481, %v2579
  %2581 = vmatmul.bf16.gmra.mxu0 %v365
  %v2582 = vpop.f32.mrf.mxu0
  %v2583 = vadd.f32 %v2484, %v2582
  %v2584 = vpop.f32.mrf.mxu0
  %v2585 = vadd.f32 %v2486, %v2584
  %2586 = vmatmul.bf16.gmra.mxu0 %v368
  %v2587 = vpop.f32.mrf.mxu0
  %v2588 = vadd.f32 %v2489, %v2587
  %v2589 = vpop.f32.mrf.mxu0
  %v2590 = vadd.f32 %v2491, %v2589
  %2591 = vmatmul.bf16.gmra.mxu0 %v371
  %v2592 = vpop.f32.mrf.mxu0
  %v2593 = vadd.f32 %v2494, %v2592
  %v2594 = vpop.f32.mrf.mxu0
  %v2595 = vadd.f32 %v2496, %v2594
  %2596 = vmatmul.bf16.gmra.mxu0 %v374
  %v2597 = vpop.f32.mrf.mxu0
  %v2598 = vadd.f32 %v2499, %v2597
  %v2599 = vpop.f32.mrf.mxu0
  %v2600 = vadd.f32 %v2501, %v2599
  %2601 = vmatmul.bf16.gmra.mxu0 %v377
  %v2602 = vpop.f32.mrf.mxu0
  %v2603 = vadd.f32 %v2504, %v2602
  %v2604 = vpop.f32.mrf.mxu0
  %v2605 = vadd.f32 %v2506, %v2604
  %2606 = vmatmul.bf16.gmra.mxu0 %v380
  %v2607 = vpop.f32.mrf.mxu0
  %v2608 = vadd.f32 %v2509, %v2607
  %v2609 = vpop.f32.mrf.mxu0
  %v2610 = vadd.f32 %v2511, %v2609
  %2611 = vmatmul.bf16.gmra.mxu0 %v383
  %v2612 = vpop.f32.mrf.mxu0
  %v2613 = vadd.f32 %v2514, %v2612
  %v2614 = vpop.f32.mrf.mxu0
  %v2615 = vadd.f32 %v2516, %v2614
  %2616 = vdwg.mxu0
  %v2617 = vmax.f32 %v2528, %v2550
  %v2618 = vmax.f32 %v2530, %v2553
  %v2619 = vmax.f32 %v2533, %v2555
  %v2620 = vmax.f32 %v2535, %v2558
  %v2621 = vmax.f32 %v2538, %v2560
  %v2622 = vmax.f32 %v2540, %v2563
  %v2623 = vmax.f32 %v2543, %v2565
  %v2624 = vmax.f32 %v2545, %v2568
  %v2625 = vmax.f32 %v2548, %v2570
  %v2626 = vmax.f32 %v2573, %v2595
  %v2627 = vmax.f32 %v2575, %v2598
  %v2628 = vmax.f32 %v2578, %v2600
  %v2629 = vmax.f32 %v2580, %v2603
  %v2630 = vmax.f32 %v2583, %v2605
  %v2631 = vmax.f32 %v2585, %v2608
  %v2632 = vmax.f32 %v2588, %v2610
  %v2633 = vmax.f32 %v2590, %v2613
  %v2634 = vmax.f32 %v2593, %v2615
  %v2635 = vmax.f32 %v2617, %v2626
  %v2636 = vmax.f32 %v2618, %v2627
  %v2637 = vmax.f32 %v2619, %v2628
  %v2638 = vmax.f32 %v2620, %v2629
  %v2639 = vmax.f32 %v2621, %v2630
  %v2640 = vmax.f32 %v2622, %v2631
  %v2641 = vmax.f32 %v2623, %v2632
  %v2642 = vmax.f32 %v2624, %v2633
  %v2643 = vmax.f32 %v2625, %v2634
  %v2644 = vmax.f32 %v2635, 0.0
  %v2645 = vmax.f32 %v2636, 0.0
  %v2646 = vmax.f32 %v2637, 0.0
  %v2647 = vmax.f32 %v2638, 0.0
  %v2648 = vmax.f32 %v2639, 0.0
  %v2649 = vmax.f32 %v2640, 0.0
  %v2650 = vmax.f32 %v2641, 0.0
  %v2651 = vmax.f32 %v2642, 0.0
  %v2652 = vmax.f32 %v2643, 0.0
  %2653 = vst [vmem:[#allocation2 + $0x1b0] sm:$0xff] %v2644
  %2654 = vst [vmem:[#allocation2 + $0x1b8] sm:$0xff] %v2645
  %2655 = vst [vmem:[#allocation2 + $0x1c0] sm:$0xff] %v2646
  %2656 = vst [vmem:[#allocation2 + $0x1c8] sm:$0xff] %v2647
  %2657 = vst [vmem:[#allocation2 + $0x1d0] sm:$0xff] %v2648
  %2658 = vst [vmem:[#allocation2 + $0x1d8] sm:$0xff] %v2649
  %2659 = vst [vmem:[#allocation2 + $0x1e0] sm:$0xff] %v2650
  %2660 = vst [vmem:[#allocation2 + $0x1e8] sm:$0xff] %v2651
  %2661 = vst [vmem:[#allocation2 + $0x1f0] sm:$0xff] %v2652
  %v2662 = vld [vmem:[%s0 + $0xe0] sm:$0xf]
  %v2663 = vld [vmem:[%s0 + $0xe4] sm:$0xf]
  %v2664 = vld [vmem:[%s0 + $0xe8] sm:$0xf]
  %v2665 = vld [vmem:[%s0 + $0xec] sm:$0xf]
  %v2666 = vld [vmem:[%s0 + $0xf0] sm:$0xf]
  %v2667 = vld [vmem:[%s0 + $0xf4] sm:$0xf]
  %v2668 = vld [vmem:[%s0 + $0xf8] sm:$0xf]
  %v2669 = vld [vmem:[%s0 + $0xfc] sm:$0xf]
  %v2670 = vld [vmem:[%s0 + $0x100] sm:$0xf]
  %v2671 = vld [vmem:[%s0 + $0x104] sm:$0xf]
  %v2672 = vld [vmem:[%s0 + $0x108] sm:$0xf]
  %v2673 = vld [vmem:[%s0 + $0x10c] sm:$0xf]
  %v2674 = vld [vmem:[%s0 + $0x110] sm:$0xf]
  %v2675 = vld [vmem:[%s0 + $0x114] sm:$0xf]
  %v2676 = vld [vmem:[%s0 + $0x118] sm:$0xf]
  %v2677 = vld [vmem:[%s0 + $0x11c] sm:$0xf]
  %v2678 = vld [vmem:[%s0 + $0x120] sm:$0xf]
  %v2679 = vld [vmem:[%s0 + $0x124] sm:$0xf]
  %v2680 = vld [vmem:[%s0 + $0x128] sm:$0xf]
  %v2681 = vld [vmem:[%s0 + $0x12c] sm:$0xf]
  %v2682 = vld [vmem:[%s0 + $0x130] sm:$0xf]
  %v2683 = vld [vmem:[%s0 + $0x134] sm:$0xf]
  %v2684 = vld [vmem:[%s0 + $0x138] sm:$0xf]
  %v2685 = vld [vmem:[%s0 + $0x13c] sm:$0xf]
  %v2710 = vunpack.c.l.b16 %v2662
  %v2711 = vunpack.c.l.b16 %v2663
  %v2712 = vunpack.c.l.b16 %v2664
  %v2713 = vunpack.c.l.b16 %v2665
  %v2714 = vunpack.c.l.b16 %v2666
  %v2715 = vunpack.c.l.b16 %v2667
  %v2716 = vunpack.c.l.b16 %v2668
  %v2717 = vunpack.c.l.b16 %v2669
  %v2718 = vunpack.c.l.b16 %v2670
  %v2719 = vunpack.c.l.b16 %v2671
  %v2720 = vunpack.c.l.b16 %v2672
  %v2721 = vunpack.c.l.b16 %v2673
  %v2722 = vunpack.c.l.b16 %v2674
  %v2723 = vunpack.c.l.b16 %v2675
  %v2724 = vunpack.c.l.b16 %v2676
  %v2725 = vunpack.c.l.b16 %v2677
  %v2726 = vunpack.c.l.b16 %v2678
  %v2727 = vunpack.c.l.b16 %v2679
  %v2728 = vunpack.c.l.b16 %v2680
  %v2729 = vunpack.c.l.b16 %v2681
  %v2730 = vunpack.c.l.b16 %v2682
  %v2731 = vunpack.c.l.b16 %v2683
  %v2732 = vunpack.c.l.b16 %v2684
  %v2733 = vunpack.c.l.b16 %v2685
  %v2734 = vpack.c.b16 %v2711, %v2710
  %v2735 = vpack.c.b16 %v2713, %v2712
  %v2736 = vpack.c.b16 %v2715, %v2714
  %v2737 = vpack.c.b16 %v2717, %v2716
  %v2738 = vpack.c.b16 %v2719, %v2718
  %v2739 = vpack.c.b16 %v2721, %v2720
  %v2740 = vpack.c.b16 %v2723, %v2722
  %v2741 = vpack.c.b16 %v2725, %v2724
  %v2742 = vpack.c.b16 %v2727, %v2726
  %v2743 = vpack.c.b16 %v2729, %v2728
  %v2744 = vpack.c.b16 %v2731, %v2730
  %v2745 = vpack.c.b16 %v2733, %v2732
  %2758 = vmatpush.bf16.msra.mxu0 %v2741
  %2759 = vmatpush.bf16.msra.mxu0 %v2740
  %2760 = vmatpush.bf16.msra.mxu0 %v2739
  %2761 = vmatpush.bf16.msra.mxu0 %v2738
  %2762 = vmatpush.bf16.msra.mxu0 %v2737
  %2763 = vmatpush.bf16.msra.mxu0 %v2736
  %2764 = vmatpush.bf16.msra.mxu0 %v2735
  %2765 = vmatpush.bf16.msra.mxu0 %v2734
  %2766 = vmatmul.bf16.gmra.mxu0 %v204
  %v2767 = vpop.f32.mrf.mxu0
  %v2768 = vadd.f32 0.0, %v2767
  %v2769 = vpop.f32.mrf.mxu0
  %v2770 = vadd.f32 0.0, %v2769
  %2771 = vmatmul.bf16.gmra.mxu0 %v206
  %v2772 = vpop.f32.mrf.mxu0
  %v2773 = vadd.f32 0.0, %v2772
  %v2774 = vpop.f32.mrf.mxu0
  %v2775 = vadd.f32 0.0, %v2774
  %2776 = vmatmul.bf16.gmra.mxu0 %v208
  %v2777 = vpop.f32.mrf.mxu0
  %v2778 = vadd.f32 0.0, %v2777
  %v2779 = vpop.f32.mrf.mxu0
  %v2780 = vadd.f32 0.0, %v2779
  %2781 = vmatmul.bf16.gmra.mxu0 %v210
  %v2782 = vpop.f32.mrf.mxu0
  %v2783 = vadd.f32 0.0, %v2782
  %v2784 = vpop.f32.mrf.mxu0
  %v2785 = vadd.f32 0.0, %v2784
  %2786 = vmatmul.bf16.gmra.mxu0 %v212
  %v2787 = vpop.f32.mrf.mxu0
  %v2788 = vadd.f32 0.0, %v2787
  %v2789 = vpop.f32.mrf.mxu0
  %v2790 = vadd.f32 0.0, %v2789
  %2791 = vmatmul.bf16.gmra.mxu0 %v214
  %v2792 = vpop.f32.mrf.mxu0
  %v2793 = vadd.f32 0.0, %v2792
  %v2794 = vpop.f32.mrf.mxu0
  %v2795 = vadd.f32 0.0, %v2794
  %2796 = vmatmul.bf16.gmra.mxu0 %v216
  %v2797 = vpop.f32.mrf.mxu0
  %v2798 = vadd.f32 0.0, %v2797
  %v2799 = vpop.f32.mrf.mxu0
  %v2800 = vadd.f32 0.0, %v2799
  %2801 = vmatmul.bf16.gmra.mxu0 %v218
  %v2802 = vpop.f32.mrf.mxu0
  %v2803 = vadd.f32 0.0, %v2802
  %v2804 = vpop.f32.mrf.mxu0
  %v2805 = vadd.f32 0.0, %v2804
  %2806 = vmatmul.bf16.gmra.mxu0 %v220
  %v2807 = vpop.f32.mrf.mxu0
  %v2808 = vadd.f32 0.0, %v2807
  %v2809 = vpop.f32.mrf.mxu0
  %v2810 = vadd.f32 0.0, %v2809
  %2811 = vmatmul.bf16.gmra.mxu0 %v222
  %v2812 = vpop.f32.mrf.mxu0
  %v2813 = vadd.f32 0.0, %v2812
  %v2814 = vpop.f32.mrf.mxu0
  %v2815 = vadd.f32 0.0, %v2814
  %2816 = vmatmul.bf16.gmra.mxu0 %v224
  %v2817 = vpop.f32.mrf.mxu0
  %v2818 = vadd.f32 0.0, %v2817
  %v2819 = vpop.f32.mrf.mxu0
  %v2820 = vadd.f32 0.0, %v2819
  %2821 = vmatmul.bf16.gmra.mxu0 %v226
  %v2822 = vpop.f32.mrf.mxu0
  %v2823 = vadd.f32 0.0, %v2822
  %v2824 = vpop.f32.mrf.mxu0
  %v2825 = vadd.f32 0.0, %v2824
  %2826 = vmatmul.bf16.gmra.mxu0 %v228
  %v2827 = vpop.f32.mrf.mxu0
  %v2828 = vadd.f32 0.0, %v2827
  %v2829 = vpop.f32.mrf.mxu0
  %v2830 = vadd.f32 0.0, %v2829
  %2831 = vmatmul.bf16.gmra.mxu0 %v230
  %v2832 = vpop.f32.mrf.mxu0
  %v2833 = vadd.f32 0.0, %v2832
  %v2834 = vpop.f32.mrf.mxu0
  %v2835 = vadd.f32 0.0, %v2834
  %2836 = vmatmul.bf16.gmra.mxu0 %v232
  %v2837 = vpop.f32.mrf.mxu0
  %v2838 = vadd.f32 0.0, %v2837
  %v2839 = vpop.f32.mrf.mxu0
  %v2840 = vadd.f32 0.0, %v2839
  %2841 = vmatmul.bf16.gmra.mxu0 %v234
  %v2842 = vpop.f32.mrf.mxu0
  %v2843 = vadd.f32 0.0, %v2842
  %v2844 = vpop.f32.mrf.mxu0
  %v2845 = vadd.f32 0.0, %v2844
  %2846 = vmatmul.bf16.gmra.mxu0 %v236
  %v2847 = vpop.f32.mrf.mxu0
  %v2848 = vadd.f32 0.0, %v2847
  %v2849 = vpop.f32.mrf.mxu0
  %v2850 = vadd.f32 0.0, %v2849
  %2851 = vmatmul.bf16.gmra.mxu0 %v238
  %v2852 = vpop.f32.mrf.mxu0
  %v2853 = vadd.f32 0.0, %v2852
  %v2854 = vpop.f32.mrf.mxu0
  %v2855 = vadd.f32 0.0, %v2854
  %2856 = vdwg.mxu0
  %2857 = vmatpush.bf16.msra.mxu0 0
  %2858 = vmatpush.bf16.msra.mxu0 0
  %2859 = vmatpush.bf16.msra.mxu0 0
  %2860 = vmatpush.bf16.msra.mxu0 0
  %2861 = vmatpush.bf16.msra.mxu0 %v2745
  %2862 = vmatpush.bf16.msra.mxu0 %v2744
  %2863 = vmatpush.bf16.msra.mxu0 %v2743
  %2864 = vmatpush.bf16.msra.mxu0 %v2742
  %2865 = vmatmul.bf16.gmra.mxu0 %v332
  %v2866 = vpop.f32.mrf.mxu0
  %v2867 = vadd.f32 %v2768, %v2866
  %v2868 = vpop.f32.mrf.mxu0
  %v2869 = vadd.f32 %v2770, %v2868
  %2870 = vmatmul.bf16.gmra.mxu0 %v335
  %v2871 = vpop.f32.mrf.mxu0
  %v2872 = vadd.f32 %v2773, %v2871
  %v2873 = vpop.f32.mrf.mxu0
  %v2874 = vadd.f32 %v2775, %v2873
  %2875 = vmatmul.bf16.gmra.mxu0 %v338
  %v2876 = vpop.f32.mrf.mxu0
  %v2877 = vadd.f32 %v2778, %v2876
  %v2878 = vpop.f32.mrf.mxu0
  %v2879 = vadd.f32 %v2780, %v2878
  %2880 = vmatmul.bf16.gmra.mxu0 %v341
  %v2881 = vpop.f32.mrf.mxu0
  %v2882 = vadd.f32 %v2783, %v2881
  %v2883 = vpop.f32.mrf.mxu0
  %v2884 = vadd.f32 %v2785, %v2883
  %2885 = vmatmul.bf16.gmra.mxu0 %v344
  %v2886 = vpop.f32.mrf.mxu0
  %v2887 = vadd.f32 %v2788, %v2886
  %v2888 = vpop.f32.mrf.mxu0
  %v2889 = vadd.f32 %v2790, %v2888
  %2890 = vmatmul.bf16.gmra.mxu0 %v347
  %v2891 = vpop.f32.mrf.mxu0
  %v2892 = vadd.f32 %v2793, %v2891
  %v2893 = vpop.f32.mrf.mxu0
  %v2894 = vadd.f32 %v2795, %v2893
  %2895 = vmatmul.bf16.gmra.mxu0 %v350
  %v2896 = vpop.f32.mrf.mxu0
  %v2897 = vadd.f32 %v2798, %v2896
  %v2898 = vpop.f32.mrf.mxu0
  %v2899 = vadd.f32 %v2800, %v2898
  %2900 = vmatmul.bf16.gmra.mxu0 %v353
  %v2901 = vpop.f32.mrf.mxu0
  %v2902 = vadd.f32 %v2803, %v2901
  %v2903 = vpop.f32.mrf.mxu0
  %v2904 = vadd.f32 %v2805, %v2903
  %2905 = vmatmul.bf16.gmra.mxu0 %v356
  %v2906 = vpop.f32.mrf.mxu0
  %v2907 = vadd.f32 %v2808, %v2906
  %v2908 = vpop.f32.mrf.mxu0
  %v2909 = vadd.f32 %v2810, %v2908
  %2910 = vmatmul.bf16.gmra.mxu0 %v359
  %v2911 = vpop.f32.mrf.mxu0
  %v2912 = vadd.f32 %v2813, %v2911
  %v2913 = vpop.f32.mrf.mxu0
  %v2914 = vadd.f32 %v2815, %v2913
  %2915 = vmatmul.bf16.gmra.mxu0 %v362
  %v2916 = vpop.f32.mrf.mxu0
  %v2917 = vadd.f32 %v2818, %v2916
  %v2918 = vpop.f32.mrf.mxu0
  %v2919 = vadd.f32 %v2820, %v2918
  %2920 = vmatmul.bf16.gmra.mxu0 %v365
  %v2921 = vpop.f32.mrf.mxu0
  %v2922 = vadd.f32 %v2823, %v2921
  %v2923 = vpop.f32.mrf.mxu0
  %v2924 = vadd.f32 %v2825, %v2923
  %2925 = vmatmul.bf16.gmra.mxu0 %v368
  %v2926 = vpop.f32.mrf.mxu0
  %v2927 = vadd.f32 %v2828, %v2926
  %v2928 = vpop.f32.mrf.mxu0
  %v2929 = vadd.f32 %v2830, %v2928
  %2930 = vmatmul.bf16.gmra.mxu0 %v371
  %v2931 = vpop.f32.mrf.mxu0
  %v2932 = vadd.f32 %v2833, %v2931
  %v2933 = vpop.f32.mrf.mxu0
  %v2934 = vadd.f32 %v2835, %v2933
  %2935 = vmatmul.bf16.gmra.mxu0 %v374
  %v2936 = vpop.f32.mrf.mxu0
  %v2937 = vadd.f32 %v2838, %v2936
  %v2938 = vpop.f32.mrf.mxu0
  %v2939 = vadd.f32 %v2840, %v2938
  %2940 = vmatmul.bf16.gmra.mxu0 %v377
  %v2941 = vpop.f32.mrf.mxu0
  %v2942 = vadd.f32 %v2843, %v2941
  %v2943 = vpop.f32.mrf.mxu0
  %v2944 = vadd.f32 %v2845, %v2943
  %2945 = vmatmul.bf16.gmra.mxu0 %v380
  %v2946 = vpop.f32.mrf.mxu0
  %v2947 = vadd.f32 %v2848, %v2946
  %v2948 = vpop.f32.mrf.mxu0
  %v2949 = vadd.f32 %v2850, %v2948
  %2950 = vmatmul.bf16.gmra.mxu0 %v383
  %v2951 = vpop.f32.mrf.mxu0
  %v2952 = vadd.f32 %v2853, %v2951
  %v2953 = vpop.f32.mrf.mxu0
  %v2954 = vadd.f32 %v2855, %v2953
  %2955 = vdwg.mxu0
  %v2956 = vmax.f32 %v2867, %v2889
  %v2957 = vmax.f32 %v2869, %v2892
  %v2958 = vmax.f32 %v2872, %v2894
  %v2959 = vmax.f32 %v2874, %v2897
  %v2960 = vmax.f32 %v2877, %v2899
  %v2961 = vmax.f32 %v2879, %v2902
  %v2962 = vmax.f32 %v2882, %v2904
  %v2963 = vmax.f32 %v2884, %v2907
  %v2964 = vmax.f32 %v2887, %v2909
  %v2965 = vmax.f32 %v2912, %v2934
  %v2966 = vmax.f32 %v2914, %v2937
  %v2967 = vmax.f32 %v2917, %v2939
  %v2968 = vmax.f32 %v2919, %v2942
  %v2969 = vmax.f32 %v2922, %v2944
  %v2970 = vmax.f32 %v2924, %v2947
  %v2971 = vmax.f32 %v2927, %v2949
  %v2972 = vmax.f32 %v2929, %v2952
  %v2973 = vmax.f32 %v2932, %v2954
  %v2974 = vmax.f32 %v2956, %v2965
  %v2975 = vmax.f32 %v2957, %v2966
  %v2976 = vmax.f32 %v2958, %v2967
  %v2977 = vmax.f32 %v2959, %v2968
  %v2978 = vmax.f32 %v2960, %v2969
  %v2979 = vmax.f32 %v2961, %v2970
  %v2980 = vmax.f32 %v2962, %v2971
  %v2981 = vmax.f32 %v2963, %v2972
  %v2982 = vmax.f32 %v2964, %v2973
  %v2983 = vmax.f32 %v2974, 0.0
  %v2984 = vmax.f32 %v2975, 0.0
  %v2985 = vmax.f32 %v2976, 0.0
  %v2986 = vmax.f32 %v2977, 0.0
  %v2987 = vmax.f32 %v2978, 0.0
  %v2988 = vmax.f32 %v2979, 0.0
  %v2989 = vmax.f32 %v2980, 0.0
  %v2990 = vmax.f32 %v2981, 0.0
  %v2991 = vmax.f32 %v2982, 0.0
  %2992 = vst [vmem:[#allocation2 + $0x1f8] sm:$0xff] %v2983
  %2993 = vst [vmem:[#allocation2 + $0x200] sm:$0xff] %v2984
  %2994 = vst [vmem:[#allocation2 + $0x208] sm:$0xff] %v2985
  %2995 = vst [vmem:[#allocation2 + $0x210] sm:$0xff] %v2986
  %2996 = vst [vmem:[#allocation2 + $0x218] sm:$0xff] %v2987
  %2997 = vst [vmem:[#allocation2 + $0x220] sm:$0xff] %v2988
  %2998 = vst [vmem:[#allocation2 + $0x228] sm:$0xff] %v2989
  %2999 = vst [vmem:[#allocation2 + $0x230] sm:$0xff] %v2990
  %3000 = vst [vmem:[#allocation2 + $0x238] sm:$0xff] %v2991
  %v3001 = vld [vmem:[%s0 + $0x100] sm:$0xf]
  %v3002 = vld [vmem:[%s0 + $0x104] sm:$0xf]
  %v3003 = vld [vmem:[%s0 + $0x108] sm:$0xf]
  %v3004 = vld [vmem:[%s0 + $0x10c] sm:$0xf]
  %v3005 = vld [vmem:[%s0 + $0x110] sm:$0xf]
  %v3006 = vld [vmem:[%s0 + $0x114] sm:$0xf]
  %v3007 = vld [vmem:[%s0 + $0x118] sm:$0xf]
  %v3008 = vld [vmem:[%s0 + $0x11c] sm:$0xf]
  %v3009 = vld [vmem:[%s0 + $0x120] sm:$0xf]
  %v3010 = vld [vmem:[%s0 + $0x124] sm:$0xf]
  %v3011 = vld [vmem:[%s0 + $0x128] sm:$0xf]
  %v3012 = vld [vmem:[%s0 + $0x12c] sm:$0xf]
  %v3013 = vld [vmem:[%s0 + $0x130] sm:$0xf]
  %v3014 = vld [vmem:[%s0 + $0x134] sm:$0xf]
  %v3015 = vld [vmem:[%s0 + $0x138] sm:$0xf]
  %v3016 = vld [vmem:[%s0 + $0x13c] sm:$0xf]
  %v3017 = vld [vmem:[%s0 + $0x140] sm:$0xf]
  %v3018 = vld [vmem:[%s0 + $0x144] sm:$0xf]
  %v3019 = vld [vmem:[%s0 + $0x148] sm:$0xf]
  %v3020 = vld [vmem:[%s0 + $0x14c] sm:$0xf]
  %v3021 = vld [vmem:[%s0 + $0x150] sm:$0xf]
  %v3022 = vld [vmem:[%s0 + $0x154] sm:$0xf]
  %v3023 = vld [vmem:[%s0 + $0x158] sm:$0xf]
  %v3024 = vld [vmem:[%s0 + $0x15c] sm:$0xf]
  %v3049 = vunpack.c.l.b16 %v3001
  %v3050 = vunpack.c.l.b16 %v3002
  %v3051 = vunpack.c.l.b16 %v3003
  %v3052 = vunpack.c.l.b16 %v3004
  %v3053 = vunpack.c.l.b16 %v3005
  %v3054 = vunpack.c.l.b16 %v3006
  %v3055 = vunpack.c.l.b16 %v3007
  %v3056 = vunpack.c.l.b16 %v3008
  %v3057 = vunpack.c.l.b16 %v3009
  %v3058 = vunpack.c.l.b16 %v3010
  %v3059 = vunpack.c.l.b16 %v3011
  %v3060 = vunpack.c.l.b16 %v3012
  %v3061 = vunpack.c.l.b16 %v3013
  %v3062 = vunpack.c.l.b16 %v3014
  %v3063 = vunpack.c.l.b16 %v3015
  %v3064 = vunpack.c.l.b16 %v3016
  %v3065 = vunpack.c.l.b16 %v3017
  %v3066 = vunpack.c.l.b16 %v3018
  %v3067 = vunpack.c.l.b16 %v3019
  %v3068 = vunpack.c.l.b16 %v3020
  %v3069 = vunpack.c.l.b16 %v3021
  %v3070 = vunpack.c.l.b16 %v3022
  %v3071 = vunpack.c.l.b16 %v3023
  %v3072 = vunpack.c.l.b16 %v3024
  %v3073 = vpack.c.b16 %v3050, %v3049
  %v3074 = vpack.c.b16 %v3052, %v3051
  %v3075 = vpack.c.b16 %v3054, %v3053
  %v3076 = vpack.c.b16 %v3056, %v3055
  %v3077 = vpack.c.b16 %v3058, %v3057
  %v3078 = vpack.c.b16 %v3060, %v3059
  %v3079 = vpack.c.b16 %v3062, %v3061
  %v3080 = vpack.c.b16 %v3064, %v3063
  %v3081 = vpack.c.b16 %v3066, %v3065
  %v3082 = vpack.c.b16 %v3068, %v3067
  %v3083 = vpack.c.b16 %v3070, %v3069
  %v3084 = vpack.c.b16 %v3072, %v3071
  %3097 = vmatpush.bf16.msra.mxu0 %v3080
  %3098 = vmatpush.bf16.msra.mxu0 %v3079
  %3099 = vmatpush.bf16.msra.mxu0 %v3078
  %3100 = vmatpush.bf16.msra.mxu0 %v3077
  %3101 = vmatpush.bf16.msra.mxu0 %v3076
  %3102 = vmatpush.bf16.msra.mxu0 %v3075
  %3103 = vmatpush.bf16.msra.mxu0 %v3074
  %3104 = vmatpush.bf16.msra.mxu0 %v3073
  %3105 = vmatmul.bf16.gmra.mxu0 %v204
  %v3106 = vpop.f32.mrf.mxu0
  %v3107 = vadd.f32 0.0, %v3106
  %v3108 = vpop.f32.mrf.mxu0
  %v3109 = vadd.f32 0.0, %v3108
  %3110 = vmatmul.bf16.gmra.mxu0 %v206
  %v3111 = vpop.f32.mrf.mxu0
  %v3112 = vadd.f32 0.0, %v3111
  %v3113 = vpop.f32.mrf.mxu0
  %v3114 = vadd.f32 0.0, %v3113
  %3115 = vmatmul.bf16.gmra.mxu0 %v208
  %v3116 = vpop.f32.mrf.mxu0
  %v3117 = vadd.f32 0.0, %v3116
  %v3118 = vpop.f32.mrf.mxu0
  %v3119 = vadd.f32 0.0, %v3118
  %3120 = vmatmul.bf16.gmra.mxu0 %v210
  %v3121 = vpop.f32.mrf.mxu0
  %v3122 = vadd.f32 0.0, %v3121
  %v3123 = vpop.f32.mrf.mxu0
  %v3124 = vadd.f32 0.0, %v3123
  %3125 = vmatmul.bf16.gmra.mxu0 %v212
  %v3126 = vpop.f32.mrf.mxu0
  %v3127 = vadd.f32 0.0, %v3126
  %v3128 = vpop.f32.mrf.mxu0
  %v3129 = vadd.f32 0.0, %v3128
  %3130 = vmatmul.bf16.gmra.mxu0 %v214
  %v3131 = vpop.f32.mrf.mxu0
  %v3132 = vadd.f32 0.0, %v3131
  %v3133 = vpop.f32.mrf.mxu0
  %v3134 = vadd.f32 0.0, %v3133
  %3135 = vmatmul.bf16.gmra.mxu0 %v216
  %v3136 = vpop.f32.mrf.mxu0
  %v3137 = vadd.f32 0.0, %v3136
  %v3138 = vpop.f32.mrf.mxu0
  %v3139 = vadd.f32 0.0, %v3138
  %3140 = vmatmul.bf16.gmra.mxu0 %v218
  %v3141 = vpop.f32.mrf.mxu0
  %v3142 = vadd.f32 0.0, %v3141
  %v3143 = vpop.f32.mrf.mxu0
  %v3144 = vadd.f32 0.0, %v3143
  %3145 = vmatmul.bf16.gmra.mxu0 %v220
  %v3146 = vpop.f32.mrf.mxu0
  %v3147 = vadd.f32 0.0, %v3146
  %v3148 = vpop.f32.mrf.mxu0
  %v3149 = vadd.f32 0.0, %v3148
  %3150 = vmatmul.bf16.gmra.mxu0 %v222
  %v3151 = vpop.f32.mrf.mxu0
  %v3152 = vadd.f32 0.0, %v3151
  %v3153 = vpop.f32.mrf.mxu0
  %v3154 = vadd.f32 0.0, %v3153
  %3155 = vmatmul.bf16.gmra.mxu0 %v224
  %v3156 = vpop.f32.mrf.mxu0
  %v3157 = vadd.f32 0.0, %v3156
  %v3158 = vpop.f32.mrf.mxu0
  %v3159 = vadd.f32 0.0, %v3158
  %3160 = vmatmul.bf16.gmra.mxu0 %v226
  %v3161 = vpop.f32.mrf.mxu0
  %v3162 = vadd.f32 0.0, %v3161
  %v3163 = vpop.f32.mrf.mxu0
  %v3164 = vadd.f32 0.0, %v3163
  %3165 = vmatmul.bf16.gmra.mxu0 %v228
  %v3166 = vpop.f32.mrf.mxu0
  %v3167 = vadd.f32 0.0, %v3166
  %v3168 = vpop.f32.mrf.mxu0
  %v3169 = vadd.f32 0.0, %v3168
  %3170 = vmatmul.bf16.gmra.mxu0 %v230
  %v3171 = vpop.f32.mrf.mxu0
  %v3172 = vadd.f32 0.0, %v3171
  %v3173 = vpop.f32.mrf.mxu0
  %v3174 = vadd.f32 0.0, %v3173
  %3175 = vmatmul.bf16.gmra.mxu0 %v232
  %v3176 = vpop.f32.mrf.mxu0
  %v3177 = vadd.f32 0.0, %v3176
  %v3178 = vpop.f32.mrf.mxu0
  %v3179 = vadd.f32 0.0, %v3178
  %3180 = vmatmul.bf16.gmra.mxu0 %v234
  %v3181 = vpop.f32.mrf.mxu0
  %v3182 = vadd.f32 0.0, %v3181
  %v3183 = vpop.f32.mrf.mxu0
  %v3184 = vadd.f32 0.0, %v3183
  %3185 = vmatmul.bf16.gmra.mxu0 %v236
  %v3186 = vpop.f32.mrf.mxu0
  %v3187 = vadd.f32 0.0, %v3186
  %v3188 = vpop.f32.mrf.mxu0
  %v3189 = vadd.f32 0.0, %v3188
  %3190 = vmatmul.bf16.gmra.mxu0 %v238
  %v3191 = vpop.f32.mrf.mxu0
  %v3192 = vadd.f32 0.0, %v3191
  %v3193 = vpop.f32.mrf.mxu0
  %v3194 = vadd.f32 0.0, %v3193
  %3195 = vdwg.mxu0
  %3196 = vmatpush.bf16.msra.mxu0 0
  %3197 = vmatpush.bf16.msra.mxu0 0
  %3198 = vmatpush.bf16.msra.mxu0 0
  %3199 = vmatpush.bf16.msra.mxu0 0
  %3200 = vmatpush.bf16.msra.mxu0 %v3084
  %3201 = vmatpush.bf16.msra.mxu0 %v3083
  %3202 = vmatpush.bf16.msra.mxu0 %v3082
  %3203 = vmatpush.bf16.msra.mxu0 %v3081
  %3204 = vmatmul.bf16.gmra.mxu0 %v332
  %v3205 = vpop.f32.mrf.mxu0
  %v3206 = vadd.f32 %v3107, %v3205
  %v3207 = vpop.f32.mrf.mxu0
  %v3208 = vadd.f32 %v3109, %v3207
  %3209 = vmatmul.bf16.gmra.mxu0 %v335
  %v3210 = vpop.f32.mrf.mxu0
  %v3211 = vadd.f32 %v3112, %v3210
  %v3212 = vpop.f32.mrf.mxu0
  %v3213 = vadd.f32 %v3114, %v3212
  %3214 = vmatmul.bf16.gmra.mxu0 %v338
  %v3215 = vpop.f32.mrf.mxu0
  %v3216 = vadd.f32 %v3117, %v3215
  %v3217 = vpop.f32.mrf.mxu0
  %v3218 = vadd.f32 %v3119, %v3217
  %3219 = vmatmul.bf16.gmra.mxu0 %v341
  %v3220 = vpop.f32.mrf.mxu0
  %v3221 = vadd.f32 %v3122, %v3220
  %v3222 = vpop.f32.mrf.mxu0
  %v3223 = vadd.f32 %v3124, %v3222
  %3224 = vmatmul.bf16.gmra.mxu0 %v344
  %v3225 = vpop.f32.mrf.mxu0
  %v3226 = vadd.f32 %v3127, %v3225
  %v3227 = vpop.f32.mrf.mxu0
  %v3228 = vadd.f32 %v3129, %v3227
  %3229 = vmatmul.bf16.gmra.mxu0 %v347
  %v3230 = vpop.f32.mrf.mxu0
  %v3231 = vadd.f32 %v3132, %v3230
  %v3232 = vpop.f32.mrf.mxu0
  %v3233 = vadd.f32 %v3134, %v3232
  %3234 = vmatmul.bf16.gmra.mxu0 %v350
  %v3235 = vpop.f32.mrf.mxu0
  %v3236 = vadd.f32 %v3137, %v3235
  %v3237 = vpop.f32.mrf.mxu0
  %v3238 = vadd.f32 %v3139, %v3237
  %3239 = vmatmul.bf16.gmra.mxu0 %v353
  %v3240 = vpop.f32.mrf.mxu0
  %v3241 = vadd.f32 %v3142, %v3240
  %v3242 = vpop.f32.mrf.mxu0
  %v3243 = vadd.f32 %v3144, %v3242
  %3244 = vmatmul.bf16.gmra.mxu0 %v356
  %v3245 = vpop.f32.mrf.mxu0
  %v3246 = vadd.f32 %v3147, %v3245
  %v3247 = vpop.f32.mrf.mxu0
  %v3248 = vadd.f32 %v3149, %v3247
  %3249 = vmatmul.bf16.gmra.mxu0 %v359
  %v3250 = vpop.f32.mrf.mxu0
  %v3251 = vadd.f32 %v3152, %v3250
  %v3252 = vpop.f32.mrf.mxu0
  %v3253 = vadd.f32 %v3154, %v3252
  %3254 = vmatmul.bf16.gmra.mxu0 %v362
  %v3255 = vpop.f32.mrf.mxu0
  %v3256 = vadd.f32 %v3157, %v3255
  %v3257 = vpop.f32.mrf.mxu0
  %v3258 = vadd.f32 %v3159, %v3257
  %3259 = vmatmul.bf16.gmra.mxu0 %v365
  %v3260 = vpop.f32.mrf.mxu0
  %v3261 = vadd.f32 %v3162, %v3260
  %v3262 = vpop.f32.mrf.mxu0
  %v3263 = vadd.f32 %v3164, %v3262
  %3264 = vmatmul.bf16.gmra.mxu0 %v368
  %v3265 = vpop.f32.mrf.mxu0
  %v3266 = vadd.f32 %v3167, %v3265
  %v3267 = vpop.f32.mrf.mxu0
  %v3268 = vadd.f32 %v3169, %v3267
  %3269 = vmatmul.bf16.gmra.mxu0 %v371
  %v3270 = vpop.f32.mrf.mxu0
  %v3271 = vadd.f32 %v3172, %v3270
  %v3272 = vpop.f32.mrf.mxu0
  %v3273 = vadd.f32 %v3174, %v3272
  %3274 = vmatmul.bf16.gmra.mxu0 %v374
  %v3275 = vpop.f32.mrf.mxu0
  %v3276 = vadd.f32 %v3177, %v3275
  %v3277 = vpop.f32.mrf.mxu0
  %v3278 = vadd.f32 %v3179, %v3277
  %3279 = vmatmul.bf16.gmra.mxu0 %v377
  %v3280 = vpop.f32.mrf.mxu0
  %v3281 = vadd.f32 %v3182, %v3280
  %v3282 = vpop.f32.mrf.mxu0
  %v3283 = vadd.f32 %v3184, %v3282
  %3284 = vmatmul.bf16.gmra.mxu0 %v380
  %v3285 = vpop.f32.mrf.mxu0
  %v3286 = vadd.f32 %v3187, %v3285
  %v3287 = vpop.f32.mrf.mxu0
  %v3288 = vadd.f32 %v3189, %v3287
  %3289 = vmatmul.bf16.gmra.mxu0 %v383
  %v3290 = vpop.f32.mrf.mxu0
  %v3291 = vadd.f32 %v3192, %v3290
  %v3292 = vpop.f32.mrf.mxu0
  %v3293 = vadd.f32 %v3194, %v3292
  %3294 = vdwg.mxu0
  %v3295 = vmax.f32 %v3206, %v3228
  %v3296 = vmax.f32 %v3208, %v3231
  %v3297 = vmax.f32 %v3211, %v3233
  %v3298 = vmax.f32 %v3213, %v3236
  %v3299 = vmax.f32 %v3216, %v3238
  %v3300 = vmax.f32 %v3218, %v3241
  %v3301 = vmax.f32 %v3221, %v3243
  %v3302 = vmax.f32 %v3223, %v3246
  %v3303 = vmax.f32 %v3226, %v3248
  %v3304 = vmax.f32 %v3251, %v3273
  %v3305 = vmax.f32 %v3253, %v3276
  %v3306 = vmax.f32 %v3256, %v3278
  %v3307 = vmax.f32 %v3258, %v3281
  %v3308 = vmax.f32 %v3261, %v3283
  %v3309 = vmax.f32 %v3263, %v3286
  %v3310 = vmax.f32 %v3266, %v3288
  %v3311 = vmax.f32 %v3268, %v3291
  %v3312 = vmax.f32 %v3271, %v3293
  %v3313 = vmax.f32 %v3295, %v3304
  %v3314 = vmax.f32 %v3296, %v3305
  %v3315 = vmax.f32 %v3297, %v3306
  %v3316 = vmax.f32 %v3298, %v3307
  %v3317 = vmax.f32 %v3299, %v3308
  %v3318 = vmax.f32 %v3300, %v3309
  %v3319 = vmax.f32 %v3301, %v3310
  %v3320 = vmax.f32 %v3302, %v3311
  %v3321 = vmax.f32 %v3303, %v3312
  %v3322 = vmax.f32 %v3313, 0.0
  %v3323 = vmax.f32 %v3314, 0.0
  %v3324 = vmax.f32 %v3315, 0.0
  %v3325 = vmax.f32 %v3316, 0.0
  %v3326 = vmax.f32 %v3317, 0.0
  %v3327 = vmax.f32 %v3318, 0.0
  %v3328 = vmax.f32 %v3319, 0.0
  %v3329 = vmax.f32 %v3320, 0.0
  %v3330 = vmax.f32 %v3321, 0.0
  %3331 = vst [vmem:[#allocation2 + $0x240] sm:$0xff] %v3322
  %3332 = vst [vmem:[#allocation2 + $0x248] sm:$0xff] %v3323
  %3333 = vst [vmem:[#allocation2 + $0x250] sm:$0xff] %v3324
  %3334 = vst [vmem:[#allocation2 + $0x258] sm:$0xff] %v3325
  %3335 = vst [vmem:[#allocation2 + $0x260] sm:$0xff] %v3326
  %3336 = vst [vmem:[#allocation2 + $0x268] sm:$0xff] %v3327
  %3337 = vst [vmem:[#allocation2 + $0x270] sm:$0xff] %v3328
  %3338 = vst [vmem:[#allocation2 + $0x278] sm:$0xff] %v3329
  %3339 = vst [vmem:[#allocation2 + $0x280] sm:$0xff] %v3330
  %v3340 = vld [vmem:[%s0 + $0x120] sm:$0xf]
  %v3341 = vld [vmem:[%s0 + $0x124] sm:$0xf]
  %v3342 = vld [vmem:[%s0 + $0x128] sm:$0xf]
  %v3343 = vld [vmem:[%s0 + $0x12c] sm:$0xf]
  %v3344 = vld [vmem:[%s0 + $0x130] sm:$0xf]
  %v3345 = vld [vmem:[%s0 + $0x134] sm:$0xf]
  %v3346 = vld [vmem:[%s0 + $0x138] sm:$0xf]
  %v3347 = vld [vmem:[%s0 + $0x13c] sm:$0xf]
  %v3348 = vld [vmem:[%s0 + $0x140] sm:$0xf]
  %v3349 = vld [vmem:[%s0 + $0x144] sm:$0xf]
  %v3350 = vld [vmem:[%s0 + $0x148] sm:$0xf]
  %v3351 = vld [vmem:[%s0 + $0x14c] sm:$0xf]
  %v3352 = vld [vmem:[%s0 + $0x150] sm:$0xf]
  %v3353 = vld [vmem:[%s0 + $0x154] sm:$0xf]
  %v3354 = vld [vmem:[%s0 + $0x158] sm:$0xf]
  %v3355 = vld [vmem:[%s0 + $0x15c] sm:$0xf]
  %v3356 = vld [vmem:[%s0 + $0x160] sm:$0xf]
  %v3357 = vld [vmem:[%s0 + $0x164] sm:$0xf]
  %v3358 = vld [vmem:[%s0 + $0x168] sm:$0xf]
  %v3359 = vld [vmem:[%s0 + $0x16c] sm:$0xf]
  %v3360 = vld [vmem:[%s0 + $0x170] sm:$0xf]
  %v3361 = vld [vmem:[%s0 + $0x174] sm:$0xf]
  %v3362 = vld [vmem:[%s0 + $0x178] sm:$0xf]
  %v3363 = vld [vmem:[%s0 + $0x17c] sm:$0xf]
  %v3388 = vunpack.c.l.b16 %v3340
  %v3389 = vunpack.c.l.b16 %v3341
  %v3390 = vunpack.c.l.b16 %v3342
  %v3391 = vunpack.c.l.b16 %v3343
  %v3392 = vunpack.c.l.b16 %v3344
  %v3393 = vunpack.c.l.b16 %v3345
  %v3394 = vunpack.c.l.b16 %v3346
  %v3395 = vunpack.c.l.b16 %v3347
  %v3396 = vunpack.c.l.b16 %v3348
  %v3397 = vunpack.c.l.b16 %v3349
  %v3398 = vunpack.c.l.b16 %v3350
  %v3399 = vunpack.c.l.b16 %v3351
  %v3400 = vunpack.c.l.b16 %v3352
  %v3401 = vunpack.c.l.b16 %v3353
  %v3402 = vunpack.c.l.b16 %v3354
  %v3403 = vunpack.c.l.b16 %v3355
  %v3404 = vunpack.c.l.b16 %v3356
  %v3405 = vunpack.c.l.b16 %v3357
  %v3406 = vunpack.c.l.b16 %v3358
  %v3407 = vunpack.c.l.b16 %v3359
  %v3408 = vunpack.c.l.b16 %v3360
  %v3409 = vunpack.c.l.b16 %v3361
  %v3410 = vunpack.c.l.b16 %v3362
  %v3411 = vunpack.c.l.b16 %v3363
  %v3412 = vpack.c.b16 %v3389, %v3388
  %v3413 = vpack.c.b16 %v3391, %v3390
  %v3414 = vpack.c.b16 %v3393, %v3392
  %v3415 = vpack.c.b16 %v3395, %v3394
  %v3416 = vpack.c.b16 %v3397, %v3396
  %v3417 = vpack.c.b16 %v3399, %v3398
  %v3418 = vpack.c.b16 %v3401, %v3400
  %v3419 = vpack.c.b16 %v3403, %v3402
  %v3420 = vpack.c.b16 %v3405, %v3404
  %v3421 = vpack.c.b16 %v3407, %v3406
  %v3422 = vpack.c.b16 %v3409, %v3408
  %v3423 = vpack.c.b16 %v3411, %v3410
  %3436 = vmatpush.bf16.msra.mxu0 %v3419
  %3437 = vmatpush.bf16.msra.mxu0 %v3418
  %3438 = vmatpush.bf16.msra.mxu0 %v3417
  %3439 = vmatpush.bf16.msra.mxu0 %v3416
  %3440 = vmatpush.bf16.msra.mxu0 %v3415
  %3441 = vmatpush.bf16.msra.mxu0 %v3414
  %3442 = vmatpush.bf16.msra.mxu0 %v3413
  %3443 = vmatpush.bf16.msra.mxu0 %v3412
  %3444 = vmatmul.bf16.gmra.mxu0 %v204
  %v3445 = vpop.f32.mrf.mxu0
  %v3446 = vadd.f32 0.0, %v3445
  %v3447 = vpop.f32.mrf.mxu0
  %v3448 = vadd.f32 0.0, %v3447
  %3449 = vmatmul.bf16.gmra.mxu0 %v206
  %v3450 = vpop.f32.mrf.mxu0
  %v3451 = vadd.f32 0.0, %v3450
  %v3452 = vpop.f32.mrf.mxu0
  %v3453 = vadd.f32 0.0, %v3452
  %3454 = vmatmul.bf16.gmra.mxu0 %v208
  %v3455 = vpop.f32.mrf.mxu0
  %v3456 = vadd.f32 0.0, %v3455
  %v3457 = vpop.f32.mrf.mxu0
  %v3458 = vadd.f32 0.0, %v3457
  %3459 = vmatmul.bf16.gmra.mxu0 %v210
  %v3460 = vpop.f32.mrf.mxu0
  %v3461 = vadd.f32 0.0, %v3460
  %v3462 = vpop.f32.mrf.mxu0
  %v3463 = vadd.f32 0.0, %v3462
  %3464 = vmatmul.bf16.gmra.mxu0 %v212
  %v3465 = vpop.f32.mrf.mxu0
  %v3466 = vadd.f32 0.0, %v3465
  %v3467 = vpop.f32.mrf.mxu0
  %v3468 = vadd.f32 0.0, %v3467
  %3469 = vmatmul.bf16.gmra.mxu0 %v214
  %v3470 = vpop.f32.mrf.mxu0
  %v3471 = vadd.f32 0.0, %v3470
  %v3472 = vpop.f32.mrf.mxu0
  %v3473 = vadd.f32 0.0, %v3472
  %3474 = vmatmul.bf16.gmra.mxu0 %v216
  %v3475 = vpop.f32.mrf.mxu0
  %v3476 = vadd.f32 0.0, %v3475
  %v3477 = vpop.f32.mrf.mxu0
  %v3478 = vadd.f32 0.0, %v3477
  %3479 = vmatmul.bf16.gmra.mxu0 %v218
  %v3480 = vpop.f32.mrf.mxu0
  %v3481 = vadd.f32 0.0, %v3480
  %v3482 = vpop.f32.mrf.mxu0
  %v3483 = vadd.f32 0.0, %v3482
  %3484 = vmatmul.bf16.gmra.mxu0 %v220
  %v3485 = vpop.f32.mrf.mxu0
  %v3486 = vadd.f32 0.0, %v3485
  %v3487 = vpop.f32.mrf.mxu0
  %v3488 = vadd.f32 0.0, %v3487
  %3489 = vmatmul.bf16.gmra.mxu0 %v222
  %v3490 = vpop.f32.mrf.mxu0
  %v3491 = vadd.f32 0.0, %v3490
  %v3492 = vpop.f32.mrf.mxu0
  %v3493 = vadd.f32 0.0, %v3492
  %3494 = vmatmul.bf16.gmra.mxu0 %v224
  %v3495 = vpop.f32.mrf.mxu0
  %v3496 = vadd.f32 0.0, %v3495
  %v3497 = vpop.f32.mrf.mxu0
  %v3498 = vadd.f32 0.0, %v3497
  %3499 = vmatmul.bf16.gmra.mxu0 %v226
  %v3500 = vpop.f32.mrf.mxu0
  %v3501 = vadd.f32 0.0, %v3500
  %v3502 = vpop.f32.mrf.mxu0
  %v3503 = vadd.f32 0.0, %v3502
  %3504 = vmatmul.bf16.gmra.mxu0 %v228
  %v3505 = vpop.f32.mrf.mxu0
  %v3506 = vadd.f32 0.0, %v3505
  %v3507 = vpop.f32.mrf.mxu0
  %v3508 = vadd.f32 0.0, %v3507
  %3509 = vmatmul.bf16.gmra.mxu0 %v230
  %v3510 = vpop.f32.mrf.mxu0
  %v3511 = vadd.f32 0.0, %v3510
  %v3512 = vpop.f32.mrf.mxu0
  %v3513 = vadd.f32 0.0, %v3512
  %3514 = vmatmul.bf16.gmra.mxu0 %v232
  %v3515 = vpop.f32.mrf.mxu0
  %v3516 = vadd.f32 0.0, %v3515
  %v3517 = vpop.f32.mrf.mxu0
  %v3518 = vadd.f32 0.0, %v3517
  %3519 = vmatmul.bf16.gmra.mxu0 %v234
  %v3520 = vpop.f32.mrf.mxu0
  %v3521 = vadd.f32 0.0, %v3520
  %v3522 = vpop.f32.mrf.mxu0
  %v3523 = vadd.f32 0.0, %v3522
  %3524 = vmatmul.bf16.gmra.mxu0 %v236
  %v3525 = vpop.f32.mrf.mxu0
  %v3526 = vadd.f32 0.0, %v3525
  %v3527 = vpop.f32.mrf.mxu0
  %v3528 = vadd.f32 0.0, %v3527
  %3529 = vmatmul.bf16.gmra.mxu0 %v238
  %v3530 = vpop.f32.mrf.mxu0
  %v3531 = vadd.f32 0.0, %v3530
  %v3532 = vpop.f32.mrf.mxu0
  %v3533 = vadd.f32 0.0, %v3532
  %3534 = vdwg.mxu0
  %3535 = vmatpush.bf16.msra.mxu0 0
  %3536 = vmatpush.bf16.msra.mxu0 0
  %3537 = vmatpush.bf16.msra.mxu0 0
  %3538 = vmatpush.bf16.msra.mxu0 0
  %3539 = vmatpush.bf16.msra.mxu0 %v3423
  %3540 = vmatpush.bf16.msra.mxu0 %v3422
  %3541 = vmatpush.bf16.msra.mxu0 %v3421
  %3542 = vmatpush.bf16.msra.mxu0 %v3420
  %3543 = vmatmul.bf16.gmra.mxu0 %v332
  %v3544 = vpop.f32.mrf.mxu0
  %v3545 = vadd.f32 %v3446, %v3544
  %v3546 = vpop.f32.mrf.mxu0
  %v3547 = vadd.f32 %v3448, %v3546
  %3548 = vmatmul.bf16.gmra.mxu0 %v335
  %v3549 = vpop.f32.mrf.mxu0
  %v3550 = vadd.f32 %v3451, %v3549
  %v3551 = vpop.f32.mrf.mxu0
  %v3552 = vadd.f32 %v3453, %v3551
  %3553 = vmatmul.bf16.gmra.mxu0 %v338
  %v3554 = vpop.f32.mrf.mxu0
  %v3555 = vadd.f32 %v3456, %v3554
  %v3556 = vpop.f32.mrf.mxu0
  %v3557 = vadd.f32 %v3458, %v3556
  %3558 = vmatmul.bf16.gmra.mxu0 %v341
  %v3559 = vpop.f32.mrf.mxu0
  %v3560 = vadd.f32 %v3461, %v3559
  %v3561 = vpop.f32.mrf.mxu0
  %v3562 = vadd.f32 %v3463, %v3561
  %3563 = vmatmul.bf16.gmra.mxu0 %v344
  %v3564 = vpop.f32.mrf.mxu0
  %v3565 = vadd.f32 %v3466, %v3564
  %v3566 = vpop.f32.mrf.mxu0
  %v3567 = vadd.f32 %v3468, %v3566
  %3568 = vmatmul.bf16.gmra.mxu0 %v347
  %v3569 = vpop.f32.mrf.mxu0
  %v3570 = vadd.f32 %v3471, %v3569
  %v3571 = vpop.f32.mrf.mxu0
  %v3572 = vadd.f32 %v3473, %v3571
  %3573 = vmatmul.bf16.gmra.mxu0 %v350
  %v3574 = vpop.f32.mrf.mxu0
  %v3575 = vadd.f32 %v3476, %v3574
  %v3576 = vpop.f32.mrf.mxu0
  %v3577 = vadd.f32 %v3478, %v3576
  %3578 = vmatmul.bf16.gmra.mxu0 %v353
  %v3579 = vpop.f32.mrf.mxu0
  %v3580 = vadd.f32 %v3481, %v3579
  %v3581 = vpop.f32.mrf.mxu0
  %v3582 = vadd.f32 %v3483, %v3581
  %3583 = vmatmul.bf16.gmra.mxu0 %v356
  %v3584 = vpop.f32.mrf.mxu0
  %v3585 = vadd.f32 %v3486, %v3584
  %v3586 = vpop.f32.mrf.mxu0
  %v3587 = vadd.f32 %v3488, %v3586
  %3588 = vmatmul.bf16.gmra.mxu0 %v359
  %v3589 = vpop.f32.mrf.mxu0
  %v3590 = vadd.f32 %v3491, %v3589
  %v3591 = vpop.f32.mrf.mxu0
  %v3592 = vadd.f32 %v3493, %v3591
  %3593 = vmatmul.bf16.gmra.mxu0 %v362
  %v3594 = vpop.f32.mrf.mxu0
  %v3595 = vadd.f32 %v3496, %v3594
  %v3596 = vpop.f32.mrf.mxu0
  %v3597 = vadd.f32 %v3498, %v3596
  %3598 = vmatmul.bf16.gmra.mxu0 %v365
  %v3599 = vpop.f32.mrf.mxu0
  %v3600 = vadd.f32 %v3501, %v3599
  %v3601 = vpop.f32.mrf.mxu0
  %v3602 = vadd.f32 %v3503, %v3601
  %3603 = vmatmul.bf16.gmra.mxu0 %v368
  %v3604 = vpop.f32.mrf.mxu0
  %v3605 = vadd.f32 %v3506, %v3604
  %v3606 = vpop.f32.mrf.mxu0
  %v3607 = vadd.f32 %v3508, %v3606
  %3608 = vmatmul.bf16.gmra.mxu0 %v371
  %v3609 = vpop.f32.mrf.mxu0
  %v3610 = vadd.f32 %v3511, %v3609
  %v3611 = vpop.f32.mrf.mxu0
  %v3612 = vadd.f32 %v3513, %v3611
  %3613 = vmatmul.bf16.gmra.mxu0 %v374
  %v3614 = vpop.f32.mrf.mxu0
  %v3615 = vadd.f32 %v3516, %v3614
  %v3616 = vpop.f32.mrf.mxu0
  %v3617 = vadd.f32 %v3518, %v3616
  %3618 = vmatmul.bf16.gmra.mxu0 %v377
  %v3619 = vpop.f32.mrf.mxu0
  %v3620 = vadd.f32 %v3521, %v3619
  %v3621 = vpop.f32.mrf.mxu0
  %v3622 = vadd.f32 %v3523, %v3621
  %3623 = vmatmul.bf16.gmra.mxu0 %v380
  %v3624 = vpop.f32.mrf.mxu0
  %v3625 = vadd.f32 %v3526, %v3624
  %v3626 = vpop.f32.mrf.mxu0
  %v3627 = vadd.f32 %v3528, %v3626
  %3628 = vmatmul.bf16.gmra.mxu0 %v383
  %v3629 = vpop.f32.mrf.mxu0
  %v3630 = vadd.f32 %v3531, %v3629
  %v3631 = vpop.f32.mrf.mxu0
  %v3632 = vadd.f32 %v3533, %v3631
  %3633 = vdwg.mxu0
  %v3634 = vmax.f32 %v3545, %v3567
  %v3635 = vmax.f32 %v3547, %v3570
  %v3636 = vmax.f32 %v3550, %v3572
  %v3637 = vmax.f32 %v3552, %v3575
  %v3638 = vmax.f32 %v3555, %v3577
  %v3639 = vmax.f32 %v3557, %v3580
  %v3640 = vmax.f32 %v3560, %v3582
  %v3641 = vmax.f32 %v3562, %v3585
  %v3642 = vmax.f32 %v3565, %v3587
  %v3643 = vmax.f32 %v3590, %v3612
  %v3644 = vmax.f32 %v3592, %v3615
  %v3645 = vmax.f32 %v3595, %v3617
  %v3646 = vmax.f32 %v3597, %v3620
  %v3647 = vmax.f32 %v3600, %v3622
  %v3648 = vmax.f32 %v3602, %v3625
  %v3649 = vmax.f32 %v3605, %v3627
  %v3650 = vmax.f32 %v3607, %v3630
  %v3651 = vmax.f32 %v3610, %v3632
  %v3652 = vmax.f32 %v3634, %v3643
  %v3653 = vmax.f32 %v3635, %v3644
  %v3654 = vmax.f32 %v3636, %v3645
  %v3655 = vmax.f32 %v3637, %v3646
  %v3656 = vmax.f32 %v3638, %v3647
  %v3657 = vmax.f32 %v3639, %v3648
  %v3658 = vmax.f32 %v3640, %v3649
  %v3659 = vmax.f32 %v3641, %v3650
  %v3660 = vmax.f32 %v3642, %v3651
  %v3661 = vmax.f32 %v3652, 0.0
  %v3662 = vmax.f32 %v3653, 0.0
  %v3663 = vmax.f32 %v3654, 0.0
  %v3664 = vmax.f32 %v3655, 0.0
  %v3665 = vmax.f32 %v3656, 0.0
  %v3666 = vmax.f32 %v3657, 0.0
  %v3667 = vmax.f32 %v3658, 0.0
  %v3668 = vmax.f32 %v3659, 0.0
  %v3669 = vmax.f32 %v3660, 0.0
  %3670 = vst [vmem:[#allocation2 + $0x288] sm:$0xff] %v3661
  %3671 = vst [vmem:[#allocation2 + $0x290] sm:$0xff] %v3662
  %3672 = vst [vmem:[#allocation2 + $0x298] sm:$0xff] %v3663
  %3673 = vst [vmem:[#allocation2 + $0x2a0] sm:$0xff] %v3664
  %3674 = vst [vmem:[#allocation2 + $0x2a8] sm:$0xff] %v3665
  %3675 = vst [vmem:[#allocation2 + $0x2b0] sm:$0xff] %v3666
  %3676 = vst [vmem:[#allocation2 + $0x2b8] sm:$0xff] %v3667
  %3677 = vst [vmem:[#allocation2 + $0x2c0] sm:$0xff] %v3668
  %3678 = vst [vmem:[#allocation2 + $0x2c8] sm:$0xff] %v3669
  %v3679 = vld [vmem:[%s0 + $0x140] sm:$0xf]
  %v3680 = vld [vmem:[%s0 + $0x144] sm:$0xf]
  %v3681 = vld [vmem:[%s0 + $0x148] sm:$0xf]
  %v3682 = vld [vmem:[%s0 + $0x14c] sm:$0xf]
  %v3683 = vld [vmem:[%s0 + $0x150] sm:$0xf]
  %v3684 = vld [vmem:[%s0 + $0x154] sm:$0xf]
  %v3685 = vld [vmem:[%s0 + $0x158] sm:$0xf]
  %v3686 = vld [vmem:[%s0 + $0x15c] sm:$0xf]
  %v3687 = vld [vmem:[%s0 + $0x160] sm:$0xf]
  %v3688 = vld [vmem:[%s0 + $0x164] sm:$0xf]
  %v3689 = vld [vmem:[%s0 + $0x168] sm:$0xf]
  %v3690 = vld [vmem:[%s0 + $0x16c] sm:$0xf]
  %v3691 = vld [vmem:[%s0 + $0x170] sm:$0xf]
  %v3692 = vld [vmem:[%s0 + $0x174] sm:$0xf]
  %v3693 = vld [vmem:[%s0 + $0x178] sm:$0xf]
  %v3694 = vld [vmem:[%s0 + $0x17c] sm:$0xf]
  %v3695 = vld [vmem:[%s0 + $0x180] sm:$0xf]
  %v3696 = vld [vmem:[%s0 + $0x184] sm:$0xf]
  %v3697 = vld [vmem:[%s0 + $0x188] sm:$0xf]
  %v3698 = vld [vmem:[%s0 + $0x18c] sm:$0xf]
  %v3699 = vld [vmem:[%s0 + $0x190] sm:$0xf]
  %v3700 = vld [vmem:[%s0 + $0x194] sm:$0xf]
  %v3701 = vld [vmem:[%s0 + $0x198] sm:$0xf]
  %v3702 = vld [vmem:[%s0 + $0x19c] sm:$0xf]
  %v3727 = vunpack.c.l.b16 %v3679
  %v3728 = vunpack.c.l.b16 %v3680
  %v3729 = vunpack.c.l.b16 %v3681
  %v3730 = vunpack.c.l.b16 %v3682
  %v3731 = vunpack.c.l.b16 %v3683
  %v3732 = vunpack.c.l.b16 %v3684
  %v3733 = vunpack.c.l.b16 %v3685
  %v3734 = vunpack.c.l.b16 %v3686
  %v3735 = vunpack.c.l.b16 %v3687
  %v3736 = vunpack.c.l.b16 %v3688
  %v3737 = vunpack.c.l.b16 %v3689
  %v3738 = vunpack.c.l.b16 %v3690
  %v3739 = vunpack.c.l.b16 %v3691
  %v3740 = vunpack.c.l.b16 %v3692
  %v3741 = vunpack.c.l.b16 %v3693
  %v3742 = vunpack.c.l.b16 %v3694
  %v3743 = vunpack.c.l.b16 %v3695
  %v3744 = vunpack.c.l.b16 %v3696
  %v3745 = vunpack.c.l.b16 %v3697
  %v3746 = vunpack.c.l.b16 %v3698
  %v3747 = vunpack.c.l.b16 %v3699
  %v3748 = vunpack.c.l.b16 %v3700
  %v3749 = vunpack.c.l.b16 %v3701
  %v3750 = vunpack.c.l.b16 %v3702
  %v3751 = vpack.c.b16 %v3728, %v3727
  %v3752 = vpack.c.b16 %v3730, %v3729
  %v3753 = vpack.c.b16 %v3732, %v3731
  %v3754 = vpack.c.b16 %v3734, %v3733
  %v3755 = vpack.c.b16 %v3736, %v3735
  %v3756 = vpack.c.b16 %v3738, %v3737
  %v3757 = vpack.c.b16 %v3740, %v3739
  %v3758 = vpack.c.b16 %v3742, %v3741
  %v3759 = vpack.c.b16 %v3744, %v3743
  %v3760 = vpack.c.b16 %v3746, %v3745
  %v3761 = vpack.c.b16 %v3748, %v3747
  %v3762 = vpack.c.b16 %v3750, %v3749
  %3775 = vmatpush.bf16.msra.mxu0 %v3758
  %3776 = vmatpush.bf16.msra.mxu0 %v3757
  %3777 = vmatpush.bf16.msra.mxu0 %v3756
  %3778 = vmatpush.bf16.msra.mxu0 %v3755
  %3779 = vmatpush.bf16.msra.mxu0 %v3754
  %3780 = vmatpush.bf16.msra.mxu0 %v3753
  %3781 = vmatpush.bf16.msra.mxu0 %v3752
  %3782 = vmatpush.bf16.msra.mxu0 %v3751
  %3783 = vmatmul.bf16.gmra.mxu0 %v204
  %v3784 = vpop.f32.mrf.mxu0
  %v3785 = vadd.f32 0.0, %v3784
  %v3786 = vpop.f32.mrf.mxu0
  %v3787 = vadd.f32 0.0, %v3786
  %3788 = vmatmul.bf16.gmra.mxu0 %v206
  %v3789 = vpop.f32.mrf.mxu0
  %v3790 = vadd.f32 0.0, %v3789
  %v3791 = vpop.f32.mrf.mxu0
  %v3792 = vadd.f32 0.0, %v3791
  %3793 = vmatmul.bf16.gmra.mxu0 %v208
  %v3794 = vpop.f32.mrf.mxu0
  %v3795 = vadd.f32 0.0, %v3794
  %v3796 = vpop.f32.mrf.mxu0
  %v3797 = vadd.f32 0.0, %v3796
  %3798 = vmatmul.bf16.gmra.mxu0 %v210
  %v3799 = vpop.f32.mrf.mxu0
  %v3800 = vadd.f32 0.0, %v3799
  %v3801 = vpop.f32.mrf.mxu0
  %v3802 = vadd.f32 0.0, %v3801
  %3803 = vmatmul.bf16.gmra.mxu0 %v212
  %v3804 = vpop.f32.mrf.mxu0
  %v3805 = vadd.f32 0.0, %v3804
  %v3806 = vpop.f32.mrf.mxu0
  %v3807 = vadd.f32 0.0, %v3806
  %3808 = vmatmul.bf16.gmra.mxu0 %v214
  %v3809 = vpop.f32.mrf.mxu0
  %v3810 = vadd.f32 0.0, %v3809
  %v3811 = vpop.f32.mrf.mxu0
  %v3812 = vadd.f32 0.0, %v3811
  %3813 = vmatmul.bf16.gmra.mxu0 %v216
  %v3814 = vpop.f32.mrf.mxu0
  %v3815 = vadd.f32 0.0, %v3814
  %v3816 = vpop.f32.mrf.mxu0
  %v3817 = vadd.f32 0.0, %v3816
  %3818 = vmatmul.bf16.gmra.mxu0 %v218
  %v3819 = vpop.f32.mrf.mxu0
  %v3820 = vadd.f32 0.0, %v3819
  %v3821 = vpop.f32.mrf.mxu0
  %v3822 = vadd.f32 0.0, %v3821
  %3823 = vmatmul.bf16.gmra.mxu0 %v220
  %v3824 = vpop.f32.mrf.mxu0
  %v3825 = vadd.f32 0.0, %v3824
  %v3826 = vpop.f32.mrf.mxu0
  %v3827 = vadd.f32 0.0, %v3826
  %3828 = vmatmul.bf16.gmra.mxu0 %v222
  %v3829 = vpop.f32.mrf.mxu0
  %v3830 = vadd.f32 0.0, %v3829
  %v3831 = vpop.f32.mrf.mxu0
  %v3832 = vadd.f32 0.0, %v3831
  %3833 = vmatmul.bf16.gmra.mxu0 %v224
  %v3834 = vpop.f32.mrf.mxu0
  %v3835 = vadd.f32 0.0, %v3834
  %v3836 = vpop.f32.mrf.mxu0
  %v3837 = vadd.f32 0.0, %v3836
  %3838 = vmatmul.bf16.gmra.mxu0 %v226
  %v3839 = vpop.f32.mrf.mxu0
  %v3840 = vadd.f32 0.0, %v3839
  %v3841 = vpop.f32.mrf.mxu0
  %v3842 = vadd.f32 0.0, %v3841
  %3843 = vmatmul.bf16.gmra.mxu0 %v228
  %v3844 = vpop.f32.mrf.mxu0
  %v3845 = vadd.f32 0.0, %v3844
  %v3846 = vpop.f32.mrf.mxu0
  %v3847 = vadd.f32 0.0, %v3846
  %3848 = vmatmul.bf16.gmra.mxu0 %v230
  %v3849 = vpop.f32.mrf.mxu0
  %v3850 = vadd.f32 0.0, %v3849
  %v3851 = vpop.f32.mrf.mxu0
  %v3852 = vadd.f32 0.0, %v3851
  %3853 = vmatmul.bf16.gmra.mxu0 %v232
  %v3854 = vpop.f32.mrf.mxu0
  %v3855 = vadd.f32 0.0, %v3854
  %v3856 = vpop.f32.mrf.mxu0
  %v3857 = vadd.f32 0.0, %v3856
  %3858 = vmatmul.bf16.gmra.mxu0 %v234
  %v3859 = vpop.f32.mrf.mxu0
  %v3860 = vadd.f32 0.0, %v3859
  %v3861 = vpop.f32.mrf.mxu0
  %v3862 = vadd.f32 0.0, %v3861
  %3863 = vmatmul.bf16.gmra.mxu0 %v236
  %v3864 = vpop.f32.mrf.mxu0
  %v3865 = vadd.f32 0.0, %v3864
  %v3866 = vpop.f32.mrf.mxu0
  %v3867 = vadd.f32 0.0, %v3866
  %3868 = vmatmul.bf16.gmra.mxu0 %v238
  %v3869 = vpop.f32.mrf.mxu0
  %v3870 = vadd.f32 0.0, %v3869
  %v3871 = vpop.f32.mrf.mxu0
  %v3872 = vadd.f32 0.0, %v3871
  %3873 = vdwg.mxu0
  %3874 = vmatpush.bf16.msra.mxu0 0
  %3875 = vmatpush.bf16.msra.mxu0 0
  %3876 = vmatpush.bf16.msra.mxu0 0
  %3877 = vmatpush.bf16.msra.mxu0 0
  %3878 = vmatpush.bf16.msra.mxu0 %v3762
  %3879 = vmatpush.bf16.msra.mxu0 %v3761
  %3880 = vmatpush.bf16.msra.mxu0 %v3760
  %3881 = vmatpush.bf16.msra.mxu0 %v3759
  %3882 = vmatmul.bf16.gmra.mxu0 %v332
  %v3883 = vpop.f32.mrf.mxu0
  %v3884 = vadd.f32 %v3785, %v3883
  %v3885 = vpop.f32.mrf.mxu0
  %v3886 = vadd.f32 %v3787, %v3885
  %3887 = vmatmul.bf16.gmra.mxu0 %v335
  %v3888 = vpop.f32.mrf.mxu0
  %v3889 = vadd.f32 %v3790, %v3888
  %v3890 = vpop.f32.mrf.mxu0
  %v3891 = vadd.f32 %v3792, %v3890
  %3892 = vmatmul.bf16.gmra.mxu0 %v338
  %v3893 = vpop.f32.mrf.mxu0
  %v3894 = vadd.f32 %v3795, %v3893
  %v3895 = vpop.f32.mrf.mxu0
  %v3896 = vadd.f32 %v3797, %v3895
  %3897 = vmatmul.bf16.gmra.mxu0 %v341
  %v3898 = vpop.f32.mrf.mxu0
  %v3899 = vadd.f32 %v3800, %v3898
  %v3900 = vpop.f32.mrf.mxu0
  %v3901 = vadd.f32 %v3802, %v3900
  %3902 = vmatmul.bf16.gmra.mxu0 %v344
  %v3903 = vpop.f32.mrf.mxu0
  %v3904 = vadd.f32 %v3805, %v3903
  %v3905 = vpop.f32.mrf.mxu0
  %v3906 = vadd.f32 %v3807, %v3905
  %3907 = vmatmul.bf16.gmra.mxu0 %v347
  %v3908 = vpop.f32.mrf.mxu0
  %v3909 = vadd.f32 %v3810, %v3908
  %v3910 = vpop.f32.mrf.mxu0
  %v3911 = vadd.f32 %v3812, %v3910
  %3912 = vmatmul.bf16.gmra.mxu0 %v350
  %v3913 = vpop.f32.mrf.mxu0
  %v3914 = vadd.f32 %v3815, %v3913
  %v3915 = vpop.f32.mrf.mxu0
  %v3916 = vadd.f32 %v3817, %v3915
  %3917 = vmatmul.bf16.gmra.mxu0 %v353
  %v3918 = vpop.f32.mrf.mxu0
  %v3919 = vadd.f32 %v3820, %v3918
  %v3920 = vpop.f32.mrf.mxu0
  %v3921 = vadd.f32 %v3822, %v3920
  %3922 = vmatmul.bf16.gmra.mxu0 %v356
  %v3923 = vpop.f32.mrf.mxu0
  %v3924 = vadd.f32 %v3825, %v3923
  %v3925 = vpop.f32.mrf.mxu0
  %v3926 = vadd.f32 %v3827, %v3925
  %3927 = vmatmul.bf16.gmra.mxu0 %v359
  %v3928 = vpop.f32.mrf.mxu0
  %v3929 = vadd.f32 %v3830, %v3928
  %v3930 = vpop.f32.mrf.mxu0
  %v3931 = vadd.f32 %v3832, %v3930
  %3932 = vmatmul.bf16.gmra.mxu0 %v362
  %v3933 = vpop.f32.mrf.mxu0
  %v3934 = vadd.f32 %v3835, %v3933
  %v3935 = vpop.f32.mrf.mxu0
  %v3936 = vadd.f32 %v3837, %v3935
  %3937 = vmatmul.bf16.gmra.mxu0 %v365
  %v3938 = vpop.f32.mrf.mxu0
  %v3939 = vadd.f32 %v3840, %v3938
  %v3940 = vpop.f32.mrf.mxu0
  %v3941 = vadd.f32 %v3842, %v3940
  %3942 = vmatmul.bf16.gmra.mxu0 %v368
  %v3943 = vpop.f32.mrf.mxu0
  %v3944 = vadd.f32 %v3845, %v3943
  %v3945 = vpop.f32.mrf.mxu0
  %v3946 = vadd.f32 %v3847, %v3945
  %3947 = vmatmul.bf16.gmra.mxu0 %v371
  %v3948 = vpop.f32.mrf.mxu0
  %v3949 = vadd.f32 %v3850, %v3948
  %v3950 = vpop.f32.mrf.mxu0
  %v3951 = vadd.f32 %v3852, %v3950
  %3952 = vmatmul.bf16.gmra.mxu0 %v374
  %v3953 = vpop.f32.mrf.mxu0
  %v3954 = vadd.f32 %v3855, %v3953
  %v3955 = vpop.f32.mrf.mxu0
  %v3956 = vadd.f32 %v3857, %v3955
  %3957 = vmatmul.bf16.gmra.mxu0 %v377
  %v3958 = vpop.f32.mrf.mxu0
  %v3959 = vadd.f32 %v3860, %v3958
  %v3960 = vpop.f32.mrf.mxu0
  %v3961 = vadd.f32 %v3862, %v3960
  %3962 = vmatmul.bf16.gmra.mxu0 %v380
  %v3963 = vpop.f32.mrf.mxu0
  %v3964 = vadd.f32 %v3865, %v3963
  %v3965 = vpop.f32.mrf.mxu0
  %v3966 = vadd.f32 %v3867, %v3965
  %3967 = vmatmul.bf16.gmra.mxu0 %v383
  %v3968 = vpop.f32.mrf.mxu0
  %v3969 = vadd.f32 %v3870, %v3968
  %v3970 = vpop.f32.mrf.mxu0
  %v3971 = vadd.f32 %v3872, %v3970
  %3972 = vdwg.mxu0
  %v3973 = vmax.f32 %v3884, %v3906
  %v3974 = vmax.f32 %v3886, %v3909
  %v3975 = vmax.f32 %v3889, %v3911
  %v3976 = vmax.f32 %v3891, %v3914
  %v3977 = vmax.f32 %v3894, %v3916
  %v3978 = vmax.f32 %v3896, %v3919
  %v3979 = vmax.f32 %v3899, %v3921
  %v3980 = vmax.f32 %v3901, %v3924
  %v3981 = vmax.f32 %v3904, %v3926
  %v3982 = vmax.f32 %v3929, %v3951
  %v3983 = vmax.f32 %v3931, %v3954
  %v3984 = vmax.f32 %v3934, %v3956
  %v3985 = vmax.f32 %v3936, %v3959
  %v3986 = vmax.f32 %v3939, %v3961
  %v3987 = vmax.f32 %v3941, %v3964
  %v3988 = vmax.f32 %v3944, %v3966
  %v3989 = vmax.f32 %v3946, %v3969
  %v3990 = vmax.f32 %v3949, %v3971
  %v3991 = vmax.f32 %v3973, %v3982
  %v3992 = vmax.f32 %v3974, %v3983
  %v3993 = vmax.f32 %v3975, %v3984
  %v3994 = vmax.f32 %v3976, %v3985
  %v3995 = vmax.f32 %v3977, %v3986
  %v3996 = vmax.f32 %v3978, %v3987
  %v3997 = vmax.f32 %v3979, %v3988
  %v3998 = vmax.f32 %v3980, %v3989
  %v3999 = vmax.f32 %v3981, %v3990
  %v4000 = vmax.f32 %v3991, 0.0
  %v4001 = vmax.f32 %v3992, 0.0
  %v4002 = vmax.f32 %v3993, 0.0
  %v4003 = vmax.f32 %v3994, 0.0
  %v4004 = vmax.f32 %v3995, 0.0
  %v4005 = vmax.f32 %v3996, 0.0
  %v4006 = vmax.f32 %v3997, 0.0
  %v4007 = vmax.f32 %v3998, 0.0
  %v4008 = vmax.f32 %v3999, 0.0
  %4009 = vst [vmem:[#allocation2 + $0x2d0] sm:$0xff] %v4000
  %4010 = vst [vmem:[#allocation2 + $0x2d8] sm:$0xff] %v4001
  %4011 = vst [vmem:[#allocation2 + $0x2e0] sm:$0xff] %v4002
  %4012 = vst [vmem:[#allocation2 + $0x2e8] sm:$0xff] %v4003
  %4013 = vst [vmem:[#allocation2 + $0x2f0] sm:$0xff] %v4004
  %4014 = vst [vmem:[#allocation2 + $0x2f8] sm:$0xff] %v4005
  %4015 = vst [vmem:[#allocation2 + $0x300] sm:$0xff] %v4006
  %4016 = vst [vmem:[#allocation2 + $0x308] sm:$0xff] %v4007
  %4017 = vst [vmem:[#allocation2 + $0x310] sm:$0xff] %v4008
  %v4018 = vld [vmem:[%s0 + $0x160] sm:$0xf]
  %v4019 = vld [vmem:[%s0 + $0x164] sm:$0xf]
  %v4020 = vld [vmem:[%s0 + $0x168] sm:$0xf]
  %v4021 = vld [vmem:[%s0 + $0x16c] sm:$0xf]
  %v4022 = vld [vmem:[%s0 + $0x170] sm:$0xf]
  %v4023 = vld [vmem:[%s0 + $0x174] sm:$0xf]
  %v4024 = vld [vmem:[%s0 + $0x178] sm:$0xf]
  %v4025 = vld [vmem:[%s0 + $0x17c] sm:$0xf]
  %v4026 = vld [vmem:[%s0 + $0x180] sm:$0xf]
  %v4027 = vld [vmem:[%s0 + $0x184] sm:$0xf]
  %v4028 = vld [vmem:[%s0 + $0x188] sm:$0xf]
  %v4029 = vld [vmem:[%s0 + $0x18c] sm:$0xf]
  %v4030 = vld [vmem:[%s0 + $0x190] sm:$0xf]
  %v4031 = vld [vmem:[%s0 + $0x194] sm:$0xf]
  %v4032 = vld [vmem:[%s0 + $0x198] sm:$0xf]
  %v4033 = vld [vmem:[%s0 + $0x19c] sm:$0xf]
  %v4034 = vld [vmem:[%s0 + $0x1a0] sm:$0xf]
  %v4035 = vld [vmem:[%s0 + $0x1a4] sm:$0xf]
  %v4036 = vld [vmem:[%s0 + $0x1a8] sm:$0xf]
  %v4037 = vld [vmem:[%s0 + $0x1ac] sm:$0xf]
  %v4038 = vld [vmem:[%s0 + $0x1b0] sm:$0xf]
  %v4039 = vld [vmem:[%s0 + $0x1b4] sm:$0xf]
  %v4040 = vld [vmem:[%s0 + $0x1b8] sm:$0xf]
  %v4041 = vld [vmem:[%s0 + $0x1bc] sm:$0xf]
  %v4066 = vunpack.c.l.b16 %v4018
  %v4067 = vunpack.c.l.b16 %v4019
  %v4068 = vunpack.c.l.b16 %v4020
  %v4069 = vunpack.c.l.b16 %v4021
  %v4070 = vunpack.c.l.b16 %v4022
  %v4071 = vunpack.c.l.b16 %v4023
  %v4072 = vunpack.c.l.b16 %v4024
  %v4073 = vunpack.c.l.b16 %v4025
  %v4074 = vunpack.c.l.b16 %v4026
  %v4075 = vunpack.c.l.b16 %v4027
  %v4076 = vunpack.c.l.b16 %v4028
  %v4077 = vunpack.c.l.b16 %v4029
  %v4078 = vunpack.c.l.b16 %v4030
  %v4079 = vunpack.c.l.b16 %v4031
  %v4080 = vunpack.c.l.b16 %v4032
  %v4081 = vunpack.c.l.b16 %v4033
  %v4082 = vunpack.c.l.b16 %v4034
  %v4083 = vunpack.c.l.b16 %v4035
  %v4084 = vunpack.c.l.b16 %v4036
  %v4085 = vunpack.c.l.b16 %v4037
  %v4086 = vunpack.c.l.b16 %v4038
  %v4087 = vunpack.c.l.b16 %v4039
  %v4088 = vunpack.c.l.b16 %v4040
  %v4089 = vunpack.c.l.b16 %v4041
  %v4090 = vpack.c.b16 %v4067, %v4066
  %v4091 = vpack.c.b16 %v4069, %v4068
  %v4092 = vpack.c.b16 %v4071, %v4070
  %v4093 = vpack.c.b16 %v4073, %v4072
  %v4094 = vpack.c.b16 %v4075, %v4074
  %v4095 = vpack.c.b16 %v4077, %v4076
  %v4096 = vpack.c.b16 %v4079, %v4078
  %v4097 = vpack.c.b16 %v4081, %v4080
  %v4098 = vpack.c.b16 %v4083, %v4082
  %v4099 = vpack.c.b16 %v4085, %v4084
  %v4100 = vpack.c.b16 %v4087, %v4086
  %v4101 = vpack.c.b16 %v4089, %v4088
  %4114 = vmatpush.bf16.msra.mxu0 %v4097
  %4115 = vmatpush.bf16.msra.mxu0 %v4096
  %4116 = vmatpush.bf16.msra.mxu0 %v4095
  %4117 = vmatpush.bf16.msra.mxu0 %v4094
  %4118 = vmatpush.bf16.msra.mxu0 %v4093
  %4119 = vmatpush.bf16.msra.mxu0 %v4092
  %4120 = vmatpush.bf16.msra.mxu0 %v4091
  %4121 = vmatpush.bf16.msra.mxu0 %v4090
  %4122 = vmatmul.bf16.gmra.mxu0 %v204
  %v4123 = vpop.f32.mrf.mxu0
  %v4124 = vadd.f32 0.0, %v4123
  %v4125 = vpop.f32.mrf.mxu0
  %v4126 = vadd.f32 0.0, %v4125
  %4127 = vmatmul.bf16.gmra.mxu0 %v206
  %v4128 = vpop.f32.mrf.mxu0
  %v4129 = vadd.f32 0.0, %v4128
  %v4130 = vpop.f32.mrf.mxu0
  %v4131 = vadd.f32 0.0, %v4130
  %4132 = vmatmul.bf16.gmra.mxu0 %v208
  %v4133 = vpop.f32.mrf.mxu0
  %v4134 = vadd.f32 0.0, %v4133
  %v4135 = vpop.f32.mrf.mxu0
  %v4136 = vadd.f32 0.0, %v4135
  %4137 = vmatmul.bf16.gmra.mxu0 %v210
  %v4138 = vpop.f32.mrf.mxu0
  %v4139 = vadd.f32 0.0, %v4138
  %v4140 = vpop.f32.mrf.mxu0
  %v4141 = vadd.f32 0.0, %v4140
  %4142 = vmatmul.bf16.gmra.mxu0 %v212
  %v4143 = vpop.f32.mrf.mxu0
  %v4144 = vadd.f32 0.0, %v4143
  %v4145 = vpop.f32.mrf.mxu0
  %v4146 = vadd.f32 0.0, %v4145
  %4147 = vmatmul.bf16.gmra.mxu0 %v214
  %v4148 = vpop.f32.mrf.mxu0
  %v4149 = vadd.f32 0.0, %v4148
  %v4150 = vpop.f32.mrf.mxu0
  %v4151 = vadd.f32 0.0, %v4150
  %4152 = vmatmul.bf16.gmra.mxu0 %v216
  %v4153 = vpop.f32.mrf.mxu0
  %v4154 = vadd.f32 0.0, %v4153
  %v4155 = vpop.f32.mrf.mxu0
  %v4156 = vadd.f32 0.0, %v4155
  %4157 = vmatmul.bf16.gmra.mxu0 %v218
  %v4158 = vpop.f32.mrf.mxu0
  %v4159 = vadd.f32 0.0, %v4158
  %v4160 = vpop.f32.mrf.mxu0
  %v4161 = vadd.f32 0.0, %v4160
  %4162 = vmatmul.bf16.gmra.mxu0 %v220
  %v4163 = vpop.f32.mrf.mxu0
  %v4164 = vadd.f32 0.0, %v4163
  %v4165 = vpop.f32.mrf.mxu0
  %v4166 = vadd.f32 0.0, %v4165
  %4167 = vmatmul.bf16.gmra.mxu0 %v222
  %v4168 = vpop.f32.mrf.mxu0
  %v4169 = vadd.f32 0.0, %v4168
  %v4170 = vpop.f32.mrf.mxu0
  %v4171 = vadd.f32 0.0, %v4170
  %4172 = vmatmul.bf16.gmra.mxu0 %v224
  %v4173 = vpop.f32.mrf.mxu0
  %v4174 = vadd.f32 0.0, %v4173
  %v4175 = vpop.f32.mrf.mxu0
  %v4176 = vadd.f32 0.0, %v4175
  %4177 = vmatmul.bf16.gmra.mxu0 %v226
  %v4178 = vpop.f32.mrf.mxu0
  %v4179 = vadd.f32 0.0, %v4178
  %v4180 = vpop.f32.mrf.mxu0
  %v4181 = vadd.f32 0.0, %v4180
  %4182 = vmatmul.bf16.gmra.mxu0 %v228
  %v4183 = vpop.f32.mrf.mxu0
  %v4184 = vadd.f32 0.0, %v4183
  %v4185 = vpop.f32.mrf.mxu0
  %v4186 = vadd.f32 0.0, %v4185
  %4187 = vmatmul.bf16.gmra.mxu0 %v230
  %v4188 = vpop.f32.mrf.mxu0
  %v4189 = vadd.f32 0.0, %v4188
  %v4190 = vpop.f32.mrf.mxu0
  %v4191 = vadd.f32 0.0, %v4190
  %4192 = vmatmul.bf16.gmra.mxu0 %v232
  %v4193 = vpop.f32.mrf.mxu0
  %v4194 = vadd.f32 0.0, %v4193
  %v4195 = vpop.f32.mrf.mxu0
  %v4196 = vadd.f32 0.0, %v4195
  %4197 = vmatmul.bf16.gmra.mxu0 %v234
  %v4198 = vpop.f32.mrf.mxu0
  %v4199 = vadd.f32 0.0, %v4198
  %v4200 = vpop.f32.mrf.mxu0
  %v4201 = vadd.f32 0.0, %v4200
  %4202 = vmatmul.bf16.gmra.mxu0 %v236
  %v4203 = vpop.f32.mrf.mxu0
  %v4204 = vadd.f32 0.0, %v4203
  %v4205 = vpop.f32.mrf.mxu0
  %v4206 = vadd.f32 0.0, %v4205
  %4207 = vmatmul.bf16.gmra.mxu0 %v238
  %v4208 = vpop.f32.mrf.mxu0
  %v4209 = vadd.f32 0.0, %v4208
  %v4210 = vpop.f32.mrf.mxu0
  %v4211 = vadd.f32 0.0, %v4210
  %4212 = vdwg.mxu0
  %4213 = vmatpush.bf16.msra.mxu0 0
  %4214 = vmatpush.bf16.msra.mxu0 0
  %4215 = vmatpush.bf16.msra.mxu0 0
  %4216 = vmatpush.bf16.msra.mxu0 0
  %4217 = vmatpush.bf16.msra.mxu0 %v4101
  %4218 = vmatpush.bf16.msra.mxu0 %v4100
  %4219 = vmatpush.bf16.msra.mxu0 %v4099
  %4220 = vmatpush.bf16.msra.mxu0 %v4098
  %4221 = vmatmul.bf16.gmra.mxu0 %v332
  %v4222 = vpop.f32.mrf.mxu0
  %v4223 = vadd.f32 %v4124, %v4222
  %v4224 = vpop.f32.mrf.mxu0
  %v4225 = vadd.f32 %v4126, %v4224
  %4226 = vmatmul.bf16.gmra.mxu0 %v335
  %v4227 = vpop.f32.mrf.mxu0
  %v4228 = vadd.f32 %v4129, %v4227
  %v4229 = vpop.f32.mrf.mxu0
  %v4230 = vadd.f32 %v4131, %v4229
  %4231 = vmatmul.bf16.gmra.mxu0 %v338
  %v4232 = vpop.f32.mrf.mxu0
  %v4233 = vadd.f32 %v4134, %v4232
  %v4234 = vpop.f32.mrf.mxu0
  %v4235 = vadd.f32 %v4136, %v4234
  %4236 = vmatmul.bf16.gmra.mxu0 %v341
  %v4237 = vpop.f32.mrf.mxu0
  %v4238 = vadd.f32 %v4139, %v4237
  %v4239 = vpop.f32.mrf.mxu0
  %v4240 = vadd.f32 %v4141, %v4239
  %4241 = vmatmul.bf16.gmra.mxu0 %v344
  %v4242 = vpop.f32.mrf.mxu0
  %v4243 = vadd.f32 %v4144, %v4242
  %v4244 = vpop.f32.mrf.mxu0
  %v4245 = vadd.f32 %v4146, %v4244
  %4246 = vmatmul.bf16.gmra.mxu0 %v347
  %v4247 = vpop.f32.mrf.mxu0
  %v4248 = vadd.f32 %v4149, %v4247
  %v4249 = vpop.f32.mrf.mxu0
  %v4250 = vadd.f32 %v4151, %v4249
  %4251 = vmatmul.bf16.gmra.mxu0 %v350
  %v4252 = vpop.f32.mrf.mxu0
  %v4253 = vadd.f32 %v4154, %v4252
  %v4254 = vpop.f32.mrf.mxu0
  %v4255 = vadd.f32 %v4156, %v4254
  %4256 = vmatmul.bf16.gmra.mxu0 %v353
  %v4257 = vpop.f32.mrf.mxu0
  %v4258 = vadd.f32 %v4159, %v4257
  %v4259 = vpop.f32.mrf.mxu0
  %v4260 = vadd.f32 %v4161, %v4259
  %4261 = vmatmul.bf16.gmra.mxu0 %v356
  %v4262 = vpop.f32.mrf.mxu0
  %v4263 = vadd.f32 %v4164, %v4262
  %v4264 = vpop.f32.mrf.mxu0
  %v4265 = vadd.f32 %v4166, %v4264
  %4266 = vmatmul.bf16.gmra.mxu0 %v359
  %v4267 = vpop.f32.mrf.mxu0
  %v4268 = vadd.f32 %v4169, %v4267
  %v4269 = vpop.f32.mrf.mxu0
  %v4270 = vadd.f32 %v4171, %v4269
  %4271 = vmatmul.bf16.gmra.mxu0 %v362
  %v4272 = vpop.f32.mrf.mxu0
  %v4273 = vadd.f32 %v4174, %v4272
  %v4274 = vpop.f32.mrf.mxu0
  %v4275 = vadd.f32 %v4176, %v4274
  %4276 = vmatmul.bf16.gmra.mxu0 %v365
  %v4277 = vpop.f32.mrf.mxu0
  %v4278 = vadd.f32 %v4179, %v4277
  %v4279 = vpop.f32.mrf.mxu0
  %v4280 = vadd.f32 %v4181, %v4279
  %4281 = vmatmul.bf16.gmra.mxu0 %v368
  %v4282 = vpop.f32.mrf.mxu0
  %v4283 = vadd.f32 %v4184, %v4282
  %v4284 = vpop.f32.mrf.mxu0
  %v4285 = vadd.f32 %v4186, %v4284
  %4286 = vmatmul.bf16.gmra.mxu0 %v371
  %v4287 = vpop.f32.mrf.mxu0
  %v4288 = vadd.f32 %v4189, %v4287
  %v4289 = vpop.f32.mrf.mxu0
  %v4290 = vadd.f32 %v4191, %v4289
  %4291 = vmatmul.bf16.gmra.mxu0 %v374
  %v4292 = vpop.f32.mrf.mxu0
  %v4293 = vadd.f32 %v4194, %v4292
  %v4294 = vpop.f32.mrf.mxu0
  %v4295 = vadd.f32 %v4196, %v4294
  %4296 = vmatmul.bf16.gmra.mxu0 %v377
  %v4297 = vpop.f32.mrf.mxu0
  %v4298 = vadd.f32 %v4199, %v4297
  %v4299 = vpop.f32.mrf.mxu0
  %v4300 = vadd.f32 %v4201, %v4299
  %4301 = vmatmul.bf16.gmra.mxu0 %v380
  %v4302 = vpop.f32.mrf.mxu0
  %v4303 = vadd.f32 %v4204, %v4302
  %v4304 = vpop.f32.mrf.mxu0
  %v4305 = vadd.f32 %v4206, %v4304
  %4306 = vmatmul.bf16.gmra.mxu0 %v383
  %v4307 = vpop.f32.mrf.mxu0
  %v4308 = vadd.f32 %v4209, %v4307
  %v4309 = vpop.f32.mrf.mxu0
  %v4310 = vadd.f32 %v4211, %v4309
  %4311 = vdwg.mxu0
  %v4312 = vmax.f32 %v4223, %v4245
  %v4313 = vmax.f32 %v4225, %v4248
  %v4314 = vmax.f32 %v4228, %v4250
  %v4315 = vmax.f32 %v4230, %v4253
  %v4316 = vmax.f32 %v4233, %v4255
  %v4317 = vmax.f32 %v4235, %v4258
  %v4318 = vmax.f32 %v4238, %v4260
  %v4319 = vmax.f32 %v4240, %v4263
  %v4320 = vmax.f32 %v4243, %v4265
  %v4321 = vmax.f32 %v4268, %v4290
  %v4322 = vmax.f32 %v4270, %v4293
  %v4323 = vmax.f32 %v4273, %v4295
  %v4324 = vmax.f32 %v4275, %v4298
  %v4325 = vmax.f32 %v4278, %v4300
  %v4326 = vmax.f32 %v4280, %v4303
  %v4327 = vmax.f32 %v4283, %v4305
  %v4328 = vmax.f32 %v4285, %v4308
  %v4329 = vmax.f32 %v4288, %v4310
  %v4330 = vmax.f32 %v4312, %v4321
  %v4331 = vmax.f32 %v4313, %v4322
  %v4332 = vmax.f32 %v4314, %v4323
  %v4333 = vmax.f32 %v4315, %v4324
  %v4334 = vmax.f32 %v4316, %v4325
  %v4335 = vmax.f32 %v4317, %v4326
  %v4336 = vmax.f32 %v4318, %v4327
  %v4337 = vmax.f32 %v4319, %v4328
  %v4338 = vmax.f32 %v4320, %v4329
  %v4339 = vmax.f32 %v4330, 0.0
  %v4340 = vmax.f32 %v4331, 0.0
  %v4341 = vmax.f32 %v4332, 0.0
  %v4342 = vmax.f32 %v4333, 0.0
  %v4343 = vmax.f32 %v4334, 0.0
  %v4344 = vmax.f32 %v4335, 0.0
  %v4345 = vmax.f32 %v4336, 0.0
  %v4346 = vmax.f32 %v4337, 0.0
  %v4347 = vmax.f32 %v4338, 0.0
  %4348 = vst [vmem:[#allocation2 + $0x318] sm:$0xff] %v4339
  %4349 = vst [vmem:[#allocation2 + $0x320] sm:$0xff] %v4340
  %4350 = vst [vmem:[#allocation2 + $0x328] sm:$0xff] %v4341
  %4351 = vst [vmem:[#allocation2 + $0x330] sm:$0xff] %v4342
  %4352 = vst [vmem:[#allocation2 + $0x338] sm:$0xff] %v4343
  %4353 = vst [vmem:[#allocation2 + $0x340] sm:$0xff] %v4344
  %4354 = vst [vmem:[#allocation2 + $0x348] sm:$0xff] %v4345
  %4355 = vst [vmem:[#allocation2 + $0x350] sm:$0xff] %v4346
  %4356 = vst [vmem:[#allocation2 + $0x358] sm:$0xff] %v4347
  %v4357 = vld [vmem:[%s2] sm:$0xff]
  %v4358 = vld [vmem:[%s2 + $0x8] sm:$0xf]
  %v4359 = vld [vmem:[%s2 + $0xc] sm:$0xff]
  %v4360 = vld [vmem:[%s2 + $0x14] sm:$0xf]
  %v4361 = vld [vmem:[%s2 + $0x18] sm:$0xff]
  %v4362 = vld [vmem:[%s2 + $0x20] sm:$0xf]
  %v4363 = vld [vmem:[%s2 + $0x24] sm:$0xff]
  %v4364 = vld [vmem:[%s2 + $0x2c] sm:$0xf]
  %v4365 = vld [vmem:[%s2 + $0x30] sm:$0xff]
  %v4366 = vld [vmem:[%s2 + $0x38] sm:$0xf]
  %v4367 = vld [vmem:[%s2 + $0x3c] sm:$0xff]
  %v4368 = vld [vmem:[%s2 + $0x44] sm:$0xf]
  %v4369 = vld [vmem:[%s2 + $0x48] sm:$0xff]
  %v4370 = vld [vmem:[%s2 + $0x50] sm:$0xf]
  %v4371 = vld [vmem:[%s2 + $0x54] sm:$0xff]
  %v4372 = vld [vmem:[%s2 + $0x5c] sm:$0xf]
  %v4373 = vld [vmem:[%s2 + $0x60] sm:$0xff]
  %v4374 = vld [vmem:[%s2 + $0x68] sm:$0xf]
  %v4375 = vld [vmem:[%s2 + $0x6c] sm:$0xff]
  %v4376 = vld [vmem:[%s2 + $0x74] sm:$0xf]
  %v4377 = vld [vmem:[%s2 + $0x78] sm:$0xff]
  %v4378 = vld [vmem:[%s2 + $0x80] sm:$0xf]
  %v4379 = vld [vmem:[%s2 + $0x84] sm:$0xff]
  %v4380 = vld [vmem:[%s2 + $0x8c] sm:$0xf]
  %v4381 = vld [vmem:[%s2 + $0x90] sm:$0xff]
  %v4382 = vld [vmem:[%s2 + $0x98] sm:$0xf]
  %v4383 = vld [vmem:[%s2 + $0x9c] sm:$0xff]
  %v4384 = vld [vmem:[%s2 + $0xa4] sm:$0xf]
  %v4385 = vld [vmem:[%s2 + $0xa8] sm:$0xff]
  %v4386 = vld [vmem:[%s2 + $0xb0] sm:$0xf]
  %v4387 = vld [vmem:[%s2 + $0xb4] sm:$0xff]
  %v4388 = vld [vmem:[%s2 + $0xbc] sm:$0xf]
  %v4389 = vld [vmem:[%s3] sm:$0xff]
  %v4390 = vld [vmem:[%s3 + $0x8] sm:$0xff]
  %v4391 = vld [vmem:[%s3 + $0x10] sm:$0xff]
  %v4392 = vld [vmem:[%s3 + $0x18] sm:$0xff]
  %v4393 = vld [vmem:[%s3 + $0x20] sm:$0xff]
  %v4394 = vld [vmem:[%s3 + $0x28] sm:$0xff]
  %v4395 = vld [vmem:[%s3 + $0x30] sm:$0xff]
  %v4396 = vld [vmem:[%s3 + $0x38] sm:$0xff]
  %v4397 = vld [vmem:[%s3 + $0x40] sm:$0xff]
  %v4398 = vld [vmem:[%s3 + $0x48] sm:$0xff]
  %v4399 = vld [vmem:[%s3 + $0x50] sm:$0xff]
  %v4400 = vld [vmem:[%s3 + $0x58] sm:$0xff]
  %v4401 = vld [vmem:[%s3 + $0x60] sm:$0xff]
  %v4402 = vld [vmem:[%s3 + $0x68] sm:$0xff]
  %v4403 = vld [vmem:[%s3 + $0x70] sm:$0xff]
  %v4404 = vld [vmem:[%s3 + $0x78] sm:$0xff]
  %4406 = vset.pattern.permute.xlu0 0
  %4407 = vperm.xlu0 %4406, %v4389
  %v4408 = vpop.permute.xlu0 %4407
  %4411 = vset.pattern.permute.xlu0 0
  %4412 = vperm.xlu0 %4411, %v4390
  %v4413 = vpop.permute.xlu0 %4412
  %4416 = vset.pattern.permute.xlu0 0
  %4417 = vperm.xlu0 %4416, %v4391
  %v4418 = vpop.permute.xlu0 %4417
  %4421 = vset.pattern.permute.xlu0 0
  %4422 = vperm.xlu0 %4421, %v4392
  %v4423 = vpop.permute.xlu0 %4422
  %4426 = vset.pattern.permute.xlu0 0
  %4427 = vperm.xlu0 %4426, %v4393
  %v4428 = vpop.permute.xlu0 %4427
  %4431 = vset.pattern.permute.xlu0 0
  %4432 = vperm.xlu0 %4431, %v4394
  %v4433 = vpop.permute.xlu0 %4432
  %4436 = vset.pattern.permute.xlu0 0
  %4437 = vperm.xlu0 %4436, %v4395
  %v4438 = vpop.permute.xlu0 %4437
  %4441 = vset.pattern.permute.xlu0 0
  %4442 = vperm.xlu0 %4441, %v4396
  %v4443 = vpop.permute.xlu0 %4442
  %4446 = vset.pattern.permute.xlu0 0
  %4447 = vperm.xlu0 %4446, %v4397
  %v4448 = vpop.permute.xlu0 %4447
  %4451 = vset.pattern.permute.xlu0 0
  %4452 = vperm.xlu0 %4451, %v4398
  %v4453 = vpop.permute.xlu0 %4452
  %4456 = vset.pattern.permute.xlu0 0
  %4457 = vperm.xlu0 %4456, %v4399
  %v4458 = vpop.permute.xlu0 %4457
  %4461 = vset.pattern.permute.xlu0 0
  %4462 = vperm.xlu0 %4461, %v4400
  %v4463 = vpop.permute.xlu0 %4462
  %4466 = vset.pattern.permute.xlu0 0
  %4467 = vperm.xlu0 %4466, %v4401
  %v4468 = vpop.permute.xlu0 %4467
  %4471 = vset.pattern.permute.xlu0 0
  %4472 = vperm.xlu0 %4471, %v4402
  %v4473 = vpop.permute.xlu0 %4472
  %4476 = vset.pattern.permute.xlu0 0
  %4477 = vperm.xlu0 %4476, %v4403
  %v4478 = vpop.permute.xlu0 %4477
  %4481 = vset.pattern.permute.xlu0 0
  %4482 = vperm.xlu0 %4481, %v4404
  %v4483 = vpop.permute.xlu0 %4482
  %v4485 = vld [vmem:[#allocation2] sm:$0xff]
  %v4486 = vld [vmem:[#allocation2 + $0x8] sm:$0xff]
  %v4487 = vld [vmem:[#allocation2 + $0x10] sm:$0xff]
  %v4488 = vld [vmem:[#allocation2 + $0x18] sm:$0xff]
  %v4489 = vld [vmem:[#allocation2 + $0x20] sm:$0xff]
  %v4490 = vld [vmem:[#allocation2 + $0x28] sm:$0xff]
  %v4491 = vld [vmem:[#allocation2 + $0x30] sm:$0xff]
  %v4492 = vld [vmem:[#allocation2 + $0x38] sm:$0xff]
  %v4493 = vld [vmem:[#allocation2 + $0x40] sm:$0xff]
  %v4494 = vld [vmem:[#allocation2 + $0x48] sm:$0xff]
  %v4495 = vld [vmem:[#allocation2 + $0x50] sm:$0xff]
  %v4496 = vld [vmem:[#allocation2 + $0x58] sm:$0xff]
  %v4497 = vld [vmem:[#allocation2 + $0x60] sm:$0xff]
  %v4498 = vld [vmem:[#allocation2 + $0x68] sm:$0xff]
  %v4499 = vld [vmem:[#allocation2 + $0x70] sm:$0xff]
  %v4500 = vld [vmem:[#allocation2 + $0x78] sm:$0xff]
  %v4501 = vld [vmem:[#allocation2 + $0x80] sm:$0xff]
  %v4502 = vld [vmem:[#allocation2 + $0x88] sm:$0xff]
  %v4503 = vld [vmem:[#allocation2 + $0x90] sm:$0xff]
  %v4504 = vld [vmem:[#allocation2 + $0x98] sm:$0xff]
  %v4505 = vld [vmem:[#allocation2 + $0xa0] sm:$0xff]
  %v4506 = vld [vmem:[#allocation2 + $0xa8] sm:$0xff]
  %v4507 = vld [vmem:[#allocation2 + $0xb0] sm:$0xff]
  %v4508 = vld [vmem:[#allocation2 + $0xb8] sm:$0xff]
  %v4509 = vld [vmem:[#allocation2 + $0xc0] sm:$0xff]
  %v4510 = vld [vmem:[#allocation2 + $0xc8] sm:$0xff]
  %v4511 = vld [vmem:[#allocation2 + $0xd0] sm:$0xff]
  %v4512 = vld [vmem:[#allocation2 + $0xd8] sm:$0xff]
  %v4513 = vld [vmem:[#allocation2 + $0xe0] sm:$0xff]
  %v4514 = vld [vmem:[#allocation2 + $0xe8] sm:$0xff]
  %v4515 = vld [vmem:[#allocation2 + $0xf0] sm:$0xff]
  %v4516 = vld [vmem:[#allocation2 + $0xf8] sm:$0xff]
  %v4517 = vld [vmem:[#allocation2 + $0x100] sm:$0xff]
  %v4518 = vld [vmem:[#allocation2 + $0x108] sm:$0xff]
  %v4519 = vld [vmem:[#allocation2 + $0x110] sm:$0xff]
  %v4520 = vld [vmem:[#allocation2 + $0x118] sm:$0xff]
  %v4521 = vld [vmem:[#allocation2 + $0x120] sm:$0xff]
  %v4522 = vld [vmem:[#allocation2 + $0x128] sm:$0xff]
  %v4523 = vld [vmem:[#allocation2 + $0x130] sm:$0xff]
  %v4524 = vld [vmem:[#allocation2 + $0x138] sm:$0xff]
  %v4525 = vld [vmem:[#allocation2 + $0x140] sm:$0xff]
  %v4526 = vld [vmem:[#allocation2 + $0x148] sm:$0xff]
  %v4527 = vld [vmem:[#allocation2 + $0x150] sm:$0xff]
  %v4528 = vld [vmem:[#allocation2 + $0x158] sm:$0xff]
  %v4529 = vld [vmem:[#allocation2 + $0x160] sm:$0xff]
  %v4530 = vpack.c.bf16 %v4486, %v4485
  %v4531 = vpack.c.bf16 %v4488, %v4487
  %v4532 = vpack.c.bf16 %v4490, %v4489
  %v4533 = vpack.c.bf16 %v4492, %v4491
  %v4534 = vpack.c.bf16 %v4494, %v4493
  %v4535 = vpack.c.bf16 %v4496, %v4495
  %v4536 = vpack.c.bf16 %v4498, %v4497
  %v4537 = vpack.c.bf16 %v4500, %v4499
  %v4538 = vpack.c.bf16 %v4502, %v4501
  %v4539 = vpack.c.bf16 %v4504, %v4503
  %v4540 = vpack.c.bf16 %v4506, %v4505
  %v4541 = vpack.c.bf16 %v4508, %v4507
  %v4542 = vpack.c.bf16 %v4510, %v4509
  %v4543 = vpack.c.bf16 %v4512, %v4511
  %v4544 = vpack.c.bf16 %v4514, %v4513
  %v4545 = vpack.c.bf16 %v4516, %v4515
  %v4546 = vpack.c.bf16 %v4518, %v4517
  %v4547 = vpack.c.bf16 %v4520, %v4519
  %v4548 = vpack.c.bf16 %v4522, %v4521
  %v4549 = vpack.c.bf16 %v4524, %v4523
  %v4550 = vpack.c.bf16 %v4526, %v4525
  %v4551 = vpack.c.bf16 %v4528, %v4527
  %v4552 = vpack.c.bf16 %v4529, %v4529
  %v4585 = vunpack.c.l.b16 %v4357
  %v4586 = vunpack.c.h.b16 %v4357
  %v4587 = vunpack.c.l.b16 %v4358
  %v4588 = vunpack.c.l.b16 %v4359
  %v4589 = vunpack.c.h.b16 %v4359
  %v4590 = vunpack.c.l.b16 %v4360
  %v4591 = vunpack.c.l.b16 %v4361
  %v4592 = vunpack.c.h.b16 %v4361
  %v4593 = vunpack.c.l.b16 %v4362
  %v4594 = vunpack.c.l.b16 %v4363
  %v4595 = vunpack.c.h.b16 %v4363
  %v4596 = vunpack.c.l.b16 %v4364
  %v4597 = vunpack.c.l.b16 %v4365
  %v4598 = vunpack.c.h.b16 %v4365
  %v4599 = vunpack.c.l.b16 %v4366
  %v4600 = vunpack.c.l.b16 %v4367
  %v4601 = vunpack.c.h.b16 %v4367
  %v4602 = vunpack.c.l.b16 %v4368
  %v4603 = vunpack.c.l.b16 %v4369
  %v4604 = vunpack.c.h.b16 %v4369
  %v4605 = vunpack.c.l.b16 %v4370
  %v4606 = vunpack.c.l.b16 %v4371
  %v4607 = vunpack.c.h.b16 %v4371
  %v4608 = vunpack.c.l.b16 %v4372
  %v4609 = vunpack.c.l.b16 %v4373
  %v4610 = vunpack.c.h.b16 %v4373
  %v4611 = vunpack.c.l.b16 %v4374
  %v4612 = vunpack.c.l.b16 %v4375
  %v4613 = vunpack.c.h.b16 %v4375
  %v4614 = vunpack.c.l.b16 %v4376
  %v4615 = vunpack.c.l.b16 %v4377
  %v4616 = vunpack.c.h.b16 %v4377
  %v4617 = vunpack.c.l.b16 %v4378
  %v4618 = vunpack.c.l.b16 %v4379
  %v4619 = vunpack.c.h.b16 %v4379
  %v4620 = vunpack.c.l.b16 %v4380
  %v4621 = vunpack.c.l.b16 %v4381
  %v4622 = vunpack.c.h.b16 %v4381
  %v4623 = vunpack.c.l.b16 %v4382
  %v4624 = vunpack.c.l.b16 %v4383
  %v4625 = vunpack.c.h.b16 %v4383
  %v4626 = vunpack.c.l.b16 %v4384
  %v4627 = vunpack.c.l.b16 %v4385
  %v4628 = vunpack.c.h.b16 %v4385
  %v4629 = vunpack.c.l.b16 %v4386
  %v4630 = vunpack.c.l.b16 %v4387
  %v4631 = vunpack.c.h.b16 %v4387
  %v4632 = vunpack.c.l.b16 %v4388
  %v4633 = vpack.c.b16 %v4588, %v4585
  %v4634 = vpack.c.b16 %v4589, %v4586
  %v4635 = vpack.c.b16 %v4590, %v4587
  %v4636 = vpack.c.b16 %v4594, %v4591
  %v4637 = vpack.c.b16 %v4595, %v4592
  %v4638 = vpack.c.b16 %v4596, %v4593
  %v4639 = vpack.c.b16 %v4600, %v4597
  %v4640 = vpack.c.b16 %v4601, %v4598
  %v4641 = vpack.c.b16 %v4602, %v4599
  %v4642 = vpack.c.b16 %v4606, %v4603
  %v4643 = vpack.c.b16 %v4607, %v4604
  %v4644 = vpack.c.b16 %v4608, %v4605
  %v4645 = vpack.c.b16 %v4612, %v4609
  %v4646 = vpack.c.b16 %v4613, %v4610
  %v4647 = vpack.c.b16 %v4614, %v4611
  %v4648 = vpack.c.b16 %v4618, %v4615
  %v4649 = vpack.c.b16 %v4619, %v4616
  %v4650 = vpack.c.b16 %v4620, %v4617
  %v4651 = vpack.c.b16 %v4624, %v4621
  %v4652 = vpack.c.b16 %v4625, %v4622
  %v4653 = vpack.c.b16 %v4626, %v4623
  %v4654 = vpack.c.b16 %v4630, %v4627
  %v4655 = vpack.c.b16 %v4631, %v4628
  %v4656 = vpack.c.b16 %v4632, %v4629
  %vm4673 = vcmask 850944
  %v4675 = vsel %vm4673, %v4635, 0
  %v4678 = vsel %vm4673, %v4638, 0
  %v4681 = vsel %vm4673, %v4641, 0
  %v4684 = vsel %vm4673, %v4644, 0
  %v4687 = vsel %vm4673, %v4647, 0
  %v4690 = vsel %vm4673, %v4650, 0
  %v4693 = vsel %vm4673, %v4653, 0
  %v4696 = vsel %vm4673, %v4656, 0
  %vm4698 = vcmask 1043456
  %v4700 = vsel %vm4698, %v4552, 0
  %4702 = vmatpush.bf16.msra.mxu0 %v4537
  %4703 = vmatpush.bf16.msra.mxu0 %v4536
  %4704 = vmatpush.bf16.msra.mxu0 %v4535
  %4705 = vmatpush.bf16.msra.mxu0 %v4534
  %4706 = vmatpush.bf16.msra.mxu0 %v4533
  %4707 = vmatpush.bf16.msra.mxu0 %v4532
  %4708 = vmatpush.bf16.msra.mxu0 %v4531
  %4709 = vmatpush.bf16.msra.mxu0 %v4530
  %4710 = vmatmul.bf16.gmra.mxu0 %v4633
  %v4711 = vpop.f32.mrf.mxu0
  %v4712 = vadd.f32 %v4408, %v4711
  %v4713 = vpop.f32.mrf.mxu0
  %v4714 = vadd.f32 %v4413, %v4713
  %4715 = vmatmul.bf16.gmra.mxu0 %v4636
  %v4716 = vpop.f32.mrf.mxu0
  %v4717 = vadd.f32 %v4418, %v4716
  %v4718 = vpop.f32.mrf.mxu0
  %v4719 = vadd.f32 %v4423, %v4718
  %4720 = vmatmul.bf16.gmra.mxu0 %v4639
  %v4721 = vpop.f32.mrf.mxu0
  %v4722 = vadd.f32 %v4428, %v4721
  %v4723 = vpop.f32.mrf.mxu0
  %v4724 = vadd.f32 %v4433, %v4723
  %4725 = vmatmul.bf16.gmra.mxu0 %v4642
  %v4726 = vpop.f32.mrf.mxu0
  %v4727 = vadd.f32 %v4438, %v4726
  %v4728 = vpop.f32.mrf.mxu0
  %v4729 = vadd.f32 %v4443, %v4728
  %4730 = vmatmul.bf16.gmra.mxu0 %v4645
  %v4731 = vpop.f32.mrf.mxu0
  %v4732 = vadd.f32 %v4448, %v4731
  %v4733 = vpop.f32.mrf.mxu0
  %v4734 = vadd.f32 %v4453, %v4733
  %4735 = vmatmul.bf16.gmra.mxu0 %v4648
  %v4736 = vpop.f32.mrf.mxu0
  %v4737 = vadd.f32 %v4458, %v4736
  %v4738 = vpop.f32.mrf.mxu0
  %v4739 = vadd.f32 %v4463, %v4738
  %4740 = vmatmul.bf16.gmra.mxu0 %v4651
  %v4741 = vpop.f32.mrf.mxu0
  %v4742 = vadd.f32 %v4468, %v4741
  %v4743 = vpop.f32.mrf.mxu0
  %v4744 = vadd.f32 %v4473, %v4743
  %4745 = vmatmul.bf16.gmra.mxu0 %v4654
  %v4746 = vpop.f32.mrf.mxu0
  %v4747 = vadd.f32 %v4478, %v4746
  %v4748 = vpop.f32.mrf.mxu0
  %v4749 = vadd.f32 %v4483, %v4748
  %4750 = vdwg.mxu0
  %4751 = vmatpush.bf16.msra.mxu0 %v4545
  %4752 = vmatpush.bf16.msra.mxu0 %v4544
  %4753 = vmatpush.bf16.msra.mxu0 %v4543
  %4754 = vmatpush.bf16.msra.mxu0 %v4542
  %4755 = vmatpush.bf16.msra.mxu0 %v4541
  %4756 = vmatpush.bf16.msra.mxu0 %v4540
  %4757 = vmatpush.bf16.msra.mxu0 %v4539
  %4758 = vmatpush.bf16.msra.mxu0 %v4538
  %4759 = vmatmul.bf16.gmra.mxu0 %v4634
  %v4760 = vpop.f32.mrf.mxu0
  %v4761 = vadd.f32 %v4712, %v4760
  %v4762 = vpop.f32.mrf.mxu0
  %v4763 = vadd.f32 %v4714, %v4762
  %4764 = vmatmul.bf16.gmra.mxu0 %v4637
  %v4765 = vpop.f32.mrf.mxu0
  %v4766 = vadd.f32 %v4717, %v4765
  %v4767 = vpop.f32.mrf.mxu0
  %v4768 = vadd.f32 %v4719, %v4767
  %4769 = vmatmul.bf16.gmra.mxu0 %v4640
  %v4770 = vpop.f32.mrf.mxu0
  %v4771 = vadd.f32 %v4722, %v4770
  %v4772 = vpop.f32.mrf.mxu0
  %v4773 = vadd.f32 %v4724, %v4772
  %4774 = vmatmul.bf16.gmra.mxu0 %v4643
  %v4775 = vpop.f32.mrf.mxu0
  %v4776 = vadd.f32 %v4727, %v4775
  %v4777 = vpop.f32.mrf.mxu0
  %v4778 = vadd.f32 %v4729, %v4777
  %4779 = vmatmul.bf16.gmra.mxu0 %v4646
  %v4780 = vpop.f32.mrf.mxu0
  %v4781 = vadd.f32 %v4732, %v4780
  %v4782 = vpop.f32.mrf.mxu0
  %v4783 = vadd.f32 %v4734, %v4782
  %4784 = vmatmul.bf16.gmra.mxu0 %v4649
  %v4785 = vpop.f32.mrf.mxu0
  %v4786 = vadd.f32 %v4737, %v4785
  %v4787 = vpop.f32.mrf.mxu0
  %v4788 = vadd.f32 %v4739, %v4787
  %4789 = vmatmul.bf16.gmra.mxu0 %v4652
  %v4790 = vpop.f32.mrf.mxu0
  %v4791 = vadd.f32 %v4742, %v4790
  %v4792 = vpop.f32.mrf.mxu0
  %v4793 = vadd.f32 %v4744, %v4792
  %4794 = vmatmul.bf16.gmra.mxu0 %v4655
  %v4795 = vpop.f32.mrf.mxu0
  %v4796 = vadd.f32 %v4747, %v4795
  %v4797 = vpop.f32.mrf.mxu0
  %v4798 = vadd.f32 %v4749, %v4797
  %4799 = vdwg.mxu0
  %4800 = vmatpush.bf16.msra.mxu0 0
  %4801 = vmatpush.bf16.msra.mxu0 %v4700
  %4802 = vmatpush.bf16.msra.mxu0 %v4551
  %4803 = vmatpush.bf16.msra.mxu0 %v4550
  %4804 = vmatpush.bf16.msra.mxu0 %v4549
  %4805 = vmatpush.bf16.msra.mxu0 %v4548
  %4806 = vmatpush.bf16.msra.mxu0 %v4547
  %4807 = vmatpush.bf16.msra.mxu0 %v4546
  %4808 = vmatmul.bf16.gmra.mxu0 %v4675
  %v4809 = vpop.f32.mrf.mxu0
  %v4810 = vadd.f32 %v4761, %v4809
  %v4811 = vpop.f32.mrf.mxu0
  %v4812 = vadd.f32 %v4763, %v4811
  %4813 = vmatmul.bf16.gmra.mxu0 %v4678
  %v4814 = vpop.f32.mrf.mxu0
  %v4815 = vadd.f32 %v4766, %v4814
  %v4816 = vpop.f32.mrf.mxu0
  %v4817 = vadd.f32 %v4768, %v4816
  %4818 = vmatmul.bf16.gmra.mxu0 %v4681
  %v4819 = vpop.f32.mrf.mxu0
  %v4820 = vadd.f32 %v4771, %v4819
  %v4821 = vpop.f32.mrf.mxu0
  %v4822 = vadd.f32 %v4773, %v4821
  %4823 = vmatmul.bf16.gmra.mxu0 %v4684
  %v4824 = vpop.f32.mrf.mxu0
  %v4825 = vadd.f32 %v4776, %v4824
  %v4826 = vpop.f32.mrf.mxu0
  %v4827 = vadd.f32 %v4778, %v4826
  %4828 = vmatmul.bf16.gmra.mxu0 %v4687
  %v4829 = vpop.f32.mrf.mxu0
  %v4830 = vadd.f32 %v4781, %v4829
  %v4831 = vpop.f32.mrf.mxu0
  %v4832 = vadd.f32 %v4783, %v4831
  %4833 = vmatmul.bf16.gmra.mxu0 %v4690
  %v4834 = vpop.f32.mrf.mxu0
  %v4835 = vadd.f32 %v4786, %v4834
  %v4836 = vpop.f32.mrf.mxu0
  %v4837 = vadd.f32 %v4788, %v4836
  %4838 = vmatmul.bf16.gmra.mxu0 %v4693
  %v4839 = vpop.f32.mrf.mxu0
  %v4840 = vadd.f32 %v4791, %v4839
  %v4841 = vpop.f32.mrf.mxu0
  %v4842 = vadd.f32 %v4793, %v4841
  %4843 = vmatmul.bf16.gmra.mxu0 %v4696
  %v4844 = vpop.f32.mrf.mxu0
  %v4845 = vadd.f32 %v4796, %v4844
  %v4846 = vpop.f32.mrf.mxu0
  %v4847 = vadd.f32 %v4798, %v4846
  %4848 = vdwg.mxu0
  %v4849 = vmax.f32 %v4810, %v4830
  %v4850 = vmax.f32 %v4812, %v4832
  %v4851 = vmax.f32 %v4815, %v4835
  %v4852 = vmax.f32 %v4817, %v4837
  %v4853 = vmax.f32 %v4820, %v4840
  %v4854 = vmax.f32 %v4822, %v4842
  %v4855 = vmax.f32 %v4825, %v4845
  %v4856 = vmax.f32 %v4827, %v4847
  %v4857 = vld [vmem:[#allocation2 + $0x48] sm:$0xff]
  %v4858 = vld [vmem:[#allocation2 + $0x50] sm:$0xff]
  %v4859 = vld [vmem:[#allocation2 + $0x58] sm:$0xff]
  %v4860 = vld [vmem:[#allocation2 + $0x60] sm:$0xff]
  %v4861 = vld [vmem:[#allocation2 + $0x68] sm:$0xff]
  %v4862 = vld [vmem:[#allocation2 + $0x70] sm:$0xff]
  %v4863 = vld [vmem:[#allocation2 + $0x78] sm:$0xff]
  %v4864 = vld [vmem:[#allocation2 + $0x80] sm:$0xff]
  %v4865 = vld [vmem:[#allocation2 + $0x88] sm:$0xff]
  %v4866 = vld [vmem:[#allocation2 + $0x90] sm:$0xff]
  %v4867 = vld [vmem:[#allocation2 + $0x98] sm:$0xff]
  %v4868 = vld [vmem:[#allocation2 + $0xa0] sm:$0xff]
  %v4869 = vld [vmem:[#allocation2 + $0xa8] sm:$0xff]
  %v4870 = vld [vmem:[#allocation2 + $0xb0] sm:$0xff]
  %v4871 = vld [vmem:[#allocation2 + $0xb8] sm:$0xff]
  %v4872 = vld [vmem:[#allocation2 + $0xc0] sm:$0xff]
  %v4873 = vld [vmem:[#allocation2 + $0xc8] sm:$0xff]
  %v4874 = vld [vmem:[#allocation2 + $0xd0] sm:$0xff]
  %v4875 = vld [vmem:[#allocation2 + $0xd8] sm:$0xff]
  %v4876 = vld [vmem:[#allocation2 + $0xe0] sm:$0xff]
  %v4877 = vld [vmem:[#allocation2 + $0xe8] sm:$0xff]
  %v4878 = vld [vmem:[#allocation2 + $0xf0] sm:$0xff]
  %v4879 = vld [vmem:[#allocation2 + $0xf8] sm:$0xff]
  %v4880 = vld [vmem:[#allocation2 + $0x100] sm:$0xff]
  %v4881 = vld [vmem:[#allocation2 + $0x108] sm:$0xff]
  %v4882 = vld [vmem:[#allocation2 + $0x110] sm:$0xff]
  %v4883 = vld [vmem:[#allocation2 + $0x118] sm:$0xff]
  %v4884 = vld [vmem:[#allocation2 + $0x120] sm:$0xff]
  %v4885 = vld [vmem:[#allocation2 + $0x128] sm:$0xff]
  %v4886 = vld [vmem:[#allocation2 + $0x130] sm:$0xff]
  %v4887 = vld [vmem:[#allocation2 + $0x138] sm:$0xff]
  %v4888 = vld [vmem:[#allocation2 + $0x140] sm:$0xff]
  %v4889 = vld [vmem:[#allocation2 + $0x148] sm:$0xff]
  %v4890 = vld [vmem:[#allocation2 + $0x150] sm:$0xff]
  %v4891 = vld [vmem:[#allocation2 + $0x158] sm:$0xff]
  %v4892 = vld [vmem:[#allocation2 + $0x160] sm:$0xff]
  %v4893 = vld [vmem:[#allocation2 + $0x168] sm:$0xff]
  %v4894 = vld [vmem:[#allocation2 + $0x170] sm:$0xff]
  %v4895 = vld [vmem:[#allocation2 + $0x178] sm:$0xff]
  %v4896 = vld [vmem:[#allocation2 + $0x180] sm:$0xff]
  %v4897 = vld [vmem:[#allocation2 + $0x188] sm:$0xff]
  %v4898 = vld [vmem:[#allocation2 + $0x190] sm:$0xff]
  %v4899 = vld [vmem:[#allocation2 + $0x198] sm:$0xff]
  %v4900 = vld [vmem:[#allocation2 + $0x1a0] sm:$0xff]
  %v4901 = vld [vmem:[#allocation2 + $0x1a8] sm:$0xff]
  %v4902 = vpack.c.bf16 %v4858, %v4857
  %v4903 = vpack.c.bf16 %v4860, %v4859
  %v4904 = vpack.c.bf16 %v4862, %v4861
  %v4905 = vpack.c.bf16 %v4864, %v4863
  %v4906 = vpack.c.bf16 %v4866, %v4865
  %v4907 = vpack.c.bf16 %v4868, %v4867
  %v4908 = vpack.c.bf16 %v4870, %v4869
  %v4909 = vpack.c.bf16 %v4872, %v4871
  %v4910 = vpack.c.bf16 %v4874, %v4873
  %v4911 = vpack.c.bf16 %v4876, %v4875
  %v4912 = vpack.c.bf16 %v4878, %v4877
  %v4913 = vpack.c.bf16 %v4880, %v4879
  %v4914 = vpack.c.bf16 %v4882, %v4881
  %v4915 = vpack.c.bf16 %v4884, %v4883
  %v4916 = vpack.c.bf16 %v4886, %v4885
  %v4917 = vpack.c.bf16 %v4888, %v4887
  %v4918 = vpack.c.bf16 %v4890, %v4889
  %v4919 = vpack.c.bf16 %v4892, %v4891
  %v4920 = vpack.c.bf16 %v4894, %v4893
  %v4921 = vpack.c.bf16 %v4896, %v4895
  %v4922 = vpack.c.bf16 %v4898, %v4897
  %v4923 = vpack.c.bf16 %v4900, %v4899
  %v4924 = vpack.c.bf16 %v4901, %v4901
  %v4926 = vsel %vm4698, %v4924, 0
  %4928 = vmatpush.bf16.msra.mxu0 %v4909
  %4929 = vmatpush.bf16.msra.mxu0 %v4908
  %4930 = vmatpush.bf16.msra.mxu0 %v4907
  %4931 = vmatpush.bf16.msra.mxu0 %v4906
  %4932 = vmatpush.bf16.msra.mxu0 %v4905
  %4933 = vmatpush.bf16.msra.mxu0 %v4904
  %4934 = vmatpush.bf16.msra.mxu0 %v4903
  %4935 = vmatpush.bf16.msra.mxu0 %v4902
  %4936 = vmatmul.bf16.gmra.mxu0 %v4633
  %v4937 = vpop.f32.mrf.mxu0
  %v4938 = vadd.f32 %v4408, %v4937
  %v4939 = vpop.f32.mrf.mxu0
  %v4940 = vadd.f32 %v4413, %v4939
  %4941 = vmatmul.bf16.gmra.mxu0 %v4636
  %v4942 = vpop.f32.mrf.mxu0
  %v4943 = vadd.f32 %v4418, %v4942
  %v4944 = vpop.f32.mrf.mxu0
  %v4945 = vadd.f32 %v4423, %v4944
  %4946 = vmatmul.bf16.gmra.mxu0 %v4639
  %v4947 = vpop.f32.mrf.mxu0
  %v4948 = vadd.f32 %v4428, %v4947
  %v4949 = vpop.f32.mrf.mxu0
  %v4950 = vadd.f32 %v4433, %v4949
  %4951 = vmatmul.bf16.gmra.mxu0 %v4642
  %v4952 = vpop.f32.mrf.mxu0
  %v4953 = vadd.f32 %v4438, %v4952
  %v4954 = vpop.f32.mrf.mxu0
  %v4955 = vadd.f32 %v4443, %v4954
  %4956 = vmatmul.bf16.gmra.mxu0 %v4645
  %v4957 = vpop.f32.mrf.mxu0
  %v4958 = vadd.f32 %v4448, %v4957
  %v4959 = vpop.f32.mrf.mxu0
  %v4960 = vadd.f32 %v4453, %v4959
  %4961 = vmatmul.bf16.gmra.mxu0 %v4648
  %v4962 = vpop.f32.mrf.mxu0
  %v4963 = vadd.f32 %v4458, %v4962
  %v4964 = vpop.f32.mrf.mxu0
  %v4965 = vadd.f32 %v4463, %v4964
  %4966 = vmatmul.bf16.gmra.mxu0 %v4651
  %v4967 = vpop.f32.mrf.mxu0
  %v4968 = vadd.f32 %v4468, %v4967
  %v4969 = vpop.f32.mrf.mxu0
  %v4970 = vadd.f32 %v4473, %v4969
  %4971 = vmatmul.bf16.gmra.mxu0 %v4654
  %v4972 = vpop.f32.mrf.mxu0
  %v4973 = vadd.f32 %v4478, %v4972
  %v4974 = vpop.f32.mrf.mxu0
  %v4975 = vadd.f32 %v4483, %v4974
  %4976 = vdwg.mxu0
  %4977 = vmatpush.bf16.msra.mxu0 %v4917
  %4978 = vmatpush.bf16.msra.mxu0 %v4916
  %4979 = vmatpush.bf16.msra.mxu0 %v4915
  %4980 = vmatpush.bf16.msra.mxu0 %v4914
  %4981 = vmatpush.bf16.msra.mxu0 %v4913
  %4982 = vmatpush.bf16.msra.mxu0 %v4912
  %4983 = vmatpush.bf16.msra.mxu0 %v4911
  %4984 = vmatpush.bf16.msra.mxu0 %v4910
  %4985 = vmatmul.bf16.gmra.mxu0 %v4634
  %v4986 = vpop.f32.mrf.mxu0
  %v4987 = vadd.f32 %v4938, %v4986
  %v4988 = vpop.f32.mrf.mxu0
  %v4989 = vadd.f32 %v4940, %v4988
  %4990 = vmatmul.bf16.gmra.mxu0 %v4637
  %v4991 = vpop.f32.mrf.mxu0
  %v4992 = vadd.f32 %v4943, %v4991
  %v4993 = vpop.f32.mrf.mxu0
  %v4994 = vadd.f32 %v4945, %v4993
  %4995 = vmatmul.bf16.gmra.mxu0 %v4640
  %v4996 = vpop.f32.mrf.mxu0
  %v4997 = vadd.f32 %v4948, %v4996
  %v4998 = vpop.f32.mrf.mxu0
  %v4999 = vadd.f32 %v4950, %v4998
  %5000 = vmatmul.bf16.gmra.mxu0 %v4643
  %v5001 = vpop.f32.mrf.mxu0
  %v5002 = vadd.f32 %v4953, %v5001
  %v5003 = vpop.f32.mrf.mxu0
  %v5004 = vadd.f32 %v4955, %v5003
  %5005 = vmatmul.bf16.gmra.mxu0 %v4646
  %v5006 = vpop.f32.mrf.mxu0
  %v5007 = vadd.f32 %v4958, %v5006
  %v5008 = vpop.f32.mrf.mxu0
  %v5009 = vadd.f32 %v4960, %v5008
  %5010 = vmatmul.bf16.gmra.mxu0 %v4649
  %v5011 = vpop.f32.mrf.mxu0
  %v5012 = vadd.f32 %v4963, %v5011
  %v5013 = vpop.f32.mrf.mxu0
  %v5014 = vadd.f32 %v4965, %v5013
  %5015 = vmatmul.bf16.gmra.mxu0 %v4652
  %v5016 = vpop.f32.mrf.mxu0
  %v5017 = vadd.f32 %v4968, %v5016
  %v5018 = vpop.f32.mrf.mxu0
  %v5019 = vadd.f32 %v4970, %v5018
  %5020 = vmatmul.bf16.gmra.mxu0 %v4655
  %v5021 = vpop.f32.mrf.mxu0
  %v5022 = vadd.f32 %v4973, %v5021
  %v5023 = vpop.f32.mrf.mxu0
  %v5024 = vadd.f32 %v4975, %v5023
  %5025 = vdwg.mxu0
  %5026 = vmatpush.bf16.msra.mxu0 0
  %5027 = vmatpush.bf16.msra.mxu0 %v4926
  %5028 = vmatpush.bf16.msra.mxu0 %v4923
  %5029 = vmatpush.bf16.msra.mxu0 %v4922
  %5030 = vmatpush.bf16.msra.mxu0 %v4921
  %5031 = vmatpush.bf16.msra.mxu0 %v4920
  %5032 = vmatpush.bf16.msra.mxu0 %v4919
  %5033 = vmatpush.bf16.msra.mxu0 %v4918
  %5034 = vmatmul.bf16.gmra.mxu0 %v4675
  %v5035 = vpop.f32.mrf.mxu0
  %v5036 = vadd.f32 %v4987, %v5035
  %v5037 = vpop.f32.mrf.mxu0
  %v5038 = vadd.f32 %v4989, %v5037
  %5039 = vmatmul.bf16.gmra.mxu0 %v4678
  %v5040 = vpop.f32.mrf.mxu0
  %v5041 = vadd.f32 %v4992, %v5040
  %v5042 = vpop.f32.mrf.mxu0
  %v5043 = vadd.f32 %v4994, %v5042
  %5044 = vmatmul.bf16.gmra.mxu0 %v4681
  %v5045 = vpop.f32.mrf.mxu0
  %v5046 = vadd.f32 %v4997, %v5045
  %v5047 = vpop.f32.mrf.mxu0
  %v5048 = vadd.f32 %v4999, %v5047
  %5049 = vmatmul.bf16.gmra.mxu0 %v4684
  %v5050 = vpop.f32.mrf.mxu0
  %v5051 = vadd.f32 %v5002, %v5050
  %v5052 = vpop.f32.mrf.mxu0
  %v5053 = vadd.f32 %v5004, %v5052
  %5054 = vmatmul.bf16.gmra.mxu0 %v4687
  %v5055 = vpop.f32.mrf.mxu0
  %v5056 = vadd.f32 %v5007, %v5055
  %v5057 = vpop.f32.mrf.mxu0
  %v5058 = vadd.f32 %v5009, %v5057
  %5059 = vmatmul.bf16.gmra.mxu0 %v4690
  %v5060 = vpop.f32.mrf.mxu0
  %v5061 = vadd.f32 %v5012, %v5060
  %v5062 = vpop.f32.mrf.mxu0
  %v5063 = vadd.f32 %v5014, %v5062
  %5064 = vmatmul.bf16.gmra.mxu0 %v4693
  %v5065 = vpop.f32.mrf.mxu0
  %v5066 = vadd.f32 %v5017, %v5065
  %v5067 = vpop.f32.mrf.mxu0
  %v5068 = vadd.f32 %v5019, %v5067
  %5069 = vmatmul.bf16.gmra.mxu0 %v4696
  %v5070 = vpop.f32.mrf.mxu0
  %v5071 = vadd.f32 %v5022, %v5070
  %v5072 = vpop.f32.mrf.mxu0
  %v5073 = vadd.f32 %v5024, %v5072
  %5074 = vdwg.mxu0
  %v5075 = vmax.f32 %v5036, %v5056
  %v5076 = vmax.f32 %v5038, %v5058
  %v5077 = vmax.f32 %v5041, %v5061
  %v5078 = vmax.f32 %v5043, %v5063
  %v5079 = vmax.f32 %v5046, %v5066
  %v5080 = vmax.f32 %v5048, %v5068
  %v5081 = vmax.f32 %v5051, %v5071
  %v5082 = vmax.f32 %v5053, %v5073
  %v5083 = vmax.f32 %v4849, %v5075
  %v5084 = vmax.f32 %v4850, %v5076
  %v5085 = vmax.f32 %v4851, %v5077
  %v5086 = vmax.f32 %v4852, %v5078
  %v5087 = vmax.f32 %v4853, %v5079
  %v5088 = vmax.f32 %v4854, %v5080
  %v5089 = vmax.f32 %v4855, %v5081
  %v5090 = vmax.f32 %v4856, %v5082
  %v5091 = vmax.f32 %v5083, 0.0
  %v5092 = vmax.f32 %v5084, 0.0
  %v5093 = vmax.f32 %v5085, 0.0
  %v5094 = vmax.f32 %v5086, 0.0
  %v5095 = vmax.f32 %v5087, 0.0
  %v5096 = vmax.f32 %v5088, 0.0
  %v5097 = vmax.f32 %v5089, 0.0
  %v5098 = vmax.f32 %v5090, 0.0
  %5099 = vst [vmem:[#allocation3] sm:$0xff] %v5091
  %5100 = vst [vmem:[#allocation3 + $0x8] sm:$0xff] %v5092
  %5101 = vst [vmem:[#allocation3 + $0x10] sm:$0xff] %v5093
  %5102 = vst [vmem:[#allocation3 + $0x18] sm:$0xff] %v5094
  %5103 = vst [vmem:[#allocation3 + $0x20] sm:$0xff] %v5095
  %5104 = vst [vmem:[#allocation3 + $0x28] sm:$0xff] %v5096
  %5105 = vst [vmem:[#allocation3 + $0x30] sm:$0xff] %v5097
  %5106 = vst [vmem:[#allocation3 + $0x38] sm:$0xff] %v5098
  %v5107 = vld [vmem:[#allocation2 + $0x90] sm:$0xff]
  %v5108 = vld [vmem:[#allocation2 + $0x98] sm:$0xff]
  %v5109 = vld [vmem:[#allocation2 + $0xa0] sm:$0xff]
  %v5110 = vld [vmem:[#allocation2 + $0xa8] sm:$0xff]
  %v5111 = vld [vmem:[#allocation2 + $0xb0] sm:$0xff]
  %v5112 = vld [vmem:[#allocation2 + $0xb8] sm:$0xff]
  %v5113 = vld [vmem:[#allocation2 + $0xc0] sm:$0xff]
  %v5114 = vld [vmem:[#allocation2 + $0xc8] sm:$0xff]
  %v5115 = vld [vmem:[#allocation2 + $0xd0] sm:$0xff]
  %v5116 = vld [vmem:[#allocation2 + $0xd8] sm:$0xff]
  %v5117 = vld [vmem:[#allocation2 + $0xe0] sm:$0xff]
  %v5118 = vld [vmem:[#allocation2 + $0xe8] sm:$0xff]
  %v5119 = vld [vmem:[#allocation2 + $0xf0] sm:$0xff]
  %v5120 = vld [vmem:[#allocation2 + $0xf8] sm:$0xff]
  %v5121 = vld [vmem:[#allocation2 + $0x100] sm:$0xff]
  %v5122 = vld [vmem:[#allocation2 + $0x108] sm:$0xff]
  %v5123 = vld [vmem:[#allocation2 + $0x110] sm:$0xff]
  %v5124 = vld [vmem:[#allocation2 + $0x118] sm:$0xff]
  %v5125 = vld [vmem:[#allocation2 + $0x120] sm:$0xff]
  %v5126 = vld [vmem:[#allocation2 + $0x128] sm:$0xff]
  %v5127 = vld [vmem:[#allocation2 + $0x130] sm:$0xff]
  %v5128 = vld [vmem:[#allocation2 + $0x138] sm:$0xff]
  %v5129 = vld [vmem:[#allocation2 + $0x140] sm:$0xff]
  %v5130 = vld [vmem:[#allocation2 + $0x148] sm:$0xff]
  %v5131 = vld [vmem:[#allocation2 + $0x150] sm:$0xff]
  %v5132 = vld [vmem:[#allocation2 + $0x158] sm:$0xff]
  %v5133 = vld [vmem:[#allocation2 + $0x160] sm:$0xff]
  %v5134 = vld [vmem:[#allocation2 + $0x168] sm:$0xff]
  %v5135 = vld [vmem:[#allocation2 + $0x170] sm:$0xff]
  %v5136 = vld [vmem:[#allocation2 + $0x178] sm:$0xff]
  %v5137 = vld [vmem:[#allocation2 + $0x180] sm:$0xff]
  %v5138 = vld [vmem:[#allocation2 + $0x188] sm:$0xff]
  %v5139 = vld [vmem:[#allocation2 + $0x190] sm:$0xff]
  %v5140 = vld [vmem:[#allocation2 + $0x198] sm:$0xff]
  %v5141 = vld [vmem:[#allocation2 + $0x1a0] sm:$0xff]
  %v5142 = vld [vmem:[#allocation2 + $0x1a8] sm:$0xff]
  %v5143 = vld [vmem:[#allocation2 + $0x1b0] sm:$0xff]
  %v5144 = vld [vmem:[#allocation2 + $0x1b8] sm:$0xff]
  %v5145 = vld [vmem:[#allocation2 + $0x1c0] sm:$0xff]
  %v5146 = vld [vmem:[#allocation2 + $0x1c8] sm:$0xff]
  %v5147 = vld [vmem:[#allocation2 + $0x1d0] sm:$0xff]
  %v5148 = vld [vmem:[#allocation2 + $0x1d8] sm:$0xff]
  %v5149 = vld [vmem:[#allocation2 + $0x1e0] sm:$0xff]
  %v5150 = vld [vmem:[#allocation2 + $0x1e8] sm:$0xff]
  %v5151 = vld [vmem:[#allocation2 + $0x1f0] sm:$0xff]
  %v5152 = vpack.c.bf16 %v5108, %v5107
  %v5153 = vpack.c.bf16 %v5110, %v5109
  %v5154 = vpack.c.bf16 %v5112, %v5111
  %v5155 = vpack.c.bf16 %v5114, %v5113
  %v5156 = vpack.c.bf16 %v5116, %v5115
  %v5157 = vpack.c.bf16 %v5118, %v5117
  %v5158 = vpack.c.bf16 %v5120, %v5119
  %v5159 = vpack.c.bf16 %v5122, %v5121
  %v5160 = vpack.c.bf16 %v5124, %v5123
  %v5161 = vpack.c.bf16 %v5126, %v5125
  %v5162 = vpack.c.bf16 %v5128, %v5127
  %v5163 = vpack.c.bf16 %v5130, %v5129
  %v5164 = vpack.c.bf16 %v5132, %v5131
  %v5165 = vpack.c.bf16 %v5134, %v5133
  %v5166 = vpack.c.bf16 %v5136, %v5135
  %v5167 = vpack.c.bf16 %v5138, %v5137
  %v5168 = vpack.c.bf16 %v5140, %v5139
  %v5169 = vpack.c.bf16 %v5142, %v5141
  %v5170 = vpack.c.bf16 %v5144, %v5143
  %v5171 = vpack.c.bf16 %v5146, %v5145
  %v5172 = vpack.c.bf16 %v5148, %v5147
  %v5173 = vpack.c.bf16 %v5150, %v5149
  %v5174 = vpack.c.bf16 %v5151, %v5151
  %v5176 = vsel %vm4698, %v5174, 0
  %5178 = vmatpush.bf16.msra.mxu0 %v5159
  %5179 = vmatpush.bf16.msra.mxu0 %v5158
  %5180 = vmatpush.bf16.msra.mxu0 %v5157
  %5181 = vmatpush.bf16.msra.mxu0 %v5156
  %5182 = vmatpush.bf16.msra.mxu0 %v5155
  %5183 = vmatpush.bf16.msra.mxu0 %v5154
  %5184 = vmatpush.bf16.msra.mxu0 %v5153
  %5185 = vmatpush.bf16.msra.mxu0 %v5152
  %5186 = vmatmul.bf16.gmra.mxu0 %v4633
  %v5187 = vpop.f32.mrf.mxu0
  %v5188 = vadd.f32 %v4408, %v5187
  %v5189 = vpop.f32.mrf.mxu0
  %v5190 = vadd.f32 %v4413, %v5189
  %5191 = vmatmul.bf16.gmra.mxu0 %v4636
  %v5192 = vpop.f32.mrf.mxu0
  %v5193 = vadd.f32 %v4418, %v5192
  %v5194 = vpop.f32.mrf.mxu0
  %v5195 = vadd.f32 %v4423, %v5194
  %5196 = vmatmul.bf16.gmra.mxu0 %v4639
  %v5197 = vpop.f32.mrf.mxu0
  %v5198 = vadd.f32 %v4428, %v5197
  %v5199 = vpop.f32.mrf.mxu0
  %v5200 = vadd.f32 %v4433, %v5199
  %5201 = vmatmul.bf16.gmra.mxu0 %v4642
  %v5202 = vpop.f32.mrf.mxu0
  %v5203 = vadd.f32 %v4438, %v5202
  %v5204 = vpop.f32.mrf.mxu0
  %v5205 = vadd.f32 %v4443, %v5204
  %5206 = vmatmul.bf16.gmra.mxu0 %v4645
  %v5207 = vpop.f32.mrf.mxu0
  %v5208 = vadd.f32 %v4448, %v5207
  %v5209 = vpop.f32.mrf.mxu0
  %v5210 = vadd.f32 %v4453, %v5209
  %5211 = vmatmul.bf16.gmra.mxu0 %v4648
  %v5212 = vpop.f32.mrf.mxu0
  %v5213 = vadd.f32 %v4458, %v5212
  %v5214 = vpop.f32.mrf.mxu0
  %v5215 = vadd.f32 %v4463, %v5214
  %5216 = vmatmul.bf16.gmra.mxu0 %v4651
  %v5217 = vpop.f32.mrf.mxu0
  %v5218 = vadd.f32 %v4468, %v5217
  %v5219 = vpop.f32.mrf.mxu0
  %v5220 = vadd.f32 %v4473, %v5219
  %5221 = vmatmul.bf16.gmra.mxu0 %v4654
  %v5222 = vpop.f32.mrf.mxu0
  %v5223 = vadd.f32 %v4478, %v5222
  %v5224 = vpop.f32.mrf.mxu0
  %v5225 = vadd.f32 %v4483, %v5224
  %5226 = vdwg.mxu0
  %5227 = vmatpush.bf16.msra.mxu0 %v5167
  %5228 = vmatpush.bf16.msra.mxu0 %v5166
  %5229 = vmatpush.bf16.msra.mxu0 %v5165
  %5230 = vmatpush.bf16.msra.mxu0 %v5164
  %5231 = vmatpush.bf16.msra.mxu0 %v5163
  %5232 = vmatpush.bf16.msra.mxu0 %v5162
  %5233 = vmatpush.bf16.msra.mxu0 %v5161
  %5234 = vmatpush.bf16.msra.mxu0 %v5160
  %5235 = vmatmul.bf16.gmra.mxu0 %v4634
  %v5236 = vpop.f32.mrf.mxu0
  %v5237 = vadd.f32 %v5188, %v5236
  %v5238 = vpop.f32.mrf.mxu0
  %v5239 = vadd.f32 %v5190, %v5238
  %5240 = vmatmul.bf16.gmra.mxu0 %v4637
  %v5241 = vpop.f32.mrf.mxu0
  %v5242 = vadd.f32 %v5193, %v5241
  %v5243 = vpop.f32.mrf.mxu0
  %v5244 = vadd.f32 %v5195, %v5243
  %5245 = vmatmul.bf16.gmra.mxu0 %v4640
  %v5246 = vpop.f32.mrf.mxu0
  %v5247 = vadd.f32 %v5198, %v5246
  %v5248 = vpop.f32.mrf.mxu0
  %v5249 = vadd.f32 %v5200, %v5248
  %5250 = vmatmul.bf16.gmra.mxu0 %v4643
  %v5251 = vpop.f32.mrf.mxu0
  %v5252 = vadd.f32 %v5203, %v5251
  %v5253 = vpop.f32.mrf.mxu0
  %v5254 = vadd.f32 %v5205, %v5253
  %5255 = vmatmul.bf16.gmra.mxu0 %v4646
  %v5256 = vpop.f32.mrf.mxu0
  %v5257 = vadd.f32 %v5208, %v5256
  %v5258 = vpop.f32.mrf.mxu0
  %v5259 = vadd.f32 %v5210, %v5258
  %5260 = vmatmul.bf16.gmra.mxu0 %v4649
  %v5261 = vpop.f32.mrf.mxu0
  %v5262 = vadd.f32 %v5213, %v5261
  %v5263 = vpop.f32.mrf.mxu0
  %v5264 = vadd.f32 %v5215, %v5263
  %5265 = vmatmul.bf16.gmra.mxu0 %v4652
  %v5266 = vpop.f32.mrf.mxu0
  %v5267 = vadd.f32 %v5218, %v5266
  %v5268 = vpop.f32.mrf.mxu0
  %v5269 = vadd.f32 %v5220, %v5268
  %5270 = vmatmul.bf16.gmra.mxu0 %v4655
  %v5271 = vpop.f32.mrf.mxu0
  %v5272 = vadd.f32 %v5223, %v5271
  %v5273 = vpop.f32.mrf.mxu0
  %v5274 = vadd.f32 %v5225, %v5273
  %5275 = vdwg.mxu0
  %5276 = vmatpush.bf16.msra.mxu0 0
  %5277 = vmatpush.bf16.msra.mxu0 %v5176
  %5278 = vmatpush.bf16.msra.mxu0 %v5173
  %5279 = vmatpush.bf16.msra.mxu0 %v5172
  %5280 = vmatpush.bf16.msra.mxu0 %v5171
  %5281 = vmatpush.bf16.msra.mxu0 %v5170
  %5282 = vmatpush.bf16.msra.mxu0 %v5169
  %5283 = vmatpush.bf16.msra.mxu0 %v5168
  %5284 = vmatmul.bf16.gmra.mxu0 %v4675
  %v5285 = vpop.f32.mrf.mxu0
  %v5286 = vadd.f32 %v5237, %v5285
  %v5287 = vpop.f32.mrf.mxu0
  %v5288 = vadd.f32 %v5239, %v5287
  %5289 = vmatmul.bf16.gmra.mxu0 %v4678
  %v5290 = vpop.f32.mrf.mxu0
  %v5291 = vadd.f32 %v5242, %v5290
  %v5292 = vpop.f32.mrf.mxu0
  %v5293 = vadd.f32 %v5244, %v5292
  %5294 = vmatmul.bf16.gmra.mxu0 %v4681
  %v5295 = vpop.f32.mrf.mxu0
  %v5296 = vadd.f32 %v5247, %v5295
  %v5297 = vpop.f32.mrf.mxu0
  %v5298 = vadd.f32 %v5249, %v5297
  %5299 = vmatmul.bf16.gmra.mxu0 %v4684
  %v5300 = vpop.f32.mrf.mxu0
  %v5301 = vadd.f32 %v5252, %v5300
  %v5302 = vpop.f32.mrf.mxu0
  %v5303 = vadd.f32 %v5254, %v5302
  %5304 = vmatmul.bf16.gmra.mxu0 %v4687
  %v5305 = vpop.f32.mrf.mxu0
  %v5306 = vadd.f32 %v5257, %v5305
  %v5307 = vpop.f32.mrf.mxu0
  %v5308 = vadd.f32 %v5259, %v5307
  %5309 = vmatmul.bf16.gmra.mxu0 %v4690
  %v5310 = vpop.f32.mrf.mxu0
  %v5311 = vadd.f32 %v5262, %v5310
  %v5312 = vpop.f32.mrf.mxu0
  %v5313 = vadd.f32 %v5264, %v5312
  %5314 = vmatmul.bf16.gmra.mxu0 %v4693
  %v5315 = vpop.f32.mrf.mxu0
  %v5316 = vadd.f32 %v5267, %v5315
  %v5317 = vpop.f32.mrf.mxu0
  %v5318 = vadd.f32 %v5269, %v5317
  %5319 = vmatmul.bf16.gmra.mxu0 %v4696
  %v5320 = vpop.f32.mrf.mxu0
  %v5321 = vadd.f32 %v5272, %v5320
  %v5322 = vpop.f32.mrf.mxu0
  %v5323 = vadd.f32 %v5274, %v5322
  %5324 = vdwg.mxu0
  %v5325 = vmax.f32 %v5286, %v5306
  %v5326 = vmax.f32 %v5288, %v5308
  %v5327 = vmax.f32 %v5291, %v5311
  %v5328 = vmax.f32 %v5293, %v5313
  %v5329 = vmax.f32 %v5296, %v5316
  %v5330 = vmax.f32 %v5298, %v5318
  %v5331 = vmax.f32 %v5301, %v5321
  %v5332 = vmax.f32 %v5303, %v5323
  %v5333 = vld [vmem:[#allocation2 + $0xd8] sm:$0xff]
  %v5334 = vld [vmem:[#allocation2 + $0xe0] sm:$0xff]
  %v5335 = vld [vmem:[#allocation2 + $0xe8] sm:$0xff]
  %v5336 = vld [vmem:[#allocation2 + $0xf0] sm:$0xff]
  %v5337 = vld [vmem:[#allocation2 + $0xf8] sm:$0xff]
  %v5338 = vld [vmem:[#allocation2 + $0x100] sm:$0xff]
  %v5339 = vld [vmem:[#allocation2 + $0x108] sm:$0xff]
  %v5340 = vld [vmem:[#allocation2 + $0x110] sm:$0xff]
  %v5341 = vld [vmem:[#allocation2 + $0x118] sm:$0xff]
  %v5342 = vld [vmem:[#allocation2 + $0x120] sm:$0xff]
  %v5343 = vld [vmem:[#allocation2 + $0x128] sm:$0xff]
  %v5344 = vld [vmem:[#allocation2 + $0x130] sm:$0xff]
  %v5345 = vld [vmem:[#allocation2 + $0x138] sm:$0xff]
  %v5346 = vld [vmem:[#allocation2 + $0x140] sm:$0xff]
  %v5347 = vld [vmem:[#allocation2 + $0x148] sm:$0xff]
  %v5348 = vld [vmem:[#allocation2 + $0x150] sm:$0xff]
  %v5349 = vld [vmem:[#allocation2 + $0x158] sm:$0xff]
  %v5350 = vld [vmem:[#allocation2 + $0x160] sm:$0xff]
  %v5351 = vld [vmem:[#allocation2 + $0x168] sm:$0xff]
  %v5352 = vld [vmem:[#allocation2 + $0x170] sm:$0xff]
  %v5353 = vld [vmem:[#allocation2 + $0x178] sm:$0xff]
  %v5354 = vld [vmem:[#allocation2 + $0x180] sm:$0xff]
  %v5355 = vld [vmem:[#allocation2 + $0x188] sm:$0xff]
  %v5356 = vld [vmem:[#allocation2 + $0x190] sm:$0xff]
  %v5357 = vld [vmem:[#allocation2 + $0x198] sm:$0xff]
  %v5358 = vld [vmem:[#allocation2 + $0x1a0] sm:$0xff]
  %v5359 = vld [vmem:[#allocation2 + $0x1a8] sm:$0xff]
  %v5360 = vld [vmem:[#allocation2 + $0x1b0] sm:$0xff]
  %v5361 = vld [vmem:[#allocation2 + $0x1b8] sm:$0xff]
  %v5362 = vld [vmem:[#allocation2 + $0x1c0] sm:$0xff]
  %v5363 = vld [vmem:[#allocation2 + $0x1c8] sm:$0xff]
  %v5364 = vld [vmem:[#allocation2 + $0x1d0] sm:$0xff]
  %v5365 = vld [vmem:[#allocation2 + $0x1d8] sm:$0xff]
  %v5366 = vld [vmem:[#allocation2 + $0x1e0] sm:$0xff]
  %v5367 = vld [vmem:[#allocation2 + $0x1e8] sm:$0xff]
  %v5368 = vld [vmem:[#allocation2 + $0x1f0] sm:$0xff]
  %v5369 = vld [vmem:[#allocation2 + $0x1f8] sm:$0xff]
  %v5370 = vld [vmem:[#allocation2 + $0x200] sm:$0xff]
  %v5371 = vld [vmem:[#allocation2 + $0x208] sm:$0xff]
  %v5372 = vld [vmem:[#allocation2 + $0x210] sm:$0xff]
  %v5373 = vld [vmem:[#allocation2 + $0x218] sm:$0xff]
  %v5374 = vld [vmem:[#allocation2 + $0x220] sm:$0xff]
  %v5375 = vld [vmem:[#allocation2 + $0x228] sm:$0xff]
  %v5376 = vld [vmem:[#allocation2 + $0x230] sm:$0xff]
  %v5377 = vld [vmem:[#allocation2 + $0x238] sm:$0xff]
  %v5378 = vpack.c.bf16 %v5334, %v5333
  %v5379 = vpack.c.bf16 %v5336, %v5335
  %v5380 = vpack.c.bf16 %v5338, %v5337
  %v5381 = vpack.c.bf16 %v5340, %v5339
  %v5382 = vpack.c.bf16 %v5342, %v5341
  %v5383 = vpack.c.bf16 %v5344, %v5343
  %v5384 = vpack.c.bf16 %v5346, %v5345
  %v5385 = vpack.c.bf16 %v5348, %v5347
  %v5386 = vpack.c.bf16 %v5350, %v5349
  %v5387 = vpack.c.bf16 %v5352, %v5351
  %v5388 = vpack.c.bf16 %v5354, %v5353
  %v5389 = vpack.c.bf16 %v5356, %v5355
  %v5390 = vpack.c.bf16 %v5358, %v5357
  %v5391 = vpack.c.bf16 %v5360, %v5359
  %v5392 = vpack.c.bf16 %v5362, %v5361
  %v5393 = vpack.c.bf16 %v5364, %v5363
  %v5394 = vpack.c.bf16 %v5366, %v5365
  %v5395 = vpack.c.bf16 %v5368, %v5367
  %v5396 = vpack.c.bf16 %v5370, %v5369
  %v5397 = vpack.c.bf16 %v5372, %v5371
  %v5398 = vpack.c.bf16 %v5374, %v5373
  %v5399 = vpack.c.bf16 %v5376, %v5375
  %v5400 = vpack.c.bf16 %v5377, %v5377
  %v5402 = vsel %vm4698, %v5400, 0
  %5404 = vmatpush.bf16.msra.mxu0 %v5385
  %5405 = vmatpush.bf16.msra.mxu0 %v5384
  %5406 = vmatpush.bf16.msra.mxu0 %v5383
  %5407 = vmatpush.bf16.msra.mxu0 %v5382
  %5408 = vmatpush.bf16.msra.mxu0 %v5381
  %5409 = vmatpush.bf16.msra.mxu0 %v5380
  %5410 = vmatpush.bf16.msra.mxu0 %v5379
  %5411 = vmatpush.bf16.msra.mxu0 %v5378
  %5412 = vmatmul.bf16.gmra.mxu0 %v4633
  %v5413 = vpop.f32.mrf.mxu0
  %v5414 = vadd.f32 %v4408, %v5413
  %v5415 = vpop.f32.mrf.mxu0
  %v5416 = vadd.f32 %v4413, %v5415
  %5417 = vmatmul.bf16.gmra.mxu0 %v4636
  %v5418 = vpop.f32.mrf.mxu0
  %v5419 = vadd.f32 %v4418, %v5418
  %v5420 = vpop.f32.mrf.mxu0
  %v5421 = vadd.f32 %v4423, %v5420
  %5422 = vmatmul.bf16.gmra.mxu0 %v4639
  %v5423 = vpop.f32.mrf.mxu0
  %v5424 = vadd.f32 %v4428, %v5423
  %v5425 = vpop.f32.mrf.mxu0
  %v5426 = vadd.f32 %v4433, %v5425
  %5427 = vmatmul.bf16.gmra.mxu0 %v4642
  %v5428 = vpop.f32.mrf.mxu0
  %v5429 = vadd.f32 %v4438, %v5428
  %v5430 = vpop.f32.mrf.mxu0
  %v5431 = vadd.f32 %v4443, %v5430
  %5432 = vmatmul.bf16.gmra.mxu0 %v4645
  %v5433 = vpop.f32.mrf.mxu0
  %v5434 = vadd.f32 %v4448, %v5433
  %v5435 = vpop.f32.mrf.mxu0
  %v5436 = vadd.f32 %v4453, %v5435
  %5437 = vmatmul.bf16.gmra.mxu0 %v4648
  %v5438 = vpop.f32.mrf.mxu0
  %v5439 = vadd.f32 %v4458, %v5438
  %v5440 = vpop.f32.mrf.mxu0
  %v5441 = vadd.f32 %v4463, %v5440
  %5442 = vmatmul.bf16.gmra.mxu0 %v4651
  %v5443 = vpop.f32.mrf.mxu0
  %v5444 = vadd.f32 %v4468, %v5443
  %v5445 = vpop.f32.mrf.mxu0
  %v5446 = vadd.f32 %v4473, %v5445
  %5447 = vmatmul.bf16.gmra.mxu0 %v4654
  %v5448 = vpop.f32.mrf.mxu0
  %v5449 = vadd.f32 %v4478, %v5448
  %v5450 = vpop.f32.mrf.mxu0
  %v5451 = vadd.f32 %v4483, %v5450
  %5452 = vdwg.mxu0
  %5453 = vmatpush.bf16.msra.mxu0 %v5393
  %5454 = vmatpush.bf16.msra.mxu0 %v5392
  %5455 = vmatpush.bf16.msra.mxu0 %v5391
  %5456 = vmatpush.bf16.msra.mxu0 %v5390
  %5457 = vmatpush.bf16.msra.mxu0 %v5389
  %5458 = vmatpush.bf16.msra.mxu0 %v5388
  %5459 = vmatpush.bf16.msra.mxu0 %v5387
  %5460 = vmatpush.bf16.msra.mxu0 %v5386
  %5461 = vmatmul.bf16.gmra.mxu0 %v4634
  %v5462 = vpop.f32.mrf.mxu0
  %v5463 = vadd.f32 %v5414, %v5462
  %v5464 = vpop.f32.mrf.mxu0
  %v5465 = vadd.f32 %v5416, %v5464
  %5466 = vmatmul.bf16.gmra.mxu0 %v4637
  %v5467 = vpop.f32.mrf.mxu0
  %v5468 = vadd.f32 %v5419, %v5467
  %v5469 = vpop.f32.mrf.mxu0
  %v5470 = vadd.f32 %v5421, %v5469
  %5471 = vmatmul.bf16.gmra.mxu0 %v4640
  %v5472 = vpop.f32.mrf.mxu0
  %v5473 = vadd.f32 %v5424, %v5472
  %v5474 = vpop.f32.mrf.mxu0
  %v5475 = vadd.f32 %v5426, %v5474
  %5476 = vmatmul.bf16.gmra.mxu0 %v4643
  %v5477 = vpop.f32.mrf.mxu0
  %v5478 = vadd.f32 %v5429, %v5477
  %v5479 = vpop.f32.mrf.mxu0
  %v5480 = vadd.f32 %v5431, %v5479
  %5481 = vmatmul.bf16.gmra.mxu0 %v4646
  %v5482 = vpop.f32.mrf.mxu0
  %v5483 = vadd.f32 %v5434, %v5482
  %v5484 = vpop.f32.mrf.mxu0
  %v5485 = vadd.f32 %v5436, %v5484
  %5486 = vmatmul.bf16.gmra.mxu0 %v4649
  %v5487 = vpop.f32.mrf.mxu0
  %v5488 = vadd.f32 %v5439, %v5487
  %v5489 = vpop.f32.mrf.mxu0
  %v5490 = vadd.f32 %v5441, %v5489
  %5491 = vmatmul.bf16.gmra.mxu0 %v4652
  %v5492 = vpop.f32.mrf.mxu0
  %v5493 = vadd.f32 %v5444, %v5492
  %v5494 = vpop.f32.mrf.mxu0
  %v5495 = vadd.f32 %v5446, %v5494
  %5496 = vmatmul.bf16.gmra.mxu0 %v4655
  %v5497 = vpop.f32.mrf.mxu0
  %v5498 = vadd.f32 %v5449, %v5497
  %v5499 = vpop.f32.mrf.mxu0
  %v5500 = vadd.f32 %v5451, %v5499
  %5501 = vdwg.mxu0
  %5502 = vmatpush.bf16.msra.mxu0 0
  %5503 = vmatpush.bf16.msra.mxu0 %v5402
  %5504 = vmatpush.bf16.msra.mxu0 %v5399
  %5505 = vmatpush.bf16.msra.mxu0 %v5398
  %5506 = vmatpush.bf16.msra.mxu0 %v5397
  %5507 = vmatpush.bf16.msra.mxu0 %v5396
  %5508 = vmatpush.bf16.msra.mxu0 %v5395
  %5509 = vmatpush.bf16.msra.mxu0 %v5394
  %5510 = vmatmul.bf16.gmra.mxu0 %v4675
  %v5511 = vpop.f32.mrf.mxu0
  %v5512 = vadd.f32 %v5463, %v5511
  %v5513 = vpop.f32.mrf.mxu0
  %v5514 = vadd.f32 %v5465, %v5513
  %5515 = vmatmul.bf16.gmra.mxu0 %v4678
  %v5516 = vpop.f32.mrf.mxu0
  %v5517 = vadd.f32 %v5468, %v5516
  %v5518 = vpop.f32.mrf.mxu0
  %v5519 = vadd.f32 %v5470, %v5518
  %5520 = vmatmul.bf16.gmra.mxu0 %v4681
  %v5521 = vpop.f32.mrf.mxu0
  %v5522 = vadd.f32 %v5473, %v5521
  %v5523 = vpop.f32.mrf.mxu0
  %v5524 = vadd.f32 %v5475, %v5523
  %5525 = vmatmul.bf16.gmra.mxu0 %v4684
  %v5526 = vpop.f32.mrf.mxu0
  %v5527 = vadd.f32 %v5478, %v5526
  %v5528 = vpop.f32.mrf.mxu0
  %v5529 = vadd.f32 %v5480, %v5528
  %5530 = vmatmul.bf16.gmra.mxu0 %v4687
  %v5531 = vpop.f32.mrf.mxu0
  %v5532 = vadd.f32 %v5483, %v5531
  %v5533 = vpop.f32.mrf.mxu0
  %v5534 = vadd.f32 %v5485, %v5533
  %5535 = vmatmul.bf16.gmra.mxu0 %v4690
  %v5536 = vpop.f32.mrf.mxu0
  %v5537 = vadd.f32 %v5488, %v5536
  %v5538 = vpop.f32.mrf.mxu0
  %v5539 = vadd.f32 %v5490, %v5538
  %5540 = vmatmul.bf16.gmra.mxu0 %v4693
  %v5541 = vpop.f32.mrf.mxu0
  %v5542 = vadd.f32 %v5493, %v5541
  %v5543 = vpop.f32.mrf.mxu0
  %v5544 = vadd.f32 %v5495, %v5543
  %5545 = vmatmul.bf16.gmra.mxu0 %v4696
  %v5546 = vpop.f32.mrf.mxu0
  %v5547 = vadd.f32 %v5498, %v5546
  %v5548 = vpop.f32.mrf.mxu0
  %v5549 = vadd.f32 %v5500, %v5548
  %5550 = vdwg.mxu0
  %v5551 = vmax.f32 %v5512, %v5532
  %v5552 = vmax.f32 %v5514, %v5534
  %v5553 = vmax.f32 %v5517, %v5537
  %v5554 = vmax.f32 %v5519, %v5539
  %v5555 = vmax.f32 %v5522, %v5542
  %v5556 = vmax.f32 %v5524, %v5544
  %v5557 = vmax.f32 %v5527, %v5547
  %v5558 = vmax.f32 %v5529, %v5549
  %v5559 = vmax.f32 %v5325, %v5551
  %v5560 = vmax.f32 %v5326, %v5552
  %v5561 = vmax.f32 %v5327, %v5553
  %v5562 = vmax.f32 %v5328, %v5554
  %v5563 = vmax.f32 %v5329, %v5555
  %v5564 = vmax.f32 %v5330, %v5556
  %v5565 = vmax.f32 %v5331, %v5557
  %v5566 = vmax.f32 %v5332, %v5558
  %v5567 = vmax.f32 %v5559, 0.0
  %v5568 = vmax.f32 %v5560, 0.0
  %v5569 = vmax.f32 %v5561, 0.0
  %v5570 = vmax.f32 %v5562, 0.0
  %v5571 = vmax.f32 %v5563, 0.0
  %v5572 = vmax.f32 %v5564, 0.0
  %v5573 = vmax.f32 %v5565, 0.0
  %v5574 = vmax.f32 %v5566, 0.0
  %5575 = vst [vmem:[#allocation3 + $0x40] sm:$0xff] %v5567
  %5576 = vst [vmem:[#allocation3 + $0x48] sm:$0xff] %v5568
  %5577 = vst [vmem:[#allocation3 + $0x50] sm:$0xff] %v5569
  %5578 = vst [vmem:[#allocation3 + $0x58] sm:$0xff] %v5570
  %5579 = vst [vmem:[#allocation3 + $0x60] sm:$0xff] %v5571
  %5580 = vst [vmem:[#allocation3 + $0x68] sm:$0xff] %v5572
  %5581 = vst [vmem:[#allocation3 + $0x70] sm:$0xff] %v5573
  %5582 = vst [vmem:[#allocation3 + $0x78] sm:$0xff] %v5574
  %v5583 = vld [vmem:[#allocation2 + $0x120] sm:$0xff]
  %v5584 = vld [vmem:[#allocation2 + $0x128] sm:$0xff]
  %v5585 = vld [vmem:[#allocation2 + $0x130] sm:$0xff]
  %v5586 = vld [vmem:[#allocation2 + $0x138] sm:$0xff]
  %v5587 = vld [vmem:[#allocation2 + $0x140] sm:$0xff]
  %v5588 = vld [vmem:[#allocation2 + $0x148] sm:$0xff]
  %v5589 = vld [vmem:[#allocation2 + $0x150] sm:$0xff]
  %v5590 = vld [vmem:[#allocation2 + $0x158] sm:$0xff]
  %v5591 = vld [vmem:[#allocation2 + $0x160] sm:$0xff]
  %v5592 = vld [vmem:[#allocation2 + $0x168] sm:$0xff]
  %v5593 = vld [vmem:[#allocation2 + $0x170] sm:$0xff]
  %v5594 = vld [vmem:[#allocation2 + $0x178] sm:$0xff]
  %v5595 = vld [vmem:[#allocation2 + $0x180] sm:$0xff]
  %v5596 = vld [vmem:[#allocation2 + $0x188] sm:$0xff]
  %v5597 = vld [vmem:[#allocation2 + $0x190] sm:$0xff]
  %v5598 = vld [vmem:[#allocation2 + $0x198] sm:$0xff]
  %v5599 = vld [vmem:[#allocation2 + $0x1a0] sm:$0xff]
  %v5600 = vld [vmem:[#allocation2 + $0x1a8] sm:$0xff]
  %v5601 = vld [vmem:[#allocation2 + $0x1b0] sm:$0xff]
  %v5602 = vld [vmem:[#allocation2 + $0x1b8] sm:$0xff]
  %v5603 = vld [vmem:[#allocation2 + $0x1c0] sm:$0xff]
  %v5604 = vld [vmem:[#allocation2 + $0x1c8] sm:$0xff]
  %v5605 = vld [vmem:[#allocation2 + $0x1d0] sm:$0xff]
  %v5606 = vld [vmem:[#allocation2 + $0x1d8] sm:$0xff]
  %v5607 = vld [vmem:[#allocation2 + $0x1e0] sm:$0xff]
  %v5608 = vld [vmem:[#allocation2 + $0x1e8] sm:$0xff]
  %v5609 = vld [vmem:[#allocation2 + $0x1f0] sm:$0xff]
  %v5610 = vld [vmem:[#allocation2 + $0x1f8] sm:$0xff]
  %v5611 = vld [vmem:[#allocation2 + $0x200] sm:$0xff]
  %v5612 = vld [vmem:[#allocation2 + $0x208] sm:$0xff]
  %v5613 = vld [vmem:[#allocation2 + $0x210] sm:$0xff]
  %v5614 = vld [vmem:[#allocation2 + $0x218] sm:$0xff]
  %v5615 = vld [vmem:[#allocation2 + $0x220] sm:$0xff]
  %v5616 = vld [vmem:[#allocation2 + $0x228] sm:$0xff]
  %v5617 = vld [vmem:[#allocation2 + $0x230] sm:$0xff]
  %v5618 = vld [vmem:[#allocation2 + $0x238] sm:$0xff]
  %v5619 = vld [vmem:[#allocation2 + $0x240] sm:$0xff]
  %v5620 = vld [vmem:[#allocation2 + $0x248] sm:$0xff]
  %v5621 = vld [vmem:[#allocation2 + $0x250] sm:$0xff]
  %v5622 = vld [vmem:[#allocation2 + $0x258] sm:$0xff]
  %v5623 = vld [vmem:[#allocation2 + $0x260] sm:$0xff]
  %v5624 = vld [vmem:[#allocation2 + $0x268] sm:$0xff]
  %v5625 = vld [vmem:[#allocation2 + $0x270] sm:$0xff]
  %v5626 = vld [vmem:[#allocation2 + $0x278] sm:$0xff]
  %v5627 = vld [vmem:[#allocation2 + $0x280] sm:$0xff]
  %v5628 = vpack.c.bf16 %v5584, %v5583
  %v5629 = vpack.c.bf16 %v5586, %v5585
  %v5630 = vpack.c.bf16 %v5588, %v5587
  %v5631 = vpack.c.bf16 %v5590, %v5589
  %v5632 = vpack.c.bf16 %v5592, %v5591
  %v5633 = vpack.c.bf16 %v5594, %v5593
  %v5634 = vpack.c.bf16 %v5596, %v5595
  %v5635 = vpack.c.bf16 %v5598, %v5597
  %v5636 = vpack.c.bf16 %v5600, %v5599
  %v5637 = vpack.c.bf16 %v5602, %v5601
  %v5638 = vpack.c.bf16 %v5604, %v5603
  %v5639 = vpack.c.bf16 %v5606, %v5605
  %v5640 = vpack.c.bf16 %v5608, %v5607
  %v5641 = vpack.c.bf16 %v5610, %v5609
  %v5642 = vpack.c.bf16 %v5612, %v5611
  %v5643 = vpack.c.bf16 %v5614, %v5613
  %v5644 = vpack.c.bf16 %v5616, %v5615
  %v5645 = vpack.c.bf16 %v5618, %v5617
  %v5646 = vpack.c.bf16 %v5620, %v5619
  %v5647 = vpack.c.bf16 %v5622, %v5621
  %v5648 = vpack.c.bf16 %v5624, %v5623
  %v5649 = vpack.c.bf16 %v5626, %v5625
  %v5650 = vpack.c.bf16 %v5627, %v5627
  %v5652 = vsel %vm4698, %v5650, 0
  %5654 = vmatpush.bf16.msra.mxu0 %v5635
  %5655 = vmatpush.bf16.msra.mxu0 %v5634
  %5656 = vmatpush.bf16.msra.mxu0 %v5633
  %5657 = vmatpush.bf16.msra.mxu0 %v5632
  %5658 = vmatpush.bf16.msra.mxu0 %v5631
  %5659 = vmatpush.bf16.msra.mxu0 %v5630
  %5660 = vmatpush.bf16.msra.mxu0 %v5629
  %5661 = vmatpush.bf16.msra.mxu0 %v5628
  %5662 = vmatmul.bf16.gmra.mxu0 %v4633
  %v5663 = vpop.f32.mrf.mxu0
  %v5664 = vadd.f32 %v4408, %v5663
  %v5665 = vpop.f32.mrf.mxu0
  %v5666 = vadd.f32 %v4413, %v5665
  %5667 = vmatmul.bf16.gmra.mxu0 %v4636
  %v5668 = vpop.f32.mrf.mxu0
  %v5669 = vadd.f32 %v4418, %v5668
  %v5670 = vpop.f32.mrf.mxu0
  %v5671 = vadd.f32 %v4423, %v5670
  %5672 = vmatmul.bf16.gmra.mxu0 %v4639
  %v5673 = vpop.f32.mrf.mxu0
  %v5674 = vadd.f32 %v4428, %v5673
  %v5675 = vpop.f32.mrf.mxu0
  %v5676 = vadd.f32 %v4433, %v5675
  %5677 = vmatmul.bf16.gmra.mxu0 %v4642
  %v5678 = vpop.f32.mrf.mxu0
  %v5679 = vadd.f32 %v4438, %v5678
  %v5680 = vpop.f32.mrf.mxu0
  %v5681 = vadd.f32 %v4443, %v5680
  %5682 = vmatmul.bf16.gmra.mxu0 %v4645
  %v5683 = vpop.f32.mrf.mxu0
  %v5684 = vadd.f32 %v4448, %v5683
  %v5685 = vpop.f32.mrf.mxu0
  %v5686 = vadd.f32 %v4453, %v5685
  %5687 = vmatmul.bf16.gmra.mxu0 %v4648
  %v5688 = vpop.f32.mrf.mxu0
  %v5689 = vadd.f32 %v4458, %v5688
  %v5690 = vpop.f32.mrf.mxu0
  %v5691 = vadd.f32 %v4463, %v5690
  %5692 = vmatmul.bf16.gmra.mxu0 %v4651
  %v5693 = vpop.f32.mrf.mxu0
  %v5694 = vadd.f32 %v4468, %v5693
  %v5695 = vpop.f32.mrf.mxu0
  %v5696 = vadd.f32 %v4473, %v5695
  %5697 = vmatmul.bf16.gmra.mxu0 %v4654
  %v5698 = vpop.f32.mrf.mxu0
  %v5699 = vadd.f32 %v4478, %v5698
  %v5700 = vpop.f32.mrf.mxu0
  %v5701 = vadd.f32 %v4483, %v5700
  %5702 = vdwg.mxu0
  %5703 = vmatpush.bf16.msra.mxu0 %v5643
  %5704 = vmatpush.bf16.msra.mxu0 %v5642
  %5705 = vmatpush.bf16.msra.mxu0 %v5641
  %5706 = vmatpush.bf16.msra.mxu0 %v5640
  %5707 = vmatpush.bf16.msra.mxu0 %v5639
  %5708 = vmatpush.bf16.msra.mxu0 %v5638
  %5709 = vmatpush.bf16.msra.mxu0 %v5637
  %5710 = vmatpush.bf16.msra.mxu0 %v5636
  %5711 = vmatmul.bf16.gmra.mxu0 %v4634
  %v5712 = vpop.f32.mrf.mxu0
  %v5713 = vadd.f32 %v5664, %v5712
  %v5714 = vpop.f32.mrf.mxu0
  %v5715 = vadd.f32 %v5666, %v5714
  %5716 = vmatmul.bf16.gmra.mxu0 %v4637
  %v5717 = vpop.f32.mrf.mxu0
  %v5718 = vadd.f32 %v5669, %v5717
  %v5719 = vpop.f32.mrf.mxu0
  %v5720 = vadd.f32 %v5671, %v5719
  %5721 = vmatmul.bf16.gmra.mxu0 %v4640
  %v5722 = vpop.f32.mrf.mxu0
  %v5723 = vadd.f32 %v5674, %v5722
  %v5724 = vpop.f32.mrf.mxu0
  %v5725 = vadd.f32 %v5676, %v5724
  %5726 = vmatmul.bf16.gmra.mxu0 %v4643
  %v5727 = vpop.f32.mrf.mxu0
  %v5728 = vadd.f32 %v5679, %v5727
  %v5729 = vpop.f32.mrf.mxu0
  %v5730 = vadd.f32 %v5681, %v5729
  %5731 = vmatmul.bf16.gmra.mxu0 %v4646
  %v5732 = vpop.f32.mrf.mxu0
  %v5733 = vadd.f32 %v5684, %v5732
  %v5734 = vpop.f32.mrf.mxu0
  %v5735 = vadd.f32 %v5686, %v5734
  %5736 = vmatmul.bf16.gmra.mxu0 %v4649
  %v5737 = vpop.f32.mrf.mxu0
  %v5738 = vadd.f32 %v5689, %v5737
  %v5739 = vpop.f32.mrf.mxu0
  %v5740 = vadd.f32 %v5691, %v5739
  %5741 = vmatmul.bf16.gmra.mxu0 %v4652
  %v5742 = vpop.f32.mrf.mxu0
  %v5743 = vadd.f32 %v5694, %v5742
  %v5744 = vpop.f32.mrf.mxu0
  %v5745 = vadd.f32 %v5696, %v5744
  %5746 = vmatmul.bf16.gmra.mxu0 %v4655
  %v5747 = vpop.f32.mrf.mxu0
  %v5748 = vadd.f32 %v5699, %v5747
  %v5749 = vpop.f32.mrf.mxu0
  %v5750 = vadd.f32 %v5701, %v5749
  %5751 = vdwg.mxu0
  %5752 = vmatpush.bf16.msra.mxu0 0
  %5753 = vmatpush.bf16.msra.mxu0 %v5652
  %5754 = vmatpush.bf16.msra.mxu0 %v5649
  %5755 = vmatpush.bf16.msra.mxu0 %v5648
  %5756 = vmatpush.bf16.msra.mxu0 %v5647
  %5757 = vmatpush.bf16.msra.mxu0 %v5646
  %5758 = vmatpush.bf16.msra.mxu0 %v5645
  %5759 = vmatpush.bf16.msra.mxu0 %v5644
  %5760 = vmatmul.bf16.gmra.mxu0 %v4675
  %v5761 = vpop.f32.mrf.mxu0
  %v5762 = vadd.f32 %v5713, %v5761
  %v5763 = vpop.f32.mrf.mxu0
  %v5764 = vadd.f32 %v5715, %v5763
  %5765 = vmatmul.bf16.gmra.mxu0 %v4678
  %v5766 = vpop.f32.mrf.mxu0
  %v5767 = vadd.f32 %v5718, %v5766
  %v5768 = vpop.f32.mrf.mxu0
  %v5769 = vadd.f32 %v5720, %v5768
  %5770 = vmatmul.bf16.gmra.mxu0 %v4681
  %v5771 = vpop.f32.mrf.mxu0
  %v5772 = vadd.f32 %v5723, %v5771
  %v5773 = vpop.f32.mrf.mxu0
  %v5774 = vadd.f32 %v5725, %v5773
  %5775 = vmatmul.bf16.gmra.mxu0 %v4684
  %v5776 = vpop.f32.mrf.mxu0
  %v5777 = vadd.f32 %v5728, %v5776
  %v5778 = vpop.f32.mrf.mxu0
  %v5779 = vadd.f32 %v5730, %v5778
  %5780 = vmatmul.bf16.gmra.mxu0 %v4687
  %v5781 = vpop.f32.mrf.mxu0
  %v5782 = vadd.f32 %v5733, %v5781
  %v5783 = vpop.f32.mrf.mxu0
  %v5784 = vadd.f32 %v5735, %v5783
  %5785 = vmatmul.bf16.gmra.mxu0 %v4690
  %v5786 = vpop.f32.mrf.mxu0
  %v5787 = vadd.f32 %v5738, %v5786
  %v5788 = vpop.f32.mrf.mxu0
  %v5789 = vadd.f32 %v5740, %v5788
  %5790 = vmatmul.bf16.gmra.mxu0 %v4693
  %v5791 = vpop.f32.mrf.mxu0
  %v5792 = vadd.f32 %v5743, %v5791
  %v5793 = vpop.f32.mrf.mxu0
  %v5794 = vadd.f32 %v5745, %v5793
  %5795 = vmatmul.bf16.gmra.mxu0 %v4696
  %v5796 = vpop.f32.mrf.mxu0
  %v5797 = vadd.f32 %v5748, %v5796
  %v5798 = vpop.f32.mrf.mxu0
  %v5799 = vadd.f32 %v5750, %v5798
  %5800 = vdwg.mxu0
  %v5801 = vmax.f32 %v5762, %v5782
  %v5802 = vmax.f32 %v5764, %v5784
  %v5803 = vmax.f32 %v5767, %v5787
  %v5804 = vmax.f32 %v5769, %v5789
  %v5805 = vmax.f32 %v5772, %v5792
  %v5806 = vmax.f32 %v5774, %v5794
  %v5807 = vmax.f32 %v5777, %v5797
  %v5808 = vmax.f32 %v5779, %v5799
  %v5809 = vld [vmem:[#allocation2 + $0x168] sm:$0xff]
  %v5810 = vld [vmem:[#allocation2 + $0x170] sm:$0xff]
  %v5811 = vld [vmem:[#allocation2 + $0x178] sm:$0xff]
  %v5812 = vld [vmem:[#allocation2 + $0x180] sm:$0xff]
  %v5813 = vld [vmem:[#allocation2 + $0x188] sm:$0xff]
  %v5814 = vld [vmem:[#allocation2 + $0x190] sm:$0xff]
  %v5815 = vld [vmem:[#allocation2 + $0x198] sm:$0xff]
  %v5816 = vld [vmem:[#allocation2 + $0x1a0] sm:$0xff]
  %v5817 = vld [vmem:[#allocation2 + $0x1a8] sm:$0xff]
  %v5818 = vld [vmem:[#allocation2 + $0x1b0] sm:$0xff]
  %v5819 = vld [vmem:[#allocation2 + $0x1b8] sm:$0xff]
  %v5820 = vld [vmem:[#allocation2 + $0x1c0] sm:$0xff]
  %v5821 = vld [vmem:[#allocation2 + $0x1c8] sm:$0xff]
  %v5822 = vld [vmem:[#allocation2 + $0x1d0] sm:$0xff]
  %v5823 = vld [vmem:[#allocation2 + $0x1d8] sm:$0xff]
  %v5824 = vld [vmem:[#allocation2 + $0x1e0] sm:$0xff]
  %v5825 = vld [vmem:[#allocation2 + $0x1e8] sm:$0xff]
  %v5826 = vld [vmem:[#allocation2 + $0x1f0] sm:$0xff]
  %v5827 = vld [vmem:[#allocation2 + $0x1f8] sm:$0xff]
  %v5828 = vld [vmem:[#allocation2 + $0x200] sm:$0xff]
  %v5829 = vld [vmem:[#allocation2 + $0x208] sm:$0xff]
  %v5830 = vld [vmem:[#allocation2 + $0x210] sm:$0xff]
  %v5831 = vld [vmem:[#allocation2 + $0x218] sm:$0xff]
  %v5832 = vld [vmem:[#allocation2 + $0x220] sm:$0xff]
  %v5833 = vld [vmem:[#allocation2 + $0x228] sm:$0xff]
  %v5834 = vld [vmem:[#allocation2 + $0x230] sm:$0xff]
  %v5835 = vld [vmem:[#allocation2 + $0x238] sm:$0xff]
  %v5836 = vld [vmem:[#allocation2 + $0x240] sm:$0xff]
  %v5837 = vld [vmem:[#allocation2 + $0x248] sm:$0xff]
  %v5838 = vld [vmem:[#allocation2 + $0x250] sm:$0xff]
  %v5839 = vld [vmem:[#allocation2 + $0x258] sm:$0xff]
  %v5840 = vld [vmem:[#allocation2 + $0x260] sm:$0xff]
  %v5841 = vld [vmem:[#allocation2 + $0x268] sm:$0xff]
  %v5842 = vld [vmem:[#allocation2 + $0x270] sm:$0xff]
  %v5843 = vld [vmem:[#allocation2 + $0x278] sm:$0xff]
  %v5844 = vld [vmem:[#allocation2 + $0x280] sm:$0xff]
  %v5845 = vld [vmem:[#allocation2 + $0x288] sm:$0xff]
  %v5846 = vld [vmem:[#allocation2 + $0x290] sm:$0xff]
  %v5847 = vld [vmem:[#allocation2 + $0x298] sm:$0xff]
  %v5848 = vld [vmem:[#allocation2 + $0x2a0] sm:$0xff]
  %v5849 = vld [vmem:[#allocation2 + $0x2a8] sm:$0xff]
  %v5850 = vld [vmem:[#allocation2 + $0x2b0] sm:$0xff]
  %v5851 = vld [vmem:[#allocation2 + $0x2b8] sm:$0xff]
  %v5852 = vld [vmem:[#allocation2 + $0x2c0] sm:$0xff]
  %v5853 = vld [vmem:[#allocation2 + $0x2c8] sm:$0xff]
  %v5854 = vpack.c.bf16 %v5810, %v5809
  %v5855 = vpack.c.bf16 %v5812, %v5811
  %v5856 = vpack.c.bf16 %v5814, %v5813
  %v5857 = vpack.c.bf16 %v5816, %v5815
  %v5858 = vpack.c.bf16 %v5818, %v5817
  %v5859 = vpack.c.bf16 %v5820, %v5819
  %v5860 = vpack.c.bf16 %v5822, %v5821
  %v5861 = vpack.c.bf16 %v5824, %v5823
  %v5862 = vpack.c.bf16 %v5826, %v5825
  %v5863 = vpack.c.bf16 %v5828, %v5827
  %v5864 = vpack.c.bf16 %v5830, %v5829
  %v5865 = vpack.c.bf16 %v5832, %v5831
  %v5866 = vpack.c.bf16 %v5834, %v5833
  %v5867 = vpack.c.bf16 %v5836, %v5835
  %v5868 = vpack.c.bf16 %v5838, %v5837
  %v5869 = vpack.c.bf16 %v5840, %v5839
  %v5870 = vpack.c.bf16 %v5842, %v5841
  %v5871 = vpack.c.bf16 %v5844, %v5843
  %v5872 = vpack.c.bf16 %v5846, %v5845
  %v5873 = vpack.c.bf16 %v5848, %v5847
  %v5874 = vpack.c.bf16 %v5850, %v5849
  %v5875 = vpack.c.bf16 %v5852, %v5851
  %v5876 = vpack.c.bf16 %v5853, %v5853
  %v5878 = vsel %vm4698, %v5876, 0
  %5880 = vmatpush.bf16.msra.mxu0 %v5861
  %5881 = vmatpush.bf16.msra.mxu0 %v5860
  %5882 = vmatpush.bf16.msra.mxu0 %v5859
  %5883 = vmatpush.bf16.msra.mxu0 %v5858
  %5884 = vmatpush.bf16.msra.mxu0 %v5857
  %5885 = vmatpush.bf16.msra.mxu0 %v5856
  %5886 = vmatpush.bf16.msra.mxu0 %v5855
  %5887 = vmatpush.bf16.msra.mxu0 %v5854
  %5888 = vmatmul.bf16.gmra.mxu0 %v4633
  %v5889 = vpop.f32.mrf.mxu0
  %v5890 = vadd.f32 %v4408, %v5889
  %v5891 = vpop.f32.mrf.mxu0
  %v5892 = vadd.f32 %v4413, %v5891
  %5893 = vmatmul.bf16.gmra.mxu0 %v4636
  %v5894 = vpop.f32.mrf.mxu0
  %v5895 = vadd.f32 %v4418, %v5894
  %v5896 = vpop.f32.mrf.mxu0
  %v5897 = vadd.f32 %v4423, %v5896
  %5898 = vmatmul.bf16.gmra.mxu0 %v4639
  %v5899 = vpop.f32.mrf.mxu0
  %v5900 = vadd.f32 %v4428, %v5899
  %v5901 = vpop.f32.mrf.mxu0
  %v5902 = vadd.f32 %v4433, %v5901
  %5903 = vmatmul.bf16.gmra.mxu0 %v4642
  %v5904 = vpop.f32.mrf.mxu0
  %v5905 = vadd.f32 %v4438, %v5904
  %v5906 = vpop.f32.mrf.mxu0
  %v5907 = vadd.f32 %v4443, %v5906
  %5908 = vmatmul.bf16.gmra.mxu0 %v4645
  %v5909 = vpop.f32.mrf.mxu0
  %v5910 = vadd.f32 %v4448, %v5909
  %v5911 = vpop.f32.mrf.mxu0
  %v5912 = vadd.f32 %v4453, %v5911
  %5913 = vmatmul.bf16.gmra.mxu0 %v4648
  %v5914 = vpop.f32.mrf.mxu0
  %v5915 = vadd.f32 %v4458, %v5914
  %v5916 = vpop.f32.mrf.mxu0
  %v5917 = vadd.f32 %v4463, %v5916
  %5918 = vmatmul.bf16.gmra.mxu0 %v4651
  %v5919 = vpop.f32.mrf.mxu0
  %v5920 = vadd.f32 %v4468, %v5919
  %v5921 = vpop.f32.mrf.mxu0
  %v5922 = vadd.f32 %v4473, %v5921
  %5923 = vmatmul.bf16.gmra.mxu0 %v4654
  %v5924 = vpop.f32.mrf.mxu0
  %v5925 = vadd.f32 %v4478, %v5924
  %v5926 = vpop.f32.mrf.mxu0
  %v5927 = vadd.f32 %v4483, %v5926
  %5928 = vdwg.mxu0
  %5929 = vmatpush.bf16.msra.mxu0 %v5869
  %5930 = vmatpush.bf16.msra.mxu0 %v5868
  %5931 = vmatpush.bf16.msra.mxu0 %v5867
  %5932 = vmatpush.bf16.msra.mxu0 %v5866
  %5933 = vmatpush.bf16.msra.mxu0 %v5865
  %5934 = vmatpush.bf16.msra.mxu0 %v5864
  %5935 = vmatpush.bf16.msra.mxu0 %v5863
  %5936 = vmatpush.bf16.msra.mxu0 %v5862
  %5937 = vmatmul.bf16.gmra.mxu0 %v4634
  %v5938 = vpop.f32.mrf.mxu0
  %v5939 = vadd.f32 %v5890, %v5938
  %v5940 = vpop.f32.mrf.mxu0
  %v5941 = vadd.f32 %v5892, %v5940
  %5942 = vmatmul.bf16.gmra.mxu0 %v4637
  %v5943 = vpop.f32.mrf.mxu0
  %v5944 = vadd.f32 %v5895, %v5943
  %v5945 = vpop.f32.mrf.mxu0
  %v5946 = vadd.f32 %v5897, %v5945
  %5947 = vmatmul.bf16.gmra.mxu0 %v4640
  %v5948 = vpop.f32.mrf.mxu0
  %v5949 = vadd.f32 %v5900, %v5948
  %v5950 = vpop.f32.mrf.mxu0
  %v5951 = vadd.f32 %v5902, %v5950
  %5952 = vmatmul.bf16.gmra.mxu0 %v4643
  %v5953 = vpop.f32.mrf.mxu0
  %v5954 = vadd.f32 %v5905, %v5953
  %v5955 = vpop.f32.mrf.mxu0
  %v5956 = vadd.f32 %v5907, %v5955
  %5957 = vmatmul.bf16.gmra.mxu0 %v4646
  %v5958 = vpop.f32.mrf.mxu0
  %v5959 = vadd.f32 %v5910, %v5958
  %v5960 = vpop.f32.mrf.mxu0
  %v5961 = vadd.f32 %v5912, %v5960
  %5962 = vmatmul.bf16.gmra.mxu0 %v4649
  %v5963 = vpop.f32.mrf.mxu0
  %v5964 = vadd.f32 %v5915, %v5963
  %v5965 = vpop.f32.mrf.mxu0
  %v5966 = vadd.f32 %v5917, %v5965
  %5967 = vmatmul.bf16.gmra.mxu0 %v4652
  %v5968 = vpop.f32.mrf.mxu0
  %v5969 = vadd.f32 %v5920, %v5968
  %v5970 = vpop.f32.mrf.mxu0
  %v5971 = vadd.f32 %v5922, %v5970
  %5972 = vmatmul.bf16.gmra.mxu0 %v4655
  %v5973 = vpop.f32.mrf.mxu0
  %v5974 = vadd.f32 %v5925, %v5973
  %v5975 = vpop.f32.mrf.mxu0
  %v5976 = vadd.f32 %v5927, %v5975
  %5977 = vdwg.mxu0
  %5978 = vmatpush.bf16.msra.mxu0 0
  %5979 = vmatpush.bf16.msra.mxu0 %v5878
  %5980 = vmatpush.bf16.msra.mxu0 %v5875
  %5981 = vmatpush.bf16.msra.mxu0 %v5874
  %5982 = vmatpush.bf16.msra.mxu0 %v5873
  %5983 = vmatpush.bf16.msra.mxu0 %v5872
  %5984 = vmatpush.bf16.msra.mxu0 %v5871
  %5985 = vmatpush.bf16.msra.mxu0 %v5870
  %5986 = vmatmul.bf16.gmra.mxu0 %v4675
  %v5987 = vpop.f32.mrf.mxu0
  %v5988 = vadd.f32 %v5939, %v5987
  %v5989 = vpop.f32.mrf.mxu0
  %v5990 = vadd.f32 %v5941, %v5989
  %5991 = vmatmul.bf16.gmra.mxu0 %v4678
  %v5992 = vpop.f32.mrf.mxu0
  %v5993 = vadd.f32 %v5944, %v5992
  %v5994 = vpop.f32.mrf.mxu0
  %v5995 = vadd.f32 %v5946, %v5994
  %5996 = vmatmul.bf16.gmra.mxu0 %v4681
  %v5997 = vpop.f32.mrf.mxu0
  %v5998 = vadd.f32 %v5949, %v5997
  %v5999 = vpop.f32.mrf.mxu0
  %v6000 = vadd.f32 %v5951, %v5999
  %6001 = vmatmul.bf16.gmra.mxu0 %v4684
  %v6002 = vpop.f32.mrf.mxu0
  %v6003 = vadd.f32 %v5954, %v6002
  %v6004 = vpop.f32.mrf.mxu0
  %v6005 = vadd.f32 %v5956, %v6004
  %6006 = vmatmul.bf16.gmra.mxu0 %v4687
  %v6007 = vpop.f32.mrf.mxu0
  %v6008 = vadd.f32 %v5959, %v6007
  %v6009 = vpop.f32.mrf.mxu0
  %v6010 = vadd.f32 %v5961, %v6009
  %6011 = vmatmul.bf16.gmra.mxu0 %v4690
  %v6012 = vpop.f32.mrf.mxu0
  %v6013 = vadd.f32 %v5964, %v6012
  %v6014 = vpop.f32.mrf.mxu0
  %v6015 = vadd.f32 %v5966, %v6014
  %6016 = vmatmul.bf16.gmra.mxu0 %v4693
  %v6017 = vpop.f32.mrf.mxu0
  %v6018 = vadd.f32 %v5969, %v6017
  %v6019 = vpop.f32.mrf.mxu0
  %v6020 = vadd.f32 %v5971, %v6019
  %6021 = vmatmul.bf16.gmra.mxu0 %v4696
  %v6022 = vpop.f32.mrf.mxu0
  %v6023 = vadd.f32 %v5974, %v6022
  %v6024 = vpop.f32.mrf.mxu0
  %v6025 = vadd.f32 %v5976, %v6024
  %6026 = vdwg.mxu0
  %v6027 = vmax.f32 %v5988, %v6008
  %v6028 = vmax.f32 %v5990, %v6010
  %v6029 = vmax.f32 %v5993, %v6013
  %v6030 = vmax.f32 %v5995, %v6015
  %v6031 = vmax.f32 %v5998, %v6018
  %v6032 = vmax.f32 %v6000, %v6020
  %v6033 = vmax.f32 %v6003, %v6023
  %v6034 = vmax.f32 %v6005, %v6025
  %v6035 = vmax.f32 %v5801, %v6027
  %v6036 = vmax.f32 %v5802, %v6028
  %v6037 = vmax.f32 %v5803, %v6029
  %v6038 = vmax.f32 %v5804, %v6030
  %v6039 = vmax.f32 %v5805, %v6031
  %v6040 = vmax.f32 %v5806, %v6032
  %v6041 = vmax.f32 %v5807, %v6033
  %v6042 = vmax.f32 %v5808, %v6034
  %v6043 = vmax.f32 %v6035, 0.0
  %v6044 = vmax.f32 %v6036, 0.0
  %v6045 = vmax.f32 %v6037, 0.0
  %v6046 = vmax.f32 %v6038, 0.0
  %v6047 = vmax.f32 %v6039, 0.0
  %v6048 = vmax.f32 %v6040, 0.0
  %v6049 = vmax.f32 %v6041, 0.0
  %v6050 = vmax.f32 %v6042, 0.0
  %6051 = vst [vmem:[#allocation3 + $0x80] sm:$0xff] %v6043
  %6052 = vst [vmem:[#allocation3 + $0x88] sm:$0xff] %v6044
  %6053 = vst [vmem:[#allocation3 + $0x90] sm:$0xff] %v6045
  %6054 = vst [vmem:[#allocation3 + $0x98] sm:$0xff] %v6046
  %6055 = vst [vmem:[#allocation3 + $0xa0] sm:$0xff] %v6047
  %6056 = vst [vmem:[#allocation3 + $0xa8] sm:$0xff] %v6048
  %6057 = vst [vmem:[#allocation3 + $0xb0] sm:$0xff] %v6049
  %6058 = vst [vmem:[#allocation3 + $0xb8] sm:$0xff] %v6050
  %v6059 = vld [vmem:[#allocation2 + $0x1b0] sm:$0xff]
  %v6060 = vld [vmem:[#allocation2 + $0x1b8] sm:$0xff]
  %v6061 = vld [vmem:[#allocation2 + $0x1c0] sm:$0xff]
  %v6062 = vld [vmem:[#allocation2 + $0x1c8] sm:$0xff]
  %v6063 = vld [vmem:[#allocation2 + $0x1d0] sm:$0xff]
  %v6064 = vld [vmem:[#allocation2 + $0x1d8] sm:$0xff]
  %v6065 = vld [vmem:[#allocation2 + $0x1e0] sm:$0xff]
  %v6066 = vld [vmem:[#allocation2 + $0x1e8] sm:$0xff]
  %v6067 = vld [vmem:[#allocation2 + $0x1f0] sm:$0xff]
  %v6068 = vld [vmem:[#allocation2 + $0x1f8] sm:$0xff]
  %v6069 = vld [vmem:[#allocation2 + $0x200] sm:$0xff]
  %v6070 = vld [vmem:[#allocation2 + $0x208] sm:$0xff]
  %v6071 = vld [vmem:[#allocation2 + $0x210] sm:$0xff]
  %v6072 = vld [vmem:[#allocation2 + $0x218] sm:$0xff]
  %v6073 = vld [vmem:[#allocation2 + $0x220] sm:$0xff]
  %v6074 = vld [vmem:[#allocation2 + $0x228] sm:$0xff]
  %v6075 = vld [vmem:[#allocation2 + $0x230] sm:$0xff]
  %v6076 = vld [vmem:[#allocation2 + $0x238] sm:$0xff]
  %v6077 = vld [vmem:[#allocation2 + $0x240] sm:$0xff]
  %v6078 = vld [vmem:[#allocation2 + $0x248] sm:$0xff]
  %v6079 = vld [vmem:[#allocation2 + $0x250] sm:$0xff]
  %v6080 = vld [vmem:[#allocation2 + $0x258] sm:$0xff]
  %v6081 = vld [vmem:[#allocation2 + $0x260] sm:$0xff]
  %v6082 = vld [vmem:[#allocation2 + $0x268] sm:$0xff]
  %v6083 = vld [vmem:[#allocation2 + $0x270] sm:$0xff]
  %v6084 = vld [vmem:[#allocation2 + $0x278] sm:$0xff]
  %v6085 = vld [vmem:[#allocation2 + $0x280] sm:$0xff]
  %v6086 = vld [vmem:[#allocation2 + $0x288] sm:$0xff]
  %v6087 = vld [vmem:[#allocation2 + $0x290] sm:$0xff]
  %v6088 = vld [vmem:[#allocation2 + $0x298] sm:$0xff]
  %v6089 = vld [vmem:[#allocation2 + $0x2a0] sm:$0xff]
  %v6090 = vld [vmem:[#allocation2 + $0x2a8] sm:$0xff]
  %v6091 = vld [vmem:[#allocation2 + $0x2b0] sm:$0xff]
  %v6092 = vld [vmem:[#allocation2 + $0x2b8] sm:$0xff]
  %v6093 = vld [vmem:[#allocation2 + $0x2c0] sm:$0xff]
  %v6094 = vld [vmem:[#allocation2 + $0x2c8] sm:$0xff]
  %v6095 = vld [vmem:[#allocation2 + $0x2d0] sm:$0xff]
  %v6096 = vld [vmem:[#allocation2 + $0x2d8] sm:$0xff]
  %v6097 = vld [vmem:[#allocation2 + $0x2e0] sm:$0xff]
  %v6098 = vld [vmem:[#allocation2 + $0x2e8] sm:$0xff]
  %v6099 = vld [vmem:[#allocation2 + $0x2f0] sm:$0xff]
  %v6100 = vld [vmem:[#allocation2 + $0x2f8] sm:$0xff]
  %v6101 = vld [vmem:[#allocation2 + $0x300] sm:$0xff]
  %v6102 = vld [vmem:[#allocation2 + $0x308] sm:$0xff]
  %v6103 = vld [vmem:[#allocation2 + $0x310] sm:$0xff]
  %v6104 = vpack.c.bf16 %v6060, %v6059
  %v6105 = vpack.c.bf16 %v6062, %v6061
  %v6106 = vpack.c.bf16 %v6064, %v6063
  %v6107 = vpack.c.bf16 %v6066, %v6065
  %v6108 = vpack.c.bf16 %v6068, %v6067
  %v6109 = vpack.c.bf16 %v6070, %v6069
  %v6110 = vpack.c.bf16 %v6072, %v6071
  %v6111 = vpack.c.bf16 %v6074, %v6073
  %v6112 = vpack.c.bf16 %v6076, %v6075
  %v6113 = vpack.c.bf16 %v6078, %v6077
  %v6114 = vpack.c.bf16 %v6080, %v6079
  %v6115 = vpack.c.bf16 %v6082, %v6081
  %v6116 = vpack.c.bf16 %v6084, %v6083
  %v6117 = vpack.c.bf16 %v6086, %v6085
  %v6118 = vpack.c.bf16 %v6088, %v6087
  %v6119 = vpack.c.bf16 %v6090, %v6089
  %v6120 = vpack.c.bf16 %v6092, %v6091
  %v6121 = vpack.c.bf16 %v6094, %v6093
  %v6122 = vpack.c.bf16 %v6096, %v6095
  %v6123 = vpack.c.bf16 %v6098, %v6097
  %v6124 = vpack.c.bf16 %v6100, %v6099
  %v6125 = vpack.c.bf16 %v6102, %v6101
  %v6126 = vpack.c.bf16 %v6103, %v6103
  %v6128 = vsel %vm4698, %v6126, 0
  %6130 = vmatpush.bf16.msra.mxu0 %v6111
  %6131 = vmatpush.bf16.msra.mxu0 %v6110
  %6132 = vmatpush.bf16.msra.mxu0 %v6109
  %6133 = vmatpush.bf16.msra.mxu0 %v6108
  %6134 = vmatpush.bf16.msra.mxu0 %v6107
  %6135 = vmatpush.bf16.msra.mxu0 %v6106
  %6136 = vmatpush.bf16.msra.mxu0 %v6105
  %6137 = vmatpush.bf16.msra.mxu0 %v6104
  %6138 = vmatmul.bf16.gmra.mxu0 %v4633
  %v6139 = vpop.f32.mrf.mxu0
  %v6140 = vadd.f32 %v4408, %v6139
  %v6141 = vpop.f32.mrf.mxu0
  %v6142 = vadd.f32 %v4413, %v6141
  %6143 = vmatmul.bf16.gmra.mxu0 %v4636
  %v6144 = vpop.f32.mrf.mxu0
  %v6145 = vadd.f32 %v4418, %v6144
  %v6146 = vpop.f32.mrf.mxu0
  %v6147 = vadd.f32 %v4423, %v6146
  %6148 = vmatmul.bf16.gmra.mxu0 %v4639
  %v6149 = vpop.f32.mrf.mxu0
  %v6150 = vadd.f32 %v4428, %v6149
  %v6151 = vpop.f32.mrf.mxu0
  %v6152 = vadd.f32 %v4433, %v6151
  %6153 = vmatmul.bf16.gmra.mxu0 %v4642
  %v6154 = vpop.f32.mrf.mxu0
  %v6155 = vadd.f32 %v4438, %v6154
  %v6156 = vpop.f32.mrf.mxu0
  %v6157 = vadd.f32 %v4443, %v6156
  %6158 = vmatmul.bf16.gmra.mxu0 %v4645
  %v6159 = vpop.f32.mrf.mxu0
  %v6160 = vadd.f32 %v4448, %v6159
  %v6161 = vpop.f32.mrf.mxu0
  %v6162 = vadd.f32 %v4453, %v6161
  %6163 = vmatmul.bf16.gmra.mxu0 %v4648
  %v6164 = vpop.f32.mrf.mxu0
  %v6165 = vadd.f32 %v4458, %v6164
  %v6166 = vpop.f32.mrf.mxu0
  %v6167 = vadd.f32 %v4463, %v6166
  %6168 = vmatmul.bf16.gmra.mxu0 %v4651
  %v6169 = vpop.f32.mrf.mxu0
  %v6170 = vadd.f32 %v4468, %v6169
  %v6171 = vpop.f32.mrf.mxu0
  %v6172 = vadd.f32 %v4473, %v6171
  %6173 = vmatmul.bf16.gmra.mxu0 %v4654
  %v6174 = vpop.f32.mrf.mxu0
  %v6175 = vadd.f32 %v4478, %v6174
  %v6176 = vpop.f32.mrf.mxu0
  %v6177 = vadd.f32 %v4483, %v6176
  %6178 = vdwg.mxu0
  %6179 = vmatpush.bf16.msra.mxu0 %v6119
  %6180 = vmatpush.bf16.msra.mxu0 %v6118
  %6181 = vmatpush.bf16.msra.mxu0 %v6117
  %6182 = vmatpush.bf16.msra.mxu0 %v6116
  %6183 = vmatpush.bf16.msra.mxu0 %v6115
  %6184 = vmatpush.bf16.msra.mxu0 %v6114
  %6185 = vmatpush.bf16.msra.mxu0 %v6113
  %6186 = vmatpush.bf16.msra.mxu0 %v6112
  %6187 = vmatmul.bf16.gmra.mxu0 %v4634
  %v6188 = vpop.f32.mrf.mxu0
  %v6189 = vadd.f32 %v6140, %v6188
  %v6190 = vpop.f32.mrf.mxu0
  %v6191 = vadd.f32 %v6142, %v6190
  %6192 = vmatmul.bf16.gmra.mxu0 %v4637
  %v6193 = vpop.f32.mrf.mxu0
  %v6194 = vadd.f32 %v6145, %v6193
  %v6195 = vpop.f32.mrf.mxu0
  %v6196 = vadd.f32 %v6147, %v6195
  %6197 = vmatmul.bf16.gmra.mxu0 %v4640
  %v6198 = vpop.f32.mrf.mxu0
  %v6199 = vadd.f32 %v6150, %v6198
  %v6200 = vpop.f32.mrf.mxu0
  %v6201 = vadd.f32 %v6152, %v6200
  %6202 = vmatmul.bf16.gmra.mxu0 %v4643
  %v6203 = vpop.f32.mrf.mxu0
  %v6204 = vadd.f32 %v6155, %v6203
  %v6205 = vpop.f32.mrf.mxu0
  %v6206 = vadd.f32 %v6157, %v6205
  %6207 = vmatmul.bf16.gmra.mxu0 %v4646
  %v6208 = vpop.f32.mrf.mxu0
  %v6209 = vadd.f32 %v6160, %v6208
  %v6210 = vpop.f32.mrf.mxu0
  %v6211 = vadd.f32 %v6162, %v6210
  %6212 = vmatmul.bf16.gmra.mxu0 %v4649
  %v6213 = vpop.f32.mrf.mxu0
  %v6214 = vadd.f32 %v6165, %v6213
  %v6215 = vpop.f32.mrf.mxu0
  %v6216 = vadd.f32 %v6167, %v6215
  %6217 = vmatmul.bf16.gmra.mxu0 %v4652
  %v6218 = vpop.f32.mrf.mxu0
  %v6219 = vadd.f32 %v6170, %v6218
  %v6220 = vpop.f32.mrf.mxu0
  %v6221 = vadd.f32 %v6172, %v6220
  %6222 = vmatmul.bf16.gmra.mxu0 %v4655
  %v6223 = vpop.f32.mrf.mxu0
  %v6224 = vadd.f32 %v6175, %v6223
  %v6225 = vpop.f32.mrf.mxu0
  %v6226 = vadd.f32 %v6177, %v6225
  %6227 = vdwg.mxu0
  %6228 = vmatpush.bf16.msra.mxu0 0
  %6229 = vmatpush.bf16.msra.mxu0 %v6128
  %6230 = vmatpush.bf16.msra.mxu0 %v6125
  %6231 = vmatpush.bf16.msra.mxu0 %v6124
  %6232 = vmatpush.bf16.msra.mxu0 %v6123
  %6233 = vmatpush.bf16.msra.mxu0 %v6122
  %6234 = vmatpush.bf16.msra.mxu0 %v6121
  %6235 = vmatpush.bf16.msra.mxu0 %v6120
  %6236 = vmatmul.bf16.gmra.mxu0 %v4675
  %v6237 = vpop.f32.mrf.mxu0
  %v6238 = vadd.f32 %v6189, %v6237
  %v6239 = vpop.f32.mrf.mxu0
  %v6240 = vadd.f32 %v6191, %v6239
  %6241 = vmatmul.bf16.gmra.mxu0 %v4678
  %v6242 = vpop.f32.mrf.mxu0
  %v6243 = vadd.f32 %v6194, %v6242
  %v6244 = vpop.f32.mrf.mxu0
  %v6245 = vadd.f32 %v6196, %v6244
  %6246 = vmatmul.bf16.gmra.mxu0 %v4681
  %v6247 = vpop.f32.mrf.mxu0
  %v6248 = vadd.f32 %v6199, %v6247
  %v6249 = vpop.f32.mrf.mxu0
  %v6250 = vadd.f32 %v6201, %v6249
  %6251 = vmatmul.bf16.gmra.mxu0 %v4684
  %v6252 = vpop.f32.mrf.mxu0
  %v6253 = vadd.f32 %v6204, %v6252
  %v6254 = vpop.f32.mrf.mxu0
  %v6255 = vadd.f32 %v6206, %v6254
  %6256 = vmatmul.bf16.gmra.mxu0 %v4687
  %v6257 = vpop.f32.mrf.mxu0
  %v6258 = vadd.f32 %v6209, %v6257
  %v6259 = vpop.f32.mrf.mxu0
  %v6260 = vadd.f32 %v6211, %v6259
  %6261 = vmatmul.bf16.gmra.mxu0 %v4690
  %v6262 = vpop.f32.mrf.mxu0
  %v6263 = vadd.f32 %v6214, %v6262
  %v6264 = vpop.f32.mrf.mxu0
  %v6265 = vadd.f32 %v6216, %v6264
  %6266 = vmatmul.bf16.gmra.mxu0 %v4693
  %v6267 = vpop.f32.mrf.mxu0
  %v6268 = vadd.f32 %v6219, %v6267
  %v6269 = vpop.f32.mrf.mxu0
  %v6270 = vadd.f32 %v6221, %v6269
  %6271 = vmatmul.bf16.gmra.mxu0 %v4696
  %v6272 = vpop.f32.mrf.mxu0
  %v6273 = vadd.f32 %v6224, %v6272
  %v6274 = vpop.f32.mrf.mxu0
  %v6275 = vadd.f32 %v6226, %v6274
  %6276 = vdwg.mxu0
  %v6277 = vmax.f32 %v6238, %v6258
  %v6278 = vmax.f32 %v6240, %v6260
  %v6279 = vmax.f32 %v6243, %v6263
  %v6280 = vmax.f32 %v6245, %v6265
  %v6281 = vmax.f32 %v6248, %v6268
  %v6282 = vmax.f32 %v6250, %v6270
  %v6283 = vmax.f32 %v6253, %v6273
  %v6284 = vmax.f32 %v6255, %v6275
  %v6285 = vld [vmem:[#allocation2 + $0x1f8] sm:$0xff]
  %v6286 = vld [vmem:[#allocation2 + $0x200] sm:$0xff]
  %v6287 = vld [vmem:[#allocation2 + $0x208] sm:$0xff]
  %v6288 = vld [vmem:[#allocation2 + $0x210] sm:$0xff]
  %v6289 = vld [vmem:[#allocation2 + $0x218] sm:$0xff]
  %v6290 = vld [vmem:[#allocation2 + $0x220] sm:$0xff]
  %v6291 = vld [vmem:[#allocation2 + $0x228] sm:$0xff]
  %v6292 = vld [vmem:[#allocation2 + $0x230] sm:$0xff]
  %v6293 = vld [vmem:[#allocation2 + $0x238] sm:$0xff]
  %v6294 = vld [vmem:[#allocation2 + $0x240] sm:$0xff]
  %v6295 = vld [vmem:[#allocation2 + $0x248] sm:$0xff]
  %v6296 = vld [vmem:[#allocation2 + $0x250] sm:$0xff]
  %v6297 = vld [vmem:[#allocation2 + $0x258] sm:$0xff]
  %v6298 = vld [vmem:[#allocation2 + $0x260] sm:$0xff]
  %v6299 = vld [vmem:[#allocation2 + $0x268] sm:$0xff]
  %v6300 = vld [vmem:[#allocation2 + $0x270] sm:$0xff]
  %v6301 = vld [vmem:[#allocation2 + $0x278] sm:$0xff]
  %v6302 = vld [vmem:[#allocation2 + $0x280] sm:$0xff]
  %v6303 = vld [vmem:[#allocation2 + $0x288] sm:$0xff]
  %v6304 = vld [vmem:[#allocation2 + $0x290] sm:$0xff]
  %v6305 = vld [vmem:[#allocation2 + $0x298] sm:$0xff]
  %v6306 = vld [vmem:[#allocation2 + $0x2a0] sm:$0xff]
  %v6307 = vld [vmem:[#allocation2 + $0x2a8] sm:$0xff]
  %v6308 = vld [vmem:[#allocation2 + $0x2b0] sm:$0xff]
  %v6309 = vld [vmem:[#allocation2 + $0x2b8] sm:$0xff]
  %v6310 = vld [vmem:[#allocation2 + $0x2c0] sm:$0xff]
  %v6311 = vld [vmem:[#allocation2 + $0x2c8] sm:$0xff]
  %v6312 = vld [vmem:[#allocation2 + $0x2d0] sm:$0xff]
  %v6313 = vld [vmem:[#allocation2 + $0x2d8] sm:$0xff]
  %v6314 = vld [vmem:[#allocation2 + $0x2e0] sm:$0xff]
  %v6315 = vld [vmem:[#allocation2 + $0x2e8] sm:$0xff]
  %v6316 = vld [vmem:[#allocation2 + $0x2f0] sm:$0xff]
  %v6317 = vld [vmem:[#allocation2 + $0x2f8] sm:$0xff]
  %v6318 = vld [vmem:[#allocation2 + $0x300] sm:$0xff]
  %v6319 = vld [vmem:[#allocation2 + $0x308] sm:$0xff]
  %v6320 = vld [vmem:[#allocation2 + $0x310] sm:$0xff]
  %v6321 = vld [vmem:[#allocation2 + $0x318] sm:$0xff]
  %v6322 = vld [vmem:[#allocation2 + $0x320] sm:$0xff]
  %v6323 = vld [vmem:[#allocation2 + $0x328] sm:$0xff]
  %v6324 = vld [vmem:[#allocation2 + $0x330] sm:$0xff]
  %v6325 = vld [vmem:[#allocation2 + $0x338] sm:$0xff]
  %v6326 = vld [vmem:[#allocation2 + $0x340] sm:$0xff]
  %v6327 = vld [vmem:[#allocation2 + $0x348] sm:$0xff]
  %v6328 = vld [vmem:[#allocation2 + $0x350] sm:$0xff]
  %v6329 = vld [vmem:[#allocation2 + $0x358] sm:$0xff]
  %v6330 = vpack.c.bf16 %v6286, %v6285
  %v6331 = vpack.c.bf16 %v6288, %v6287
  %v6332 = vpack.c.bf16 %v6290, %v6289
  %v6333 = vpack.c.bf16 %v6292, %v6291
  %v6334 = vpack.c.bf16 %v6294, %v6293
  %v6335 = vpack.c.bf16 %v6296, %v6295
  %v6336 = vpack.c.bf16 %v6298, %v6297
  %v6337 = vpack.c.bf16 %v6300, %v6299
  %v6338 = vpack.c.bf16 %v6302, %v6301
  %v6339 = vpack.c.bf16 %v6304, %v6303
  %v6340 = vpack.c.bf16 %v6306, %v6305
  %v6341 = vpack.c.bf16 %v6308, %v6307
  %v6342 = vpack.c.bf16 %v6310, %v6309
  %v6343 = vpack.c.bf16 %v6312, %v6311
  %v6344 = vpack.c.bf16 %v6314, %v6313
  %v6345 = vpack.c.bf16 %v6316, %v6315
  %v6346 = vpack.c.bf16 %v6318, %v6317
  %v6347 = vpack.c.bf16 %v6320, %v6319
  %v6348 = vpack.c.bf16 %v6322, %v6321
  %v6349 = vpack.c.bf16 %v6324, %v6323
  %v6350 = vpack.c.bf16 %v6326, %v6325
  %v6351 = vpack.c.bf16 %v6328, %v6327
  %v6352 = vpack.c.bf16 %v6329, %v6329
  %v6354 = vsel %vm4698, %v6352, 0
  %6356 = vmatpush.bf16.msra.mxu0 %v6337
  %6357 = vmatpush.bf16.msra.mxu0 %v6336
  %6358 = vmatpush.bf16.msra.mxu0 %v6335
  %6359 = vmatpush.bf16.msra.mxu0 %v6334
  %6360 = vmatpush.bf16.msra.mxu0 %v6333
  %6361 = vmatpush.bf16.msra.mxu0 %v6332
  %6362 = vmatpush.bf16.msra.mxu0 %v6331
  %6363 = vmatpush.bf16.msra.mxu0 %v6330
  %6364 = vmatmul.bf16.gmra.mxu0 %v4633
  %v6365 = vpop.f32.mrf.mxu0
  %v6366 = vadd.f32 %v4408, %v6365
  %v6367 = vpop.f32.mrf.mxu0
  %v6368 = vadd.f32 %v4413, %v6367
  %6369 = vmatmul.bf16.gmra.mxu0 %v4636
  %v6370 = vpop.f32.mrf.mxu0
  %v6371 = vadd.f32 %v4418, %v6370
  %v6372 = vpop.f32.mrf.mxu0
  %v6373 = vadd.f32 %v4423, %v6372
  %6374 = vmatmul.bf16.gmra.mxu0 %v4639
  %v6375 = vpop.f32.mrf.mxu0
  %v6376 = vadd.f32 %v4428, %v6375
  %v6377 = vpop.f32.mrf.mxu0
  %v6378 = vadd.f32 %v4433, %v6377
  %6379 = vmatmul.bf16.gmra.mxu0 %v4642
  %v6380 = vpop.f32.mrf.mxu0
  %v6381 = vadd.f32 %v4438, %v6380
  %v6382 = vpop.f32.mrf.mxu0
  %v6383 = vadd.f32 %v4443, %v6382
  %6384 = vmatmul.bf16.gmra.mxu0 %v4645
  %v6385 = vpop.f32.mrf.mxu0
  %v6386 = vadd.f32 %v4448, %v6385
  %v6387 = vpop.f32.mrf.mxu0
  %v6388 = vadd.f32 %v4453, %v6387
  %6389 = vmatmul.bf16.gmra.mxu0 %v4648
  %v6390 = vpop.f32.mrf.mxu0
  %v6391 = vadd.f32 %v4458, %v6390
  %v6392 = vpop.f32.mrf.mxu0
  %v6393 = vadd.f32 %v4463, %v6392
  %6394 = vmatmul.bf16.gmra.mxu0 %v4651
  %v6395 = vpop.f32.mrf.mxu0
  %v6396 = vadd.f32 %v4468, %v6395
  %v6397 = vpop.f32.mrf.mxu0
  %v6398 = vadd.f32 %v4473, %v6397
  %6399 = vmatmul.bf16.gmra.mxu0 %v4654
  %v6400 = vpop.f32.mrf.mxu0
  %v6401 = vadd.f32 %v4478, %v6400
  %v6402 = vpop.f32.mrf.mxu0
  %v6403 = vadd.f32 %v4483, %v6402
  %6404 = vdwg.mxu0
  %6405 = vmatpush.bf16.msra.mxu0 %v6345
  %6406 = vmatpush.bf16.msra.mxu0 %v6344
  %6407 = vmatpush.bf16.msra.mxu0 %v6343
  %6408 = vmatpush.bf16.msra.mxu0 %v6342
  %6409 = vmatpush.bf16.msra.mxu0 %v6341
  %6410 = vmatpush.bf16.msra.mxu0 %v6340
  %6411 = vmatpush.bf16.msra.mxu0 %v6339
  %6412 = vmatpush.bf16.msra.mxu0 %v6338
  %6413 = vmatmul.bf16.gmra.mxu0 %v4634
  %v6414 = vpop.f32.mrf.mxu0
  %v6415 = vadd.f32 %v6366, %v6414
  %v6416 = vpop.f32.mrf.mxu0
  %v6417 = vadd.f32 %v6368, %v6416
  %6418 = vmatmul.bf16.gmra.mxu0 %v4637
  %v6419 = vpop.f32.mrf.mxu0
  %v6420 = vadd.f32 %v6371, %v6419
  %v6421 = vpop.f32.mrf.mxu0
  %v6422 = vadd.f32 %v6373, %v6421
  %6423 = vmatmul.bf16.gmra.mxu0 %v4640
  %v6424 = vpop.f32.mrf.mxu0
  %v6425 = vadd.f32 %v6376, %v6424
  %v6426 = vpop.f32.mrf.mxu0
  %v6427 = vadd.f32 %v6378, %v6426
  %6428 = vmatmul.bf16.gmra.mxu0 %v4643
  %v6429 = vpop.f32.mrf.mxu0
  %v6430 = vadd.f32 %v6381, %v6429
  %v6431 = vpop.f32.mrf.mxu0
  %v6432 = vadd.f32 %v6383, %v6431
  %6433 = vmatmul.bf16.gmra.mxu0 %v4646
  %v6434 = vpop.f32.mrf.mxu0
  %v6435 = vadd.f32 %v6386, %v6434
  %v6436 = vpop.f32.mrf.mxu0
  %v6437 = vadd.f32 %v6388, %v6436
  %6438 = vmatmul.bf16.gmra.mxu0 %v4649
  %v6439 = vpop.f32.mrf.mxu0
  %v6440 = vadd.f32 %v6391, %v6439
  %v6441 = vpop.f32.mrf.mxu0
  %v6442 = vadd.f32 %v6393, %v6441
  %6443 = vmatmul.bf16.gmra.mxu0 %v4652
  %v6444 = vpop.f32.mrf.mxu0
  %v6445 = vadd.f32 %v6396, %v6444
  %v6446 = vpop.f32.mrf.mxu0
  %v6447 = vadd.f32 %v6398, %v6446
  %6448 = vmatmul.bf16.gmra.mxu0 %v4655
  %v6449 = vpop.f32.mrf.mxu0
  %v6450 = vadd.f32 %v6401, %v6449
  %v6451 = vpop.f32.mrf.mxu0
  %v6452 = vadd.f32 %v6403, %v6451
  %6453 = vdwg.mxu0
  %6454 = vmatpush.bf16.msra.mxu0 0
  %6455 = vmatpush.bf16.msra.mxu0 %v6354
  %6456 = vmatpush.bf16.msra.mxu0 %v6351
  %6457 = vmatpush.bf16.msra.mxu0 %v6350
  %6458 = vmatpush.bf16.msra.mxu0 %v6349
  %6459 = vmatpush.bf16.msra.mxu0 %v6348
  %6460 = vmatpush.bf16.msra.mxu0 %v6347
  %6461 = vmatpush.bf16.msra.mxu0 %v6346
  %6462 = vmatmul.bf16.gmra.mxu0 %v4675
  %v6463 = vpop.f32.mrf.mxu0
  %v6464 = vadd.f32 %v6415, %v6463
  %v6465 = vpop.f32.mrf.mxu0
  %v6466 = vadd.f32 %v6417, %v6465
  %6467 = vmatmul.bf16.gmra.mxu0 %v4678
  %v6468 = vpop.f32.mrf.mxu0
  %v6469 = vadd.f32 %v6420, %v6468
  %v6470 = vpop.f32.mrf.mxu0
  %v6471 = vadd.f32 %v6422, %v6470
  %6472 = vmatmul.bf16.gmra.mxu0 %v4681
  %v6473 = vpop.f32.mrf.mxu0
  %v6474 = vadd.f32 %v6425, %v6473
  %v6475 = vpop.f32.mrf.mxu0
  %v6476 = vadd.f32 %v6427, %v6475
  %6477 = vmatmul.bf16.gmra.mxu0 %v4684
  %v6478 = vpop.f32.mrf.mxu0
  %v6479 = vadd.f32 %v6430, %v6478
  %v6480 = vpop.f32.mrf.mxu0
  %v6481 = vadd.f32 %v6432, %v6480
  %6482 = vmatmul.bf16.gmra.mxu0 %v4687
  %v6483 = vpop.f32.mrf.mxu0
  %v6484 = vadd.f32 %v6435, %v6483
  %v6485 = vpop.f32.mrf.mxu0
  %v6486 = vadd.f32 %v6437, %v6485
  %6487 = vmatmul.bf16.gmra.mxu0 %v4690
  %v6488 = vpop.f32.mrf.mxu0
  %v6489 = vadd.f32 %v6440, %v6488
  %v6490 = vpop.f32.mrf.mxu0
  %v6491 = vadd.f32 %v6442, %v6490
  %6492 = vmatmul.bf16.gmra.mxu0 %v4693
  %v6493 = vpop.f32.mrf.mxu0
  %v6494 = vadd.f32 %v6445, %v6493
  %v6495 = vpop.f32.mrf.mxu0
  %v6496 = vadd.f32 %v6447, %v6495
  %6497 = vmatmul.bf16.gmra.mxu0 %v4696
  %v6498 = vpop.f32.mrf.mxu0
  %v6499 = vadd.f32 %v6450, %v6498
  %v6500 = vpop.f32.mrf.mxu0
  %v6501 = vadd.f32 %v6452, %v6500
  %6502 = vdwg.mxu0
  %v6503 = vmax.f32 %v6464, %v6484
  %v6504 = vmax.f32 %v6466, %v6486
  %v6505 = vmax.f32 %v6469, %v6489
  %v6506 = vmax.f32 %v6471, %v6491
  %v6507 = vmax.f32 %v6474, %v6494
  %v6508 = vmax.f32 %v6476, %v6496
  %v6509 = vmax.f32 %v6479, %v6499
  %v6510 = vmax.f32 %v6481, %v6501
  %v6511 = vmax.f32 %v6277, %v6503
  %v6512 = vmax.f32 %v6278, %v6504
  %v6513 = vmax.f32 %v6279, %v6505
  %v6514 = vmax.f32 %v6280, %v6506
  %v6515 = vmax.f32 %v6281, %v6507
  %v6516 = vmax.f32 %v6282, %v6508
  %v6517 = vmax.f32 %v6283, %v6509
  %v6518 = vmax.f32 %v6284, %v6510
  %v6519 = vmax.f32 %v6511, 0.0
  %v6520 = vmax.f32 %v6512, 0.0
  %v6521 = vmax.f32 %v6513, 0.0
  %v6522 = vmax.f32 %v6514, 0.0
  %v6523 = vmax.f32 %v6515, 0.0
  %v6524 = vmax.f32 %v6516, 0.0
  %v6525 = vmax.f32 %v6517, 0.0
  %v6526 = vmax.f32 %v6518, 0.0
  %6527 = vst [vmem:[#allocation3 + $0xc0] sm:$0xff] %v6519
  %6528 = vst [vmem:[#allocation3 + $0xc8] sm:$0xff] %v6520
  %6529 = vst [vmem:[#allocation3 + $0xd0] sm:$0xff] %v6521
  %6530 = vst [vmem:[#allocation3 + $0xd8] sm:$0xff] %v6522
  %6531 = vst [vmem:[#allocation3 + $0xe0] sm:$0xff] %v6523
  %6532 = vst [vmem:[#allocation3 + $0xe8] sm:$0xff] %v6524
  %6533 = vst [vmem:[#allocation3 + $0xf0] sm:$0xff] %v6525
  %6534 = vst [vmem:[#allocation3 + $0xf8] sm:$0xff] %v6526
  %v6535 = vld [vmem:[#allocation3] sm:$0xff]
  %v6536 = vld [vmem:[#allocation3 + $0x8] sm:$0xff]
  %v6537 = vld [vmem:[#allocation3 + $0x10] sm:$0xff]
  %v6538 = vld [vmem:[#allocation3 + $0x18] sm:$0xff]
  %v6539 = vld [vmem:[#allocation3 + $0x20] sm:$0xff]
  %v6540 = vld [vmem:[#allocation3 + $0x28] sm:$0xff]
  %v6541 = vld [vmem:[#allocation3 + $0x30] sm:$0xff]
  %v6542 = vld [vmem:[#allocation3 + $0x38] sm:$0xff]
  %v6543 = vld [vmem:[#allocation3 + $0x40] sm:$0xff]
  %v6544 = vld [vmem:[#allocation3 + $0x48] sm:$0xff]
  %v6545 = vld [vmem:[#allocation3 + $0x50] sm:$0xff]
  %v6546 = vld [vmem:[#allocation3 + $0x58] sm:$0xff]
  %v6547 = vld [vmem:[#allocation3 + $0x60] sm:$0xff]
  %v6548 = vld [vmem:[#allocation3 + $0x68] sm:$0xff]
  %v6549 = vld [vmem:[#allocation3 + $0x70] sm:$0xff]
  %v6550 = vld [vmem:[#allocation3 + $0x78] sm:$0xff]
  %v6551 = vld [vmem:[#allocation3 + $0x80] sm:$0xff]
  %v6552 = vld [vmem:[#allocation3 + $0x88] sm:$0xff]
  %v6553 = vld [vmem:[#allocation3 + $0x90] sm:$0xff]
  %v6554 = vld [vmem:[#allocation3 + $0x98] sm:$0xff]
  %v6555 = vld [vmem:[#allocation3 + $0xa0] sm:$0xff]
  %v6556 = vld [vmem:[#allocation3 + $0xa8] sm:$0xff]
  %v6557 = vld [vmem:[#allocation3 + $0xb0] sm:$0xff]
  %v6558 = vld [vmem:[#allocation3 + $0xb8] sm:$0xff]
  %v6559 = vld [vmem:[#allocation3 + $0xc0] sm:$0xff]
  %v6560 = vld [vmem:[#allocation3 + $0xc8] sm:$0xff]
  %v6561 = vld [vmem:[#allocation3 + $0xd0] sm:$0xff]
  %v6562 = vld [vmem:[#allocation3 + $0xd8] sm:$0xff]
  %v6563 = vld [vmem:[#allocation3 + $0xe0] sm:$0xff]
  %v6564 = vld [vmem:[#allocation3 + $0xe8] sm:$0xff]
  %v6565 = vld [vmem:[#allocation3 + $0xf0] sm:$0xff]
  %v6566 = vld [vmem:[#allocation3 + $0xf8] sm:$0xff]
  %v6567 = vpack.c.bf16 %v6536, %v6535
  %v6568 = vpack.c.bf16 %v6538, %v6537
  %v6569 = vpack.c.bf16 %v6540, %v6539
  %v6570 = vpack.c.bf16 %v6542, %v6541
  %v6571 = vpack.c.bf16 %v6544, %v6543
  %v6572 = vpack.c.bf16 %v6546, %v6545
  %v6573 = vpack.c.bf16 %v6548, %v6547
  %v6574 = vpack.c.bf16 %v6550, %v6549
  %v6575 = vpack.c.bf16 %v6552, %v6551
  %v6576 = vpack.c.bf16 %v6554, %v6553
  %v6577 = vpack.c.bf16 %v6556, %v6555
  %v6578 = vpack.c.bf16 %v6558, %v6557
  %v6579 = vpack.c.bf16 %v6560, %v6559
  %v6580 = vpack.c.bf16 %v6562, %v6561
  %v6581 = vpack.c.bf16 %v6564, %v6563
  %v6582 = vpack.c.bf16 %v6566, %v6565
  %v6583 = vld [vmem:[%s4] sm:$0xff]
  %v6584 = vld [vmem:[%s4 + $0x8] sm:$0xff]
  %v6585 = vld [vmem:[%s4 + $0x10] sm:$0xff]
  %v6586 = vld [vmem:[%s4 + $0x18] sm:$0xff]
  %v6587 = vld [vmem:[%s4 + $0x20] sm:$0xff]
  %v6588 = vld [vmem:[%s4 + $0x28] sm:$0xff]
  %v6589 = vld [vmem:[%s4 + $0x30] sm:$0xff]
  %v6590 = vld [vmem:[%s4 + $0x38] sm:$0xff]
  %v6591 = vld [vmem:[%s4 + $0x40] sm:$0xff]
  %v6592 = vld [vmem:[%s4 + $0x48] sm:$0xff]
  %v6593 = vld [vmem:[%s4 + $0x50] sm:$0xff]
  %v6594 = vld [vmem:[%s4 + $0x58] sm:$0xff]
  %v6595 = vld [vmem:[%s4 + $0x60] sm:$0xff]
  %v6596 = vld [vmem:[%s4 + $0x68] sm:$0xff]
  %v6597 = vld [vmem:[%s4 + $0x70] sm:$0xff]
  %v6598 = vld [vmem:[%s5] sm:$0xff]
  %v6599 = vld [vmem:[%s5 + $0x8] sm:$0xff]
  %v6600 = vld [vmem:[%s5 + $0x10] sm:$0xff]
  %v6601 = vld [vmem:[%s5 + $0x18] sm:$0xff]
  %v6602 = vld [vmem:[%s5 + $0x20] sm:$0xff]
  %v6603 = vld [vmem:[%s5 + $0x28] sm:$0xff]
  %v6604 = vld [vmem:[%s5 + $0x30] sm:$0xff]
  %v6605 = vld [vmem:[%s5 + $0x38] sm:$0xff]
  %v6606 = vld [vmem:[%s5 + $0x40] sm:$0xff]
  %v6607 = vld [vmem:[%s5 + $0x48] sm:$0xff]
  %v6608 = vld [vmem:[%s5 + $0x50] sm:$0xff]
  %v6609 = vld [vmem:[%s5 + $0x58] sm:$0xff]
  %v6610 = vld [vmem:[%s5 + $0x60] sm:$0xff]
  %v6611 = vld [vmem:[%s5 + $0x68] sm:$0xff]
  %v6612 = vld [vmem:[%s5 + $0x70] sm:$0xff]
  %6614 = vset.pattern.permute.xlu0 0
  %6615 = vperm.xlu0 %6614, %v6598
  %v6616 = vpop.permute.xlu0 %6615
  %6619 = vset.pattern.permute.xlu0 0
  %6620 = vperm.xlu0 %6619, %v6599
  %v6621 = vpop.permute.xlu0 %6620
  %6624 = vset.pattern.permute.xlu0 0
  %6625 = vperm.xlu0 %6624, %v6600
  %v6626 = vpop.permute.xlu0 %6625
  %6629 = vset.pattern.permute.xlu0 0
  %6630 = vperm.xlu0 %6629, %v6601
  %v6631 = vpop.permute.xlu0 %6630
  %6634 = vset.pattern.permute.xlu0 0
  %6635 = vperm.xlu0 %6634, %v6602
  %v6636 = vpop.permute.xlu0 %6635
  %6639 = vset.pattern.permute.xlu0 0
  %6640 = vperm.xlu0 %6639, %v6603
  %v6641 = vpop.permute.xlu0 %6640
  %6644 = vset.pattern.permute.xlu0 0
  %6645 = vperm.xlu0 %6644, %v6604
  %v6646 = vpop.permute.xlu0 %6645
  %6649 = vset.pattern.permute.xlu0 0
  %6650 = vperm.xlu0 %6649, %v6605
  %v6651 = vpop.permute.xlu0 %6650
  %6654 = vset.pattern.permute.xlu0 0
  %6655 = vperm.xlu0 %6654, %v6606
  %v6656 = vpop.permute.xlu0 %6655
  %6659 = vset.pattern.permute.xlu0 0
  %6660 = vperm.xlu0 %6659, %v6607
  %v6661 = vpop.permute.xlu0 %6660
  %6664 = vset.pattern.permute.xlu0 0
  %6665 = vperm.xlu0 %6664, %v6608
  %v6666 = vpop.permute.xlu0 %6665
  %6669 = vset.pattern.permute.xlu0 0
  %6670 = vperm.xlu0 %6669, %v6609
  %v6671 = vpop.permute.xlu0 %6670
  %6674 = vset.pattern.permute.xlu0 0
  %6675 = vperm.xlu0 %6674, %v6610
  %v6676 = vpop.permute.xlu0 %6675
  %6679 = vset.pattern.permute.xlu0 0
  %6680 = vperm.xlu0 %6679, %v6611
  %v6681 = vpop.permute.xlu0 %6680
  %6684 = vset.pattern.permute.xlu0 0
  %6685 = vperm.xlu0 %6684, %v6612
  %v6686 = vpop.permute.xlu0 %6685
  %v6703 = vunpack.c.l.b16 %v6583
  %v6704 = vunpack.c.h.b16 %v6583
  %v6705 = vunpack.c.l.b16 %v6584
  %v6706 = vunpack.c.h.b16 %v6584
  %v6707 = vunpack.c.l.b16 %v6585
  %v6708 = vunpack.c.h.b16 %v6585
  %v6709 = vunpack.c.l.b16 %v6586
  %v6710 = vunpack.c.h.b16 %v6586
  %v6711 = vunpack.c.l.b16 %v6587
  %v6712 = vunpack.c.h.b16 %v6587
  %v6713 = vunpack.c.l.b16 %v6588
  %v6714 = vunpack.c.h.b16 %v6588
  %v6715 = vunpack.c.l.b16 %v6589
  %v6716 = vunpack.c.h.b16 %v6589
  %v6717 = vunpack.c.l.b16 %v6590
  %v6718 = vunpack.c.h.b16 %v6590
  %v6719 = vunpack.c.l.b16 %v6591
  %v6720 = vunpack.c.h.b16 %v6591
  %v6721 = vunpack.c.l.b16 %v6592
  %v6722 = vunpack.c.h.b16 %v6592
  %v6723 = vunpack.c.l.b16 %v6593
  %v6724 = vunpack.c.h.b16 %v6593
  %v6725 = vunpack.c.l.b16 %v6594
  %v6726 = vunpack.c.h.b16 %v6594
  %v6727 = vunpack.c.l.b16 %v6595
  %v6728 = vunpack.c.h.b16 %v6595
  %v6729 = vunpack.c.l.b16 %v6596
  %v6730 = vunpack.c.h.b16 %v6596
  %v6731 = vunpack.c.l.b16 %v6597
  %v6732 = vunpack.c.h.b16 %v6597
  %v6733 = vpack.c.b16 %v6705, %v6703
  %v6734 = vpack.c.b16 %v6706, %v6704
  %v6735 = vpack.c.b16 %v6709, %v6707
  %v6736 = vpack.c.b16 %v6710, %v6708
  %v6737 = vpack.c.b16 %v6713, %v6711
  %v6738 = vpack.c.b16 %v6714, %v6712
  %v6739 = vpack.c.b16 %v6717, %v6715
  %v6740 = vpack.c.b16 %v6718, %v6716
  %v6741 = vpack.c.b16 %v6721, %v6719
  %v6742 = vpack.c.b16 %v6722, %v6720
  %v6743 = vpack.c.b16 %v6725, %v6723
  %v6744 = vpack.c.b16 %v6726, %v6724
  %v6745 = vpack.c.b16 %v6729, %v6727
  %v6746 = vpack.c.b16 %v6730, %v6728
  %v6747 = vpack.c.b16 %v6731, %v6731
  %v6748 = vpack.c.b16 %v6732, %v6732
  %6765 = vmatpush.bf16.msra.mxu0 %v6574
  %6766 = vmatpush.bf16.msra.mxu0 %v6573
  %6767 = vmatpush.bf16.msra.mxu0 %v6572
  %6768 = vmatpush.bf16.msra.mxu0 %v6571
  %6769 = vmatpush.bf16.msra.mxu0 %v6570
  %6770 = vmatpush.bf16.msra.mxu0 %v6569
  %6771 = vmatpush.bf16.msra.mxu0 %v6568
  %6772 = vmatpush.bf16.msra.mxu0 %v6567
  %6773 = vmatmul.bf16.gmra.mxu0 %v6733
  %v6774 = vpop.f32.mrf.mxu0
  %v6775 = vadd.f32 %v6616, %v6774
  %v6776 = vpop.f32.mrf.mxu0
  %v6777 = vadd.f32 %v6621, %v6776
  %6778 = vmatmul.bf16.gmra.mxu0 %v6735
  %v6779 = vpop.f32.mrf.mxu0
  %v6780 = vadd.f32 %v6626, %v6779
  %v6781 = vpop.f32.mrf.mxu0
  %v6782 = vadd.f32 %v6631, %v6781
  %6783 = vmatmul.bf16.gmra.mxu0 %v6737
  %v6784 = vpop.f32.mrf.mxu0
  %v6785 = vadd.f32 %v6636, %v6784
  %v6786 = vpop.f32.mrf.mxu0
  %v6787 = vadd.f32 %v6641, %v6786
  %6788 = vmatmul.bf16.gmra.mxu0 %v6739
  %v6789 = vpop.f32.mrf.mxu0
  %v6790 = vadd.f32 %v6646, %v6789
  %v6791 = vpop.f32.mrf.mxu0
  %v6792 = vadd.f32 %v6651, %v6791
  %6793 = vmatmul.bf16.gmra.mxu0 %v6741
  %v6794 = vpop.f32.mrf.mxu0
  %v6795 = vadd.f32 %v6656, %v6794
  %v6796 = vpop.f32.mrf.mxu0
  %v6797 = vadd.f32 %v6661, %v6796
  %6798 = vmatmul.bf16.gmra.mxu0 %v6743
  %v6799 = vpop.f32.mrf.mxu0
  %v6800 = vadd.f32 %v6666, %v6799
  %v6801 = vpop.f32.mrf.mxu0
  %v6802 = vadd.f32 %v6671, %v6801
  %6803 = vmatmul.bf16.gmra.mxu0 %v6745
  %v6804 = vpop.f32.mrf.mxu0
  %v6805 = vadd.f32 %v6676, %v6804
  %v6806 = vpop.f32.mrf.mxu0
  %v6807 = vadd.f32 %v6681, %v6806
  %6808 = vmatmul.bf16.gmra.mxu0 %v6747
  %v6809 = vpop.f32.mrf.mxu0
  %v6810 = vadd.f32 %v6686, %v6809
  %v6811 = vpop.f32.mrf.mxu0
  %6812 = vdwg.mxu0
  %6813 = vmatpush.bf16.msra.mxu0 %v6582
  %6814 = vmatpush.bf16.msra.mxu0 %v6581
  %6815 = vmatpush.bf16.msra.mxu0 %v6580
  %6816 = vmatpush.bf16.msra.mxu0 %v6579
  %6817 = vmatpush.bf16.msra.mxu0 %v6578
  %6818 = vmatpush.bf16.msra.mxu0 %v6577
  %6819 = vmatpush.bf16.msra.mxu0 %v6576
  %6820 = vmatpush.bf16.msra.mxu0 %v6575
  %6821 = vmatmul.bf16.gmra.mxu0 %v6734
  %v6822 = vpop.f32.mrf.mxu0
  %v6823 = vadd.f32 %v6775, %v6822
  %v6824 = vpop.f32.mrf.mxu0
  %v6825 = vadd.f32 %v6777, %v6824
  %6826 = vmatmul.bf16.gmra.mxu0 %v6736
  %v6827 = vpop.f32.mrf.mxu0
  %v6828 = vadd.f32 %v6780, %v6827
  %v6829 = vpop.f32.mrf.mxu0
  %v6830 = vadd.f32 %v6782, %v6829
  %6831 = vmatmul.bf16.gmra.mxu0 %v6738
  %v6832 = vpop.f32.mrf.mxu0
  %v6833 = vadd.f32 %v6785, %v6832
  %v6834 = vpop.f32.mrf.mxu0
  %v6835 = vadd.f32 %v6787, %v6834
  %6836 = vmatmul.bf16.gmra.mxu0 %v6740
  %v6837 = vpop.f32.mrf.mxu0
  %v6838 = vadd.f32 %v6790, %v6837
  %v6839 = vpop.f32.mrf.mxu0
  %v6840 = vadd.f32 %v6792, %v6839
  %6841 = vmatmul.bf16.gmra.mxu0 %v6742
  %v6842 = vpop.f32.mrf.mxu0
  %v6843 = vadd.f32 %v6795, %v6842
  %v6844 = vpop.f32.mrf.mxu0
  %v6845 = vadd.f32 %v6797, %v6844
  %6846 = vmatmul.bf16.gmra.mxu0 %v6744
  %v6847 = vpop.f32.mrf.mxu0
  %v6848 = vadd.f32 %v6800, %v6847
  %v6849 = vpop.f32.mrf.mxu0
  %v6850 = vadd.f32 %v6802, %v6849
  %6851 = vmatmul.bf16.gmra.mxu0 %v6746
  %v6852 = vpop.f32.mrf.mxu0
  %v6853 = vadd.f32 %v6805, %v6852
  %v6854 = vpop.f32.mrf.mxu0
  %v6855 = vadd.f32 %v6807, %v6854
  %6856 = vmatmul.bf16.gmra.mxu0 %v6748
  %v6857 = vpop.f32.mrf.mxu0
  %v6858 = vadd.f32 %v6810, %v6857
  %v6859 = vpop.f32.mrf.mxu0
  %6860 = vdwg.mxu0
  %v6861 = vmax.f32 %v6823, 0.0
  %v6862 = vmax.f32 %v6825, 0.0
  %v6863 = vmax.f32 %v6828, 0.0
  %v6864 = vmax.f32 %v6830, 0.0
  %v6865 = vmax.f32 %v6833, 0.0
  %v6866 = vmax.f32 %v6835, 0.0
  %v6867 = vmax.f32 %v6838, 0.0
  %v6868 = vmax.f32 %v6840, 0.0
  %v6869 = vmax.f32 %v6843, 0.0
  %v6870 = vmax.f32 %v6845, 0.0
  %v6871 = vmax.f32 %v6848, 0.0
  %v6872 = vmax.f32 %v6850, 0.0
  %v6873 = vmax.f32 %v6853, 0.0
  %v6874 = vmax.f32 %v6855, 0.0
  %v6875 = vmax.f32 %v6858, 0.0
  %v6876 = vpack.c.bf16 %v6862, %v6861
  %v6877 = vpack.c.bf16 %v6864, %v6863
  %v6878 = vpack.c.bf16 %v6866, %v6865
  %v6879 = vpack.c.bf16 %v6868, %v6867
  %v6880 = vpack.c.bf16 %v6870, %v6869
  %v6881 = vpack.c.bf16 %v6872, %v6871
  %v6882 = vpack.c.bf16 %v6874, %v6873
  %v6883 = vpack.c.bf16 %v6875, %v6875
  %v6884 = vld [vmem:[%s6] sm:$0xf]
  %v6885 = vld [vmem:[%s6 + $0x4] sm:$0xf]
  %v6886 = vld [vmem:[%s6 + $0x8] sm:$0xf]
  %v6887 = vld [vmem:[%s6 + $0xc] sm:$0xf]
  %v6888 = vld [vmem:[%s6 + $0x10] sm:$0xf]
  %v6889 = vld [vmem:[%s6 + $0x14] sm:$0xf]
  %v6890 = vld [vmem:[%s6 + $0x18] sm:$0xf]
  %v6891 = vld [vmem:[%s6 + $0x1c] sm:$0xf]
  %v6892 = vld [vmem:[%s6 + $0x20] sm:$0xf]
  %v6893 = vld [vmem:[%s6 + $0x24] sm:$0xf]
  %v6894 = vld [vmem:[%s6 + $0x28] sm:$0x3]
  %v6895 = vld [vmem:[%s7] sm:$0xff]
  %v6896 = vld [vmem:[%s7 + $0x8] sm:$0xff]
  %v6897 = vld [vmem:[%s7 + $0x10] sm:$0xff]
  %v6898 = vld [vmem:[%s7 + $0x18] sm:$0xff]
  %v6899 = vld [vmem:[%s7 + $0x20] sm:$0xff]
  %v6900 = vld [vmem:[%s7 + $0x28] sm:$0xff]
  %v6901 = vld [vmem:[%s7 + $0x30] sm:$0xff]
  %v6902 = vld [vmem:[%s7 + $0x38] sm:$0xff]
  %v6903 = vld [vmem:[%s7 + $0x40] sm:$0xff]
  %v6904 = vld [vmem:[%s7 + $0x48] sm:$0xff]
  %v6905 = vld [vmem:[%s7 + $0x50] sm:$0xf]
  %6907 = vset.pattern.permute.xlu0 0
  %6908 = vperm.xlu0 %6907, %v6895
  %v6909 = vpop.permute.xlu0 %6908
  %6912 = vset.pattern.permute.xlu0 0
  %6913 = vperm.xlu0 %6912, %v6896
  %v6914 = vpop.permute.xlu0 %6913
  %6917 = vset.pattern.permute.xlu0 0
  %6918 = vperm.xlu0 %6917, %v6897
  %v6919 = vpop.permute.xlu0 %6918
  %6922 = vset.pattern.permute.xlu0 0
  %6923 = vperm.xlu0 %6922, %v6898
  %v6924 = vpop.permute.xlu0 %6923
  %6927 = vset.pattern.permute.xlu0 0
  %6928 = vperm.xlu0 %6927, %v6899
  %v6929 = vpop.permute.xlu0 %6928
  %6932 = vset.pattern.permute.xlu0 0
  %6933 = vperm.xlu0 %6932, %v6900
  %v6934 = vpop.permute.xlu0 %6933
  %6937 = vset.pattern.permute.xlu0 0
  %6938 = vperm.xlu0 %6937, %v6901
  %v6939 = vpop.permute.xlu0 %6938
  %6942 = vset.pattern.permute.xlu0 0
  %6943 = vperm.xlu0 %6942, %v6902
  %v6944 = vpop.permute.xlu0 %6943
  %6947 = vset.pattern.permute.xlu0 0
  %6948 = vperm.xlu0 %6947, %v6903
  %v6949 = vpop.permute.xlu0 %6948
  %6952 = vset.pattern.permute.xlu0 0
  %6953 = vperm.xlu0 %6952, %v6904
  %v6954 = vpop.permute.xlu0 %6953
  %6957 = vset.pattern.permute.xlu0 0
  %6958 = vperm.xlu0 %6957, %v6905
  %v6959 = vpop.permute.xlu0 %6958
  %v6972 = vunpack.c.l.b16 %v6884
  %v6973 = vunpack.c.l.b16 %v6885
  %v6974 = vunpack.c.l.b16 %v6886
  %v6975 = vunpack.c.l.b16 %v6887
  %v6976 = vunpack.c.l.b16 %v6888
  %v6977 = vunpack.c.l.b16 %v6889
  %v6978 = vunpack.c.l.b16 %v6890
  %v6979 = vunpack.c.l.b16 %v6891
  %v6980 = vunpack.c.l.b16 %v6892
  %v6981 = vunpack.c.l.b16 %v6893
  %v6982 = vunpack.c.l.b16 %v6894
  %v6983 = vpack.c.b16 %v6973, %v6972
  %v6984 = vpack.c.b16 %v6975, %v6974
  %v6985 = vpack.c.b16 %v6977, %v6976
  %v6986 = vpack.c.b16 %v6979, %v6978
  %v6987 = vpack.c.b16 %v6981, %v6980
  %v6988 = vpack.c.b16 %v6982, %v6982
  %vm6989 = vcmask 982016
  %v6991 = vsel %vm6989, %v6983, 0
  %v6994 = vsel %vm6989, %v6984, 0
  %v6997 = vsel %vm6989, %v6985, 0
  %v7000 = vsel %vm6989, %v6986, 0
  %v7003 = vsel %vm6989, %v6987, 0
  %v7006 = vsel %vm6989, %v6988, 0
  %v7009 = vsel %vm4698, %v6883, 0
  %7011 = vmatpush.bf16.msra.mxu0 %v7009
  %7012 = vmatpush.bf16.msra.mxu0 %v6882
  %7013 = vmatpush.bf16.msra.mxu0 %v6881
  %7014 = vmatpush.bf16.msra.mxu0 %v6880
  %7015 = vmatpush.bf16.msra.mxu0 %v6879
  %7016 = vmatpush.bf16.msra.mxu0 %v6878
  %7017 = vmatpush.bf16.msra.mxu0 %v6877
  %7018 = vmatpush.bf16.msra.mxu0 %v6876
  %7019 = vmatmul.bf16.gmra.mxu0 %v6991
  %v7020 = vpop.f32.mrf.mxu0
  %v7021 = vadd.f32 %v6909, %v7020
  %v7022 = vpop.f32.mrf.mxu0
  %v7023 = vadd.f32 %v6914, %v7022
  %7024 = vmatmul.bf16.gmra.mxu0 %v6994
  %v7025 = vpop.f32.mrf.mxu0
  %v7026 = vadd.f32 %v6919, %v7025
  %v7027 = vpop.f32.mrf.mxu0
  %v7028 = vadd.f32 %v6924, %v7027
  %7029 = vmatmul.bf16.gmra.mxu0 %v6997
  %v7030 = vpop.f32.mrf.mxu0
  %v7031 = vadd.f32 %v6929, %v7030
  %v7032 = vpop.f32.mrf.mxu0
  %v7033 = vadd.f32 %v6934, %v7032
  %7034 = vmatmul.bf16.gmra.mxu0 %v7000
  %v7035 = vpop.f32.mrf.mxu0
  %v7036 = vadd.f32 %v6939, %v7035
  %v7037 = vpop.f32.mrf.mxu0
  %v7038 = vadd.f32 %v6944, %v7037
  %7039 = vmatmul.bf16.gmra.mxu0 %v7003
  %v7040 = vpop.f32.mrf.mxu0
  %v7041 = vadd.f32 %v6949, %v7040
  %v7042 = vpop.f32.mrf.mxu0
  %v7043 = vadd.f32 %v6954, %v7042
  %7044 = vmatmul.bf16.gmra.mxu0 %v7006
  %v7045 = vpop.f32.mrf.mxu0
  %v7046 = vadd.f32 %v6959, %v7045
  %v7047 = vpop.f32.mrf.mxu0
  %7048 = vdwg.mxu0
  %v7049 = vmax.f32 %v7021, 0.0
  %v7050 = vmax.f32 %v7023, 0.0
  %v7051 = vmax.f32 %v7026, 0.0
  %v7052 = vmax.f32 %v7028, 0.0
  %v7053 = vmax.f32 %v7031, 0.0
  %v7054 = vmax.f32 %v7033, 0.0
  %v7055 = vmax.f32 %v7036, 0.0
  %v7056 = vmax.f32 %v7038, 0.0
  %v7057 = vmax.f32 %v7041, 0.0
  %v7058 = vmax.f32 %v7043, 0.0
  %v7059 = vmax.f32 %v7046, 0.0
  %v7060 = vpack.c.bf16 %v7050, %v7049
  %v7061 = vpack.c.bf16 %v7052, %v7051
  %v7062 = vpack.c.bf16 %v7054, %v7053
  %v7063 = vpack.c.bf16 %v7056, %v7055
  %v7064 = vpack.c.bf16 %v7058, %v7057
  %v7065 = vpack.c.bf16 %v7059, %v7059
  %v7066 = vld [vmem:[%s8] sm:$0xf]
  %v7067 = vld [vmem:[%s8 + $0x4] sm:$0x1]
  %v7068 = vld [vmem:[%s9] sm:$0xff]
  %v7069 = vld [vmem:[%s9 + $0x8] sm:$0x3]
  %7071 = vset.pattern.permute.xlu0 0
  %7072 = vperm.xlu0 %7071, %v7068
  %v7073 = vpop.permute.xlu0 %7072
  %7076 = vset.pattern.permute.xlu0 0
  %7077 = vperm.xlu0 %7076, %v7069
  %v7078 = vpop.permute.xlu0 %7077
  %v7082 = vunpack.c.l.b16 %v7066
  %v7083 = vunpack.c.l.b16 %v7067
  %v7084 = vpack.c.b16 %v7083, %v7082
  %vm7085 = vcmask 687104
  %v7087 = vsel %vm7085, %v7084, 0
  %vm7089 = vcmask 1041408
  %v7091 = vsel %vm7089, %v7065, 0
  %7093 = vmatpush.bf16.msra.mxu0 0
  %7094 = vmatpush.bf16.msra.mxu0 0
  %7095 = vmatpush.bf16.msra.mxu0 %v7091
  %7096 = vmatpush.bf16.msra.mxu0 %v7064
  %7097 = vmatpush.bf16.msra.mxu0 %v7063
  %7098 = vmatpush.bf16.msra.mxu0 %v7062
  %7099 = vmatpush.bf16.msra.mxu0 %v7061
  %7100 = vmatpush.bf16.msra.mxu0 %v7060
  %7101 = vmatmul.bf16.gmra.mxu0 %v7087
  %v7102 = vpop.f32.mrf.mxu0
  %v7103 = vadd.f32 %v7073, %v7102
  %v7104 = vpop.f32.mrf.mxu0
  %v7105 = vadd.f32 %v7078, %v7104
  %7106 = vdwg.mxu0
  %7107 = vst [vmem:[%s10] sm:$0xff] %v7103
  %7108 = vst [vmem:[%s10 + $0x8] sm:$0x3] %v7105
  // Predicated region
  $region42: #{convnet_forward.1} parent=0 // pred_check
    _
  $region43: #{convnet_forward.1} parent=0 // pred_check_branch
    %7110 = sbr.rel (0) target = $region45
  $region44: #{convnet_forward.1} parent=0 // pred_region
    _
  $region45: #{convnet_forward.1} parent=0 // pred_fallthru
    _
  // Predicated region
  $region46: #{convnet_forward.1} parent=0 // pred_check
    _
  $region47: #{convnet_forward.1} parent=0 // pred_check_branch
    %7112 = sbr.rel (0) target = $region49
  $region48: #{convnet_forward.1} parent=0 // pred_region
    _
  $region49: #{convnet_forward.1} parent=0 // pred_fallthru
    _

</llo_original>
